<compile_context>
chip_gen: v5e
topology: v5e:2x2
jax: 0.10.0
libtpu: 0.0.40
codegen_flags: <defaults>
</compile_context>

<pallas_src>
import functools
import numpy as np
import jax
import jax.numpy as jnp
from jax.experimental import pallas as pl
from jax.experimental.pallas import tpu as pltpu

BN_EPS = 1e-5
BN_SCALE = float(1.0 / np.sqrt(1.0 + BN_EPS))  # eval-mode BN: gamma=1, beta=0, mean=0, var=1


def _round_up(x, m):
    return (x + m - 1) // m * m


# ----------------------------- Pallas kernels ------------------------------

def _fused_matmul_kernel(x_ref, w_ref, b_ref, o_ref, acc_ref, *, nk, out_relu, in_relu):
    """acc += [relu](x) @ w over the K grid axis; epilogue adds bias (+ReLU)."""
    @pl.when(pl.program_id(1) == 0)
    def _init():
        acc_ref[...] = jnp.zeros_like(acc_ref)

    x = x_ref[...]
    if in_relu:
        x = jnp.maximum(x, 0)
    acc_ref[...] += jnp.dot(x, w_ref[...], preferred_element_type=jnp.float32)

    @pl.when(pl.program_id(1) == nk - 1)
    def _finalize():
        y = acc_ref[...] + b_ref[...]
        if out_relu:
            y = jnp.maximum(y, 0.0)
        o_ref[...] = y.astype(o_ref.dtype)


def fused_matmul(x, w, b, *, out_relu, in_relu=False, out_dtype=jnp.bfloat16,
                 tile_m=512, tile_k=512):
    """out = [relu]( [relu](x) @ w + b ).  x:(M,K) bf16, w:(K,N) bf16, b:(1,N) f32."""
    M, K = x.shape
    Kw, N = w.shape
    assert K == Kw
    # --- M tiling (pad only to a multiple of 8; the demo shapes need no padding) ---
    TM = min(tile_m, _round_up(M, 8))
    Mp = _round_up(M, TM)
    if Mp != M:
        x = jnp.pad(x, ((0, Mp - M), (0, 0)))
    # --- K tiling: one full-K block for small K, 128-aligned tiles otherwise ---
    if K > tile_k:
        TK = tile_k
        Kp = _round_up(K, TK)
        if Kp != K:
            x = jnp.pad(x, ((0, 0), (0, Kp - K)))
            w = jnp.pad(w, ((0, Kp - K), (0, 0)))
        nk = Kp // TK
    else:
        TK, nk = K, 1

    out = pl.pallas_call(
        functools.partial(_fused_matmul_kernel, nk=nk,
                          out_relu=out_relu, in_relu=in_relu),
        grid=(Mp // TM, nk),
        in_specs=[
            pl.BlockSpec((TM, TK), lambda i, k: (i, k)),
            pl.BlockSpec((TK, N), lambda i, k: (k, 0)),
            pl.BlockSpec((1, N), lambda i, k: (0, 0)),
        ],
        out_specs=pl.BlockSpec((TM, N), lambda i, k: (i, 0)),
        out_shape=jax.ShapeDtypeStruct((Mp, N), out_dtype),
        scratch_shapes=[pltpu.VMEM((TM, N), jnp.float32)],
        compiler_params=pltpu.CompilerParams(
            dimension_semantics=("parallel", "arbitrary"),
            vmem_limit_bytes=32 * 1024 * 1024),
    )(x, w, b)
    return out[:M] if Mp != M else out


def _pool_s1_kernel(x_ref, o_ref, *, k, op):
    """Stride-1 k*k max/mean pooling over shifted slices of the padded tile."""
    ho, wo = o_ref.shape[1], o_ref.shape[2]
    acc = None
    for dy in range(k):
        for dx in range(k):
            v = x_ref[:, dy:dy + ho, dx:dx + wo, :]
            if op == "mean":
                v = v.astype(jnp.float32)
            if acc is None:
                acc = v
            elif op == "max":
                acc = jnp.maximum(acc, v)
            else:
                acc = acc + v
    if op == "mean":
        acc = (acc * (1.0 / (k * k))).astype(o_ref.dtype)
    o_ref[...] = acc


def pool2d(x, k, stride, pad, op):
    """Max / average pooling (NHWC) without the old (k*k, M, C) HBM stack."""
    N, H, W, C = x.shape
    if pad:
        pad_val = float(jnp.finfo(x.dtype).min) if op == "max" else 0.0
        x = jnp.pad(x, ((0, 0), (pad, pad), (pad, pad), (0, 0)),
                    constant_values=pad_val)
    Hp, Wp = H + 2 * pad, W + 2 * pad
    Ho, Wo = Hp - k + 1, Wp - k + 1
    # TODO(synk): for large images, tile spatially with a halo instead of one
    #             (1, Hp, Wp, C) block per batch element.
    y = pl.pallas_call(
        functools.partial(_pool_s1_kernel, k=k, op=op),
        grid=(N,),
        in_specs=[pl.BlockSpec((1, Hp, Wp, C), lambda n: (n, 0, 0, 0))],
        out_specs=pl.BlockSpec((1, Ho, Wo, C), lambda n: (n, 0, 0, 0)),
        out_shape=jax.ShapeDtypeStruct((N, Ho, Wo, C), x.dtype),
        compiler_params=pltpu.CompilerParams(
            dimension_semantics=("parallel",),
            vmem_limit_bytes=32 * 1024 * 1024),
    )(x)
    if stride > 1:
        y = y[:, ::stride, ::stride, :]
    return y


def _head_kernel(x_ref, w_ref, b_ref, o_ref):
    """relu(norm5(x)) -> global average pool -> Linear   (norm5 scale folded in w)."""
    x = jnp.maximum(x_ref[...].astype(jnp.float32), 0.0)
    pooled = jnp.mean(x, axis=1)                                   # (N, C)
    o_ref[...] = jnp.dot(pooled, w_ref[...],
                         preferred_element_type=jnp.float32) + b_ref[...]


def head_forward(x3d, w, b):
    N, HW, C = x3d.shape
    nc = w.shape[1]
    return pl.pallas_call(
        _head_kernel,
        grid=(1,),
        in_specs=[pl.BlockSpec((N, HW, C), lambda i: (0, 0, 0)),
                  pl.BlockSpec((C, nc), lambda i: (0, 0)),
                  pl.BlockSpec((1, nc), lambda i: (0, 0))],
        out_specs=pl.BlockSpec((N, nc), lambda i: (0, 0)),
        out_shape=jax.ShapeDtypeStruct((N, nc), jnp.float32),
        compiler_params=pltpu.CompilerParams(vmem_limit_bytes=32 * 1024 * 1024),
    )(x3d, w, b)


# ------------------------------ JAX glue ------------------------------------

def im2col(x, k, stride, pad):
    """x: (N,H,W,C) -> (N*Ho*Wo, k*k*C), offset-major / channel-minor ordering."""
    N, H, W, C = x.shape
    Ho = (H + 2 * pad - k) // stride + 1
    Wo = (W + 2 * pad - k) // stride + 1
    xp = jnp.pad(x, ((0, 0), (pad, pad), (pad, pad), (0, 0)))
    cols = []
    for dy in range(k):
        for dx in range(k):
            cols.append(xp[:, dy:dy + (Ho - 1) * stride + 1:stride,
                              dx:dx + (Wo - 1) * stride + 1:stride, :])
    patches = jnp.concatenate(cols, axis=-1)
    return patches.reshape(N * Ho * Wo, k * k * C), (N, Ho, Wo)


def conv_k(x, w, b, k, stride, pad):
    """k>1 convolution (+ folded BN + ReLU) via im2col + the fused tiled matmul."""
    patches, (N, Ho, Wo) = im2col(x, k, stride, pad)
    cout = w.shape[1]
    y = fused_matmul(patches, w, b, out_relu=True)
    return y.reshape(N, Ho, Wo, cout)


# --------------------------- parameter init ---------------------------------

def conv_init(key, k, cin, cout, bias, *, bn_after=True, bn_before=False):
    """Conv weights in im2col layout (k*k*cin, cout), bf16, with eval-mode BN folded:
       conv->BN->ReLU  : W*s, b*s     (bn_after)
       BN->ReLU->conv  : s folded into W rows (bn_before)."""
    kw, kb = jax.random.split(key)
    fan_in = cin * k * k
    # kaiming_normal_ (fan_in, relu gain)
    w = jax.random.normal(kw, (k, k, cin, cout), jnp.float32) * np.sqrt(2.0 / fan_in)
    w = w.reshape(k * k * cin, cout)
    if bias:
        bound = 1.0 / np.sqrt(fan_in)
        b = jax.random.uniform(kb, (1, cout), jnp.float32, -bound, bound)
    else:
        b = jnp.zeros((1, cout), jnp.float32)
    if bn_after:
        w = w * BN_SCALE
        b = b * BN_SCALE
    if bn_before:
        w = w * BN_SCALE
    return {"w": w.astype(jnp.bfloat16), "b": b}


def inception_init(key, cin, g4):
    ks = jax.random.split(key, 7)
    b1 = conv_init(ks[0], 1, cin, g4, True)
    b2r = conv_init(ks[1], 1, cin, g4, True)
    b3r = conv_init(ks[3], 1, cin, g4, True)
    return {
        # the three 1x1 branch convs sharing the same input, fused along N
        "w_b123": jnp.concatenate([b1["w"], b2r["w"], b3r["w"]], axis=1),
        "b_b123": jnp.concatenate([b1["b"], b2r["b"], b3r["b"]], axis=1),
        "b2_c3": conv_init(ks[2], 3, g4, g4, True),
        "b3_c3a": conv_init(ks[4], 3, g4, g4, True),
        "b3_c3b": conv_init(ks[5], 3, g4, g4, True),
        "b4_c1": conv_init(ks[6], 1, cin, g4, True),
    }


def densenet_init(key, growth_rate, block_config, num_init_features, num_classes):
    # Inception outputs 4*(growth_rate//4) channels; bookkeeping assumes divisibility.
    assert growth_rate % 4 == 0, "growth_rate must be divisible by 4"
    g4 = growth_rate // 4
    keys = iter(jax.random.split(key, 64))
    params = {"conv0": conv_init(next(keys), 7, 3, num_init_features, bias=False)}
    nf = num_init_features
    blocks, transitions = [], []
    for i, nl in enumerate(block_config):
        layers = []
        for j in range(nl):
            cin = nf + j * growth_rate
            layers.append(inception_init(next(keys), cin, g4))
        blocks.append(layers)
        nf = nf + nl * growth_rate
        if i != len(block_config) - 1:
            # transition: BN -> ReLU -> 1x1 conv (no bias); input-side BN folded into W
            transitions.append(conv_init(next(keys), 1, nf, nf // 2, bias=False,
                                         bn_after=False, bn_before=True))
            nf = nf // 2
    # classifier Linear; norm5 scale folded into the weight, kept in f32
    w_cls = (jax.random.normal(next(keys), (nf, num_classes), jnp.float32)
             * np.sqrt(1.0 / nf)) * BN_SCALE
    b_cls = jnp.zeros((1, num_classes), jnp.float32)  # Linear bias init to 0
    params.update({"blocks": blocks, "transitions": transitions,
                   "classifier": {"w": w_cls, "b": b_cls},
                   "growth_rate": growth_rate, "g4": g4,
                   "num_init_features": num_init_features})
    return params


# ------------------------------- forward ------------------------------------

def inception_fwd(x, p, g4):
    N, H, W, Cin = x.shape
    M = N * H * W
    x2 = x.reshape(M, Cin)
    # fused b1 / b2-reduce / b3-reduce 1x1 convs (+ folded BN + ReLU): one wide matmul
    y123 = fused_matmul(x2, p["w_b123"], p["b_b123"], out_relu=True)
    y1 = y123[:, 0:g4].reshape(N, H, W, g4)
    t2 = y123[:, g4:2 * g4].reshape(N, H, W, g4)
    t3 = y123[:, 2 * g4:3 * g4].reshape(N, H, W, g4)
    y2 = conv_k(t2, p["b2_c3"]["w"], p["b2_c3"]["b"], 3, 1, 1)
    y3 = conv_k(t3, p["b3_c3a"]["w"], p["b3_c3a"]["b"], 3, 1, 1)
    y3 = conv_k(y3, p["b3_c3b"]["w"], p["b3_c3b"]["b"], 3, 1, 1)
    xp = pool2d(x, 3, 1, 1, "max")
    y4 = fused_matmul(xp.reshape(M, Cin), p["b4_c1"]["w"], p["b4_c1"]["b"],
                      out_relu=True).reshape(N, H, W, g4)
    return jnp.concatenate([y1, y2, y3, y4], axis=-1)


def densenet_forward(params, x_nchw):
    g4 = params["g4"]
    x = jnp.transpose(x_nchw, (0, 2, 3, 1)).astype(jnp.bfloat16)   # NCHW -> NHWC, bf16
    # stem: conv0(7x7, s2, p3, no bias) + norm0 + relu0 (folded), pool0(3x3, s2, p1)
    c0 = params["conv0"]
    x = conv_k(x, c0["w"], c0["b"], 7, 2, 3)
    x = pool2d(x, 3, 2, 1, "max")
    nblocks = len(params["blocks"])
    for i, layers in enumerate(params["blocks"]):
        feats = [x]
        for lp in layers:
            inp = jnp.concatenate(feats, axis=-1)
            feats.append(inception_fwd(inp, lp, g4))
        x = jnp.concatenate(feats, axis=-1)
        if i != nblocks - 1:
            # transition: BN -> ReLU -> 1x1 conv (no bias) -> avgpool(2, 2)
            # (BN scale folded into W; ReLU applied in-kernel on the input)
            tw = params["transitions"][i]
            N, H, W, C = x.shape
            y = fused_matmul(x.reshape(N * H * W, C), tw["w"], tw["b"],
                             out_relu=False, in_relu=True)
            x = pool2d(y.reshape(N, H, W, -1), 2, 2, 0, "mean")
    # head: norm5 + relu + adaptive_avg_pool2d((1,1)) + flatten + Linear (one kernel)
    N, H, W, C = x.shape
    cls = params["classifier"]
    return head_forward(x.reshape(N, H * W, C), cls["w"], cls["b"])


# --------------------------------- main --------------------------------------

if __name__ == "__main__":
    key = jax.random.PRNGKey(0)
    kp, kx = jax.random.split(key)
    # small config consistent with the module: growth_rate, block_config, init features
    params = densenet_init(kp, growth_rate=8, block_config=(2, 2),
                           num_init_features=8, num_classes=10)
    x = jax.random.normal(kx, (2, 3, 32, 32), jnp.float32)  # NCHW, like PyTorch

    fwd = jax.jit(lambda inp: densenet_forward(params, inp))
    logits = fwd(x)
    jax.block_until_ready(logits)
    assert logits.shape == (2, 10) and logits.dtype == jnp.float32
    print("KERNEL_OK")
</pallas_src>

<mosaic_0001>
module attributes {stable_mosaic.version = 11 : i64} {
  func.func @_pool_s1_kernel(%arg0: i32, %arg1: memref<1x18x18x8xbf16, #tpu.memory_space<vmem>>, %arg2: memref<1x16x16x8xbf16, #tpu.memory_space<vmem>>) attributes {dimension_semantics = [#tpu.dimension_semantics<parallel>], iteration_bounds = array<i64: 2>, scalar_prefetch = 0 : i64, scratch_operands = 0 : i64, tpu.core_type = #tpu.core_type<tc>, window_params = [{transform_indices = @transform_0, window_bounds = array<i64: 1, 18, 18, 8>}, {transform_indices = @transform_1, window_bounds = array<i64: 1, 16, 16, 8>}]} {
    %c0 = arith.constant 0 : index
    %c0_0 = arith.constant 0 : index
    %c0_1 = arith.constant 0 : index
    %c0_2 = arith.constant 0 : index
    %0 = vector.load %arg1[%c0, %c0_0, %c0_1, %c0_2] : memref<1x18x18x8xbf16, #tpu.memory_space<vmem>>, vector<1x16x16x8xbf16>
    %c0_3 = arith.constant 0 : index
    %c0_4 = arith.constant 0 : index
    %c1 = arith.constant 1 : index
    %c0_5 = arith.constant 0 : index
    %1 = vector.load %arg1[%c0_3, %c0_4, %c1, %c0_5] : memref<1x18x18x8xbf16, #tpu.memory_space<vmem>>, vector<1x16x16x8xbf16>
    %2 = arith.maximumf %0, %1 : vector<1x16x16x8xbf16>
    %c0_6 = arith.constant 0 : index
    %c0_7 = arith.constant 0 : index
    %c2 = arith.constant 2 : index
    %c0_8 = arith.constant 0 : index
    %3 = vector.load %arg1[%c0_6, %c0_7, %c2, %c0_8] : memref<1x18x18x8xbf16, #tpu.memory_space<vmem>>, vector<1x16x16x8xbf16>
    %4 = arith.maximumf %2, %3 : vector<1x16x16x8xbf16>
    %c0_9 = arith.constant 0 : index
    %c1_10 = arith.constant 1 : index
    %c0_11 = arith.constant 0 : index
    %c0_12 = arith.constant 0 : index
    %5 = vector.load %arg1[%c0_9, %c1_10, %c0_11, %c0_12] : memref<1x18x18x8xbf16, #tpu.memory_space<vmem>>, vector<1x16x16x8xbf16>
    %6 = arith.maximumf %4, %5 : vector<1x16x16x8xbf16>
    %c0_13 = arith.constant 0 : index
    %c1_14 = arith.constant 1 : index
    %c1_15 = arith.constant 1 : index
    %c0_16 = arith.constant 0 : index
    %7 = vector.load %arg1[%c0_13, %c1_14, %c1_15, %c0_16] : memref<1x18x18x8xbf16, #tpu.memory_space<vmem>>, vector<1x16x16x8xbf16>
    %8 = arith.maximumf %6, %7 : vector<1x16x16x8xbf16>
    %c0_17 = arith.constant 0 : index
    %c1_18 = arith.constant 1 : index
    %c2_19 = arith.constant 2 : index
    %c0_20 = arith.constant 0 : index
    %9 = vector.load %arg1[%c0_17, %c1_18, %c2_19, %c0_20] : memref<1x18x18x8xbf16, #tpu.memory_space<vmem>>, vector<1x16x16x8xbf16>
    %10 = arith.maximumf %8, %9 : vector<1x16x16x8xbf16>
    %c0_21 = arith.constant 0 : index
    %c2_22 = arith.constant 2 : index
    %c0_23 = arith.constant 0 : index
    %c0_24 = arith.constant 0 : index
    %11 = vector.load %arg1[%c0_21, %c2_22, %c0_23, %c0_24] : memref<1x18x18x8xbf16, #tpu.memory_space<vmem>>, vector<1x16x16x8xbf16>
    %12 = arith.maximumf %10, %11 : vector<1x16x16x8xbf16>
    %c0_25 = arith.constant 0 : index
    %c2_26 = arith.constant 2 : index
    %c1_27 = arith.constant 1 : index
    %c0_28 = arith.constant 0 : index
    %13 = vector.load %arg1[%c0_25, %c2_26, %c1_27, %c0_28] : memref<1x18x18x8xbf16, #tpu.memory_space<vmem>>, vector<1x16x16x8xbf16>
    %14 = arith.maximumf %12, %13 : vector<1x16x16x8xbf16>
    %c0_29 = arith.constant 0 : index
    %c2_30 = arith.constant 2 : index
    %c2_31 = arith.constant 2 : index
    %c0_32 = arith.constant 0 : index
    %15 = vector.load %arg1[%c0_29, %c2_30, %c2_31, %c0_32] : memref<1x18x18x8xbf16, #tpu.memory_space<vmem>>, vector<1x16x16x8xbf16>
    %16 = arith.maximumf %14, %15 : vector<1x16x16x8xbf16>
    %c0_33 = arith.constant 0 : index
    %c0_34 = arith.constant 0 : index
    %c0_35 = arith.constant 0 : index
    %c0_36 = arith.constant 0 : index
    %17 = vector.load %arg2[%c0_33, %c0_34, %c0_35, %c0_36] : memref<1x16x16x8xbf16, #tpu.memory_space<vmem>>, vector<1x16x16x8xbf16>
    tpu.vector_store %arg2[%c0_33, %c0_34, %c0_35, %c0_36], %16 {strides = array<i32>} : memref<1x16x16x8xbf16, #tpu.memory_space<vmem>>, vector<1x16x16x8xbf16>,
    return
  }
  func.func @transform_0(%arg0: i32) -> (i32, i32, i32, i32) {
    %c0_i32 = arith.constant 0 : i32
    %c0_i32_0 = arith.constant 0 : i32
    %c0_i32_1 = arith.constant 0 : i32
    %c0_i32_2 = arith.constant 0 : i32
    return %arg0, %c0_i32, %c0_i32_0, %c0_i32_1 : i32, i32, i32, i32
  }
  func.func @transform_1(%arg0: i32) -> (i32, i32, i32, i32) {
    %c0_i32 = arith.constant 0 : i32
    %c0_i32_0 = arith.constant 0 : i32
    %c0_i32_1 = arith.constant 0 : i32
    %c0_i32_2 = arith.constant 0 : i32
    return %arg0, %c0_i32, %c0_i32_0, %c0_i32_1 : i32, i32, i32, i32
  }
}

module attributes {stable_mosaic.version = 11 : i64} {
  func.func @_fused_matmul_kernel(%arg0: i32, %arg1: i32, %arg2: memref<512x147xbf16, #tpu.memory_space<vmem>>, %arg3: memref<147x8xbf16, #tpu.memory_space<vmem>>, %arg4: memref<1x8xf32, #tpu.memory_space<vmem>>, %arg5: memref<512x8xbf16, #tpu.memory_space<vmem>>, %arg6: memref<512x8xf32, #tpu.memory_space<vmem>>) attributes {dimension_semantics = [#tpu.dimension_semantics<parallel>, #tpu.dimension_semantics<arbitrary>], iteration_bounds = array<i64: 1, 1>, scalar_prefetch = 0 : i64, scratch_operands = 1 : i64, tpu.core_type = #tpu.core_type<tc>, window_params = [{transform_indices = @transform_0, window_bounds = array<i64: 512, 147>}, {transform_indices = @transform_1, window_bounds = array<i64: 147, 8>}, {pipeline_mode = #tpu.pipeline_mode<synchronous>, transform_indices = @transform_2, window_bounds = array<i64: 1, 8>}, {transform_indices = @transform_3, window_bounds = array<i64: 512, 8>}]} {
    %c0_i32 = arith.constant 0 : i32
    %0 = arith.cmpi eq, %arg1, %c0_i32 : i32
    %1 = arith.extui %0 : i1 to i32
    %c0_i32_0 = arith.constant 0 : i32
    %2 = arith.cmpi ne, %1, %c0_i32_0 : i32
    scf.if %2 {
      %cst_10 = arith.constant 0.000000e+00 : f32
      %12 = vector.broadcast %cst_10 : f32 to vector<512x8xf32>
      %c0_11 = arith.constant 0 : index
      %c0_12 = arith.constant 0 : index
      %13 = vector.load %arg6[%c0_11, %c0_12] : memref<512x8xf32, #tpu.memory_space<vmem>>, vector<512x8xf32>
      tpu.vector_store %arg6[%c0_11, %c0_12], %12 {strides = array<i32>} : memref<512x8xf32, #tpu.memory_space<vmem>>, vector<512x8xf32>,
    } else {
    }
    %c0 = arith.constant 0 : index
    %c0_1 = arith.constant 0 : index
    %3 = vector.load %arg2[%c0, %c0_1] : memref<512x147xbf16, #tpu.memory_space<vmem>>, vector<512x147xbf16>
    %c0_2 = arith.constant 0 : index
    %c0_3 = arith.constant 0 : index
    %4 = vector.load %arg6[%c0_2, %c0_3] : memref<512x8xf32, #tpu.memory_space<vmem>>, vector<512x8xf32>
    %c0_4 = arith.constant 0 : index
    %c0_5 = arith.constant 0 : index
    %5 = vector.load %arg3[%c0_4, %c0_5] : memref<147x8xbf16, #tpu.memory_space<vmem>>, vector<147x8xbf16>
    %cst = arith.constant dense<0.000000e+00> : vector<512x8xf32>
    %6 = tpu.matmul %3, %5, %cst {dimension_numbers = #tpu.dot_dimension_numbers<[1], [0], [0], [1], [0, 0, 1, 1], [], []>} : vector<512x147xbf16>, vector<147x8xbf16>, vector<512x8xf32> -> vector<512x8xf32>
    %7 = arith.addf %4, %6 : vector<512x8xf32>
    %c0_6 = arith.constant 0 : index
    %c0_7 = arith.constant 0 : index
    %8 = vector.load %arg6[%c0_6, %c0_7] : memref<512x8xf32, #tpu.memory_space<vmem>>, vector<512x8xf32>
    tpu.vector_store %arg6[%c0_6, %c0_7], %7 {strides = array<i32>} : memref<512x8xf32, #tpu.memory_space<vmem>>, vector<512x8xf32>,
    %c0_i32_8 = arith.constant 0 : i32
    %9 = arith.cmpi eq, %arg1, %c0_i32_8 : i32
    %10 = arith.extui %9 : i1 to i32
    %c0_i32_9 = arith.constant 0 : i32
    %11 = arith.cmpi ne, %10, %c0_i32_9 : i32
    scf.if %11 {
      %c0_10 = arith.constant 0 : index
      %c0_11 = arith.constant 0 : index
      %12 = vector.load %arg6[%c0_10, %c0_11] : memref<512x8xf32, #tpu.memory_space<vmem>>, vector<512x8xf32>
      %c0_12 = arith.constant 0 : index
      %c0_13 = arith.constant 0 : index
      %13 = vector.load %arg4[%c0_12, %c0_13] : memref<1x8xf32, #tpu.memory_space<vmem>>, vector<1x8xf32>
      %14 = vector.broadcast %13 : vector<1x8xf32> to vector<512x8xf32>
      %15 = arith.addf %12, %14 : vector<512x8xf32>
      %cst_14 = arith.constant 0.000000e+00 : f32
      %16 = vector.broadcast %cst_14 : f32 to vector<512x8xf32>
      %17 = arith.maximumf %15, %16 : vector<512x8xf32>
      %18 = arith.truncf %17 : vector<512x8xf32> to vector<512x8xbf16>
      %c0_15 = arith.constant 0 : index
      %c0_16 = arith.constant 0 : index
      %19 = vector.load %arg5[%c0_15, %c0_16] : memref<512x8xbf16, #tpu.memory_space<vmem>>, vector<512x8xbf16>
      tpu.vector_store %arg5[%c0_15, %c0_16], %18 {strides = array<i32>} : memref<512x8xbf16, #tpu.memory_space<vmem>>, vector<512x8xbf16>,
    } else {
    }
    return
  }
  func.func @transform_0(%arg0: i32, %arg1: i32) -> (i32, i32) {
    %c0_i32 = arith.constant 0 : i32
    return %arg0, %arg1 : i32, i32
  }
  func.func @transform_1(%arg0: i32, %arg1: i32) -> (i32, i32) {
    %c0_i32 = arith.constant 0 : i32
    %c0_i32_0 = arith.constant 0 : i32
    return %arg1, %c0_i32 : i32, i32
  }
  func.func @transform_2(%arg0: i32, %arg1: i32) -> (i32, i32) {
    %c0_i32 = arith.constant 0 : i32
    %c0_i32_0 = arith.constant 0 : i32
    %c0_i32_1 = arith.constant 0 : i32
    return %c0_i32, %c0_i32_0 : i32, i32
  }
  func.func @transform_3(%arg0: i32, %arg1: i32) -> (i32, i32) {
    %c0_i32 = arith.constant 0 : i32
    %c0_i32_0 = arith.constant 0 : i32
    return %arg0, %c0_i32 : i32, i32
  }
}

module attributes {stable_mosaic.version = 11 : i64} {
  func.func @_fused_matmul_kernel(%arg0: i32, %arg1: i32, %arg2: memref<128x8xbf16, #tpu.memory_space<vmem>>, %arg3: memref<8x6xbf16, #tpu.memory_space<vmem>>, %arg4: memref<1x6xf32, #tpu.memory_space<vmem>>, %arg5: memref<128x6xbf16, #tpu.memory_space<vmem>>, %arg6: memref<128x6xf32, #tpu.memory_space<vmem>>) attributes {dimension_semantics = [#tpu.dimension_semantics<parallel>, #tpu.dimension_semantics<arbitrary>], iteration_bounds = array<i64: 1, 1>, scalar_prefetch = 0 : i64, scratch_operands = 1 : i64, tpu.core_type = #tpu.core_type<tc>, window_params = [{transform_indices = @transform_0, window_bounds = array<i64: 128, 8>}, {transform_indices = @transform_1, window_bounds = array<i64: 8, 6>}, {pipeline_mode = #tpu.pipeline_mode<synchronous>, transform_indices = @transform_2, window_bounds = array<i64: 1, 6>}, {transform_indices = @transform_3, window_bounds = array<i64: 128, 6>}]} {
    %c0_i32 = arith.constant 0 : i32
    %0 = arith.cmpi eq, %arg1, %c0_i32 : i32
    %1 = arith.extui %0 : i1 to i32
    %c0_i32_0 = arith.constant 0 : i32
    %2 = arith.cmpi ne, %1, %c0_i32_0 : i32
    scf.if %2 {
      %cst_10 = arith.constant 0.000000e+00 : f32
      %12 = vector.broadcast %cst_10 : f32 to vector<128x6xf32>
      %c0_11 = arith.constant 0 : index
      %c0_12 = arith.constant 0 : index
      %13 = vector.load %arg6[%c0_11, %c0_12] : memref<128x6xf32, #tpu.memory_space<vmem>>, vector<128x6xf32>
      tpu.vector_store %arg6[%c0_11, %c0_12], %12 {strides = array<i32>} : memref<128x6xf32, #tpu.memory_space<vmem>>, vector<128x6xf32>,
    } else {
    }
    %c0 = arith.constant 0 : index
    %c0_1 = arith.constant 0 : index
    %3 = vector.load %arg2[%c0, %c0_1] : memref<128x8xbf16, #tpu.memory_space<vmem>>, vector<128x8xbf16>
    %c0_2 = arith.constant 0 : index
    %c0_3 = arith.constant 0 : index
    %4 = vector.load %arg6[%c0_2, %c0_3] : memref<128x6xf32, #tpu.memory_space<vmem>>, vector<128x6xf32>
    %c0_4 = arith.constant 0 : index
    %c0_5 = arith.constant 0 : index
    %5 = vector.load %arg3[%c0_4, %c0_5] : memref<8x6xbf16, #tpu.memory_space<vmem>>, vector<8x6xbf16>
    %cst = arith.constant dense<0.000000e+00> : vector<128x6xf32>
    %6 = tpu.matmul %3, %5, %cst {dimension_numbers = #tpu.dot_dimension_numbers<[1], [0], [0], [1], [0, 0, 1, 1], [], []>} : vector<128x8xbf16>, vector<8x6xbf16>, vector<128x6xf32> -> vector<128x6xf32>
    %7 = arith.addf %4, %6 : vector<128x6xf32>
    %c0_6 = arith.constant 0 : index
    %c0_7 = arith.constant 0 : index
    %8 = vector.load %arg6[%c0_6, %c0_7] : memref<128x6xf32, #tpu.memory_space<vmem>>, vector<128x6xf32>
    tpu.vector_store %arg6[%c0_6, %c0_7], %7 {strides = array<i32>} : memref<128x6xf32, #tpu.memory_space<vmem>>, vector<128x6xf32>,
    %c0_i32_8 = arith.constant 0 : i32
    %9 = arith.cmpi eq, %arg1, %c0_i32_8 : i32
    %10 = arith.extui %9 : i1 to i32
    %c0_i32_9 = arith.constant 0 : i32
    %11 = arith.cmpi ne, %10, %c0_i32_9 : i32
    scf.if %11 {
      %c0_10 = arith.constant 0 : index
      %c0_11 = arith.constant 0 : index
      %12 = vector.load %arg6[%c0_10, %c0_11] : memref<128x6xf32, #tpu.memory_space<vmem>>, vector<128x6xf32>
      %c0_12 = arith.constant 0 : index
      %c0_13 = arith.constant 0 : index
      %13 = vector.load %arg4[%c0_12, %c0_13] : memref<1x6xf32, #tpu.memory_space<vmem>>, vector<1x6xf32>
      %14 = vector.broadcast %13 : vector<1x6xf32> to vector<128x6xf32>
      %15 = arith.addf %12, %14 : vector<128x6xf32>
      %cst_14 = arith.constant 0.000000e+00 : f32
      %16 = vector.broadcast %cst_14 : f32 to vector<128x6xf32>
      %17 = arith.maximumf %15, %16 : vector<128x6xf32>
      %18 = arith.truncf %17 : vector<128x6xf32> to vector<128x6xbf16>
      %c0_15 = arith.constant 0 : index
      %c0_16 = arith.constant 0 : index
      %19 = vector.load %arg5[%c0_15, %c0_16] : memref<128x6xbf16, #tpu.memory_space<vmem>>, vector<128x6xbf16>
      tpu.vector_store %arg5[%c0_15, %c0_16], %18 {strides = array<i32>} : memref<128x6xbf16, #tpu.memory_space<vmem>>, vector<128x6xbf16>,
    } else {
    }
    return
  }
  func.func @transform_0(%arg0: i32, %arg1: i32) -> (i32, i32) {
    %c0_i32 = arith.constant 0 : i32
    return %arg0, %arg1 : i32, i32
  }
  func.func @transform_1(%arg0: i32, %arg1: i32) -> (i32, i32) {
    %c0_i32 = arith.constant 0 : i32
    %c0_i32_0 = arith.constant 0 : i32
    return %arg1, %c0_i32 : i32, i32
  }
  func.func @transform_2(%arg0: i32, %arg1: i32) -> (i32, i32) {
    %c0_i32 = arith.constant 0 : i32
    %c0_i32_0 = arith.constant 0 : i32
    %c0_i32_1 = arith.constant 0 : i32
    return %c0_i32, %c0_i32_0 : i32, i32
  }
  func.func @transform_3(%arg0: i32, %arg1: i32) -> (i32, i32) {
    %c0_i32 = arith.constant 0 : i32
    %c0_i32_0 = arith.constant 0 : i32
    return %arg0, %c0_i32 : i32, i32
  }
}

module attributes {stable_mosaic.version = 11 : i64} {
  func.func @_fused_matmul_kernel(%arg0: i32, %arg1: i32, %arg2: memref<128x18xbf16, #tpu.memory_space<vmem>>, %arg3: memref<18x2xbf16, #tpu.memory_space<vmem>>, %arg4: memref<1x2xf32, #tpu.memory_space<vmem>>, %arg5: memref<128x2xbf16, #tpu.memory_space<vmem>>, %arg6: memref<128x2xf32, #tpu.memory_space<vmem>>) attributes {dimension_semantics = [#tpu.dimension_semantics<parallel>, #tpu.dimension_semantics<arbitrary>], iteration_bounds = array<i64: 1, 1>, scalar_prefetch = 0 : i64, scratch_operands = 1 : i64, tpu.core_type = #tpu.core_type<tc>, window_params = [{transform_indices = @transform_0, window_bounds = array<i64: 128, 18>}, {transform_indices = @transform_1, window_bounds = array<i64: 18, 2>}, {pipeline_mode = #tpu.pipeline_mode<synchronous>, transform_indices = @transform_2, window_bounds = array<i64: 1, 2>}, {transform_indices = @transform_3, window_bounds = array<i64: 128, 2>}]} {
    %c0_i32 = arith.constant 0 : i32
    %0 = arith.cmpi eq, %arg1, %c0_i32 : i32
    %1 = arith.extui %0 : i1 to i32
    %c0_i32_0 = arith.constant 0 : i32
    %2 = arith.cmpi ne, %1, %c0_i32_0 : i32
    scf.if %2 {
      %cst_10 = arith.constant 0.000000e+00 : f32
      %12 = vector.broadcast %cst_10 : f32 to vector<128x2xf32>
      %c0_11 = arith.constant 0 : index
      %c0_12 = arith.constant 0 : index
      %13 = vector.load %arg6[%c0_11, %c0_12] : memref<128x2xf32, #tpu.memory_space<vmem>>, vector<128x2xf32>
      tpu.vector_store %arg6[%c0_11, %c0_12], %12 {strides = array<i32>} : memref<128x2xf32, #tpu.memory_space<vmem>>, vector<128x2xf32>,
    } else {
    }
    %c0 = arith.constant 0 : index
    %c0_1 = arith.constant 0 : index
    %3 = vector.load %arg2[%c0, %c0_1] : memref<128x18xbf16, #tpu.memory_space<vmem>>, vector<128x18xbf16>
    %c0_2 = arith.constant 0 : index
    %c0_3 = arith.constant 0 : index
    %4 = vector.load %arg6[%c0_2, %c0_3] : memref<128x2xf32, #tpu.memory_space<vmem>>, vector<128x2xf32>
    %c0_4 = arith.constant 0 : index
    %c0_5 = arith.constant 0 : index
    %5 = vector.load %arg3[%c0_4, %c0_5] : memref<18x2xbf16, #tpu.memory_space<vmem>>, vector<18x2xbf16>
    %cst = arith.constant dense<0.000000e+00> : vector<128x2xf32>
    %6 = tpu.matmul %3, %5, %cst {dimension_numbers = #tpu.dot_dimension_numbers<[1], [0], [0], [1], [0, 0, 1, 1], [], []>} : vector<128x18xbf16>, vector<18x2xbf16>, vector<128x2xf32> -> vector<128x2xf32>
    %7 = arith.addf %4, %6 : vector<128x2xf32>
    %c0_6 = arith.constant 0 : index
    %c0_7 = arith.constant 0 : index
    %8 = vector.load %arg6[%c0_6, %c0_7] : memref<128x2xf32, #tpu.memory_space<vmem>>, vector<128x2xf32>
    tpu.vector_store %arg6[%c0_6, %c0_7], %7 {strides = array<i32>} : memref<128x2xf32, #tpu.memory_space<vmem>>, vector<128x2xf32>,
    %c0_i32_8 = arith.constant 0 : i32
    %9 = arith.cmpi eq, %arg1, %c0_i32_8 : i32
    %10 = arith.extui %9 : i1 to i32
    %c0_i32_9 = arith.constant 0 : i32
    %11 = arith.cmpi ne, %10, %c0_i32_9 : i32
    scf.if %11 {
      %c0_10 = arith.constant 0 : index
      %c0_11 = arith.constant 0 : index
      %12 = vector.load %arg6[%c0_10, %c0_11] : memref<128x2xf32, #tpu.memory_space<vmem>>, vector<128x2xf32>
      %c0_12 = arith.constant 0 : index
      %c0_13 = arith.constant 0 : index
      %13 = vector.load %arg4[%c0_12, %c0_13] : memref<1x2xf32, #tpu.memory_space<vmem>>, vector<1x2xf32>
      %14 = vector.broadcast %13 : vector<1x2xf32> to vector<128x2xf32>
      %15 = arith.addf %12, %14 : vector<128x2xf32>
      %cst_14 = arith.constant 0.000000e+00 : f32
      %16 = vector.broadcast %cst_14 : f32 to vector<128x2xf32>
      %17 = arith.maximumf %15, %16 : vector<128x2xf32>
      %18 = arith.truncf %17 : vector<128x2xf32> to vector<128x2xbf16>
      %c0_15 = arith.constant 0 : index
      %c0_16 = arith.constant 0 : index
      %19 = vector.load %arg5[%c0_15, %c0_16] : memref<128x2xbf16, #tpu.memory_space<vmem>>, vector<128x2xbf16>
      tpu.vector_store %arg5[%c0_15, %c0_16], %18 {strides = array<i32>} : memref<128x2xbf16, #tpu.memory_space<vmem>>, vector<128x2xbf16>,
    } else {
    }
    return
  }
  func.func @transform_0(%arg0: i32, %arg1: i32) -> (i32, i32) {
    %c0_i32 = arith.constant 0 : i32
    return %arg0, %arg1 : i32, i32
  }
  func.func @transform_1(%arg0: i32, %arg1: i32) -> (i32, i32) {
    %c0_i32 = arith.constant 0 : i32
    %c0_i32_0 = arith.constant 0 : i32
    return %arg1, %c0_i32 : i32, i32
  }
  func.func @transform_2(%arg0: i32, %arg1: i32) -> (i32, i32) {
    %c0_i32 = arith.constant 0 : i32
    %c0_i32_0 = arith.constant 0 : i32
    %c0_i32_1 = arith.constant 0 : i32
    return %c0_i32, %c0_i32_0 : i32, i32
  }
  func.func @transform_3(%arg0: i32, %arg1: i32) -> (i32, i32) {
    %c0_i32 = arith.constant 0 : i32
    %c0_i32_0 = arith.constant 0 : i32
    return %arg0, %c0_i32 : i32, i32
  }
}

module attributes {stable_mosaic.version = 11 : i64} {
  func.func @_pool_s1_kernel(%arg0: i32, %arg1: memref<1x10x10x8xbf16, #tpu.memory_space<vmem>>, %arg2: memref<1x8x8x8xbf16, #tpu.memory_space<vmem>>) attributes {dimension_semantics = [#tpu.dimension_semantics<parallel>], iteration_bounds = array<i64: 2>, scalar_prefetch = 0 : i64, scratch_operands = 0 : i64, tpu.core_type = #tpu.core_type<tc>, window_params = [{transform_indices = @transform_0, window_bounds = array<i64: 1, 10, 10, 8>}, {transform_indices = @transform_1, window_bounds = array<i64: 1, 8, 8, 8>}]} {
    %c0 = arith.constant 0 : index
    %c0_0 = arith.constant 0 : index
    %c0_1 = arith.constant 0 : index
    %c0_2 = arith.constant 0 : index
    %0 = vector.load %arg1[%c0, %c0_0, %c0_1, %c0_2] : memref<1x10x10x8xbf16, #tpu.memory_space<vmem>>, vector<1x8x8x8xbf16>
    %c0_3 = arith.constant 0 : index
    %c0_4 = arith.constant 0 : index
    %c1 = arith.constant 1 : index
    %c0_5 = arith.constant 0 : index
    %1 = vector.load %arg1[%c0_3, %c0_4, %c1, %c0_5] : memref<1x10x10x8xbf16, #tpu.memory_space<vmem>>, vector<1x8x8x8xbf16>
    %2 = arith.maximumf %0, %1 : vector<1x8x8x8xbf16>
    %c0_6 = arith.constant 0 : index
    %c0_7 = arith.constant 0 : index
    %c2 = arith.constant 2 : index
    %c0_8 = arith.constant 0 : index
    %3 = vector.load %arg1[%c0_6, %c0_7, %c2, %c0_8] : memref<1x10x10x8xbf16, #tpu.memory_space<vmem>>, vector<1x8x8x8xbf16>
    %4 = arith.maximumf %2, %3 : vector<1x8x8x8xbf16>
    %c0_9 = arith.constant 0 : index
    %c1_10 = arith.constant 1 : index
    %c0_11 = arith.constant 0 : index
    %c0_12 = arith.constant 0 : index
    %5 = vector.load %arg1[%c0_9, %c1_10, %c0_11, %c0_12] : memref<1x10x10x8xbf16, #tpu.memory_space<vmem>>, vector<1x8x8x8xbf16>
    %6 = arith.maximumf %4, %5 : vector<1x8x8x8xbf16>
    %c0_13 = arith.constant 0 : index
    %c1_14 = arith.constant 1 : index
    %c1_15 = arith.constant 1 : index
    %c0_16 = arith.constant 0 : index
    %7 = vector.load %arg1[%c0_13, %c1_14, %c1_15, %c0_16] : memref<1x10x10x8xbf16, #tpu.memory_space<vmem>>, vector<1x8x8x8xbf16>
    %8 = arith.maximumf %6, %7 : vector<1x8x8x8xbf16>
    %c0_17 = arith.constant 0 : index
    %c1_18 = arith.constant 1 : index
    %c2_19 = arith.constant 2 : index
    %c0_20 = arith.constant 0 : index
    %9 = vector.load %arg1[%c0_17, %c1_18, %c2_19, %c0_20] : memref<1x10x10x8xbf16, #tpu.memory_space<vmem>>, vector<1x8x8x8xbf16>
    %10 = arith.maximumf %8, %9 : vector<1x8x8x8xbf16>
    %c0_21 = arith.constant 0 : index
    %c2_22 = arith.constant 2 : index
    %c0_23 = arith.constant 0 : index
    %c0_24 = arith.constant 0 : index
    %11 = vector.load %arg1[%c0_21, %c2_22, %c0_23, %c0_24] : memref<1x10x10x8xbf16, #tpu.memory_space<vmem>>, vector<1x8x8x8xbf16>
    %12 = arith.maximumf %10, %11 : vector<1x8x8x8xbf16>
    %c0_25 = arith.constant 0 : index
    %c2_26 = arith.constant 2 : index
    %c1_27 = arith.constant 1 : index
    %c0_28 = arith.constant 0 : index
    %13 = vector.load %arg1[%c0_25, %c2_26, %c1_27, %c0_28] : memref<1x10x10x8xbf16, #tpu.memory_space<vmem>>, vector<1x8x8x8xbf16>
    %14 = arith.maximumf %12, %13 : vector<1x8x8x8xbf16>
    %c0_29 = arith.constant 0 : index
    %c2_30 = arith.constant 2 : index
    %c2_31 = arith.constant 2 : index
    %c0_32 = arith.constant 0 : index
    %15 = vector.load %arg1[%c0_29, %c2_30, %c2_31, %c0_32] : memref<1x10x10x8xbf16, #tpu.memory_space<vmem>>, vector<1x8x8x8xbf16>
    %16 = arith.maximumf %14, %15 : vector<1x8x8x8xbf16>
    %c0_33 = arith.constant 0 : index
    %c0_34 = arith.constant 0 : index
    %c0_35 = arith.constant 0 : index
    %c0_36 = arith.constant 0 : index
    %17 = vector.load %arg2[%c0_33, %c0_34, %c0_35, %c0_36] : memref<1x8x8x8xbf16, #tpu.memory_space<vmem>>, vector<1x8x8x8xbf16>
    tpu.vector_store %arg2[%c0_33, %c0_34, %c0_35, %c0_36], %16 {strides = array<i32>} : memref<1x8x8x8xbf16, #tpu.memory_space<vmem>>, vector<1x8x8x8xbf16>,
    return
  }
  func.func @transform_0(%arg0: i32) -> (i32, i32, i32, i32) {
    %c0_i32 = arith.constant 0 : i32
    %c0_i32_0 = arith.constant 0 : i32
    %c0_i32_1 = arith.constant 0 : i32
    %c0_i32_2 = arith.constant 0 : i32
    return %arg0, %c0_i32, %c0_i32_0, %c0_i32_1 : i32, i32, i32, i32
  }
  func.func @transform_1(%arg0: i32) -> (i32, i32, i32, i32) {
    %c0_i32 = arith.constant 0 : i32
    %c0_i32_0 = arith.constant 0 : i32
    %c0_i32_1 = arith.constant 0 : i32
    %c0_i32_2 = arith.constant 0 : i32
    return %arg0, %c0_i32, %c0_i32_0, %c0_i32_1 : i32, i32, i32, i32
  }
}

module attributes {stable_mosaic.version = 11 : i64} {
  func.func @_fused_matmul_kernel(%arg0: i32, %arg1: i32, %arg2: memref<128x8xbf16, #tpu.memory_space<vmem>>, %arg3: memref<8x2xbf16, #tpu.memory_space<vmem>>, %arg4: memref<1x2xf32, #tpu.memory_space<vmem>>, %arg5: memref<128x2xbf16, #tpu.memory_space<vmem>>, %arg6: memref<128x2xf32, #tpu.memory_space<vmem>>) attributes {dimension_semantics = [#tpu.dimension_semantics<parallel>, #tpu.dimension_semantics<arbitrary>], iteration_bounds = array<i64: 1, 1>, scalar_prefetch = 0 : i64, scratch_operands = 1 : i64, tpu.core_type = #tpu.core_type<tc>, window_params = [{transform_indices = @transform_0, window_bounds = array<i64: 128, 8>}, {transform_indices = @transform_1, window_bounds = array<i64: 8, 2>}, {pipeline_mode = #tpu.pipeline_mode<synchronous>, transform_indices = @transform_2, window_bounds = array<i64: 1, 2>}, {transform_indices = @transform_3, window_bounds = array<i64: 128, 2>}]} {
    %c0_i32 = arith.constant 0 : i32
    %0 = arith.cmpi eq, %arg1, %c0_i32 : i32
    %1 = arith.extui %0 : i1 to i32
    %c0_i32_0 = arith.constant 0 : i32
    %2 = arith.cmpi ne, %1, %c0_i32_0 : i32
    scf.if %2 {
      %cst_10 = arith.constant 0.000000e+00 : f32
      %12 = vector.broadcast %cst_10 : f32 to vector<128x2xf32>
      %c0_11 = arith.constant 0 : index
      %c0_12 = arith.constant 0 : index
      %13 = vector.load %arg6[%c0_11, %c0_12] : memref<128x2xf32, #tpu.memory_space<vmem>>, vector<128x2xf32>
      tpu.vector_store %arg6[%c0_11, %c0_12], %12 {strides = array<i32>} : memref<128x2xf32, #tpu.memory_space<vmem>>, vector<128x2xf32>,
    } else {
    }
    %c0 = arith.constant 0 : index
    %c0_1 = arith.constant 0 : index
    %3 = vector.load %arg2[%c0, %c0_1] : memref<128x8xbf16, #tpu.memory_space<vmem>>, vector<128x8xbf16>
    %c0_2 = arith.constant 0 : index
    %c0_3 = arith.constant 0 : index
    %4 = vector.load %arg6[%c0_2, %c0_3] : memref<128x2xf32, #tpu.memory_space<vmem>>, vector<128x2xf32>
    %c0_4 = arith.constant 0 : index
    %c0_5 = arith.constant 0 : index
    %5 = vector.load %arg3[%c0_4, %c0_5] : memref<8x2xbf16, #tpu.memory_space<vmem>>, vector<8x2xbf16>
    %cst = arith.constant dense<0.000000e+00> : vector<128x2xf32>
    %6 = tpu.matmul %3, %5, %cst {dimension_numbers = #tpu.dot_dimension_numbers<[1], [0], [0], [1], [0, 0, 1, 1], [], []>} : vector<128x8xbf16>, vector<8x2xbf16>, vector<128x2xf32> -> vector<128x2xf32>
    %7 = arith.addf %4, %6 : vector<128x2xf32>
    %c0_6 = arith.constant 0 : index
    %c0_7 = arith.constant 0 : index
    %8 = vector.load %arg6[%c0_6, %c0_7] : memref<128x2xf32, #tpu.memory_space<vmem>>, vector<128x2xf32>
    tpu.vector_store %arg6[%c0_6, %c0_7], %7 {strides = array<i32>} : memref<128x2xf32, #tpu.memory_space<vmem>>, vector<128x2xf32>,
    %c0_i32_8 = arith.constant 0 : i32
    %9 = arith.cmpi eq, %arg1, %c0_i32_8 : i32
    %10 = arith.extui %9 : i1 to i32
    %c0_i32_9 = arith.constant 0 : i32
    %11 = arith.cmpi ne, %10, %c0_i32_9 : i32
    scf.if %11 {
      %c0_10 = arith.constant 0 : index
      %c0_11 = arith.constant 0 : index
      %12 = vector.load %arg6[%c0_10, %c0_11] : memref<128x2xf32, #tpu.memory_space<vmem>>, vector<128x2xf32>
      %c0_12 = arith.constant 0 : index
      %c0_13 = arith.constant 0 : index
      %13 = vector.load %arg4[%c0_12, %c0_13] : memref<1x2xf32, #tpu.memory_space<vmem>>, vector<1x2xf32>
      %14 = vector.broadcast %13 : vector<1x2xf32> to vector<128x2xf32>
      %15 = arith.addf %12, %14 : vector<128x2xf32>
      %cst_14 = arith.constant 0.000000e+00 : f32
      %16 = vector.broadcast %cst_14 : f32 to vector<128x2xf32>
      %17 = arith.maximumf %15, %16 : vector<128x2xf32>
      %18 = arith.truncf %17 : vector<128x2xf32> to vector<128x2xbf16>
      %c0_15 = arith.constant 0 : index
      %c0_16 = arith.constant 0 : index
      %19 = vector.load %arg5[%c0_15, %c0_16] : memref<128x2xbf16, #tpu.memory_space<vmem>>, vector<128x2xbf16>
      tpu.vector_store %arg5[%c0_15, %c0_16], %18 {strides = array<i32>} : memref<128x2xbf16, #tpu.memory_space<vmem>>, vector<128x2xbf16>,
    } else {
    }
    return
  }
  func.func @transform_0(%arg0: i32, %arg1: i32) -> (i32, i32) {
    %c0_i32 = arith.constant 0 : i32
    return %arg0, %arg1 : i32, i32
  }
  func.func @transform_1(%arg0: i32, %arg1: i32) -> (i32, i32) {
    %c0_i32 = arith.constant 0 : i32
    %c0_i32_0 = arith.constant 0 : i32
    return %arg1, %c0_i32 : i32, i32
  }
  func.func @transform_2(%arg0: i32, %arg1: i32) -> (i32, i32) {
    %c0_i32 = arith.constant 0 : i32
    %c0_i32_0 = arith.constant 0 : i32
    %c0_i32_1 = arith.constant 0 : i32
    return %c0_i32, %c0_i32_0 : i32, i32
  }
  func.func @transform_3(%arg0: i32, %arg1: i32) -> (i32, i32) {
    %c0_i32 = arith.constant 0 : i32
    %c0_i32_0 = arith.constant 0 : i32
    return %arg0, %c0_i32 : i32, i32
  }
}

module attributes {stable_mosaic.version = 11 : i64} {
  func.func @_pool_s1_kernel(%arg0: i32, %arg1: memref<1x10x10x16xbf16, #tpu.memory_space<vmem>>, %arg2: memref<1x8x8x16xbf16, #tpu.memory_space<vmem>>) attributes {dimension_semantics = [#tpu.dimension_semantics<parallel>], iteration_bounds = array<i64: 2>, scalar_prefetch = 0 : i64, scratch_operands = 0 : i64, tpu.core_type = #tpu.core_type<tc>, window_params = [{transform_indices = @transform_0, window_bounds = array<i64: 1, 10, 10, 16>}, {transform_indices = @transform_1, window_bounds = array<i64: 1, 8, 8, 16>}]} {
    %c0 = arith.constant 0 : index
    %c0_0 = arith.constant 0 : index
    %c0_1 = arith.constant 0 : index
    %c0_2 = arith.constant 0 : index
    %0 = vector.load %arg1[%c0, %c0_0, %c0_1, %c0_2] : memref<1x10x10x16xbf16, #tpu.memory_space<vmem>>, vector<1x8x8x16xbf16>
    %c0_3 = arith.constant 0 : index
    %c0_4 = arith.constant 0 : index
    %c1 = arith.constant 1 : index
    %c0_5 = arith.constant 0 : index
    %1 = vector.load %arg1[%c0_3, %c0_4, %c1, %c0_5] : memref<1x10x10x16xbf16, #tpu.memory_space<vmem>>, vector<1x8x8x16xbf16>
    %2 = arith.maximumf %0, %1 : vector<1x8x8x16xbf16>
    %c0_6 = arith.constant 0 : index
    %c0_7 = arith.constant 0 : index
    %c2 = arith.constant 2 : index
    %c0_8 = arith.constant 0 : index
    %3 = vector.load %arg1[%c0_6, %c0_7, %c2, %c0_8] : memref<1x10x10x16xbf16, #tpu.memory_space<vmem>>, vector<1x8x8x16xbf16>
    %4 = arith.maximumf %2, %3 : vector<1x8x8x16xbf16>
    %c0_9 = arith.constant 0 : index
    %c1_10 = arith.constant 1 : index
    %c0_11 = arith.constant 0 : index
    %c0_12 = arith.constant 0 : index
    %5 = vector.load %arg1[%c0_9, %c1_10, %c0_11, %c0_12] : memref<1x10x10x16xbf16, #tpu.memory_space<vmem>>, vector<1x8x8x16xbf16>
    %6 = arith.maximumf %4, %5 : vector<1x8x8x16xbf16>
    %c0_13 = arith.constant 0 : index
    %c1_14 = arith.constant 1 : index
    %c1_15 = arith.constant 1 : index
    %c0_16 = arith.constant 0 : index
    %7 = vector.load %arg1[%c0_13, %c1_14, %c1_15, %c0_16] : memref<1x10x10x16xbf16, #tpu.memory_space<vmem>>, vector<1x8x8x16xbf16>
    %8 = arith.maximumf %6, %7 : vector<1x8x8x16xbf16>
    %c0_17 = arith.constant 0 : index
    %c1_18 = arith.constant 1 : index
    %c2_19 = arith.constant 2 : index
    %c0_20 = arith.constant 0 : index
    %9 = vector.load %arg1[%c0_17, %c1_18, %c2_19, %c0_20] : memref<1x10x10x16xbf16, #tpu.memory_space<vmem>>, vector<1x8x8x16xbf16>
    %10 = arith.maximumf %8, %9 : vector<1x8x8x16xbf16>
    %c0_21 = arith.constant 0 : index
    %c2_22 = arith.constant 2 : index
    %c0_23 = arith.constant 0 : index
    %c0_24 = arith.constant 0 : index
    %11 = vector.load %arg1[%c0_21, %c2_22, %c0_23, %c0_24] : memref<1x10x10x16xbf16, #tpu.memory_space<vmem>>, vector<1x8x8x16xbf16>
    %12 = arith.maximumf %10, %11 : vector<1x8x8x16xbf16>
    %c0_25 = arith.constant 0 : index
    %c2_26 = arith.constant 2 : index
    %c1_27 = arith.constant 1 : index
    %c0_28 = arith.constant 0 : index
    %13 = vector.load %arg1[%c0_25, %c2_26, %c1_27, %c0_28] : memref<1x10x10x16xbf16, #tpu.memory_space<vmem>>, vector<1x8x8x16xbf16>
    %14 = arith.maximumf %12, %13 : vector<1x8x8x16xbf16>
    %c0_29 = arith.constant 0 : index
    %c2_30 = arith.constant 2 : index
    %c2_31 = arith.constant 2 : index
    %c0_32 = arith.constant 0 : index
    %15 = vector.load %arg1[%c0_29, %c2_30, %c2_31, %c0_32] : memref<1x10x10x16xbf16, #tpu.memory_space<vmem>>, vector<1x8x8x16xbf16>
    %16 = arith.maximumf %14, %15 : vector<1x8x8x16xbf16>
    %c0_33 = arith.constant 0 : index
    %c0_34 = arith.constant 0 : index
    %c0_35 = arith.constant 0 : index
    %c0_36 = arith.constant 0 : index
    %17 = vector.load %arg2[%c0_33, %c0_34, %c0_35, %c0_36] : memref<1x8x8x16xbf16, #tpu.memory_space<vmem>>, vector<1x8x8x16xbf16>
    tpu.vector_store %arg2[%c0_33, %c0_34, %c0_35, %c0_36], %16 {strides = array<i32>} : memref<1x8x8x16xbf16, #tpu.memory_space<vmem>>, vector<1x8x8x16xbf16>,
    return
  }
  func.func @transform_0(%arg0: i32) -> (i32, i32, i32, i32) {
    %c0_i32 = arith.constant 0 : i32
    %c0_i32_0 = arith.constant 0 : i32
    %c0_i32_1 = arith.constant 0 : i32
    %c0_i32_2 = arith.constant 0 : i32
    return %arg0, %c0_i32, %c0_i32_0, %c0_i32_1 : i32, i32, i32, i32
  }
  func.func @transform_1(%arg0: i32) -> (i32, i32, i32, i32) {
    %c0_i32 = arith.constant 0 : i32
    %c0_i32_0 = arith.constant 0 : i32
    %c0_i32_1 = arith.constant 0 : i32
    %c0_i32_2 = arith.constant 0 : i32
    return %arg0, %c0_i32, %c0_i32_0, %c0_i32_1 : i32, i32, i32, i32
  }
}

module attributes {stable_mosaic.version = 11 : i64} {
  func.func @_fused_matmul_kernel(%arg0: i32, %arg1: i32, %arg2: memref<128x16xbf16, #tpu.memory_space<vmem>>, %arg3: memref<16x2xbf16, #tpu.memory_space<vmem>>, %arg4: memref<1x2xf32, #tpu.memory_space<vmem>>, %arg5: memref<128x2xbf16, #tpu.memory_space<vmem>>, %arg6: memref<128x2xf32, #tpu.memory_space<vmem>>) attributes {dimension_semantics = [#tpu.dimension_semantics<parallel>, #tpu.dimension_semantics<arbitrary>], iteration_bounds = array<i64: 1, 1>, scalar_prefetch = 0 : i64, scratch_operands = 1 : i64, tpu.core_type = #tpu.core_type<tc>, window_params = [{transform_indices = @transform_0, window_bounds = array<i64: 128, 16>}, {transform_indices = @transform_1, window_bounds = array<i64: 16, 2>}, {pipeline_mode = #tpu.pipeline_mode<synchronous>, transform_indices = @transform_2, window_bounds = array<i64: 1, 2>}, {transform_indices = @transform_3, window_bounds = array<i64: 128, 2>}]} {
    %c0_i32 = arith.constant 0 : i32
    %0 = arith.cmpi eq, %arg1, %c0_i32 : i32
    %1 = arith.extui %0 : i1 to i32
    %c0_i32_0 = arith.constant 0 : i32
    %2 = arith.cmpi ne, %1, %c0_i32_0 : i32
    scf.if %2 {
      %cst_10 = arith.constant 0.000000e+00 : f32
      %12 = vector.broadcast %cst_10 : f32 to vector<128x2xf32>
      %c0_11 = arith.constant 0 : index
      %c0_12 = arith.constant 0 : index
      %13 = vector.load %arg6[%c0_11, %c0_12] : memref<128x2xf32, #tpu.memory_space<vmem>>, vector<128x2xf32>
      tpu.vector_store %arg6[%c0_11, %c0_12], %12 {strides = array<i32>} : memref<128x2xf32, #tpu.memory_space<vmem>>, vector<128x2xf32>,
    } else {
    }
    %c0 = arith.constant 0 : index
    %c0_1 = arith.constant 0 : index
    %3 = vector.load %arg2[%c0, %c0_1] : memref<128x16xbf16, #tpu.memory_space<vmem>>, vector<128x16xbf16>
    %c0_2 = arith.constant 0 : index
    %c0_3 = arith.constant 0 : index
    %4 = vector.load %arg6[%c0_2, %c0_3] : memref<128x2xf32, #tpu.memory_space<vmem>>, vector<128x2xf32>
    %c0_4 = arith.constant 0 : index
    %c0_5 = arith.constant 0 : index
    %5 = vector.load %arg3[%c0_4, %c0_5] : memref<16x2xbf16, #tpu.memory_space<vmem>>, vector<16x2xbf16>
    %cst = arith.constant dense<0.000000e+00> : vector<128x2xf32>
    %6 = tpu.matmul %3, %5, %cst {dimension_numbers = #tpu.dot_dimension_numbers<[1], [0], [0], [1], [0, 0, 1, 1], [], []>} : vector<128x16xbf16>, vector<16x2xbf16>, vector<128x2xf32> -> vector<128x2xf32>
    %7 = arith.addf %4, %6 : vector<128x2xf32>
    %c0_6 = arith.constant 0 : index
    %c0_7 = arith.constant 0 : index
    %8 = vector.load %arg6[%c0_6, %c0_7] : memref<128x2xf32, #tpu.memory_space<vmem>>, vector<128x2xf32>
    tpu.vector_store %arg6[%c0_6, %c0_7], %7 {strides = array<i32>} : memref<128x2xf32, #tpu.memory_space<vmem>>, vector<128x2xf32>,
    %c0_i32_8 = arith.constant 0 : i32
    %9 = arith.cmpi eq, %arg1, %c0_i32_8 : i32
    %10 = arith.extui %9 : i1 to i32
    %c0_i32_9 = arith.constant 0 : i32
    %11 = arith.cmpi ne, %10, %c0_i32_9 : i32
    scf.if %11 {
      %c0_10 = arith.constant 0 : index
      %c0_11 = arith.constant 0 : index
      %12 = vector.load %arg6[%c0_10, %c0_11] : memref<128x2xf32, #tpu.memory_space<vmem>>, vector<128x2xf32>
      %c0_12 = arith.constant 0 : index
      %c0_13 = arith.constant 0 : index
      %13 = vector.load %arg4[%c0_12, %c0_13] : memref<1x2xf32, #tpu.memory_space<vmem>>, vector<1x2xf32>
      %14 = vector.broadcast %13 : vector<1x2xf32> to vector<128x2xf32>
      %15 = arith.addf %12, %14 : vector<128x2xf32>
      %cst_14 = arith.constant 0.000000e+00 : f32
      %16 = vector.broadcast %cst_14 : f32 to vector<128x2xf32>
      %17 = arith.maximumf %15, %16 : vector<128x2xf32>
      %18 = arith.truncf %17 : vector<128x2xf32> to vector<128x2xbf16>
      %c0_15 = arith.constant 0 : index
      %c0_16 = arith.constant 0 : index
      %19 = vector.load %arg5[%c0_15, %c0_16] : memref<128x2xbf16, #tpu.memory_space<vmem>>, vector<128x2xbf16>
      tpu.vector_store %arg5[%c0_15, %c0_16], %18 {strides = array<i32>} : memref<128x2xbf16, #tpu.memory_space<vmem>>, vector<128x2xbf16>,
    } else {
    }
    return
  }
  func.func @transform_0(%arg0: i32, %arg1: i32) -> (i32, i32) {
    %c0_i32 = arith.constant 0 : i32
    return %arg0, %arg1 : i32, i32
  }
  func.func @transform_1(%arg0: i32, %arg1: i32) -> (i32, i32) {
    %c0_i32 = arith.constant 0 : i32
    %c0_i32_0 = arith.constant 0 : i32
    return %arg1, %c0_i32 : i32, i32
  }
  func.func @transform_2(%arg0: i32, %arg1: i32) -> (i32, i32) {
    %c0_i32 = arith.constant 0 : i32
    %c0_i32_0 = arith.constant 0 : i32
    %c0_i32_1 = arith.constant 0 : i32
    return %c0_i32, %c0_i32_0 : i32, i32
  }
  func.func @transform_3(%arg0: i32, %arg1: i32) -> (i32, i32) {
    %c0_i32 = arith.constant 0 : i32
    %c0_i32_0 = arith.constant 0 : i32
    return %arg0, %c0_i32 : i32, i32
  }
}

module attributes {stable_mosaic.version = 11 : i64} {
  func.func @_fused_matmul_kernel(%arg0: i32, %arg1: i32, %arg2: memref<128x16xbf16, #tpu.memory_space<vmem>>, %arg3: memref<16x6xbf16, #tpu.memory_space<vmem>>, %arg4: memref<1x6xf32, #tpu.memory_space<vmem>>, %arg5: memref<128x6xbf16, #tpu.memory_space<vmem>>, %arg6: memref<128x6xf32, #tpu.memory_space<vmem>>) attributes {dimension_semantics = [#tpu.dimension_semantics<parallel>, #tpu.dimension_semantics<arbitrary>], iteration_bounds = array<i64: 1, 1>, scalar_prefetch = 0 : i64, scratch_operands = 1 : i64, tpu.core_type = #tpu.core_type<tc>, window_params = [{transform_indices = @transform_0, window_bounds = array<i64: 128, 16>}, {transform_indices = @transform_1, window_bounds = array<i64: 16, 6>}, {pipeline_mode = #tpu.pipeline_mode<synchronous>, transform_indices = @transform_2, window_bounds = array<i64: 1, 6>}, {transform_indices = @transform_3, window_bounds = array<i64: 128, 6>}]} {
    %c0_i32 = arith.constant 0 : i32
    %0 = arith.cmpi eq, %arg1, %c0_i32 : i32
    %1 = arith.extui %0 : i1 to i32
    %c0_i32_0 = arith.constant 0 : i32
    %2 = arith.cmpi ne, %1, %c0_i32_0 : i32
    scf.if %2 {
      %cst_10 = arith.constant 0.000000e+00 : f32
      %12 = vector.broadcast %cst_10 : f32 to vector<128x6xf32>
      %c0_11 = arith.constant 0 : index
      %c0_12 = arith.constant 0 : index
      %13 = vector.load %arg6[%c0_11, %c0_12] : memref<128x6xf32, #tpu.memory_space<vmem>>, vector<128x6xf32>
      tpu.vector_store %arg6[%c0_11, %c0_12], %12 {strides = array<i32>} : memref<128x6xf32, #tpu.memory_space<vmem>>, vector<128x6xf32>,
    } else {
    }
    %c0 = arith.constant 0 : index
    %c0_1 = arith.constant 0 : index
    %3 = vector.load %arg2[%c0, %c0_1] : memref<128x16xbf16, #tpu.memory_space<vmem>>, vector<128x16xbf16>
    %c0_2 = arith.constant 0 : index
    %c0_3 = arith.constant 0 : index
    %4 = vector.load %arg6[%c0_2, %c0_3] : memref<128x6xf32, #tpu.memory_space<vmem>>, vector<128x6xf32>
    %c0_4 = arith.constant 0 : index
    %c0_5 = arith.constant 0 : index
    %5 = vector.load %arg3[%c0_4, %c0_5] : memref<16x6xbf16, #tpu.memory_space<vmem>>, vector<16x6xbf16>
    %cst = arith.constant dense<0.000000e+00> : vector<128x6xf32>
    %6 = tpu.matmul %3, %5, %cst {dimension_numbers = #tpu.dot_dimension_numbers<[1], [0], [0], [1], [0, 0, 1, 1], [], []>} : vector<128x16xbf16>, vector<16x6xbf16>, vector<128x6xf32> -> vector<128x6xf32>
    %7 = arith.addf %4, %6 : vector<128x6xf32>
    %c0_6 = arith.constant 0 : index
    %c0_7 = arith.constant 0 : index
    %8 = vector.load %arg6[%c0_6, %c0_7] : memref<128x6xf32, #tpu.memory_space<vmem>>, vector<128x6xf32>
    tpu.vector_store %arg6[%c0_6, %c0_7], %7 {strides = array<i32>} : memref<128x6xf32, #tpu.memory_space<vmem>>, vector<128x6xf32>,
    %c0_i32_8 = arith.constant 0 : i32
    %9 = arith.cmpi eq, %arg1, %c0_i32_8 : i32
    %10 = arith.extui %9 : i1 to i32
    %c0_i32_9 = arith.constant 0 : i32
    %11 = arith.cmpi ne, %10, %c0_i32_9 : i32
    scf.if %11 {
      %c0_10 = arith.constant 0 : index
      %c0_11 = arith.constant 0 : index
      %12 = vector.load %arg6[%c0_10, %c0_11] : memref<128x6xf32, #tpu.memory_space<vmem>>, vector<128x6xf32>
      %c0_12 = arith.constant 0 : index
      %c0_13 = arith.constant 0 : index
      %13 = vector.load %arg4[%c0_12, %c0_13] : memref<1x6xf32, #tpu.memory_space<vmem>>, vector<1x6xf32>
      %14 = vector.broadcast %13 : vector<1x6xf32> to vector<128x6xf32>
      %15 = arith.addf %12, %14 : vector<128x6xf32>
      %cst_14 = arith.constant 0.000000e+00 : f32
      %16 = vector.broadcast %cst_14 : f32 to vector<128x6xf32>
      %17 = arith.maximumf %15, %16 : vector<128x6xf32>
      %18 = arith.truncf %17 : vector<128x6xf32> to vector<128x6xbf16>
      %c0_15 = arith.constant 0 : index
      %c0_16 = arith.constant 0 : index
      %19 = vector.load %arg5[%c0_15, %c0_16] : memref<128x6xbf16, #tpu.memory_space<vmem>>, vector<128x6xbf16>
      tpu.vector_store %arg5[%c0_15, %c0_16], %18 {strides = array<i32>} : memref<128x6xbf16, #tpu.memory_space<vmem>>, vector<128x6xbf16>,
    } else {
    }
    return
  }
  func.func @transform_0(%arg0: i32, %arg1: i32) -> (i32, i32) {
    %c0_i32 = arith.constant 0 : i32
    return %arg0, %arg1 : i32, i32
  }
  func.func @transform_1(%arg0: i32, %arg1: i32) -> (i32, i32) {
    %c0_i32 = arith.constant 0 : i32
    %c0_i32_0 = arith.constant 0 : i32
    return %arg1, %c0_i32 : i32, i32
  }
  func.func @transform_2(%arg0: i32, %arg1: i32) -> (i32, i32) {
    %c0_i32 = arith.constant 0 : i32
    %c0_i32_0 = arith.constant 0 : i32
    %c0_i32_1 = arith.constant 0 : i32
    return %c0_i32, %c0_i32_0 : i32, i32
  }
  func.func @transform_3(%arg0: i32, %arg1: i32) -> (i32, i32) {
    %c0_i32 = arith.constant 0 : i32
    %c0_i32_0 = arith.constant 0 : i32
    return %arg0, %c0_i32 : i32, i32
  }
}

module attributes {stable_mosaic.version = 11 : i64} {
  func.func @_pool_s1_kernel(%arg0: i32, %arg1: memref<1x8x8x12xbf16, #tpu.memory_space<vmem>>, %arg2: memref<1x7x7x12xbf16, #tpu.memory_space<vmem>>) attributes {dimension_semantics = [#tpu.dimension_semantics<parallel>], iteration_bounds = array<i64: 2>, scalar_prefetch = 0 : i64, scratch_operands = 0 : i64, tpu.core_type = #tpu.core_type<tc>, window_params = [{transform_indices = @transform_0, window_bounds = array<i64: 1, 8, 8, 12>}, {transform_indices = @transform_1, window_bounds = array<i64: 1, 7, 7, 12>}]} {
    %c0 = arith.constant 0 : index
    %c0_0 = arith.constant 0 : index
    %c0_1 = arith.constant 0 : index
    %c0_2 = arith.constant 0 : index
    %0 = vector.load %arg1[%c0, %c0_0, %c0_1, %c0_2] : memref<1x8x8x12xbf16, #tpu.memory_space<vmem>>, vector<1x7x7x12xbf16>
    %1 = arith.extf %0 : vector<1x7x7x12xbf16> to vector<1x7x7x12xf32>
    %c0_3 = arith.constant 0 : index
    %c0_4 = arith.constant 0 : index
    %c1 = arith.constant 1 : index
    %c0_5 = arith.constant 0 : index
    %2 = vector.load %arg1[%c0_3, %c0_4, %c1, %c0_5] : memref<1x8x8x12xbf16, #tpu.memory_space<vmem>>, vector<1x7x7x12xbf16>
    %3 = arith.extf %2 : vector<1x7x7x12xbf16> to vector<1x7x7x12xf32>
    %4 = arith.addf %1, %3 : vector<1x7x7x12xf32>
    %c0_6 = arith.constant 0 : index
    %c1_7 = arith.constant 1 : index
    %c0_8 = arith.constant 0 : index
    %c0_9 = arith.constant 0 : index
    %5 = vector.load %arg1[%c0_6, %c1_7, %c0_8, %c0_9] : memref<1x8x8x12xbf16, #tpu.memory_space<vmem>>, vector<1x7x7x12xbf16>
    %6 = arith.extf %5 : vector<1x7x7x12xbf16> to vector<1x7x7x12xf32>
    %7 = arith.addf %4, %6 : vector<1x7x7x12xf32>
    %c0_10 = arith.constant 0 : index
    %c1_11 = arith.constant 1 : index
    %c1_12 = arith.constant 1 : index
    %c0_13 = arith.constant 0 : index
    %8 = vector.load %arg1[%c0_10, %c1_11, %c1_12, %c0_13] : memref<1x8x8x12xbf16, #tpu.memory_space<vmem>>, vector<1x7x7x12xbf16>
    %9 = arith.extf %8 : vector<1x7x7x12xbf16> to vector<1x7x7x12xf32>
    %10 = arith.addf %7, %9 : vector<1x7x7x12xf32>
    %cst = arith.constant 2.500000e-01 : f32
    %11 = vector.broadcast %cst : f32 to vector<1x7x7x12xf32>
    %12 = arith.mulf %10, %11 : vector<1x7x7x12xf32>
    %13 = arith.truncf %12 : vector<1x7x7x12xf32> to vector<1x7x7x12xbf16>
    %c0_14 = arith.constant 0 : index
    %c0_15 = arith.constant 0 : index
    %c0_16 = arith.constant 0 : index
    %c0_17 = arith.constant 0 : index
    %14 = vector.load %arg2[%c0_14, %c0_15, %c0_16, %c0_17] : memref<1x7x7x12xbf16, #tpu.memory_space<vmem>>, vector<1x7x7x12xbf16>
    tpu.vector_store %arg2[%c0_14, %c0_15, %c0_16, %c0_17], %13 {strides = array<i32>} : memref<1x7x7x12xbf16, #tpu.memory_space<vmem>>, vector<1x7x7x12xbf16>,
    return
  }
  func.func @transform_0(%arg0: i32) -> (i32, i32, i32, i32) {
    %c0_i32 = arith.constant 0 : i32
    %c0_i32_0 = arith.constant 0 : i32
    %c0_i32_1 = arith.constant 0 : i32
    %c0_i32_2 = arith.constant 0 : i32
    return %arg0, %c0_i32, %c0_i32_0, %c0_i32_1 : i32, i32, i32, i32
  }
  func.func @transform_1(%arg0: i32) -> (i32, i32, i32, i32) {
    %c0_i32 = arith.constant 0 : i32
    %c0_i32_0 = arith.constant 0 : i32
    %c0_i32_1 = arith.constant 0 : i32
    %c0_i32_2 = arith.constant 0 : i32
    return %arg0, %c0_i32, %c0_i32_0, %c0_i32_1 : i32, i32, i32, i32
  }
}

module attributes {stable_mosaic.version = 11 : i64} {
  func.func @_fused_matmul_kernel(%arg0: i32, %arg1: i32, %arg2: memref<128x24xbf16, #tpu.memory_space<vmem>>, %arg3: memref<24x12xbf16, #tpu.memory_space<vmem>>, %arg4: memref<1x12xf32, #tpu.memory_space<vmem>>, %arg5: memref<128x12xbf16, #tpu.memory_space<vmem>>, %arg6: memref<128x12xf32, #tpu.memory_space<vmem>>) attributes {dimension_semantics = [#tpu.dimension_semantics<parallel>, #tpu.dimension_semantics<arbitrary>], iteration_bounds = array<i64: 1, 1>, scalar_prefetch = 0 : i64, scratch_operands = 1 : i64, tpu.core_type = #tpu.core_type<tc>, window_params = [{transform_indices = @transform_0, window_bounds = array<i64: 128, 24>}, {transform_indices = @transform_1, window_bounds = array<i64: 24, 12>}, {pipeline_mode = #tpu.pipeline_mode<synchronous>, transform_indices = @transform_2, window_bounds = array<i64: 1, 12>}, {transform_indices = @transform_3, window_bounds = array<i64: 128, 12>}]} {
    %c0_i32 = arith.constant 0 : i32
    %0 = arith.cmpi eq, %arg1, %c0_i32 : i32
    %1 = arith.extui %0 : i1 to i32
    %c0_i32_0 = arith.constant 0 : i32
    %2 = arith.cmpi ne, %1, %c0_i32_0 : i32
    scf.if %2 {
      %cst_11 = arith.constant 0.000000e+00 : f32
      %14 = vector.broadcast %cst_11 : f32 to vector<128x12xf32>
      %c0_12 = arith.constant 0 : index
      %c0_13 = arith.constant 0 : index
      %15 = vector.load %arg6[%c0_12, %c0_13] : memref<128x12xf32, #tpu.memory_space<vmem>>, vector<128x12xf32>
      tpu.vector_store %arg6[%c0_12, %c0_13], %14 {strides = array<i32>} : memref<128x12xf32, #tpu.memory_space<vmem>>, vector<128x12xf32>,
    } else {
    }
    %c0 = arith.constant 0 : index
    %c0_1 = arith.constant 0 : index
    %3 = vector.load %arg2[%c0, %c0_1] : memref<128x24xbf16, #tpu.memory_space<vmem>>, vector<128x24xbf16>
    %cst = arith.constant 0.000000e+00 : bf16
    %4 = vector.broadcast %cst : bf16 to vector<128x24xbf16>
    %5 = arith.maximumf %3, %4 : vector<128x24xbf16>
    %c0_2 = arith.constant 0 : index
    %c0_3 = arith.constant 0 : index
    %6 = vector.load %arg6[%c0_2, %c0_3] : memref<128x12xf32, #tpu.memory_space<vmem>>, vector<128x12xf32>
    %c0_4 = arith.constant 0 : index
    %c0_5 = arith.constant 0 : index
    %7 = vector.load %arg3[%c0_4, %c0_5] : memref<24x12xbf16, #tpu.memory_space<vmem>>, vector<24x12xbf16>
    %cst_6 = arith.constant dense<0.000000e+00> : vector<128x12xf32>
    %8 = tpu.matmul %5, %7, %cst_6 {dimension_numbers = #tpu.dot_dimension_numbers<[1], [0], [0], [1], [0, 0, 1, 1], [], []>} : vector<128x24xbf16>, vector<24x12xbf16>, vector<128x12xf32> -> vector<128x12xf32>
    %9 = arith.addf %6, %8 : vector<128x12xf32>
    %c0_7 = arith.constant 0 : index
    %c0_8 = arith.constant 0 : index
    %10 = vector.load %arg6[%c0_7, %c0_8] : memref<128x12xf32, #tpu.memory_space<vmem>>, vector<128x12xf32>
    tpu.vector_store %arg6[%c0_7, %c0_8], %9 {strides = array<i32>} : memref<128x12xf32, #tpu.memory_space<vmem>>, vector<128x12xf32>,
    %c0_i32_9 = arith.constant 0 : i32
    %11 = arith.cmpi eq, %arg1, %c0_i32_9 : i32
    %12 = arith.extui %11 : i1 to i32
    %c0_i32_10 = arith.constant 0 : i32
    %13 = arith.cmpi ne, %12, %c0_i32_10 : i32
    scf.if %13 {
      %c0_11 = arith.constant 0 : index
      %c0_12 = arith.constant 0 : index
      %14 = vector.load %arg6[%c0_11, %c0_12] : memref<128x12xf32, #tpu.memory_space<vmem>>, vector<128x12xf32>
      %c0_13 = arith.constant 0 : index
      %c0_14 = arith.constant 0 : index
      %15 = vector.load %arg4[%c0_13, %c0_14] : memref<1x12xf32, #tpu.memory_space<vmem>>, vector<1x12xf32>
      %16 = vector.broadcast %15 : vector<1x12xf32> to vector<128x12xf32>
      %17 = arith.addf %14, %16 : vector<128x12xf32>
      %18 = arith.truncf %17 : vector<128x12xf32> to vector<128x12xbf16>
      %c0_15 = arith.constant 0 : index
      %c0_16 = arith.constant 0 : index
      %19 = vector.load %arg5[%c0_15, %c0_16] : memref<128x12xbf16, #tpu.memory_space<vmem>>, vector<128x12xbf16>
      tpu.vector_store %arg5[%c0_15, %c0_16], %18 {strides = array<i32>} : memref<128x12xbf16, #tpu.memory_space<vmem>>, vector<128x12xbf16>,
    } else {
    }
    return
  }
  func.func @transform_0(%arg0: i32, %arg1: i32) -> (i32, i32) {
    %c0_i32 = arith.constant 0 : i32
    return %arg0, %arg1 : i32, i32
  }
  func.func @transform_1(%arg0: i32, %arg1: i32) -> (i32, i32) {
    %c0_i32 = arith.constant 0 : i32
    %c0_i32_0 = arith.constant 0 : i32
    return %arg1, %c0_i32 : i32, i32
  }
  func.func @transform_2(%arg0: i32, %arg1: i32) -> (i32, i32) {
    %c0_i32 = arith.constant 0 : i32
    %c0_i32_0 = arith.constant 0 : i32
    %c0_i32_1 = arith.constant 0 : i32
    return %c0_i32, %c0_i32_0 : i32, i32
  }
  func.func @transform_3(%arg0: i32, %arg1: i32) -> (i32, i32) {
    %c0_i32 = arith.constant 0 : i32
    %c0_i32_0 = arith.constant 0 : i32
    return %arg0, %c0_i32 : i32, i32
  }
}

module attributes {stable_mosaic.version = 11 : i64} {
  func.func @_fused_matmul_kernel(%arg0: i32, %arg1: i32, %arg2: memref<32x12xbf16, #tpu.memory_space<vmem>>, %arg3: memref<12x6xbf16, #tpu.memory_space<vmem>>, %arg4: memref<1x6xf32, #tpu.memory_space<vmem>>, %arg5: memref<32x6xbf16, #tpu.memory_space<vmem>>, %arg6: memref<32x6xf32, #tpu.memory_space<vmem>>) attributes {dimension_semantics = [#tpu.dimension_semantics<parallel>, #tpu.dimension_semantics<arbitrary>], iteration_bounds = array<i64: 1, 1>, scalar_prefetch = 0 : i64, scratch_operands = 1 : i64, tpu.core_type = #tpu.core_type<tc>, window_params = [{transform_indices = @transform_0, window_bounds = array<i64: 32, 12>}, {transform_indices = @transform_1, window_bounds = array<i64: 12, 6>}, {pipeline_mode = #tpu.pipeline_mode<synchronous>, transform_indices = @transform_2, window_bounds = array<i64: 1, 6>}, {transform_indices = @transform_3, window_bounds = array<i64: 32, 6>}]} {
    %c0_i32 = arith.constant 0 : i32
    %0 = arith.cmpi eq, %arg1, %c0_i32 : i32
    %1 = arith.extui %0 : i1 to i32
    %c0_i32_0 = arith.constant 0 : i32
    %2 = arith.cmpi ne, %1, %c0_i32_0 : i32
    scf.if %2 {
      %cst_10 = arith.constant 0.000000e+00 : f32
      %12 = vector.broadcast %cst_10 : f32 to vector<32x6xf32>
      %c0_11 = arith.constant 0 : index
      %c0_12 = arith.constant 0 : index
      %13 = vector.load %arg6[%c0_11, %c0_12] : memref<32x6xf32, #tpu.memory_space<vmem>>, vector<32x6xf32>
      tpu.vector_store %arg6[%c0_11, %c0_12], %12 {strides = array<i32>} : memref<32x6xf32, #tpu.memory_space<vmem>>, vector<32x6xf32>,
    } else {
    }
    %c0 = arith.constant 0 : index
    %c0_1 = arith.constant 0 : index
    %3 = vector.load %arg2[%c0, %c0_1] : memref<32x12xbf16, #tpu.memory_space<vmem>>, vector<32x12xbf16>
    %c0_2 = arith.constant 0 : index
    %c0_3 = arith.constant 0 : index
    %4 = vector.load %arg6[%c0_2, %c0_3] : memref<32x6xf32, #tpu.memory_space<vmem>>, vector<32x6xf32>
    %c0_4 = arith.constant 0 : index
    %c0_5 = arith.constant 0 : index
    %5 = vector.load %arg3[%c0_4, %c0_5] : memref<12x6xbf16, #tpu.memory_space<vmem>>, vector<12x6xbf16>
    %cst = arith.constant dense<0.000000e+00> : vector<32x6xf32>
    %6 = tpu.matmul %3, %5, %cst {dimension_numbers = #tpu.dot_dimension_numbers<[1], [0], [0], [1], [0, 0, 1, 1], [], []>} : vector<32x12xbf16>, vector<12x6xbf16>, vector<32x6xf32> -> vector<32x6xf32>
    %7 = arith.addf %4, %6 : vector<32x6xf32>
    %c0_6 = arith.constant 0 : index
    %c0_7 = arith.constant 0 : index
    %8 = vector.load %arg6[%c0_6, %c0_7] : memref<32x6xf32, #tpu.memory_space<vmem>>, vector<32x6xf32>
    tpu.vector_store %arg6[%c0_6, %c0_7], %7 {strides = array<i32>} : memref<32x6xf32, #tpu.memory_space<vmem>>, vector<32x6xf32>,
    %c0_i32_8 = arith.constant 0 : i32
    %9 = arith.cmpi eq, %arg1, %c0_i32_8 : i32
    %10 = arith.extui %9 : i1 to i32
    %c0_i32_9 = arith.constant 0 : i32
    %11 = arith.cmpi ne, %10, %c0_i32_9 : i32
    scf.if %11 {
      %c0_10 = arith.constant 0 : index
      %c0_11 = arith.constant 0 : index
      %12 = vector.load %arg6[%c0_10, %c0_11] : memref<32x6xf32, #tpu.memory_space<vmem>>, vector<32x6xf32>
      %c0_12 = arith.constant 0 : index
      %c0_13 = arith.constant 0 : index
      %13 = vector.load %arg4[%c0_12, %c0_13] : memref<1x6xf32, #tpu.memory_space<vmem>>, vector<1x6xf32>
      %14 = vector.broadcast %13 : vector<1x6xf32> to vector<32x6xf32>
      %15 = arith.addf %12, %14 : vector<32x6xf32>
      %cst_14 = arith.constant 0.000000e+00 : f32
      %16 = vector.broadcast %cst_14 : f32 to vector<32x6xf32>
      %17 = arith.maximumf %15, %16 : vector<32x6xf32>
      %18 = arith.truncf %17 : vector<32x6xf32> to vector<32x6xbf16>
      %c0_15 = arith.constant 0 : index
      %c0_16 = arith.constant 0 : index
      %19 = vector.load %arg5[%c0_15, %c0_16] : memref<32x6xbf16, #tpu.memory_space<vmem>>, vector<32x6xbf16>
      tpu.vector_store %arg5[%c0_15, %c0_16], %18 {strides = array<i32>} : memref<32x6xbf16, #tpu.memory_space<vmem>>, vector<32x6xbf16>,
    } else {
    }
    return
  }
  func.func @transform_0(%arg0: i32, %arg1: i32) -> (i32, i32) {
    %c0_i32 = arith.constant 0 : i32
    return %arg0, %arg1 : i32, i32
  }
  func.func @transform_1(%arg0: i32, %arg1: i32) -> (i32, i32) {
    %c0_i32 = arith.constant 0 : i32
    %c0_i32_0 = arith.constant 0 : i32
    return %arg1, %c0_i32 : i32, i32
  }
  func.func @transform_2(%arg0: i32, %arg1: i32) -> (i32, i32) {
    %c0_i32 = arith.constant 0 : i32
    %c0_i32_0 = arith.constant 0 : i32
    %c0_i32_1 = arith.constant 0 : i32
    return %c0_i32, %c0_i32_0 : i32, i32
  }
  func.func @transform_3(%arg0: i32, %arg1: i32) -> (i32, i32) {
    %c0_i32 = arith.constant 0 : i32
    %c0_i32_0 = arith.constant 0 : i32
    return %arg0, %c0_i32 : i32, i32
  }
}

module attributes {stable_mosaic.version = 11 : i64} {
  func.func @_fused_matmul_kernel(%arg0: i32, %arg1: i32, %arg2: memref<32x18xbf16, #tpu.memory_space<vmem>>, %arg3: memref<18x2xbf16, #tpu.memory_space<vmem>>, %arg4: memref<1x2xf32, #tpu.memory_space<vmem>>, %arg5: memref<32x2xbf16, #tpu.memory_space<vmem>>, %arg6: memref<32x2xf32, #tpu.memory_space<vmem>>) attributes {dimension_semantics = [#tpu.dimension_semantics<parallel>, #tpu.dimension_semantics<arbitrary>], iteration_bounds = array<i64: 1, 1>, scalar_prefetch = 0 : i64, scratch_operands = 1 : i64, tpu.core_type = #tpu.core_type<tc>, window_params = [{transform_indices = @transform_0, window_bounds = array<i64: 32, 18>}, {transform_indices = @transform_1, window_bounds = array<i64: 18, 2>}, {pipeline_mode = #tpu.pipeline_mode<synchronous>, transform_indices = @transform_2, window_bounds = array<i64: 1, 2>}, {transform_indices = @transform_3, window_bounds = array<i64: 32, 2>}]} {
    %c0_i32 = arith.constant 0 : i32
    %0 = arith.cmpi eq, %arg1, %c0_i32 : i32
    %1 = arith.extui %0 : i1 to i32
    %c0_i32_0 = arith.constant 0 : i32
    %2 = arith.cmpi ne, %1, %c0_i32_0 : i32
    scf.if %2 {
      %cst_10 = arith.constant 0.000000e+00 : f32
      %12 = vector.broadcast %cst_10 : f32 to vector<32x2xf32>
      %c0_11 = arith.constant 0 : index
      %c0_12 = arith.constant 0 : index
      %13 = vector.load %arg6[%c0_11, %c0_12] : memref<32x2xf32, #tpu.memory_space<vmem>>, vector<32x2xf32>
      tpu.vector_store %arg6[%c0_11, %c0_12], %12 {strides = array<i32>} : memref<32x2xf32, #tpu.memory_space<vmem>>, vector<32x2xf32>,
    } else {
    }
    %c0 = arith.constant 0 : index
    %c0_1 = arith.constant 0 : index
    %3 = vector.load %arg2[%c0, %c0_1] : memref<32x18xbf16, #tpu.memory_space<vmem>>, vector<32x18xbf16>
    %c0_2 = arith.constant 0 : index
    %c0_3 = arith.constant 0 : index
    %4 = vector.load %arg6[%c0_2, %c0_3] : memref<32x2xf32, #tpu.memory_space<vmem>>, vector<32x2xf32>
    %c0_4 = arith.constant 0 : index
    %c0_5 = arith.constant 0 : index
    %5 = vector.load %arg3[%c0_4, %c0_5] : memref<18x2xbf16, #tpu.memory_space<vmem>>, vector<18x2xbf16>
    %cst = arith.constant dense<0.000000e+00> : vector<32x2xf32>
    %6 = tpu.matmul %3, %5, %cst {dimension_numbers = #tpu.dot_dimension_numbers<[1], [0], [0], [1], [0, 0, 1, 1], [], []>} : vector<32x18xbf16>, vector<18x2xbf16>, vector<32x2xf32> -> vector<32x2xf32>
    %7 = arith.addf %4, %6 : vector<32x2xf32>
    %c0_6 = arith.constant 0 : index
    %c0_7 = arith.constant 0 : index
    %8 = vector.load %arg6[%c0_6, %c0_7] : memref<32x2xf32, #tpu.memory_space<vmem>>, vector<32x2xf32>
    tpu.vector_store %arg6[%c0_6, %c0_7], %7 {strides = array<i32>} : memref<32x2xf32, #tpu.memory_space<vmem>>, vector<32x2xf32>,
    %c0_i32_8 = arith.constant 0 : i32
    %9 = arith.cmpi eq, %arg1, %c0_i32_8 : i32
    %10 = arith.extui %9 : i1 to i32
    %c0_i32_9 = arith.constant 0 : i32
    %11 = arith.cmpi ne, %10, %c0_i32_9 : i32
    scf.if %11 {
      %c0_10 = arith.constant 0 : index
      %c0_11 = arith.constant 0 : index
      %12 = vector.load %arg6[%c0_10, %c0_11] : memref<32x2xf32, #tpu.memory_space<vmem>>, vector<32x2xf32>
      %c0_12 = arith.constant 0 : index
      %c0_13 = arith.constant 0 : index
      %13 = vector.load %arg4[%c0_12, %c0_13] : memref<1x2xf32, #tpu.memory_space<vmem>>, vector<1x2xf32>
      %14 = vector.broadcast %13 : vector<1x2xf32> to vector<32x2xf32>
      %15 = arith.addf %12, %14 : vector<32x2xf32>
      %cst_14 = arith.constant 0.000000e+00 : f32
      %16 = vector.broadcast %cst_14 : f32 to vector<32x2xf32>
      %17 = arith.maximumf %15, %16 : vector<32x2xf32>
      %18 = arith.truncf %17 : vector<32x2xf32> to vector<32x2xbf16>
      %c0_15 = arith.constant 0 : index
      %c0_16 = arith.constant 0 : index
      %19 = vector.load %arg5[%c0_15, %c0_16] : memref<32x2xbf16, #tpu.memory_space<vmem>>, vector<32x2xbf16>
      tpu.vector_store %arg5[%c0_15, %c0_16], %18 {strides = array<i32>} : memref<32x2xbf16, #tpu.memory_space<vmem>>, vector<32x2xbf16>,
    } else {
    }
    return
  }
  func.func @transform_0(%arg0: i32, %arg1: i32) -> (i32, i32) {
    %c0_i32 = arith.constant 0 : i32
    return %arg0, %arg1 : i32, i32
  }
  func.func @transform_1(%arg0: i32, %arg1: i32) -> (i32, i32) {
    %c0_i32 = arith.constant 0 : i32
    %c0_i32_0 = arith.constant 0 : i32
    return %arg1, %c0_i32 : i32, i32
  }
  func.func @transform_2(%arg0: i32, %arg1: i32) -> (i32, i32) {
    %c0_i32 = arith.constant 0 : i32
    %c0_i32_0 = arith.constant 0 : i32
    %c0_i32_1 = arith.constant 0 : i32
    return %c0_i32, %c0_i32_0 : i32, i32
  }
  func.func @transform_3(%arg0: i32, %arg1: i32) -> (i32, i32) {
    %c0_i32 = arith.constant 0 : i32
    %c0_i32_0 = arith.constant 0 : i32
    return %arg0, %c0_i32 : i32, i32
  }
}

module attributes {stable_mosaic.version = 11 : i64} {
  func.func @_pool_s1_kernel(%arg0: i32, %arg1: memref<1x6x6x12xbf16, #tpu.memory_space<vmem>>, %arg2: memref<1x4x4x12xbf16, #tpu.memory_space<vmem>>) attributes {dimension_semantics = [#tpu.dimension_semantics<parallel>], iteration_bounds = array<i64: 2>, scalar_prefetch = 0 : i64, scratch_operands = 0 : i64, tpu.core_type = #tpu.core_type<tc>, window_params = [{transform_indices = @transform_0, window_bounds = array<i64: 1, 6, 6, 12>}, {transform_indices = @transform_1, window_bounds = array<i64: 1, 4, 4, 12>}]} {
    %c0 = arith.constant 0 : index
    %c0_0 = arith.constant 0 : index
    %c0_1 = arith.constant 0 : index
    %c0_2 = arith.constant 0 : index
    %0 = vector.load %arg1[%c0, %c0_0, %c0_1, %c0_2] : memref<1x6x6x12xbf16, #tpu.memory_space<vmem>>, vector<1x4x4x12xbf16>
    %c0_3 = arith.constant 0 : index
    %c0_4 = arith.constant 0 : index
    %c1 = arith.constant 1 : index
    %c0_5 = arith.constant 0 : index
    %1 = vector.load %arg1[%c0_3, %c0_4, %c1, %c0_5] : memref<1x6x6x12xbf16, #tpu.memory_space<vmem>>, vector<1x4x4x12xbf16>
    %2 = arith.maximumf %0, %1 : vector<1x4x4x12xbf16>
    %c0_6 = arith.constant 0 : index
    %c0_7 = arith.constant 0 : index
    %c2 = arith.constant 2 : index
    %c0_8 = arith.constant 0 : index
    %3 = vector.load %arg1[%c0_6, %c0_7, %c2, %c0_8] : memref<1x6x6x12xbf16, #tpu.memory_space<vmem>>, vector<1x4x4x12xbf16>
    %4 = arith.maximumf %2, %3 : vector<1x4x4x12xbf16>
    %c0_9 = arith.constant 0 : index
    %c1_10 = arith.constant 1 : index
    %c0_11 = arith.constant 0 : index
    %c0_12 = arith.constant 0 : index
    %5 = vector.load %arg1[%c0_9, %c1_10, %c0_11, %c0_12] : memref<1x6x6x12xbf16, #tpu.memory_space<vmem>>, vector<1x4x4x12xbf16>
    %6 = arith.maximumf %4, %5 : vector<1x4x4x12xbf16>
    %c0_13 = arith.constant 0 : index
    %c1_14 = arith.constant 1 : index
    %c1_15 = arith.constant 1 : index
    %c0_16 = arith.constant 0 : index
    %7 = vector.load %arg1[%c0_13, %c1_14, %c1_15, %c0_16] : memref<1x6x6x12xbf16, #tpu.memory_space<vmem>>, vector<1x4x4x12xbf16>
    %8 = arith.maximumf %6, %7 : vector<1x4x4x12xbf16>
    %c0_17 = arith.constant 0 : index
    %c1_18 = arith.constant 1 : index
    %c2_19 = arith.constant 2 : index
    %c0_20 = arith.constant 0 : index
    %9 = vector.load %arg1[%c0_17, %c1_18, %c2_19, %c0_20] : memref<1x6x6x12xbf16, #tpu.memory_space<vmem>>, vector<1x4x4x12xbf16>
    %10 = arith.maximumf %8, %9 : vector<1x4x4x12xbf16>
    %c0_21 = arith.constant 0 : index
    %c2_22 = arith.constant 2 : index
    %c0_23 = arith.constant 0 : index
    %c0_24 = arith.constant 0 : index
    %11 = vector.load %arg1[%c0_21, %c2_22, %c0_23, %c0_24] : memref<1x6x6x12xbf16, #tpu.memory_space<vmem>>, vector<1x4x4x12xbf16>
    %12 = arith.maximumf %10, %11 : vector<1x4x4x12xbf16>
    %c0_25 = arith.constant 0 : index
    %c2_26 = arith.constant 2 : index
    %c1_27 = arith.constant 1 : index
    %c0_28 = arith.constant 0 : index
    %13 = vector.load %arg1[%c0_25, %c2_26, %c1_27, %c0_28] : memref<1x6x6x12xbf16, #tpu.memory_space<vmem>>, vector<1x4x4x12xbf16>
    %14 = arith.maximumf %12, %13 : vector<1x4x4x12xbf16>
    %c0_29 = arith.constant 0 : index
    %c2_30 = arith.constant 2 : index
    %c2_31 = arith.constant 2 : index
    %c0_32 = arith.constant 0 : index
    %15 = vector.load %arg1[%c0_29, %c2_30, %c2_31, %c0_32] : memref<1x6x6x12xbf16, #tpu.memory_space<vmem>>, vector<1x4x4x12xbf16>
    %16 = arith.maximumf %14, %15 : vector<1x4x4x12xbf16>
    %c0_33 = arith.constant 0 : index
    %c0_34 = arith.constant 0 : index
    %c0_35 = arith.constant 0 : index
    %c0_36 = arith.constant 0 : index
    %17 = vector.load %arg2[%c0_33, %c0_34, %c0_35, %c0_36] : memref<1x4x4x12xbf16, #tpu.memory_space<vmem>>, vector<1x4x4x12xbf16>
    tpu.vector_store %arg2[%c0_33, %c0_34, %c0_35, %c0_36], %16 {strides = array<i32>} : memref<1x4x4x12xbf16, #tpu.memory_space<vmem>>, vector<1x4x4x12xbf16>,
    return
  }
  func.func @transform_0(%arg0: i32) -> (i32, i32, i32, i32) {
    %c0_i32 = arith.constant 0 : i32
    %c0_i32_0 = arith.constant 0 : i32
    %c0_i32_1 = arith.constant 0 : i32
    %c0_i32_2 = arith.constant 0 : i32
    return %arg0, %c0_i32, %c0_i32_0, %c0_i32_1 : i32, i32, i32, i32
  }
  func.func @transform_1(%arg0: i32) -> (i32, i32, i32, i32) {
    %c0_i32 = arith.constant 0 : i32
    %c0_i32_0 = arith.constant 0 : i32
    %c0_i32_1 = arith.constant 0 : i32
    %c0_i32_2 = arith.constant 0 : i32
    return %arg0, %c0_i32, %c0_i32_0, %c0_i32_1 : i32, i32, i32, i32
  }
}

module attributes {stable_mosaic.version = 11 : i64} {
  func.func @_fused_matmul_kernel(%arg0: i32, %arg1: i32, %arg2: memref<32x12xbf16, #tpu.memory_space<vmem>>, %arg3: memref<12x2xbf16, #tpu.memory_space<vmem>>, %arg4: memref<1x2xf32, #tpu.memory_space<vmem>>, %arg5: memref<32x2xbf16, #tpu.memory_space<vmem>>, %arg6: memref<32x2xf32, #tpu.memory_space<vmem>>) attributes {dimension_semantics = [#tpu.dimension_semantics<parallel>, #tpu.dimension_semantics<arbitrary>], iteration_bounds = array<i64: 1, 1>, scalar_prefetch = 0 : i64, scratch_operands = 1 : i64, tpu.core_type = #tpu.core_type<tc>, window_params = [{transform_indices = @transform_0, window_bounds = array<i64: 32, 12>}, {transform_indices = @transform_1, window_bounds = array<i64: 12, 2>}, {pipeline_mode = #tpu.pipeline_mode<synchronous>, transform_indices = @transform_2, window_bounds = array<i64: 1, 2>}, {transform_indices = @transform_3, window_bounds = array<i64: 32, 2>}]} {
    %c0_i32 = arith.constant 0 : i32
    %0 = arith.cmpi eq, %arg1, %c0_i32 : i32
    %1 = arith.extui %0 : i1 to i32
    %c0_i32_0 = arith.constant 0 : i32
    %2 = arith.cmpi ne, %1, %c0_i32_0 : i32
    scf.if %2 {
      %cst_10 = arith.constant 0.000000e+00 : f32
      %12 = vector.broadcast %cst_10 : f32 to vector<32x2xf32>
      %c0_11 = arith.constant 0 : index
      %c0_12 = arith.constant 0 : index
      %13 = vector.load %arg6[%c0_11, %c0_12] : memref<32x2xf32, #tpu.memory_space<vmem>>, vector<32x2xf32>
      tpu.vector_store %arg6[%c0_11, %c0_12], %12 {strides = array<i32>} : memref<32x2xf32, #tpu.memory_space<vmem>>, vector<32x2xf32>,
    } else {
    }
    %c0 = arith.constant 0 : index
    %c0_1 = arith.constant 0 : index
    %3 = vector.load %arg2[%c0, %c0_1] : memref<32x12xbf16, #tpu.memory_space<vmem>>, vector<32x12xbf16>
    %c0_2 = arith.constant 0 : index
    %c0_3 = arith.constant 0 : index
    %4 = vector.load %arg6[%c0_2, %c0_3] : memref<32x2xf32, #tpu.memory_space<vmem>>, vector<32x2xf32>
    %c0_4 = arith.constant 0 : index
    %c0_5 = arith.constant 0 : index
    %5 = vector.load %arg3[%c0_4, %c0_5] : memref<12x2xbf16, #tpu.memory_space<vmem>>, vector<12x2xbf16>
    %cst = arith.constant dense<0.000000e+00> : vector<32x2xf32>
    %6 = tpu.matmul %3, %5, %cst {dimension_numbers = #tpu.dot_dimension_numbers<[1], [0], [0], [1], [0, 0, 1, 1], [], []>} : vector<32x12xbf16>, vector<12x2xbf16>, vector<32x2xf32> -> vector<32x2xf32>
    %7 = arith.addf %4, %6 : vector<32x2xf32>
    %c0_6 = arith.constant 0 : index
    %c0_7 = arith.constant 0 : index
    %8 = vector.load %arg6[%c0_6, %c0_7] : memref<32x2xf32, #tpu.memory_space<vmem>>, vector<32x2xf32>
    tpu.vector_store %arg6[%c0_6, %c0_7], %7 {strides = array<i32>} : memref<32x2xf32, #tpu.memory_space<vmem>>, vector<32x2xf32>,
    %c0_i32_8 = arith.constant 0 : i32
    %9 = arith.cmpi eq, %arg1, %c0_i32_8 : i32
    %10 = arith.extui %9 : i1 to i32
    %c0_i32_9 = arith.constant 0 : i32
    %11 = arith.cmpi ne, %10, %c0_i32_9 : i32
    scf.if %11 {
      %c0_10 = arith.constant 0 : index
      %c0_11 = arith.constant 0 : index
      %12 = vector.load %arg6[%c0_10, %c0_11] : memref<32x2xf32, #tpu.memory_space<vmem>>, vector<32x2xf32>
      %c0_12 = arith.constant 0 : index
      %c0_13 = arith.constant 0 : index
      %13 = vector.load %arg4[%c0_12, %c0_13] : memref<1x2xf32, #tpu.memory_space<vmem>>, vector<1x2xf32>
      %14 = vector.broadcast %13 : vector<1x2xf32> to vector<32x2xf32>
      %15 = arith.addf %12, %14 : vector<32x2xf32>
      %cst_14 = arith.constant 0.000000e+00 : f32
      %16 = vector.broadcast %cst_14 : f32 to vector<32x2xf32>
      %17 = arith.maximumf %15, %16 : vector<32x2xf32>
      %18 = arith.truncf %17 : vector<32x2xf32> to vector<32x2xbf16>
      %c0_15 = arith.constant 0 : index
      %c0_16 = arith.constant 0 : index
      %19 = vector.load %arg5[%c0_15, %c0_16] : memref<32x2xbf16, #tpu.memory_space<vmem>>, vector<32x2xbf16>
      tpu.vector_store %arg5[%c0_15, %c0_16], %18 {strides = array<i32>} : memref<32x2xbf16, #tpu.memory_space<vmem>>, vector<32x2xbf16>,
    } else {
    }
    return
  }
  func.func @transform_0(%arg0: i32, %arg1: i32) -> (i32, i32) {
    %c0_i32 = arith.constant 0 : i32
    return %arg0, %arg1 : i32, i32
  }
  func.func @transform_1(%arg0: i32, %arg1: i32) -> (i32, i32) {
    %c0_i32 = arith.constant 0 : i32
    %c0_i32_0 = arith.constant 0 : i32
    return %arg1, %c0_i32 : i32, i32
  }
  func.func @transform_2(%arg0: i32, %arg1: i32) -> (i32, i32) {
    %c0_i32 = arith.constant 0 : i32
    %c0_i32_0 = arith.constant 0 : i32
    %c0_i32_1 = arith.constant 0 : i32
    return %c0_i32, %c0_i32_0 : i32, i32
  }
  func.func @transform_3(%arg0: i32, %arg1: i32) -> (i32, i32) {
    %c0_i32 = arith.constant 0 : i32
    %c0_i32_0 = arith.constant 0 : i32
    return %arg0, %c0_i32 : i32, i32
  }
}

module attributes {stable_mosaic.version = 11 : i64} {
  func.func @_pool_s1_kernel(%arg0: i32, %arg1: memref<1x6x6x20xbf16, #tpu.memory_space<vmem>>, %arg2: memref<1x4x4x20xbf16, #tpu.memory_space<vmem>>) attributes {dimension_semantics = [#tpu.dimension_semantics<parallel>], iteration_bounds = array<i64: 2>, scalar_prefetch = 0 : i64, scratch_operands = 0 : i64, tpu.core_type = #tpu.core_type<tc>, window_params = [{transform_indices = @transform_0, window_bounds = array<i64: 1, 6, 6, 20>}, {transform_indices = @transform_1, window_bounds = array<i64: 1, 4, 4, 20>}]} {
    %c0 = arith.constant 0 : index
    %c0_0 = arith.constant 0 : index
    %c0_1 = arith.constant 0 : index
    %c0_2 = arith.constant 0 : index
    %0 = vector.load %arg1[%c0, %c0_0, %c0_1, %c0_2] : memref<1x6x6x20xbf16, #tpu.memory_space<vmem>>, vector<1x4x4x20xbf16>
    %c0_3 = arith.constant 0 : index
    %c0_4 = arith.constant 0 : index
    %c1 = arith.constant 1 : index
    %c0_5 = arith.constant 0 : index
    %1 = vector.load %arg1[%c0_3, %c0_4, %c1, %c0_5] : memref<1x6x6x20xbf16, #tpu.memory_space<vmem>>, vector<1x4x4x20xbf16>
    %2 = arith.maximumf %0, %1 : vector<1x4x4x20xbf16>
    %c0_6 = arith.constant 0 : index
    %c0_7 = arith.constant 0 : index
    %c2 = arith.constant 2 : index
    %c0_8 = arith.constant 0 : index
    %3 = vector.load %arg1[%c0_6, %c0_7, %c2, %c0_8] : memref<1x6x6x20xbf16, #tpu.memory_space<vmem>>, vector<1x4x4x20xbf16>
    %4 = arith.maximumf %2, %3 : vector<1x4x4x20xbf16>
    %c0_9 = arith.constant 0 : index
    %c1_10 = arith.constant 1 : index
    %c0_11 = arith.constant 0 : index
    %c0_12 = arith.constant 0 : index
    %5 = vector.load %arg1[%c0_9, %c1_10, %c0_11, %c0_12] : memref<1x6x6x20xbf16, #tpu.memory_space<vmem>>, vector<1x4x4x20xbf16>
    %6 = arith.maximumf %4, %5 : vector<1x4x4x20xbf16>
    %c0_13 = arith.constant 0 : index
    %c1_14 = arith.constant 1 : index
    %c1_15 = arith.constant 1 : index
    %c0_16 = arith.constant 0 : index
    %7 = vector.load %arg1[%c0_13, %c1_14, %c1_15, %c0_16] : memref<1x6x6x20xbf16, #tpu.memory_space<vmem>>, vector<1x4x4x20xbf16>
    %8 = arith.maximumf %6, %7 : vector<1x4x4x20xbf16>
    %c0_17 = arith.constant 0 : index
    %c1_18 = arith.constant 1 : index
    %c2_19 = arith.constant 2 : index
    %c0_20 = arith.constant 0 : index
    %9 = vector.load %arg1[%c0_17, %c1_18, %c2_19, %c0_20] : memref<1x6x6x20xbf16, #tpu.memory_space<vmem>>, vector<1x4x4x20xbf16>
    %10 = arith.maximumf %8, %9 : vector<1x4x4x20xbf16>
    %c0_21 = arith.constant 0 : index
    %c2_22 = arith.constant 2 : index
    %c0_23 = arith.constant 0 : index
    %c0_24 = arith.constant 0 : index
    %11 = vector.load %arg1[%c0_21, %c2_22, %c0_23, %c0_24] : memref<1x6x6x20xbf16, #tpu.memory_space<vmem>>, vector<1x4x4x20xbf16>
    %12 = arith.maximumf %10, %11 : vector<1x4x4x20xbf16>
    %c0_25 = arith.constant 0 : index
    %c2_26 = arith.constant 2 : index
    %c1_27 = arith.constant 1 : index
    %c0_28 = arith.constant 0 : index
    %13 = vector.load %arg1[%c0_25, %c2_26, %c1_27, %c0_28] : memref<1x6x6x20xbf16, #tpu.memory_space<vmem>>, vector<1x4x4x20xbf16>
    %14 = arith.maximumf %12, %13 : vector<1x4x4x20xbf16>
    %c0_29 = arith.constant 0 : index
    %c2_30 = arith.constant 2 : index
    %c2_31 = arith.constant 2 : index
    %c0_32 = arith.constant 0 : index
    %15 = vector.load %arg1[%c0_29, %c2_30, %c2_31, %c0_32] : memref<1x6x6x20xbf16, #tpu.memory_space<vmem>>, vector<1x4x4x20xbf16>
    %16 = arith.maximumf %14, %15 : vector<1x4x4x20xbf16>
    %c0_33 = arith.constant 0 : index
    %c0_34 = arith.constant 0 : index
    %c0_35 = arith.constant 0 : index
    %c0_36 = arith.constant 0 : index
    %17 = vector.load %arg2[%c0_33, %c0_34, %c0_35, %c0_36] : memref<1x4x4x20xbf16, #tpu.memory_space<vmem>>, vector<1x4x4x20xbf16>
    tpu.vector_store %arg2[%c0_33, %c0_34, %c0_35, %c0_36], %16 {strides = array<i32>} : memref<1x4x4x20xbf16, #tpu.memory_space<vmem>>, vector<1x4x4x20xbf16>,
    return
  }
  func.func @transform_0(%arg0: i32) -> (i32, i32, i32, i32) {
    %c0_i32 = arith.constant 0 : i32
    %c0_i32_0 = arith.constant 0 : i32
    %c0_i32_1 = arith.constant 0 : i32
    %c0_i32_2 = arith.constant 0 : i32
    return %arg0, %c0_i32, %c0_i32_0, %c0_i32_1 : i32, i32, i32, i32
  }
  func.func @transform_1(%arg0: i32) -> (i32, i32, i32, i32) {
    %c0_i32 = arith.constant 0 : i32
    %c0_i32_0 = arith.constant 0 : i32
    %c0_i32_1 = arith.constant 0 : i32
    %c0_i32_2 = arith.constant 0 : i32
    return %arg0, %c0_i32, %c0_i32_0, %c0_i32_1 : i32, i32, i32, i32
  }
}

module attributes {stable_mosaic.version = 11 : i64} {
  func.func @_fused_matmul_kernel(%arg0: i32, %arg1: i32, %arg2: memref<32x20xbf16, #tpu.memory_space<vmem>>, %arg3: memref<20x2xbf16, #tpu.memory_space<vmem>>, %arg4: memref<1x2xf32, #tpu.memory_space<vmem>>, %arg5: memref<32x2xbf16, #tpu.memory_space<vmem>>, %arg6: memref<32x2xf32, #tpu.memory_space<vmem>>) attributes {dimension_semantics = [#tpu.dimension_semantics<parallel>, #tpu.dimension_semantics<arbitrary>], iteration_bounds = array<i64: 1, 1>, scalar_prefetch = 0 : i64, scratch_operands = 1 : i64, tpu.core_type = #tpu.core_type<tc>, window_params = [{transform_indices = @transform_0, window_bounds = array<i64: 32, 20>}, {transform_indices = @transform_1, window_bounds = array<i64: 20, 2>}, {pipeline_mode = #tpu.pipeline_mode<synchronous>, transform_indices = @transform_2, window_bounds = array<i64: 1, 2>}, {transform_indices = @transform_3, window_bounds = array<i64: 32, 2>}]} {
    %c0_i32 = arith.constant 0 : i32
    %0 = arith.cmpi eq, %arg1, %c0_i32 : i32
    %1 = arith.extui %0 : i1 to i32
    %c0_i32_0 = arith.constant 0 : i32
    %2 = arith.cmpi ne, %1, %c0_i32_0 : i32
    scf.if %2 {
      %cst_10 = arith.constant 0.000000e+00 : f32
      %12 = vector.broadcast %cst_10 : f32 to vector<32x2xf32>
      %c0_11 = arith.constant 0 : index
      %c0_12 = arith.constant 0 : index
      %13 = vector.load %arg6[%c0_11, %c0_12] : memref<32x2xf32, #tpu.memory_space<vmem>>, vector<32x2xf32>
      tpu.vector_store %arg6[%c0_11, %c0_12], %12 {strides = array<i32>} : memref<32x2xf32, #tpu.memory_space<vmem>>, vector<32x2xf32>,
    } else {
    }
    %c0 = arith.constant 0 : index
    %c0_1 = arith.constant 0 : index
    %3 = vector.load %arg2[%c0, %c0_1] : memref<32x20xbf16, #tpu.memory_space<vmem>>, vector<32x20xbf16>
    %c0_2 = arith.constant 0 : index
    %c0_3 = arith.constant 0 : index
    %4 = vector.load %arg6[%c0_2, %c0_3] : memref<32x2xf32, #tpu.memory_space<vmem>>, vector<32x2xf32>
    %c0_4 = arith.constant 0 : index
    %c0_5 = arith.constant 0 : index
    %5 = vector.load %arg3[%c0_4, %c0_5] : memref<20x2xbf16, #tpu.memory_space<vmem>>, vector<20x2xbf16>
    %cst = arith.constant dense<0.000000e+00> : vector<32x2xf32>
    %6 = tpu.matmul %3, %5, %cst {dimension_numbers = #tpu.dot_dimension_numbers<[1], [0], [0], [1], [0, 0, 1, 1], [], []>} : vector<32x20xbf16>, vector<20x2xbf16>, vector<32x2xf32> -> vector<32x2xf32>
    %7 = arith.addf %4, %6 : vector<32x2xf32>
    %c0_6 = arith.constant 0 : index
    %c0_7 = arith.constant 0 : index
    %8 = vector.load %arg6[%c0_6, %c0_7] : memref<32x2xf32, #tpu.memory_space<vmem>>, vector<32x2xf32>
    tpu.vector_store %arg6[%c0_6, %c0_7], %7 {strides = array<i32>} : memref<32x2xf32, #tpu.memory_space<vmem>>, vector<32x2xf32>,
    %c0_i32_8 = arith.constant 0 : i32
    %9 = arith.cmpi eq, %arg1, %c0_i32_8 : i32
    %10 = arith.extui %9 : i1 to i32
    %c0_i32_9 = arith.constant 0 : i32
    %11 = arith.cmpi ne, %10, %c0_i32_9 : i32
    scf.if %11 {
      %c0_10 = arith.constant 0 : index
      %c0_11 = arith.constant 0 : index
      %12 = vector.load %arg6[%c0_10, %c0_11] : memref<32x2xf32, #tpu.memory_space<vmem>>, vector<32x2xf32>
      %c0_12 = arith.constant 0 : index
      %c0_13 = arith.constant 0 : index
      %13 = vector.load %arg4[%c0_12, %c0_13] : memref<1x2xf32, #tpu.memory_space<vmem>>, vector<1x2xf32>
      %14 = vector.broadcast %13 : vector<1x2xf32> to vector<32x2xf32>
      %15 = arith.addf %12, %14 : vector<32x2xf32>
      %cst_14 = arith.constant 0.000000e+00 : f32
      %16 = vector.broadcast %cst_14 : f32 to vector<32x2xf32>
      %17 = arith.maximumf %15, %16 : vector<32x2xf32>
      %18 = arith.truncf %17 : vector<32x2xf32> to vector<32x2xbf16>
      %c0_15 = arith.constant 0 : index
      %c0_16 = arith.constant 0 : index
      %19 = vector.load %arg5[%c0_15, %c0_16] : memref<32x2xbf16, #tpu.memory_space<vmem>>, vector<32x2xbf16>
      tpu.vector_store %arg5[%c0_15, %c0_16], %18 {strides = array<i32>} : memref<32x2xbf16, #tpu.memory_space<vmem>>, vector<32x2xbf16>,
    } else {
    }
    return
  }
  func.func @transform_0(%arg0: i32, %arg1: i32) -> (i32, i32) {
    %c0_i32 = arith.constant 0 : i32
    return %arg0, %arg1 : i32, i32
  }
  func.func @transform_1(%arg0: i32, %arg1: i32) -> (i32, i32) {
    %c0_i32 = arith.constant 0 : i32
    %c0_i32_0 = arith.constant 0 : i32
    return %arg1, %c0_i32 : i32, i32
  }
  func.func @transform_2(%arg0: i32, %arg1: i32) -> (i32, i32) {
    %c0_i32 = arith.constant 0 : i32
    %c0_i32_0 = arith.constant 0 : i32
    %c0_i32_1 = arith.constant 0 : i32
    return %c0_i32, %c0_i32_0 : i32, i32
  }
  func.func @transform_3(%arg0: i32, %arg1: i32) -> (i32, i32) {
    %c0_i32 = arith.constant 0 : i32
    %c0_i32_0 = arith.constant 0 : i32
    return %arg0, %c0_i32 : i32, i32
  }
}

module attributes {stable_mosaic.version = 11 : i64} {
  func.func @_fused_matmul_kernel(%arg0: i32, %arg1: i32, %arg2: memref<32x20xbf16, #tpu.memory_space<vmem>>, %arg3: memref<20x6xbf16, #tpu.memory_space<vmem>>, %arg4: memref<1x6xf32, #tpu.memory_space<vmem>>, %arg5: memref<32x6xbf16, #tpu.memory_space<vmem>>, %arg6: memref<32x6xf32, #tpu.memory_space<vmem>>) attributes {dimension_semantics = [#tpu.dimension_semantics<parallel>, #tpu.dimension_semantics<arbitrary>], iteration_bounds = array<i64: 1, 1>, scalar_prefetch = 0 : i64, scratch_operands = 1 : i64, tpu.core_type = #tpu.core_type<tc>, window_params = [{transform_indices = @transform_0, window_bounds = array<i64: 32, 20>}, {transform_indices = @transform_1, window_bounds = array<i64: 20, 6>}, {pipeline_mode = #tpu.pipeline_mode<synchronous>, transform_indices = @transform_2, window_bounds = array<i64: 1, 6>}, {transform_indices = @transform_3, window_bounds = array<i64: 32, 6>}]} {
    %c0_i32 = arith.constant 0 : i32
    %0 = arith.cmpi eq, %arg1, %c0_i32 : i32
    %1 = arith.extui %0 : i1 to i32
    %c0_i32_0 = arith.constant 0 : i32
    %2 = arith.cmpi ne, %1, %c0_i32_0 : i32
    scf.if %2 {
      %cst_10 = arith.constant 0.000000e+00 : f32
      %12 = vector.broadcast %cst_10 : f32 to vector<32x6xf32>
      %c0_11 = arith.constant 0 : index
      %c0_12 = arith.constant 0 : index
      %13 = vector.load %arg6[%c0_11, %c0_12] : memref<32x6xf32, #tpu.memory_space<vmem>>, vector<32x6xf32>
      tpu.vector_store %arg6[%c0_11, %c0_12], %12 {strides = array<i32>} : memref<32x6xf32, #tpu.memory_space<vmem>>, vector<32x6xf32>,
    } else {
    }
    %c0 = arith.constant 0 : index
    %c0_1 = arith.constant 0 : index
    %3 = vector.load %arg2[%c0, %c0_1] : memref<32x20xbf16, #tpu.memory_space<vmem>>, vector<32x20xbf16>
    %c0_2 = arith.constant 0 : index
    %c0_3 = arith.constant 0 : index
    %4 = vector.load %arg6[%c0_2, %c0_3] : memref<32x6xf32, #tpu.memory_space<vmem>>, vector<32x6xf32>
    %c0_4 = arith.constant 0 : index
    %c0_5 = arith.constant 0 : index
    %5 = vector.load %arg3[%c0_4, %c0_5] : memref<20x6xbf16, #tpu.memory_space<vmem>>, vector<20x6xbf16>
    %cst = arith.constant dense<0.000000e+00> : vector<32x6xf32>
    %6 = tpu.matmul %3, %5, %cst {dimension_numbers = #tpu.dot_dimension_numbers<[1], [0], [0], [1], [0, 0, 1, 1], [], []>} : vector<32x20xbf16>, vector<20x6xbf16>, vector<32x6xf32> -> vector<32x6xf32>
    %7 = arith.addf %4, %6 : vector<32x6xf32>
    %c0_6 = arith.constant 0 : index
    %c0_7 = arith.constant 0 : index
    %8 = vector.load %arg6[%c0_6, %c0_7] : memref<32x6xf32, #tpu.memory_space<vmem>>, vector<32x6xf32>
    tpu.vector_store %arg6[%c0_6, %c0_7], %7 {strides = array<i32>} : memref<32x6xf32, #tpu.memory_space<vmem>>, vector<32x6xf32>,
    %c0_i32_8 = arith.constant 0 : i32
    %9 = arith.cmpi eq, %arg1, %c0_i32_8 : i32
    %10 = arith.extui %9 : i1 to i32
    %c0_i32_9 = arith.constant 0 : i32
    %11 = arith.cmpi ne, %10, %c0_i32_9 : i32
    scf.if %11 {
      %c0_10 = arith.constant 0 : index
      %c0_11 = arith.constant 0 : index
      %12 = vector.load %arg6[%c0_10, %c0_11] : memref<32x6xf32, #tpu.memory_space<vmem>>, vector<32x6xf32>
      %c0_12 = arith.constant 0 : index
      %c0_13 = arith.constant 0 : index
      %13 = vector.load %arg4[%c0_12, %c0_13] : memref<1x6xf32, #tpu.memory_space<vmem>>, vector<1x6xf32>
      %14 = vector.broadcast %13 : vector<1x6xf32> to vector<32x6xf32>
      %15 = arith.addf %12, %14 : vector<32x6xf32>
      %cst_14 = arith.constant 0.000000e+00 : f32
      %16 = vector.broadcast %cst_14 : f32 to vector<32x6xf32>
      %17 = arith.maximumf %15, %16 : vector<32x6xf32>
      %18 = arith.truncf %17 : vector<32x6xf32> to vector<32x6xbf16>
      %c0_15 = arith.constant 0 : index
      %c0_16 = arith.constant 0 : index
      %19 = vector.load %arg5[%c0_15, %c0_16] : memref<32x6xbf16, #tpu.memory_space<vmem>>, vector<32x6xbf16>
      tpu.vector_store %arg5[%c0_15, %c0_16], %18 {strides = array<i32>} : memref<32x6xbf16, #tpu.memory_space<vmem>>, vector<32x6xbf16>,
    } else {
    }
    return
  }
  func.func @transform_0(%arg0: i32, %arg1: i32) -> (i32, i32) {
    %c0_i32 = arith.constant 0 : i32
    return %arg0, %arg1 : i32, i32
  }
  func.func @transform_1(%arg0: i32, %arg1: i32) -> (i32, i32) {
    %c0_i32 = arith.constant 0 : i32
    %c0_i32_0 = arith.constant 0 : i32
    return %arg1, %c0_i32 : i32, i32
  }
  func.func @transform_2(%arg0: i32, %arg1: i32) -> (i32, i32) {
    %c0_i32 = arith.constant 0 : i32
    %c0_i32_0 = arith.constant 0 : i32
    %c0_i32_1 = arith.constant 0 : i32
    return %c0_i32, %c0_i32_0 : i32, i32
  }
  func.func @transform_3(%arg0: i32, %arg1: i32) -> (i32, i32) {
    %c0_i32 = arith.constant 0 : i32
    %c0_i32_0 = arith.constant 0 : i32
    return %arg0, %c0_i32 : i32, i32
  }
}

module attributes {stable_mosaic.version = 11 : i64} {
  func.func @_head_kernel(%arg0: i32, %arg1: memref<2x16x28xbf16, #tpu.memory_space<vmem>>, %arg2: memref<28x10xf32, #tpu.memory_space<vmem>>, %arg3: memref<1x10xf32, #tpu.memory_space<vmem>>, %arg4: memref<2x10xf32, #tpu.memory_space<vmem>>) attributes {dimension_semantics = [#tpu.dimension_semantics<arbitrary>], iteration_bounds = array<i64: 1>, scalar_prefetch = 0 : i64, scratch_operands = 0 : i64, tpu.core_type = #tpu.core_type<tc>, window_params = [{pipeline_mode = #tpu.pipeline_mode<synchronous>, transform_indices = @transform_0, window_bounds = array<i64: 2, 16, 28>}, {pipeline_mode = #tpu.pipeline_mode<synchronous>, transform_indices = @transform_1, window_bounds = array<i64: 28, 10>}, {pipeline_mode = #tpu.pipeline_mode<synchronous>, transform_indices = @transform_2, window_bounds = array<i64: 1, 10>}, {pipeline_mode = #tpu.pipeline_mode<synchronous>, transform_indices = @transform_3, window_bounds = array<i64: 2, 10>}]} {
    %c0 = arith.constant 0 : index
    %c0_0 = arith.constant 0 : index
    %c0_1 = arith.constant 0 : index
    %0 = vector.load %arg1[%c0, %c0_0, %c0_1] : memref<2x16x28xbf16, #tpu.memory_space<vmem>>, vector<2x16x28xbf16>
    %1 = arith.extf %0 : vector<2x16x28xbf16> to vector<2x16x28xf32>
    %cst = arith.constant 0.000000e+00 : f32
    %2 = vector.broadcast %cst : f32 to vector<2x16x28xf32>
    %3 = arith.maximumf %1, %2 : vector<2x16x28xf32>
    %cst_2 = arith.constant dense<0.000000e+00> : vector<2x28xf32>
    %4 = vector.multi_reduction <add>, %3, %cst_2 [1] : vector<2x16x28xf32> to vector<2x28xf32>
    %cst_3 = arith.constant 1.600000e+01 : f32
    %5 = vector.broadcast %cst_3 : f32 to vector<2x28xf32>
    %6 = arith.divf %4, %5 : vector<2x28xf32>
    %c0_4 = arith.constant 0 : index
    %c0_5 = arith.constant 0 : index
    %7 = vector.load %arg2[%c0_4, %c0_5] : memref<28x10xf32, #tpu.memory_space<vmem>>, vector<28x10xf32>
    %cst_6 = arith.constant dense<0.000000e+00> : vector<2x10xf32>
    %8 = tpu.matmul %6, %7, %cst_6 {dimension_numbers = #tpu.dot_dimension_numbers<[1], [0], [0], [1], [0, 0, 1, 1], [], []>} : vector<2x28xf32>, vector<28x10xf32>, vector<2x10xf32> -> vector<2x10xf32>
    %c0_7 = arith.constant 0 : index
    %c0_8 = arith.constant 0 : index
    %9 = vector.load %arg3[%c0_7, %c0_8] : memref<1x10xf32, #tpu.memory_space<vmem>>, vector<1x10xf32>
    %10 = vector.broadcast %9 : vector<1x10xf32> to vector<2x10xf32>
    %11 = arith.addf %8, %10 : vector<2x10xf32>
    %c0_9 = arith.constant 0 : index
    %c0_10 = arith.constant 0 : index
    %12 = vector.load %arg4[%c0_9, %c0_10] : memref<2x10xf32, #tpu.memory_space<vmem>>, vector<2x10xf32>
    tpu.vector_store %arg4[%c0_9, %c0_10], %11 {strides = array<i32>} : memref<2x10xf32, #tpu.memory_space<vmem>>, vector<2x10xf32>,
    return
  }
  func.func @transform_0(%arg0: i32) -> (i32, i32, i32) {
    %c0_i32 = arith.constant 0 : i32
    %c0_i32_0 = arith.constant 0 : i32
    %c0_i32_1 = arith.constant 0 : i32
    %c0_i32_2 = arith.constant 0 : i32
    return %c0_i32, %c0_i32_0, %c0_i32_1 : i32, i32, i32
  }
  func.func @transform_1(%arg0: i32) -> (i32, i32) {
    %c0_i32 = arith.constant 0 : i32
    %c0_i32_0 = arith.constant 0 : i32
    %c0_i32_1 = arith.constant 0 : i32
    return %c0_i32, %c0_i32_0 : i32, i32
  }
  func.func @transform_2(%arg0: i32) -> (i32, i32) {
    %c0_i32 = arith.constant 0 : i32
    %c0_i32_0 = arith.constant 0 : i32
    %c0_i32_1 = arith.constant 0 : i32
    return %c0_i32, %c0_i32_0 : i32, i32
  }
  func.func @transform_3(%arg0: i32) -> (i32, i32) {
    %c0_i32 = arith.constant 0 : i32
    %c0_i32_0 = arith.constant 0 : i32
    %c0_i32_1 = arith.constant 0 : i32
    return %c0_i32, %c0_i32_0 : i32, i32
  }
}

</mosaic_0001>

<llo_original>
// kernel: _lambda_.31
$region0: #{_lambda_.31}
  #allocation0 [shape = 'u32[]', space=smem, size = 0x4, offset = 0x4, fixed_abs, tag = 'smem constant byte address 0x4 - core index']
  #allocation1 [shape = 'u32[72,128]{1,0:T(1,128)}', space=vmem, size = 0x9000, scoped, tag = 'internal scratch']
  #allocation2 [shape = 'f32[128,6]{1,0:T(8,128)}', space=vmem, size = 0x10000, scoped, tag = 'scratch operand']
  %s0 = inlined_call_operand.vmem [shape: bf16[128,8], index: 0, kind: input, shape index: {}]
  %s1 = inlined_call_operand.vmem [shape: bf16[8,6], index: 1, kind: input, shape index: {}]
  %s2 = inlined_call_operand.vmem [shape: f32[1,6], index: 2, kind: input, shape index: {}]
  %s3 = inlined_call_operand.vmem [shape: bf16[128,6], index: 3, kind: output, shape index: {}]
  %s4 = sld [smem:[#allocation0]]
  $region30: #{_lambda_.31} parent=0
    _
  %s6 = ssub.s32 1, %s4
  %s7 = scalar_select 0, %s6, %s4
  // Predicated region
  $region2: #{_lambda_.31} parent=0 // pred_check
    _
  $region3: #{_lambda_.31} parent=0 // pred_check_branch
    %9 = sbr.rel (0) target = $region5
  $region4: #{_lambda_.31} parent=0 // pred_region
    _
  $region5: #{_lambda_.31} parent=0 // pred_fallthru
    _
  // Predicated region
  $region6: #{_lambda_.31} parent=0 // pred_check
    _
  $region7: #{_lambda_.31} parent=0 // pred_check_branch
    %11 = sbr.rel (0) target = $region9
  $region8: #{_lambda_.31} parent=0 // pred_region
    _
  $region9: #{_lambda_.31} parent=0 // pred_fallthru
    _
  // Predicated region
  $region10: #{_lambda_.31} parent=0 // pred_check
    _
  $region11: #{_lambda_.31} parent=0 // pred_check_branch
    %13 = sbr.rel (0) target = $region13
  $region12: #{_lambda_.31} parent=0 // pred_region
    _
  $region13: #{_lambda_.31} parent=0 // pred_fallthru
    _
  %p15 = scmp.eq.s32.totalorder 0, 0
  // Predicated region
  $region14: #{_lambda_.31} parent=0 // pred_check
    %p16 = pneg %p15
  $region15: #{_lambda_.31} parent=0 // pred_check_branch
    %18 = sbr.rel (%p16) target = $region17
  $region16: #{_lambda_.31} parent=0 // pred_region
    %vm19 = vcmask 48128
    %20 = vst.msk [vmem:[#allocation2] sm:$0xff] %vm19, 0.0
    %21 = vst.msk [vmem:[#allocation2 + $0x8] sm:$0xff] %vm19, 0.0
    %22 = vst.msk [vmem:[#allocation2 + $0x10] sm:$0xff] %vm19, 0.0
    %23 = vst.msk [vmem:[#allocation2 + $0x18] sm:$0xff] %vm19, 0.0
    %24 = vst.msk [vmem:[#allocation2 + $0x20] sm:$0xff] %vm19, 0.0
    %25 = vst.msk [vmem:[#allocation2 + $0x28] sm:$0xff] %vm19, 0.0
    %26 = vst.msk [vmem:[#allocation2 + $0x30] sm:$0xff] %vm19, 0.0
    %27 = vst.msk [vmem:[#allocation2 + $0x38] sm:$0xff] %vm19, 0.0
    %28 = vst.msk [vmem:[#allocation2 + $0x40] sm:$0xff] %vm19, 0.0
    %29 = vst.msk [vmem:[#allocation2 + $0x48] sm:$0xff] %vm19, 0.0
    %30 = vst.msk [vmem:[#allocation2 + $0x50] sm:$0xff] %vm19, 0.0
    %31 = vst.msk [vmem:[#allocation2 + $0x58] sm:$0xff] %vm19, 0.0
    %32 = vst.msk [vmem:[#allocation2 + $0x60] sm:$0xff] %vm19, 0.0
    %33 = vst.msk [vmem:[#allocation2 + $0x68] sm:$0xff] %vm19, 0.0
    %34 = vst.msk [vmem:[#allocation2 + $0x70] sm:$0xff] %vm19, 0.0
    %35 = vst.msk [vmem:[#allocation2 + $0x78] sm:$0xff] %vm19, 0.0
  $region17: #{_lambda_.31} parent=0 // pred_fallthru
    _
  %v36 = vld [vmem:[%s0] sm:$0xf]
  %v37 = vld [vmem:[%s0 + $0x4] sm:$0xf]
  %v38 = vld [vmem:[%s0 + $0x8] sm:$0xf]
  %v39 = vld [vmem:[%s0 + $0xc] sm:$0xf]
  %v40 = vld [vmem:[%s0 + $0x10] sm:$0xf]
  %v41 = vld [vmem:[%s0 + $0x14] sm:$0xf]
  %v42 = vld [vmem:[%s0 + $0x18] sm:$0xf]
  %v43 = vld [vmem:[%s0 + $0x1c] sm:$0xf]
  %v44 = vld [vmem:[%s0 + $0x20] sm:$0xf]
  %v45 = vld [vmem:[%s0 + $0x24] sm:$0xf]
  %v46 = vld [vmem:[%s0 + $0x28] sm:$0xf]
  %v47 = vld [vmem:[%s0 + $0x2c] sm:$0xf]
  %v48 = vld [vmem:[%s0 + $0x30] sm:$0xf]
  %v49 = vld [vmem:[%s0 + $0x34] sm:$0xf]
  %v50 = vld [vmem:[%s0 + $0x38] sm:$0xf]
  %v51 = vld [vmem:[%s0 + $0x3c] sm:$0xf]
  %v52 = vld [vmem:[#allocation2] sm:$0xff]
  %v53 = vld [vmem:[#allocation2 + $0x8] sm:$0xff]
  %v54 = vld [vmem:[#allocation2 + $0x10] sm:$0xff]
  %v55 = vld [vmem:[#allocation2 + $0x18] sm:$0xff]
  %v56 = vld [vmem:[#allocation2 + $0x20] sm:$0xff]
  %v57 = vld [vmem:[#allocation2 + $0x28] sm:$0xff]
  %v58 = vld [vmem:[#allocation2 + $0x30] sm:$0xff]
  %v59 = vld [vmem:[#allocation2 + $0x38] sm:$0xff]
  %v60 = vld [vmem:[#allocation2 + $0x40] sm:$0xff]
  %v61 = vld [vmem:[#allocation2 + $0x48] sm:$0xff]
  %v62 = vld [vmem:[#allocation2 + $0x50] sm:$0xff]
  %v63 = vld [vmem:[#allocation2 + $0x58] sm:$0xff]
  %v64 = vld [vmem:[#allocation2 + $0x60] sm:$0xff]
  %v65 = vld [vmem:[#allocation2 + $0x68] sm:$0xff]
  %v66 = vld [vmem:[#allocation2 + $0x70] sm:$0xff]
  %v67 = vld [vmem:[#allocation2 + $0x78] sm:$0xff]
  %v68 = vld [vmem:[%s1] sm:$0xf]
  %v85 = vunpack.c.l.b16 %v36
  %v86 = vunpack.c.l.b16 %v37
  %v87 = vunpack.c.l.b16 %v38
  %v88 = vunpack.c.l.b16 %v39
  %v89 = vunpack.c.l.b16 %v40
  %v90 = vunpack.c.l.b16 %v41
  %v91 = vunpack.c.l.b16 %v42
  %v92 = vunpack.c.l.b16 %v43
  %v93 = vunpack.c.l.b16 %v44
  %v94 = vunpack.c.l.b16 %v45
  %v95 = vunpack.c.l.b16 %v46
  %v96 = vunpack.c.l.b16 %v47
  %v97 = vunpack.c.l.b16 %v48
  %v98 = vunpack.c.l.b16 %v49
  %v99 = vunpack.c.l.b16 %v50
  %v100 = vunpack.c.l.b16 %v51
  %v101 = vpack.c.b16 %v86, %v85
  %v102 = vpack.c.b16 %v88, %v87
  %v103 = vpack.c.b16 %v90, %v89
  %v104 = vpack.c.b16 %v92, %v91
  %v105 = vpack.c.b16 %v94, %v93
  %v106 = vpack.c.b16 %v96, %v95
  %v107 = vpack.c.b16 %v98, %v97
  %v108 = vpack.c.b16 %v100, %v99
  %vm109 = vcmask 64512
  %v111 = vsel %vm109, %v101, 0
  %v114 = vsel %vm109, %v102, 0
  %v117 = vsel %vm109, %v103, 0
  %v120 = vsel %vm109, %v104, 0
  %v123 = vsel %vm109, %v105, 0
  %v126 = vsel %vm109, %v106, 0
  %v129 = vsel %vm109, %v107, 0
  %v132 = vsel %vm109, %v108, 0
  %vm134 = vcmask 1043456
  %v136 = vsel %vm134, %v68, 0
  %138 = vmatpush.bf16.msra.mxu0 0
  %139 = vmatpush.bf16.msra.mxu0 0
  %140 = vmatpush.bf16.msra.mxu0 0
  %141 = vmatpush.bf16.msra.mxu0 0
  %142 = vmatpush.bf16.msra.mxu0 0
  %143 = vmatpush.bf16.msra.mxu0 0
  %144 = vmatpush.bf16.msra.mxu0 0
  %145 = vmatpush.bf16.msra.mxu0 %v136
  %146 = vmatmul.bf16.gmra.mxu0 %v111
  %v147 = vpop.f32.mrf.mxu0
  %v148 = vadd.f32 0.0, %v147
  %v149 = vpop.f32.mrf.mxu0
  %v150 = vadd.f32 0.0, %v149
  %151 = vmatmul.bf16.gmra.mxu0 %v114
  %v152 = vpop.f32.mrf.mxu0
  %v153 = vadd.f32 0.0, %v152
  %v154 = vpop.f32.mrf.mxu0
  %v155 = vadd.f32 0.0, %v154
  %156 = vmatmul.bf16.gmra.mxu0 %v117
  %v157 = vpop.f32.mrf.mxu0
  %v158 = vadd.f32 0.0, %v157
  %v159 = vpop.f32.mrf.mxu0
  %v160 = vadd.f32 0.0, %v159
  %161 = vmatmul.bf16.gmra.mxu0 %v120
  %v162 = vpop.f32.mrf.mxu0
  %v163 = vadd.f32 0.0, %v162
  %v164 = vpop.f32.mrf.mxu0
  %v165 = vadd.f32 0.0, %v164
  %166 = vmatmul.bf16.gmra.mxu0 %v123
  %v167 = vpop.f32.mrf.mxu0
  %v168 = vadd.f32 0.0, %v167
  %v169 = vpop.f32.mrf.mxu0
  %v170 = vadd.f32 0.0, %v169
  %171 = vmatmul.bf16.gmra.mxu0 %v126
  %v172 = vpop.f32.mrf.mxu0
  %v173 = vadd.f32 0.0, %v172
  %v174 = vpop.f32.mrf.mxu0
  %v175 = vadd.f32 0.0, %v174
  %176 = vmatmul.bf16.gmra.mxu0 %v129
  %v177 = vpop.f32.mrf.mxu0
  %v178 = vadd.f32 0.0, %v177
  %v179 = vpop.f32.mrf.mxu0
  %v180 = vadd.f32 0.0, %v179
  %181 = vmatmul.bf16.gmra.mxu0 %v132
  %v182 = vpop.f32.mrf.mxu0
  %v183 = vadd.f32 0.0, %v182
  %v184 = vpop.f32.mrf.mxu0
  %v185 = vadd.f32 0.0, %v184
  %186 = vdwg.mxu0
  %v187 = vadd.f32 %v52, %v148
  %v188 = vadd.f32 %v53, %v150
  %v189 = vadd.f32 %v54, %v153
  %v190 = vadd.f32 %v55, %v155
  %v191 = vadd.f32 %v56, %v158
  %v192 = vadd.f32 %v57, %v160
  %v193 = vadd.f32 %v58, %v163
  %v194 = vadd.f32 %v59, %v165
  %v195 = vadd.f32 %v60, %v168
  %v196 = vadd.f32 %v61, %v170
  %v197 = vadd.f32 %v62, %v173
  %v198 = vadd.f32 %v63, %v175
  %v199 = vadd.f32 %v64, %v178
  %v200 = vadd.f32 %v65, %v180
  %v201 = vadd.f32 %v66, %v183
  %v202 = vadd.f32 %v67, %v185
  %vm203 = vcmask 48128
  %204 = vst.msk [vmem:[#allocation2] sm:$0xff] %vm203, %v187
  %205 = vst.msk [vmem:[#allocation2 + $0x8] sm:$0xff] %vm203, %v188
  %206 = vst.msk [vmem:[#allocation2 + $0x10] sm:$0xff] %vm203, %v189
  %207 = vst.msk [vmem:[#allocation2 + $0x18] sm:$0xff] %vm203, %v190
  %208 = vst.msk [vmem:[#allocation2 + $0x20] sm:$0xff] %vm203, %v191
  %209 = vst.msk [vmem:[#allocation2 + $0x28] sm:$0xff] %vm203, %v192
  %210 = vst.msk [vmem:[#allocation2 + $0x30] sm:$0xff] %vm203, %v193
  %211 = vst.msk [vmem:[#allocation2 + $0x38] sm:$0xff] %vm203, %v194
  %212 = vst.msk [vmem:[#allocation2 + $0x40] sm:$0xff] %vm203, %v195
  %213 = vst.msk [vmem:[#allocation2 + $0x48] sm:$0xff] %vm203, %v196
  %214 = vst.msk [vmem:[#allocation2 + $0x50] sm:$0xff] %vm203, %v197
  %215 = vst.msk [vmem:[#allocation2 + $0x58] sm:$0xff] %vm203, %v198
  %216 = vst.msk [vmem:[#allocation2 + $0x60] sm:$0xff] %vm203, %v199
  %217 = vst.msk [vmem:[#allocation2 + $0x68] sm:$0xff] %vm203, %v200
  %218 = vst.msk [vmem:[#allocation2 + $0x70] sm:$0xff] %vm203, %v201
  %219 = vst.msk [vmem:[#allocation2 + $0x78] sm:$0xff] %vm203, %v202
  // Predicated region
  $region18: #{_lambda_.31} parent=0 // pred_check
    %p220 = pneg %p15
  $region19: #{_lambda_.31} parent=0 // pred_check_branch
    %222 = sbr.rel (%p220) target = $region21
  $region20: #{_lambda_.31} parent=0 // pred_region
    %v223 = vld [vmem:[#allocation2] sm:$0xff]
    %v224 = vld [vmem:[#allocation2 + $0x8] sm:$0xff]
    %v225 = vld [vmem:[#allocation2 + $0x10] sm:$0xff]
    %v226 = vld [vmem:[#allocation2 + $0x18] sm:$0xff]
    %v227 = vld [vmem:[#allocation2 + $0x20] sm:$0xff]
    %v228 = vld [vmem:[#allocation2 + $0x28] sm:$0xff]
    %v229 = vld [vmem:[#allocation2 + $0x30] sm:$0xff]
    %v230 = vld [vmem:[#allocation2 + $0x38] sm:$0xff]
    %v231 = vld [vmem:[#allocation2 + $0x40] sm:$0xff]
    %v232 = vld [vmem:[#allocation2 + $0x48] sm:$0xff]
    %v233 = vld [vmem:[#allocation2 + $0x50] sm:$0xff]
    %v234 = vld [vmem:[#allocation2 + $0x58] sm:$0xff]
    %v235 = vld [vmem:[#allocation2 + $0x60] sm:$0xff]
    %v236 = vld [vmem:[#allocation2 + $0x68] sm:$0xff]
    %v237 = vld [vmem:[#allocation2 + $0x70] sm:$0xff]
    %v238 = vld [vmem:[#allocation2 + $0x78] sm:$0xff]
    %v239 = vld [vmem:[%s2] sm:$0x1]
    %v241 = vperm.slane %v239, 0
    %v243 = vadd.f32 %v223, %v241
    %v244 = vadd.f32 %v224, %v241
    %v245 = vadd.f32 %v225, %v241
    %v246 = vadd.f32 %v226, %v241
    %v247 = vadd.f32 %v227, %v241
    %v248 = vadd.f32 %v228, %v241
    %v249 = vadd.f32 %v229, %v241
    %v250 = vadd.f32 %v230, %v241
    %v251 = vadd.f32 %v231, %v241
    %v252 = vadd.f32 %v232, %v241
    %v253 = vadd.f32 %v233, %v241
    %v254 = vadd.f32 %v234, %v241
    %v255 = vadd.f32 %v235, %v241
    %v256 = vadd.f32 %v236, %v241
    %v257 = vadd.f32 %v237, %v241
    %v258 = vadd.f32 %v238, %v241
    %v259 = vmax.f32 %v243, 0.0
    %v260 = vmax.f32 %v244, 0.0
    %v261 = vmax.f32 %v245, 0.0
    %v262 = vmax.f32 %v246, 0.0
    %v263 = vmax.f32 %v247, 0.0
    %v264 = vmax.f32 %v248, 0.0
    %v265 = vmax.f32 %v249, 0.0
    %v266 = vmax.f32 %v250, 0.0
    %v267 = vmax.f32 %v251, 0.0
    %v268 = vmax.f32 %v252, 0.0
    %v269 = vmax.f32 %v253, 0.0
    %v270 = vmax.f32 %v254, 0.0
    %v271 = vmax.f32 %v255, 0.0
    %v272 = vmax.f32 %v256, 0.0
    %v273 = vmax.f32 %v257, 0.0
    %v274 = vmax.f32 %v258, 0.0
    %v275 = vpack.c.bf16 %v259, %v259
    %v276 = vpack.c.bf16 %v260, %v260
    %v277 = vpack.c.bf16 %v261, %v261
    %v278 = vpack.c.bf16 %v262, %v262
    %v279 = vpack.c.bf16 %v263, %v263
    %v280 = vpack.c.bf16 %v264, %v264
    %v281 = vpack.c.bf16 %v265, %v265
    %v282 = vpack.c.bf16 %v266, %v266
    %v283 = vpack.c.bf16 %v267, %v267
    %v284 = vpack.c.bf16 %v268, %v268
    %v285 = vpack.c.bf16 %v269, %v269
    %v286 = vpack.c.bf16 %v270, %v270
    %v287 = vpack.c.bf16 %v271, %v271
    %v288 = vpack.c.bf16 %v272, %v272
    %v289 = vpack.c.bf16 %v273, %v273
    %v290 = vpack.c.bf16 %v274, %v274
    %vm291 = vcmask 44032
    %292 = vst.msk [vmem:[%s3] sm:$0xf] %vm291, %v275
    %293 = vst.msk [vmem:[%s3 + $0x4] sm:$0xf] %vm291, %v276
    %294 = vst.msk [vmem:[%s3 + $0x8] sm:$0xf] %vm291, %v277
    %295 = vst.msk [vmem:[%s3 + $0xc] sm:$0xf] %vm291, %v278
    %296 = vst.msk [vmem:[%s3 + $0x10] sm:$0xf] %vm291, %v279
    %297 = vst.msk [vmem:[%s3 + $0x14] sm:$0xf] %vm291, %v280
    %298 = vst.msk [vmem:[%s3 + $0x18] sm:$0xf] %vm291, %v281
    %299 = vst.msk [vmem:[%s3 + $0x1c] sm:$0xf] %vm291, %v282
    %300 = vst.msk [vmem:[%s3 + $0x20] sm:$0xf] %vm291, %v283
    %301 = vst.msk [vmem:[%s3 + $0x24] sm:$0xf] %vm291, %v284
    %302 = vst.msk [vmem:[%s3 + $0x28] sm:$0xf] %vm291, %v285
    %303 = vst.msk [vmem:[%s3 + $0x2c] sm:$0xf] %vm291, %v286
    %304 = vst.msk [vmem:[%s3 + $0x30] sm:$0xf] %vm291, %v287
    %305 = vst.msk [vmem:[%s3 + $0x34] sm:$0xf] %vm291, %v288
    %306 = vst.msk [vmem:[%s3 + $0x38] sm:$0xf] %vm291, %v289
    %307 = vst.msk [vmem:[%s3 + $0x3c] sm:$0xf] %vm291, %v290
  $region21: #{_lambda_.31} parent=0 // pred_fallthru
    _
  // Predicated region
  $region22: #{_lambda_.31} parent=0 // pred_check
    _
  $region23: #{_lambda_.31} parent=0 // pred_check_branch
    %309 = sbr.rel (0) target = $region25
  $region24: #{_lambda_.31} parent=0 // pred_region
    _
  $region25: #{_lambda_.31} parent=0 // pred_fallthru
    _
  // Predicated region
  $region26: #{_lambda_.31} parent=0 // pred_check
    _
  $region27: #{_lambda_.31} parent=0 // pred_check_branch
    %311 = sbr.rel (0) target = $region29
  $region28: #{_lambda_.31} parent=0 // pred_region
    _
  $region29: #{_lambda_.31} parent=0 // pred_fallthru
    _

// kernel: _lambda_.29
$region0: #{_lambda_.29}
  #allocation0 [shape = 'u32[]', space=smem, size = 0x4, offset = 0x4, fixed_abs, tag = 'smem constant byte address 0x4 - core index']
  #allocation1 [shape = 'u32[72,128]{1,0:T(1,128)}', space=vmem, size = 0x9000, scoped, tag = 'internal scratch']
  #allocation2 [shape = 'f32[512,8]{1,0:T(8,128)}', space=vmem, size = 0x40000, scoped, tag = 'scratch operand']
  %s0 = inlined_call_operand.vmem [shape: bf16[512,147], index: 0, kind: input, shape index: {}]
  %s1 = inlined_call_operand.vmem [shape: bf16[147,8], index: 1, kind: input, shape index: {}]
  %s2 = inlined_call_operand.vmem [shape: f32[1,8], index: 2, kind: input, shape index: {}]
  %s3 = inlined_call_operand.vmem [shape: bf16[512,8], index: 3, kind: output, shape index: {}]
  %s4 = sld [smem:[#allocation0]]
  $region30: #{_lambda_.29} parent=0
    _
  %s6 = ssub.s32 1, %s4
  %s7 = scalar_select 0, %s6, %s4
  // Predicated region
  $region2: #{_lambda_.29} parent=0 // pred_check
    _
  $region3: #{_lambda_.29} parent=0 // pred_check_branch
    %9 = sbr.rel (0) target = $region5
  $region4: #{_lambda_.29} parent=0 // pred_region
    _
  $region5: #{_lambda_.29} parent=0 // pred_fallthru
    _
  // Predicated region
  $region6: #{_lambda_.29} parent=0 // pred_check
    _
  $region7: #{_lambda_.29} parent=0 // pred_check_branch
    %11 = sbr.rel (0) target = $region9
  $region8: #{_lambda_.29} parent=0 // pred_region
    _
  $region9: #{_lambda_.29} parent=0 // pred_fallthru
    _
  // Predicated region
  $region10: #{_lambda_.29} parent=0 // pred_check
    _
  $region11: #{_lambda_.29} parent=0 // pred_check_branch
    %13 = sbr.rel (0) target = $region13
  $region12: #{_lambda_.29} parent=0 // pred_region
    _
  $region13: #{_lambda_.29} parent=0 // pred_fallthru
    _
  %p15 = scmp.eq.s32.totalorder 0, 0
  // Predicated region
  $region14: #{_lambda_.29} parent=0 // pred_check
    %p16 = pneg %p15
  $region15: #{_lambda_.29} parent=0 // pred_check_branch
    %18 = sbr.rel (%p16) target = $region17
  $region16: #{_lambda_.29} parent=0 // pred_region
    %vm19 = vcmask 64512
    %20 = vst.msk [vmem:[#allocation2] sm:$0xff] %vm19, 0.0
    %21 = vst.msk [vmem:[#allocation2 + $0x8] sm:$0xff] %vm19, 0.0
    %22 = vst.msk [vmem:[#allocation2 + $0x10] sm:$0xff] %vm19, 0.0
    %23 = vst.msk [vmem:[#allocation2 + $0x18] sm:$0xff] %vm19, 0.0
    %24 = vst.msk [vmem:[#allocation2 + $0x20] sm:$0xff] %vm19, 0.0
    %25 = vst.msk [vmem:[#allocation2 + $0x28] sm:$0xff] %vm19, 0.0
    %26 = vst.msk [vmem:[#allocation2 + $0x30] sm:$0xff] %vm19, 0.0
    %27 = vst.msk [vmem:[#allocation2 + $0x38] sm:$0xff] %vm19, 0.0
    %28 = vst.msk [vmem:[#allocation2 + $0x40] sm:$0xff] %vm19, 0.0
    %29 = vst.msk [vmem:[#allocation2 + $0x48] sm:$0xff] %vm19, 0.0
    %30 = vst.msk [vmem:[#allocation2 + $0x50] sm:$0xff] %vm19, 0.0
    %31 = vst.msk [vmem:[#allocation2 + $0x58] sm:$0xff] %vm19, 0.0
    %32 = vst.msk [vmem:[#allocation2 + $0x60] sm:$0xff] %vm19, 0.0
    %33 = vst.msk [vmem:[#allocation2 + $0x68] sm:$0xff] %vm19, 0.0
    %34 = vst.msk [vmem:[#allocation2 + $0x70] sm:$0xff] %vm19, 0.0
    %35 = vst.msk [vmem:[#allocation2 + $0x78] sm:$0xff] %vm19, 0.0
    %36 = vst.msk [vmem:[#allocation2 + $0x80] sm:$0xff] %vm19, 0.0
    %37 = vst.msk [vmem:[#allocation2 + $0x88] sm:$0xff] %vm19, 0.0
    %38 = vst.msk [vmem:[#allocation2 + $0x90] sm:$0xff] %vm19, 0.0
    %39 = vst.msk [vmem:[#allocation2 + $0x98] sm:$0xff] %vm19, 0.0
    %40 = vst.msk [vmem:[#allocation2 + $0xa0] sm:$0xff] %vm19, 0.0
    %41 = vst.msk [vmem:[#allocation2 + $0xa8] sm:$0xff] %vm19, 0.0
    %42 = vst.msk [vmem:[#allocation2 + $0xb0] sm:$0xff] %vm19, 0.0
    %43 = vst.msk [vmem:[#allocation2 + $0xb8] sm:$0xff] %vm19, 0.0
    %44 = vst.msk [vmem:[#allocation2 + $0xc0] sm:$0xff] %vm19, 0.0
    %45 = vst.msk [vmem:[#allocation2 + $0xc8] sm:$0xff] %vm19, 0.0
    %46 = vst.msk [vmem:[#allocation2 + $0xd0] sm:$0xff] %vm19, 0.0
    %47 = vst.msk [vmem:[#allocation2 + $0xd8] sm:$0xff] %vm19, 0.0
    %48 = vst.msk [vmem:[#allocation2 + $0xe0] sm:$0xff] %vm19, 0.0
    %49 = vst.msk [vmem:[#allocation2 + $0xe8] sm:$0xff] %vm19, 0.0
    %50 = vst.msk [vmem:[#allocation2 + $0xf0] sm:$0xff] %vm19, 0.0
    %51 = vst.msk [vmem:[#allocation2 + $0xf8] sm:$0xff] %vm19, 0.0
    %52 = vst.msk [vmem:[#allocation2 + $0x100] sm:$0xff] %vm19, 0.0
    %53 = vst.msk [vmem:[#allocation2 + $0x108] sm:$0xff] %vm19, 0.0
    %54 = vst.msk [vmem:[#allocation2 + $0x110] sm:$0xff] %vm19, 0.0
    %55 = vst.msk [vmem:[#allocation2 + $0x118] sm:$0xff] %vm19, 0.0
    %56 = vst.msk [vmem:[#allocation2 + $0x120] sm:$0xff] %vm19, 0.0
    %57 = vst.msk [vmem:[#allocation2 + $0x128] sm:$0xff] %vm19, 0.0
    %58 = vst.msk [vmem:[#allocation2 + $0x130] sm:$0xff] %vm19, 0.0
    %59 = vst.msk [vmem:[#allocation2 + $0x138] sm:$0xff] %vm19, 0.0
    %60 = vst.msk [vmem:[#allocation2 + $0x140] sm:$0xff] %vm19, 0.0
    %61 = vst.msk [vmem:[#allocation2 + $0x148] sm:$0xff] %vm19, 0.0
    %62 = vst.msk [vmem:[#allocation2 + $0x150] sm:$0xff] %vm19, 0.0
    %63 = vst.msk [vmem:[#allocation2 + $0x158] sm:$0xff] %vm19, 0.0
    %64 = vst.msk [vmem:[#allocation2 + $0x160] sm:$0xff] %vm19, 0.0
    %65 = vst.msk [vmem:[#allocation2 + $0x168] sm:$0xff] %vm19, 0.0
    %66 = vst.msk [vmem:[#allocation2 + $0x170] sm:$0xff] %vm19, 0.0
    %67 = vst.msk [vmem:[#allocation2 + $0x178] sm:$0xff] %vm19, 0.0
    %68 = vst.msk [vmem:[#allocation2 + $0x180] sm:$0xff] %vm19, 0.0
    %69 = vst.msk [vmem:[#allocation2 + $0x188] sm:$0xff] %vm19, 0.0
    %70 = vst.msk [vmem:[#allocation2 + $0x190] sm:$0xff] %vm19, 0.0
    %71 = vst.msk [vmem:[#allocation2 + $0x198] sm:$0xff] %vm19, 0.0
    %72 = vst.msk [vmem:[#allocation2 + $0x1a0] sm:$0xff] %vm19, 0.0
    %73 = vst.msk [vmem:[#allocation2 + $0x1a8] sm:$0xff] %vm19, 0.0
    %74 = vst.msk [vmem:[#allocation2 + $0x1b0] sm:$0xff] %vm19, 0.0
    %75 = vst.msk [vmem:[#allocation2 + $0x1b8] sm:$0xff] %vm19, 0.0
    %76 = vst.msk [vmem:[#allocation2 + $0x1c0] sm:$0xff] %vm19, 0.0
    %77 = vst.msk [vmem:[#allocation2 + $0x1c8] sm:$0xff] %vm19, 0.0
    %78 = vst.msk [vmem:[#allocation2 + $0x1d0] sm:$0xff] %vm19, 0.0
    %79 = vst.msk [vmem:[#allocation2 + $0x1d8] sm:$0xff] %vm19, 0.0
    %80 = vst.msk [vmem:[#allocation2 + $0x1e0] sm:$0xff] %vm19, 0.0
    %81 = vst.msk [vmem:[#allocation2 + $0x1e8] sm:$0xff] %vm19, 0.0
    %82 = vst.msk [vmem:[#allocation2 + $0x1f0] sm:$0xff] %vm19, 0.0
    %83 = vst.msk [vmem:[#allocation2 + $0x1f8] sm:$0xff] %vm19, 0.0
  $region17: #{_lambda_.29} parent=0 // pred_fallthru
    _
  %v84 = vld [vmem:[%s0] sm:$0xff]
  %v85 = vld [vmem:[%s0 + $0x8] sm:$0xff]
  %v86 = vld [vmem:[%s0 + $0x10] sm:$0xff]
  %v87 = vld [vmem:[%s0 + $0x18] sm:$0xff]
  %v88 = vld [vmem:[%s0 + $0x20] sm:$0xff]
  %v89 = vld [vmem:[%s0 + $0x28] sm:$0xff]
  %v90 = vld [vmem:[%s0 + $0x30] sm:$0xff]
  %v91 = vld [vmem:[%s0 + $0x38] sm:$0xff]
  %v92 = vld [vmem:[%s0 + $0x40] sm:$0xff]
  %v93 = vld [vmem:[%s0 + $0x48] sm:$0xff]
  %v94 = vld [vmem:[%s0 + $0x50] sm:$0xff]
  %v95 = vld [vmem:[%s0 + $0x58] sm:$0xff]
  %v96 = vld [vmem:[%s0 + $0x60] sm:$0xff]
  %v97 = vld [vmem:[%s0 + $0x68] sm:$0xff]
  %v98 = vld [vmem:[%s0 + $0x70] sm:$0xff]
  %v99 = vld [vmem:[%s0 + $0x78] sm:$0xff]
  %v100 = vld [vmem:[%s0 + $0x80] sm:$0xff]
  %v101 = vld [vmem:[%s0 + $0x88] sm:$0xff]
  %v102 = vld [vmem:[%s0 + $0x90] sm:$0xff]
  %v103 = vld [vmem:[%s0 + $0x98] sm:$0xff]
  %v104 = vld [vmem:[%s0 + $0xa0] sm:$0xff]
  %v105 = vld [vmem:[%s0 + $0xa8] sm:$0xff]
  %v106 = vld [vmem:[%s0 + $0xb0] sm:$0xff]
  %v107 = vld [vmem:[%s0 + $0xb8] sm:$0xff]
  %v108 = vld [vmem:[%s0 + $0xc0] sm:$0xff]
  %v109 = vld [vmem:[%s0 + $0xc8] sm:$0xff]
  %v110 = vld [vmem:[%s0 + $0xd0] sm:$0xff]
  %v111 = vld [vmem:[%s0 + $0xd8] sm:$0xff]
  %v112 = vld [vmem:[%s0 + $0xe0] sm:$0xff]
  %v113 = vld [vmem:[%s0 + $0xe8] sm:$0xff]
  %v114 = vld [vmem:[%s0 + $0xf0] sm:$0xff]
  %v115 = vld [vmem:[%s0 + $0xf8] sm:$0xff]
  %v116 = vld [vmem:[%s0 + $0x100] sm:$0xff]
  %v117 = vld [vmem:[%s0 + $0x108] sm:$0xff]
  %v118 = vld [vmem:[%s0 + $0x110] sm:$0xff]
  %v119 = vld [vmem:[%s0 + $0x118] sm:$0xff]
  %v120 = vld [vmem:[%s0 + $0x120] sm:$0xff]
  %v121 = vld [vmem:[%s0 + $0x128] sm:$0xff]
  %v122 = vld [vmem:[%s0 + $0x130] sm:$0xff]
  %v123 = vld [vmem:[%s0 + $0x138] sm:$0xff]
  %v124 = vld [vmem:[%s0 + $0x140] sm:$0xff]
  %v125 = vld [vmem:[%s0 + $0x148] sm:$0xff]
  %v126 = vld [vmem:[%s0 + $0x150] sm:$0xff]
  %v127 = vld [vmem:[%s0 + $0x158] sm:$0xff]
  %v128 = vld [vmem:[%s0 + $0x160] sm:$0xff]
  %v129 = vld [vmem:[%s0 + $0x168] sm:$0xff]
  %v130 = vld [vmem:[%s0 + $0x170] sm:$0xff]
  %v131 = vld [vmem:[%s0 + $0x178] sm:$0xff]
  %v132 = vld [vmem:[%s0 + $0x180] sm:$0xff]
  %v133 = vld [vmem:[%s0 + $0x188] sm:$0xff]
  %v134 = vld [vmem:[%s0 + $0x190] sm:$0xff]
  %v135 = vld [vmem:[%s0 + $0x198] sm:$0xff]
  %v136 = vld [vmem:[%s0 + $0x1a0] sm:$0xff]
  %v137 = vld [vmem:[%s0 + $0x1a8] sm:$0xff]
  %v138 = vld [vmem:[%s0 + $0x1b0] sm:$0xff]
  %v139 = vld [vmem:[%s0 + $0x1b8] sm:$0xff]
  %v140 = vld [vmem:[%s0 + $0x1c0] sm:$0xff]
  %v141 = vld [vmem:[%s0 + $0x1c8] sm:$0xff]
  %v142 = vld [vmem:[%s0 + $0x1d0] sm:$0xff]
  %v143 = vld [vmem:[%s0 + $0x1d8] sm:$0xff]
  %v144 = vld [vmem:[%s0 + $0x1e0] sm:$0xff]
  %v145 = vld [vmem:[%s0 + $0x1e8] sm:$0xff]
  %v146 = vld [vmem:[%s0 + $0x1f0] sm:$0xff]
  %v147 = vld [vmem:[%s0 + $0x1f8] sm:$0xff]
  %v148 = vld [vmem:[#allocation2] sm:$0xff]
  %v149 = vld [vmem:[#allocation2 + $0x8] sm:$0xff]
  %v150 = vld [vmem:[#allocation2 + $0x10] sm:$0xff]
  %v151 = vld [vmem:[#allocation2 + $0x18] sm:$0xff]
  %v152 = vld [vmem:[#allocation2 + $0x20] sm:$0xff]
  %v153 = vld [vmem:[#allocation2 + $0x28] sm:$0xff]
  %v154 = vld [vmem:[#allocation2 + $0x30] sm:$0xff]
  %v155 = vld [vmem:[#allocation2 + $0x38] sm:$0xff]
  %v156 = vld [vmem:[#allocation2 + $0x40] sm:$0xff]
  %v157 = vld [vmem:[#allocation2 + $0x48] sm:$0xff]
  %v158 = vld [vmem:[#allocation2 + $0x50] sm:$0xff]
  %v159 = vld [vmem:[#allocation2 + $0x58] sm:$0xff]
  %v160 = vld [vmem:[#allocation2 + $0x60] sm:$0xff]
  %v161 = vld [vmem:[#allocation2 + $0x68] sm:$0xff]
  %v162 = vld [vmem:[#allocation2 + $0x70] sm:$0xff]
  %v163 = vld [vmem:[#allocation2 + $0x78] sm:$0xff]
  %v164 = vld [vmem:[#allocation2 + $0x80] sm:$0xff]
  %v165 = vld [vmem:[#allocation2 + $0x88] sm:$0xff]
  %v166 = vld [vmem:[#allocation2 + $0x90] sm:$0xff]
  %v167 = vld [vmem:[#allocation2 + $0x98] sm:$0xff]
  %v168 = vld [vmem:[#allocation2 + $0xa0] sm:$0xff]
  %v169 = vld [vmem:[#allocation2 + $0xa8] sm:$0xff]
  %v170 = vld [vmem:[#allocation2 + $0xb0] sm:$0xff]
  %v171 = vld [vmem:[#allocation2 + $0xb8] sm:$0xff]
  %v172 = vld [vmem:[#allocation2 + $0xc0] sm:$0xff]
  %v173 = vld [vmem:[#allocation2 + $0xc8] sm:$0xff]
  %v174 = vld [vmem:[#allocation2 + $0xd0] sm:$0xff]
  %v175 = vld [vmem:[#allocation2 + $0xd8] sm:$0xff]
  %v176 = vld [vmem:[#allocation2 + $0xe0] sm:$0xff]
  %v177 = vld [vmem:[#allocation2 + $0xe8] sm:$0xff]
  %v178 = vld [vmem:[#allocation2 + $0xf0] sm:$0xff]
  %v179 = vld [vmem:[#allocation2 + $0xf8] sm:$0xff]
  %v180 = vld [vmem:[#allocation2 + $0x100] sm:$0xff]
  %v181 = vld [vmem:[#allocation2 + $0x108] sm:$0xff]
  %v182 = vld [vmem:[#allocation2 + $0x110] sm:$0xff]
  %v183 = vld [vmem:[#allocation2 + $0x118] sm:$0xff]
  %v184 = vld [vmem:[#allocation2 + $0x120] sm:$0xff]
  %v185 = vld [vmem:[#allocation2 + $0x128] sm:$0xff]
  %v186 = vld [vmem:[#allocation2 + $0x130] sm:$0xff]
  %v187 = vld [vmem:[#allocation2 + $0x138] sm:$0xff]
  %v188 = vld [vmem:[#allocation2 + $0x140] sm:$0xff]
  %v189 = vld [vmem:[#allocation2 + $0x148] sm:$0xff]
  %v190 = vld [vmem:[#allocation2 + $0x150] sm:$0xff]
  %v191 = vld [vmem:[#allocation2 + $0x158] sm:$0xff]
  %v192 = vld [vmem:[#allocation2 + $0x160] sm:$0xff]
  %v193 = vld [vmem:[#allocation2 + $0x168] sm:$0xff]
  %v194 = vld [vmem:[#allocation2 + $0x170] sm:$0xff]
  %v195 = vld [vmem:[#allocation2 + $0x178] sm:$0xff]
  %v196 = vld [vmem:[#allocation2 + $0x180] sm:$0xff]
  %v197 = vld [vmem:[#allocation2 + $0x188] sm:$0xff]
  %v198 = vld [vmem:[#allocation2 + $0x190] sm:$0xff]
  %v199 = vld [vmem:[#allocation2 + $0x198] sm:$0xff]
  %v200 = vld [vmem:[#allocation2 + $0x1a0] sm:$0xff]
  %v201 = vld [vmem:[#allocation2 + $0x1a8] sm:$0xff]
  %v202 = vld [vmem:[#allocation2 + $0x1b0] sm:$0xff]
  %v203 = vld [vmem:[#allocation2 + $0x1b8] sm:$0xff]
  %v204 = vld [vmem:[#allocation2 + $0x1c0] sm:$0xff]
  %v205 = vld [vmem:[#allocation2 + $0x1c8] sm:$0xff]
  %v206 = vld [vmem:[#allocation2 + $0x1d0] sm:$0xff]
  %v207 = vld [vmem:[#allocation2 + $0x1d8] sm:$0xff]
  %v208 = vld [vmem:[#allocation2 + $0x1e0] sm:$0xff]
  %v209 = vld [vmem:[#allocation2 + $0x1e8] sm:$0xff]
  %v210 = vld [vmem:[#allocation2 + $0x1f0] sm:$0xff]
  %v211 = vld [vmem:[#allocation2 + $0x1f8] sm:$0xff]
  %v212 = vld [vmem:[%s1] sm:$0xf]
  %v213 = vld [vmem:[%s1 + $0x4] sm:$0xf]
  %v214 = vld [vmem:[%s1 + $0x8] sm:$0xf]
  %v215 = vld [vmem:[%s1 + $0xc] sm:$0xf]
  %v216 = vld [vmem:[%s1 + $0x10] sm:$0xf]
  %v217 = vld [vmem:[%s1 + $0x14] sm:$0xf]
  %v218 = vld [vmem:[%s1 + $0x18] sm:$0xf]
  %v219 = vld [vmem:[%s1 + $0x1c] sm:$0xf]
  %v220 = vld [vmem:[%s1 + $0x20] sm:$0xf]
  %v221 = vld [vmem:[%s1 + $0x24] sm:$0xf]
  %v222 = vld [vmem:[%s1 + $0x28] sm:$0xf]
  %v223 = vld [vmem:[%s1 + $0x2c] sm:$0xf]
  %v224 = vld [vmem:[%s1 + $0x30] sm:$0xf]
  %v225 = vld [vmem:[%s1 + $0x34] sm:$0xf]
  %v226 = vld [vmem:[%s1 + $0x38] sm:$0xf]
  %v227 = vld [vmem:[%s1 + $0x3c] sm:$0xf]
  %v228 = vld [vmem:[%s1 + $0x40] sm:$0xf]
  %v229 = vld [vmem:[%s1 + $0x44] sm:$0xf]
  %v230 = vld [vmem:[%s1 + $0x48] sm:$0x3]
  %v295 = vunpack.c.l.b16 %v84
  %v296 = vunpack.c.h.b16 %v84
  %v297 = vunpack.c.l.b16 %v85
  %v298 = vunpack.c.h.b16 %v85
  %v299 = vunpack.c.l.b16 %v86
  %v300 = vunpack.c.h.b16 %v86
  %v301 = vunpack.c.l.b16 %v87
  %v302 = vunpack.c.h.b16 %v87
  %v303 = vunpack.c.l.b16 %v88
  %v304 = vunpack.c.h.b16 %v88
  %v305 = vunpack.c.l.b16 %v89
  %v306 = vunpack.c.h.b16 %v89
  %v307 = vunpack.c.l.b16 %v90
  %v308 = vunpack.c.h.b16 %v90
  %v309 = vunpack.c.l.b16 %v91
  %v310 = vunpack.c.h.b16 %v91
  %v311 = vunpack.c.l.b16 %v92
  %v312 = vunpack.c.h.b16 %v92
  %v313 = vunpack.c.l.b16 %v93
  %v314 = vunpack.c.h.b16 %v93
  %v315 = vunpack.c.l.b16 %v94
  %v316 = vunpack.c.h.b16 %v94
  %v317 = vunpack.c.l.b16 %v95
  %v318 = vunpack.c.h.b16 %v95
  %v319 = vunpack.c.l.b16 %v96
  %v320 = vunpack.c.h.b16 %v96
  %v321 = vunpack.c.l.b16 %v97
  %v322 = vunpack.c.h.b16 %v97
  %v323 = vunpack.c.l.b16 %v98
  %v324 = vunpack.c.h.b16 %v98
  %v325 = vunpack.c.l.b16 %v99
  %v326 = vunpack.c.h.b16 %v99
  %v327 = vunpack.c.l.b16 %v100
  %v328 = vunpack.c.h.b16 %v100
  %v329 = vunpack.c.l.b16 %v101
  %v330 = vunpack.c.h.b16 %v101
  %v331 = vunpack.c.l.b16 %v102
  %v332 = vunpack.c.h.b16 %v102
  %v333 = vunpack.c.l.b16 %v103
  %v334 = vunpack.c.h.b16 %v103
  %v335 = vunpack.c.l.b16 %v104
  %v336 = vunpack.c.h.b16 %v104
  %v337 = vunpack.c.l.b16 %v105
  %v338 = vunpack.c.h.b16 %v105
  %v339 = vunpack.c.l.b16 %v106
  %v340 = vunpack.c.h.b16 %v106
  %v341 = vunpack.c.l.b16 %v107
  %v342 = vunpack.c.h.b16 %v107
  %v343 = vunpack.c.l.b16 %v108
  %v344 = vunpack.c.h.b16 %v108
  %v345 = vunpack.c.l.b16 %v109
  %v346 = vunpack.c.h.b16 %v109
  %v347 = vunpack.c.l.b16 %v110
  %v348 = vunpack.c.h.b16 %v110
  %v349 = vunpack.c.l.b16 %v111
  %v350 = vunpack.c.h.b16 %v111
  %v351 = vunpack.c.l.b16 %v112
  %v352 = vunpack.c.h.b16 %v112
  %v353 = vunpack.c.l.b16 %v113
  %v354 = vunpack.c.h.b16 %v113
  %v355 = vunpack.c.l.b16 %v114
  %v356 = vunpack.c.h.b16 %v114
  %v357 = vunpack.c.l.b16 %v115
  %v358 = vunpack.c.h.b16 %v115
  %v359 = vunpack.c.l.b16 %v116
  %v360 = vunpack.c.h.b16 %v116
  %v361 = vunpack.c.l.b16 %v117
  %v362 = vunpack.c.h.b16 %v117
  %v363 = vunpack.c.l.b16 %v118
  %v364 = vunpack.c.h.b16 %v118
  %v365 = vunpack.c.l.b16 %v119
  %v366 = vunpack.c.h.b16 %v119
  %v367 = vunpack.c.l.b16 %v120
  %v368 = vunpack.c.h.b16 %v120
  %v369 = vunpack.c.l.b16 %v121
  %v370 = vunpack.c.h.b16 %v121
  %v371 = vunpack.c.l.b16 %v122
  %v372 = vunpack.c.h.b16 %v122
  %v373 = vunpack.c.l.b16 %v123
  %v374 = vunpack.c.h.b16 %v123
  %v375 = vunpack.c.l.b16 %v124
  %v376 = vunpack.c.h.b16 %v124
  %v377 = vunpack.c.l.b16 %v125
  %v378 = vunpack.c.h.b16 %v125
  %v379 = vunpack.c.l.b16 %v126
  %v380 = vunpack.c.h.b16 %v126
  %v381 = vunpack.c.l.b16 %v127
  %v382 = vunpack.c.h.b16 %v127
  %v383 = vunpack.c.l.b16 %v128
  %v384 = vunpack.c.h.b16 %v128
  %v385 = vunpack.c.l.b16 %v129
  %v386 = vunpack.c.h.b16 %v129
  %v387 = vunpack.c.l.b16 %v130
  %v388 = vunpack.c.h.b16 %v130
  %v389 = vunpack.c.l.b16 %v131
  %v390 = vunpack.c.h.b16 %v131
  %v391 = vunpack.c.l.b16 %v132
  %v392 = vunpack.c.h.b16 %v132
  %v393 = vunpack.c.l.b16 %v133
  %v394 = vunpack.c.h.b16 %v133
  %v395 = vunpack.c.l.b16 %v134
  %v396 = vunpack.c.h.b16 %v134
  %v397 = vunpack.c.l.b16 %v135
  %v398 = vunpack.c.h.b16 %v135
  %v399 = vunpack.c.l.b16 %v136
  %v400 = vunpack.c.h.b16 %v136
  %v401 = vunpack.c.l.b16 %v137
  %v402 = vunpack.c.h.b16 %v137
  %v403 = vunpack.c.l.b16 %v138
  %v404 = vunpack.c.h.b16 %v138
  %v405 = vunpack.c.l.b16 %v139
  %v406 = vunpack.c.h.b16 %v139
  %v407 = vunpack.c.l.b16 %v140
  %v408 = vunpack.c.h.b16 %v140
  %v409 = vunpack.c.l.b16 %v141
  %v410 = vunpack.c.h.b16 %v141
  %v411 = vunpack.c.l.b16 %v142
  %v412 = vunpack.c.h.b16 %v142
  %v413 = vunpack.c.l.b16 %v143
  %v414 = vunpack.c.h.b16 %v143
  %v415 = vunpack.c.l.b16 %v144
  %v416 = vunpack.c.h.b16 %v144
  %v417 = vunpack.c.l.b16 %v145
  %v418 = vunpack.c.h.b16 %v145
  %v419 = vunpack.c.l.b16 %v146
  %v420 = vunpack.c.h.b16 %v146
  %v421 = vunpack.c.l.b16 %v147
  %v422 = vunpack.c.h.b16 %v147
  %v423 = vpack.c.b16 %v297, %v295
  %v424 = vpack.c.b16 %v298, %v296
  %v425 = vpack.c.b16 %v301, %v299
  %v426 = vpack.c.b16 %v302, %v300
  %v427 = vpack.c.b16 %v305, %v303
  %v428 = vpack.c.b16 %v306, %v304
  %v429 = vpack.c.b16 %v309, %v307
  %v430 = vpack.c.b16 %v310, %v308
  %v431 = vpack.c.b16 %v313, %v311
  %v432 = vpack.c.b16 %v314, %v312
  %v433 = vpack.c.b16 %v317, %v315
  %v434 = vpack.c.b16 %v318, %v316
  %v435 = vpack.c.b16 %v321, %v319
  %v436 = vpack.c.b16 %v322, %v320
  %v437 = vpack.c.b16 %v325, %v323
  %v438 = vpack.c.b16 %v326, %v324
  %v439 = vpack.c.b16 %v329, %v327
  %v440 = vpack.c.b16 %v330, %v328
  %v441 = vpack.c.b16 %v333, %v331
  %v442 = vpack.c.b16 %v334, %v332
  %v443 = vpack.c.b16 %v337, %v335
  %v444 = vpack.c.b16 %v338, %v336
  %v445 = vpack.c.b16 %v341, %v339
  %v446 = vpack.c.b16 %v342, %v340
  %v447 = vpack.c.b16 %v345, %v343
  %v448 = vpack.c.b16 %v346, %v344
  %v449 = vpack.c.b16 %v349, %v347
  %v450 = vpack.c.b16 %v350, %v348
  %v451 = vpack.c.b16 %v353, %v351
  %v452 = vpack.c.b16 %v354, %v352
  %v453 = vpack.c.b16 %v357, %v355
  %v454 = vpack.c.b16 %v358, %v356
  %v455 = vpack.c.b16 %v361, %v359
  %v456 = vpack.c.b16 %v362, %v360
  %v457 = vpack.c.b16 %v365, %v363
  %v458 = vpack.c.b16 %v366, %v364
  %v459 = vpack.c.b16 %v369, %v367
  %v460 = vpack.c.b16 %v370, %v368
  %v461 = vpack.c.b16 %v373, %v371
  %v462 = vpack.c.b16 %v374, %v372
  %v463 = vpack.c.b16 %v377, %v375
  %v464 = vpack.c.b16 %v378, %v376
  %v465 = vpack.c.b16 %v381, %v379
  %v466 = vpack.c.b16 %v382, %v380
  %v467 = vpack.c.b16 %v385, %v383
  %v468 = vpack.c.b16 %v386, %v384
  %v469 = vpack.c.b16 %v389, %v387
  %v470 = vpack.c.b16 %v390, %v388
  %v471 = vpack.c.b16 %v393, %v391
  %v472 = vpack.c.b16 %v394, %v392
  %v473 = vpack.c.b16 %v397, %v395
  %v474 = vpack.c.b16 %v398, %v396
  %v475 = vpack.c.b16 %v401, %v399
  %v476 = vpack.c.b16 %v402, %v400
  %v477 = vpack.c.b16 %v405, %v403
  %v478 = vpack.c.b16 %v406, %v404
  %v479 = vpack.c.b16 %v409, %v407
  %v480 = vpack.c.b16 %v410, %v408
  %v481 = vpack.c.b16 %v413, %v411
  %v482 = vpack.c.b16 %v414, %v412
  %v483 = vpack.c.b16 %v417, %v415
  %v484 = vpack.c.b16 %v418, %v416
  %v485 = vpack.c.b16 %v421, %v419
  %v486 = vpack.c.b16 %v422, %v420
  %v538 = vunpack.c.l.b16 %v212
  %v539 = vunpack.c.l.b16 %v213
  %v540 = vunpack.c.l.b16 %v214
  %v541 = vunpack.c.l.b16 %v215
  %v542 = vunpack.c.l.b16 %v216
  %v543 = vunpack.c.l.b16 %v217
  %v544 = vunpack.c.l.b16 %v218
  %v545 = vunpack.c.l.b16 %v219
  %v546 = vunpack.c.l.b16 %v220
  %v547 = vunpack.c.l.b16 %v221
  %v548 = vunpack.c.l.b16 %v222
  %v549 = vunpack.c.l.b16 %v223
  %v550 = vunpack.c.l.b16 %v224
  %v551 = vunpack.c.l.b16 %v225
  %v552 = vunpack.c.l.b16 %v226
  %v553 = vunpack.c.l.b16 %v227
  %v554 = vunpack.c.l.b16 %v228
  %v555 = vunpack.c.l.b16 %v229
  %v556 = vunpack.c.l.b16 %v230
  %v557 = vpack.c.b16 %v539, %v538
  %v558 = vpack.c.b16 %v541, %v540
  %v559 = vpack.c.b16 %v543, %v542
  %v560 = vpack.c.b16 %v545, %v544
  %v561 = vpack.c.b16 %v547, %v546
  %v562 = vpack.c.b16 %v549, %v548
  %v563 = vpack.c.b16 %v551, %v550
  %v564 = vpack.c.b16 %v553, %v552
  %v565 = vpack.c.b16 %v555, %v554
  %v566 = vpack.c.b16 %v556, %v556
  %vm576 = vcmask 154624
  %v578 = vsel %vm576, %v424, 0
  %v581 = vsel %vm576, %v426, 0
  %v584 = vsel %vm576, %v428, 0
  %v587 = vsel %vm576, %v430, 0
  %v590 = vsel %vm576, %v432, 0
  %v593 = vsel %vm576, %v434, 0
  %v596 = vsel %vm576, %v436, 0
  %v599 = vsel %vm576, %v438, 0
  %v602 = vsel %vm576, %v440, 0
  %v605 = vsel %vm576, %v442, 0
  %v608 = vsel %vm576, %v444, 0
  %v611 = vsel %vm576, %v446, 0
  %v614 = vsel %vm576, %v448, 0
  %v617 = vsel %vm576, %v450, 0
  %v620 = vsel %vm576, %v452, 0
  %v623 = vsel %vm576, %v454, 0
  %v626 = vsel %vm576, %v456, 0
  %v629 = vsel %vm576, %v458, 0
  %v632 = vsel %vm576, %v460, 0
  %v635 = vsel %vm576, %v462, 0
  %v638 = vsel %vm576, %v464, 0
  %v641 = vsel %vm576, %v466, 0
  %v644 = vsel %vm576, %v468, 0
  %v647 = vsel %vm576, %v470, 0
  %v650 = vsel %vm576, %v472, 0
  %v653 = vsel %vm576, %v474, 0
  %v656 = vsel %vm576, %v476, 0
  %v659 = vsel %vm576, %v478, 0
  %v662 = vsel %vm576, %v480, 0
  %v665 = vsel %vm576, %v482, 0
  %v668 = vsel %vm576, %v484, 0
  %v671 = vsel %vm576, %v486, 0
  %vm673 = vcmask 1040384
  %vm674 = vcmask 1041408
  %v675 = vsel %vm673, 4294967295, 65535
  %v676 = vsel %vm674, %v675, 0
  %v678 = vand.u32 %v566, %v676
  %680 = vmatpush.bf16.msra.mxu0 %v564
  %681 = vmatpush.bf16.msra.mxu0 %v563
  %682 = vmatpush.bf16.msra.mxu0 %v562
  %683 = vmatpush.bf16.msra.mxu0 %v561
  %684 = vmatpush.bf16.msra.mxu0 %v560
  %685 = vmatpush.bf16.msra.mxu0 %v559
  %686 = vmatpush.bf16.msra.mxu0 %v558
  %687 = vmatpush.bf16.msra.mxu0 %v557
  %688 = vmatmul.bf16.gmra.mxu0 %v423
  %v689 = vpop.f32.mrf.mxu0
  %v690 = vadd.f32 0.0, %v689
  %v691 = vpop.f32.mrf.mxu0
  %v692 = vadd.f32 0.0, %v691
  %693 = vmatmul.bf16.gmra.mxu0 %v425
  %v694 = vpop.f32.mrf.mxu0
  %v695 = vadd.f32 0.0, %v694
  %v696 = vpop.f32.mrf.mxu0
  %v697 = vadd.f32 0.0, %v696
  %698 = vmatmul.bf16.gmra.mxu0 %v427
  %v699 = vpop.f32.mrf.mxu0
  %v700 = vadd.f32 0.0, %v699
  %v701 = vpop.f32.mrf.mxu0
  %v702 = vadd.f32 0.0, %v701
  %703 = vmatmul.bf16.gmra.mxu0 %v429
  %v704 = vpop.f32.mrf.mxu0
  %v705 = vadd.f32 0.0, %v704
  %v706 = vpop.f32.mrf.mxu0
  %v707 = vadd.f32 0.0, %v706
  %708 = vmatmul.bf16.gmra.mxu0 %v431
  %v709 = vpop.f32.mrf.mxu0
  %v710 = vadd.f32 0.0, %v709
  %v711 = vpop.f32.mrf.mxu0
  %v712 = vadd.f32 0.0, %v711
  %713 = vmatmul.bf16.gmra.mxu0 %v433
  %v714 = vpop.f32.mrf.mxu0
  %v715 = vadd.f32 0.0, %v714
  %v716 = vpop.f32.mrf.mxu0
  %v717 = vadd.f32 0.0, %v716
  %718 = vmatmul.bf16.gmra.mxu0 %v435
  %v719 = vpop.f32.mrf.mxu0
  %v720 = vadd.f32 0.0, %v719
  %v721 = vpop.f32.mrf.mxu0
  %v722 = vadd.f32 0.0, %v721
  %723 = vmatmul.bf16.gmra.mxu0 %v437
  %v724 = vpop.f32.mrf.mxu0
  %v725 = vadd.f32 0.0, %v724
  %v726 = vpop.f32.mrf.mxu0
  %v727 = vadd.f32 0.0, %v726
  %728 = vmatmul.bf16.gmra.mxu0 %v439
  %v729 = vpop.f32.mrf.mxu0
  %v730 = vadd.f32 0.0, %v729
  %v731 = vpop.f32.mrf.mxu0
  %v732 = vadd.f32 0.0, %v731
  %733 = vmatmul.bf16.gmra.mxu0 %v441
  %v734 = vpop.f32.mrf.mxu0
  %v735 = vadd.f32 0.0, %v734
  %v736 = vpop.f32.mrf.mxu0
  %v737 = vadd.f32 0.0, %v736
  %738 = vmatmul.bf16.gmra.mxu0 %v443
  %v739 = vpop.f32.mrf.mxu0
  %v740 = vadd.f32 0.0, %v739
  %v741 = vpop.f32.mrf.mxu0
  %v742 = vadd.f32 0.0, %v741
  %743 = vmatmul.bf16.gmra.mxu0 %v445
  %v744 = vpop.f32.mrf.mxu0
  %v745 = vadd.f32 0.0, %v744
  %v746 = vpop.f32.mrf.mxu0
  %v747 = vadd.f32 0.0, %v746
  %748 = vmatmul.bf16.gmra.mxu0 %v447
  %v749 = vpop.f32.mrf.mxu0
  %v750 = vadd.f32 0.0, %v749
  %v751 = vpop.f32.mrf.mxu0
  %v752 = vadd.f32 0.0, %v751
  %753 = vmatmul.bf16.gmra.mxu0 %v449
  %v754 = vpop.f32.mrf.mxu0
  %v755 = vadd.f32 0.0, %v754
  %v756 = vpop.f32.mrf.mxu0
  %v757 = vadd.f32 0.0, %v756
  %758 = vmatmul.bf16.gmra.mxu0 %v451
  %v759 = vpop.f32.mrf.mxu0
  %v760 = vadd.f32 0.0, %v759
  %v761 = vpop.f32.mrf.mxu0
  %v762 = vadd.f32 0.0, %v761
  %763 = vmatmul.bf16.gmra.mxu0 %v453
  %v764 = vpop.f32.mrf.mxu0
  %v765 = vadd.f32 0.0, %v764
  %v766 = vpop.f32.mrf.mxu0
  %v767 = vadd.f32 0.0, %v766
  %768 = vmatmul.bf16.gmra.mxu0 %v455
  %v769 = vpop.f32.mrf.mxu0
  %v770 = vadd.f32 0.0, %v769
  %v771 = vpop.f32.mrf.mxu0
  %v772 = vadd.f32 0.0, %v771
  %773 = vmatmul.bf16.gmra.mxu0 %v457
  %v774 = vpop.f32.mrf.mxu0
  %v775 = vadd.f32 0.0, %v774
  %v776 = vpop.f32.mrf.mxu0
  %v777 = vadd.f32 0.0, %v776
  %778 = vmatmul.bf16.gmra.mxu0 %v459
  %v779 = vpop.f32.mrf.mxu0
  %v780 = vadd.f32 0.0, %v779
  %v781 = vpop.f32.mrf.mxu0
  %v782 = vadd.f32 0.0, %v781
  %783 = vmatmul.bf16.gmra.mxu0 %v461
  %v784 = vpop.f32.mrf.mxu0
  %v785 = vadd.f32 0.0, %v784
  %v786 = vpop.f32.mrf.mxu0
  %v787 = vadd.f32 0.0, %v786
  %788 = vmatmul.bf16.gmra.mxu0 %v463
  %v789 = vpop.f32.mrf.mxu0
  %v790 = vadd.f32 0.0, %v789
  %v791 = vpop.f32.mrf.mxu0
  %v792 = vadd.f32 0.0, %v791
  %793 = vmatmul.bf16.gmra.mxu0 %v465
  %v794 = vpop.f32.mrf.mxu0
  %v795 = vadd.f32 0.0, %v794
  %v796 = vpop.f32.mrf.mxu0
  %v797 = vadd.f32 0.0, %v796
  %798 = vmatmul.bf16.gmra.mxu0 %v467
  %v799 = vpop.f32.mrf.mxu0
  %v800 = vadd.f32 0.0, %v799
  %v801 = vpop.f32.mrf.mxu0
  %v802 = vadd.f32 0.0, %v801
  %803 = vmatmul.bf16.gmra.mxu0 %v469
  %v804 = vpop.f32.mrf.mxu0
  %v805 = vadd.f32 0.0, %v804
  %v806 = vpop.f32.mrf.mxu0
  %v807 = vadd.f32 0.0, %v806
  %808 = vmatmul.bf16.gmra.mxu0 %v471
  %v809 = vpop.f32.mrf.mxu0
  %v810 = vadd.f32 0.0, %v809
  %v811 = vpop.f32.mrf.mxu0
  %v812 = vadd.f32 0.0, %v811
  %813 = vmatmul.bf16.gmra.mxu0 %v473
  %v814 = vpop.f32.mrf.mxu0
  %v815 = vadd.f32 0.0, %v814
  %v816 = vpop.f32.mrf.mxu0
  %v817 = vadd.f32 0.0, %v816
  %818 = vmatmul.bf16.gmra.mxu0 %v475
  %v819 = vpop.f32.mrf.mxu0
  %v820 = vadd.f32 0.0, %v819
  %v821 = vpop.f32.mrf.mxu0
  %v822 = vadd.f32 0.0, %v821
  %823 = vmatmul.bf16.gmra.mxu0 %v477
  %v824 = vpop.f32.mrf.mxu0
  %v825 = vadd.f32 0.0, %v824
  %v826 = vpop.f32.mrf.mxu0
  %v827 = vadd.f32 0.0, %v826
  %828 = vmatmul.bf16.gmra.mxu0 %v479
  %v829 = vpop.f32.mrf.mxu0
  %v830 = vadd.f32 0.0, %v829
  %v831 = vpop.f32.mrf.mxu0
  %v832 = vadd.f32 0.0, %v831
  %833 = vmatmul.bf16.gmra.mxu0 %v481
  %v834 = vpop.f32.mrf.mxu0
  %v835 = vadd.f32 0.0, %v834
  %v836 = vpop.f32.mrf.mxu0
  %v837 = vadd.f32 0.0, %v836
  %838 = vmatmul.bf16.gmra.mxu0 %v483
  %v839 = vpop.f32.mrf.mxu0
  %v840 = vadd.f32 0.0, %v839
  %v841 = vpop.f32.mrf.mxu0
  %v842 = vadd.f32 0.0, %v841
  %843 = vmatmul.bf16.gmra.mxu0 %v485
  %v844 = vpop.f32.mrf.mxu0
  %v845 = vadd.f32 0.0, %v844
  %v846 = vpop.f32.mrf.mxu0
  %v847 = vadd.f32 0.0, %v846
  %848 = vdwg.mxu0
  %849 = vmatpush.bf16.msra.mxu0 0
  %850 = vmatpush.bf16.msra.mxu0 0
  %851 = vmatpush.bf16.msra.mxu0 0
  %852 = vmatpush.bf16.msra.mxu0 0
  %853 = vmatpush.bf16.msra.mxu0 0
  %854 = vmatpush.bf16.msra.mxu0 0
  %855 = vmatpush.bf16.msra.mxu0 %v678
  %856 = vmatpush.bf16.msra.mxu0 %v565
  %857 = vmatmul.bf16.gmra.mxu0 %v578
  %v858 = vpop.f32.mrf.mxu0
  %v859 = vadd.f32 %v690, %v858
  %v860 = vpop.f32.mrf.mxu0
  %v861 = vadd.f32 %v692, %v860
  %862 = vmatmul.bf16.gmra.mxu0 %v581
  %v863 = vpop.f32.mrf.mxu0
  %v864 = vadd.f32 %v695, %v863
  %v865 = vpop.f32.mrf.mxu0
  %v866 = vadd.f32 %v697, %v865
  %867 = vmatmul.bf16.gmra.mxu0 %v584
  %v868 = vpop.f32.mrf.mxu0
  %v869 = vadd.f32 %v700, %v868
  %v870 = vpop.f32.mrf.mxu0
  %v871 = vadd.f32 %v702, %v870
  %872 = vmatmul.bf16.gmra.mxu0 %v587
  %v873 = vpop.f32.mrf.mxu0
  %v874 = vadd.f32 %v705, %v873
  %v875 = vpop.f32.mrf.mxu0
  %v876 = vadd.f32 %v707, %v875
  %877 = vmatmul.bf16.gmra.mxu0 %v590
  %v878 = vpop.f32.mrf.mxu0
  %v879 = vadd.f32 %v710, %v878
  %v880 = vpop.f32.mrf.mxu0
  %v881 = vadd.f32 %v712, %v880
  %882 = vmatmul.bf16.gmra.mxu0 %v593
  %v883 = vpop.f32.mrf.mxu0
  %v884 = vadd.f32 %v715, %v883
  %v885 = vpop.f32.mrf.mxu0
  %v886 = vadd.f32 %v717, %v885
  %887 = vmatmul.bf16.gmra.mxu0 %v596
  %v888 = vpop.f32.mrf.mxu0
  %v889 = vadd.f32 %v720, %v888
  %v890 = vpop.f32.mrf.mxu0
  %v891 = vadd.f32 %v722, %v890
  %892 = vmatmul.bf16.gmra.mxu0 %v599
  %v893 = vpop.f32.mrf.mxu0
  %v894 = vadd.f32 %v725, %v893
  %v895 = vpop.f32.mrf.mxu0
  %v896 = vadd.f32 %v727, %v895
  %897 = vmatmul.bf16.gmra.mxu0 %v602
  %v898 = vpop.f32.mrf.mxu0
  %v899 = vadd.f32 %v730, %v898
  %v900 = vpop.f32.mrf.mxu0
  %v901 = vadd.f32 %v732, %v900
  %902 = vmatmul.bf16.gmra.mxu0 %v605
  %v903 = vpop.f32.mrf.mxu0
  %v904 = vadd.f32 %v735, %v903
  %v905 = vpop.f32.mrf.mxu0
  %v906 = vadd.f32 %v737, %v905
  %907 = vmatmul.bf16.gmra.mxu0 %v608
  %v908 = vpop.f32.mrf.mxu0
  %v909 = vadd.f32 %v740, %v908
  %v910 = vpop.f32.mrf.mxu0
  %v911 = vadd.f32 %v742, %v910
  %912 = vmatmul.bf16.gmra.mxu0 %v611
  %v913 = vpop.f32.mrf.mxu0
  %v914 = vadd.f32 %v745, %v913
  %v915 = vpop.f32.mrf.mxu0
  %v916 = vadd.f32 %v747, %v915
  %917 = vmatmul.bf16.gmra.mxu0 %v614
  %v918 = vpop.f32.mrf.mxu0
  %v919 = vadd.f32 %v750, %v918
  %v920 = vpop.f32.mrf.mxu0
  %v921 = vadd.f32 %v752, %v920
  %922 = vmatmul.bf16.gmra.mxu0 %v617
  %v923 = vpop.f32.mrf.mxu0
  %v924 = vadd.f32 %v755, %v923
  %v925 = vpop.f32.mrf.mxu0
  %v926 = vadd.f32 %v757, %v925
  %927 = vmatmul.bf16.gmra.mxu0 %v620
  %v928 = vpop.f32.mrf.mxu0
  %v929 = vadd.f32 %v760, %v928
  %v930 = vpop.f32.mrf.mxu0
  %v931 = vadd.f32 %v762, %v930
  %932 = vmatmul.bf16.gmra.mxu0 %v623
  %v933 = vpop.f32.mrf.mxu0
  %v934 = vadd.f32 %v765, %v933
  %v935 = vpop.f32.mrf.mxu0
  %v936 = vadd.f32 %v767, %v935
  %937 = vmatmul.bf16.gmra.mxu0 %v626
  %v938 = vpop.f32.mrf.mxu0
  %v939 = vadd.f32 %v770, %v938
  %v940 = vpop.f32.mrf.mxu0
  %v941 = vadd.f32 %v772, %v940
  %942 = vmatmul.bf16.gmra.mxu0 %v629
  %v943 = vpop.f32.mrf.mxu0
  %v944 = vadd.f32 %v775, %v943
  %v945 = vpop.f32.mrf.mxu0
  %v946 = vadd.f32 %v777, %v945
  %947 = vmatmul.bf16.gmra.mxu0 %v632
  %v948 = vpop.f32.mrf.mxu0
  %v949 = vadd.f32 %v780, %v948
  %v950 = vpop.f32.mrf.mxu0
  %v951 = vadd.f32 %v782, %v950
  %952 = vmatmul.bf16.gmra.mxu0 %v635
  %v953 = vpop.f32.mrf.mxu0
  %v954 = vadd.f32 %v785, %v953
  %v955 = vpop.f32.mrf.mxu0
  %v956 = vadd.f32 %v787, %v955
  %957 = vmatmul.bf16.gmra.mxu0 %v638
  %v958 = vpop.f32.mrf.mxu0
  %v959 = vadd.f32 %v790, %v958
  %v960 = vpop.f32.mrf.mxu0
  %v961 = vadd.f32 %v792, %v960
  %962 = vmatmul.bf16.gmra.mxu0 %v641
  %v963 = vpop.f32.mrf.mxu0
  %v964 = vadd.f32 %v795, %v963
  %v965 = vpop.f32.mrf.mxu0
  %v966 = vadd.f32 %v797, %v965
  %967 = vmatmul.bf16.gmra.mxu0 %v644
  %v968 = vpop.f32.mrf.mxu0
  %v969 = vadd.f32 %v800, %v968
  %v970 = vpop.f32.mrf.mxu0
  %v971 = vadd.f32 %v802, %v970
  %972 = vmatmul.bf16.gmra.mxu0 %v647
  %v973 = vpop.f32.mrf.mxu0
  %v974 = vadd.f32 %v805, %v973
  %v975 = vpop.f32.mrf.mxu0
  %v976 = vadd.f32 %v807, %v975
  %977 = vmatmul.bf16.gmra.mxu0 %v650
  %v978 = vpop.f32.mrf.mxu0
  %v979 = vadd.f32 %v810, %v978
  %v980 = vpop.f32.mrf.mxu0
  %v981 = vadd.f32 %v812, %v980
  %982 = vmatmul.bf16.gmra.mxu0 %v653
  %v983 = vpop.f32.mrf.mxu0
  %v984 = vadd.f32 %v815, %v983
  %v985 = vpop.f32.mrf.mxu0
  %v986 = vadd.f32 %v817, %v985
  %987 = vmatmul.bf16.gmra.mxu0 %v656
  %v988 = vpop.f32.mrf.mxu0
  %v989 = vadd.f32 %v820, %v988
  %v990 = vpop.f32.mrf.mxu0
  %v991 = vadd.f32 %v822, %v990
  %992 = vmatmul.bf16.gmra.mxu0 %v659
  %v993 = vpop.f32.mrf.mxu0
  %v994 = vadd.f32 %v825, %v993
  %v995 = vpop.f32.mrf.mxu0
  %v996 = vadd.f32 %v827, %v995
  %997 = vmatmul.bf16.gmra.mxu0 %v662
  %v998 = vpop.f32.mrf.mxu0
  %v999 = vadd.f32 %v830, %v998
  %v1000 = vpop.f32.mrf.mxu0
  %v1001 = vadd.f32 %v832, %v1000
  %1002 = vmatmul.bf16.gmra.mxu0 %v665
  %v1003 = vpop.f32.mrf.mxu0
  %v1004 = vadd.f32 %v835, %v1003
  %v1005 = vpop.f32.mrf.mxu0
  %v1006 = vadd.f32 %v837, %v1005
  %1007 = vmatmul.bf16.gmra.mxu0 %v668
  %v1008 = vpop.f32.mrf.mxu0
  %v1009 = vadd.f32 %v840, %v1008
  %v1010 = vpop.f32.mrf.mxu0
  %v1011 = vadd.f32 %v842, %v1010
  %1012 = vmatmul.bf16.gmra.mxu0 %v671
  %v1013 = vpop.f32.mrf.mxu0
  %v1014 = vadd.f32 %v845, %v1013
  %v1015 = vpop.f32.mrf.mxu0
  %v1016 = vadd.f32 %v847, %v1015
  %1017 = vdwg.mxu0
  %v1018 = vadd.f32 %v148, %v859
  %v1019 = vadd.f32 %v149, %v861
  %v1020 = vadd.f32 %v150, %v864
  %v1021 = vadd.f32 %v151, %v866
  %v1022 = vadd.f32 %v152, %v869
  %v1023 = vadd.f32 %v153, %v871
  %v1024 = vadd.f32 %v154, %v874
  %v1025 = vadd.f32 %v155, %v876
  %v1026 = vadd.f32 %v156, %v879
  %v1027 = vadd.f32 %v157, %v881
  %v1028 = vadd.f32 %v158, %v884
  %v1029 = vadd.f32 %v159, %v886
  %v1030 = vadd.f32 %v160, %v889
  %v1031 = vadd.f32 %v161, %v891
  %v1032 = vadd.f32 %v162, %v894
  %v1033 = vadd.f32 %v163, %v896
  %v1034 = vadd.f32 %v164, %v899
  %v1035 = vadd.f32 %v165, %v901
  %v1036 = vadd.f32 %v166, %v904
  %v1037 = vadd.f32 %v167, %v906
  %v1038 = vadd.f32 %v168, %v909
  %v1039 = vadd.f32 %v169, %v911
  %v1040 = vadd.f32 %v170, %v914
  %v1041 = vadd.f32 %v171, %v916
  %v1042 = vadd.f32 %v172, %v919
  %v1043 = vadd.f32 %v173, %v921
  %v1044 = vadd.f32 %v174, %v924
  %v1045 = vadd.f32 %v175, %v926
  %v1046 = vadd.f32 %v176, %v929
  %v1047 = vadd.f32 %v177, %v931
  %v1048 = vadd.f32 %v178, %v934
  %v1049 = vadd.f32 %v179, %v936
  %v1050 = vadd.f32 %v180, %v939
  %v1051 = vadd.f32 %v181, %v941
  %v1052 = vadd.f32 %v182, %v944
  %v1053 = vadd.f32 %v183, %v946
  %v1054 = vadd.f32 %v184, %v949
  %v1055 = vadd.f32 %v185, %v951
  %v1056 = vadd.f32 %v186, %v954
  %v1057 = vadd.f32 %v187, %v956
  %v1058 = vadd.f32 %v188, %v959
  %v1059 = vadd.f32 %v189, %v961
  %v1060 = vadd.f32 %v190, %v964
  %v1061 = vadd.f32 %v191, %v966
  %v1062 = vadd.f32 %v192, %v969
  %v1063 = vadd.f32 %v193, %v971
  %v1064 = vadd.f32 %v194, %v974
  %v1065 = vadd.f32 %v195, %v976
  %v1066 = vadd.f32 %v196, %v979
  %v1067 = vadd.f32 %v197, %v981
  %v1068 = vadd.f32 %v198, %v984
  %v1069 = vadd.f32 %v199, %v986
  %v1070 = vadd.f32 %v200, %v989
  %v1071 = vadd.f32 %v201, %v991
  %v1072 = vadd.f32 %v202, %v994
  %v1073 = vadd.f32 %v203, %v996
  %v1074 = vadd.f32 %v204, %v999
  %v1075 = vadd.f32 %v205, %v1001
  %v1076 = vadd.f32 %v206, %v1004
  %v1077 = vadd.f32 %v207, %v1006
  %v1078 = vadd.f32 %v208, %v1009
  %v1079 = vadd.f32 %v209, %v1011
  %v1080 = vadd.f32 %v210, %v1014
  %v1081 = vadd.f32 %v211, %v1016
  %vm1082 = vcmask 64512
  %1083 = vst.msk [vmem:[#allocation2] sm:$0xff] %vm1082, %v1018
  %1084 = vst.msk [vmem:[#allocation2 + $0x8] sm:$0xff] %vm1082, %v1019
  %1085 = vst.msk [vmem:[#allocation2 + $0x10] sm:$0xff] %vm1082, %v1020
  %1086 = vst.msk [vmem:[#allocation2 + $0x18] sm:$0xff] %vm1082, %v1021
  %1087 = vst.msk [vmem:[#allocation2 + $0x20] sm:$0xff] %vm1082, %v1022
  %1088 = vst.msk [vmem:[#allocation2 + $0x28] sm:$0xff] %vm1082, %v1023
  %1089 = vst.msk [vmem:[#allocation2 + $0x30] sm:$0xff] %vm1082, %v1024
  %1090 = vst.msk [vmem:[#allocation2 + $0x38] sm:$0xff] %vm1082, %v1025
  %1091 = vst.msk [vmem:[#allocation2 + $0x40] sm:$0xff] %vm1082, %v1026
  %1092 = vst.msk [vmem:[#allocation2 + $0x48] sm:$0xff] %vm1082, %v1027
  %1093 = vst.msk [vmem:[#allocation2 + $0x50] sm:$0xff] %vm1082, %v1028
  %1094 = vst.msk [vmem:[#allocation2 + $0x58] sm:$0xff] %vm1082, %v1029
  %1095 = vst.msk [vmem:[#allocation2 + $0x60] sm:$0xff] %vm1082, %v1030
  %1096 = vst.msk [vmem:[#allocation2 + $0x68] sm:$0xff] %vm1082, %v1031
  %1097 = vst.msk [vmem:[#allocation2 + $0x70] sm:$0xff] %vm1082, %v1032
  %1098 = vst.msk [vmem:[#allocation2 + $0x78] sm:$0xff] %vm1082, %v1033
  %1099 = vst.msk [vmem:[#allocation2 + $0x80] sm:$0xff] %vm1082, %v1034
  %1100 = vst.msk [vmem:[#allocation2 + $0x88] sm:$0xff] %vm1082, %v1035
  %1101 = vst.msk [vmem:[#allocation2 + $0x90] sm:$0xff] %vm1082, %v1036
  %1102 = vst.msk [vmem:[#allocation2 + $0x98] sm:$0xff] %vm1082, %v1037
  %1103 = vst.msk [vmem:[#allocation2 + $0xa0] sm:$0xff] %vm1082, %v1038
  %1104 = vst.msk [vmem:[#allocation2 + $0xa8] sm:$0xff] %vm1082, %v1039
  %1105 = vst.msk [vmem:[#allocation2 + $0xb0] sm:$0xff] %vm1082, %v1040
  %1106 = vst.msk [vmem:[#allocation2 + $0xb8] sm:$0xff] %vm1082, %v1041
  %1107 = vst.msk [vmem:[#allocation2 + $0xc0] sm:$0xff] %vm1082, %v1042
  %1108 = vst.msk [vmem:[#allocation2 + $0xc8] sm:$0xff] %vm1082, %v1043
  %1109 = vst.msk [vmem:[#allocation2 + $0xd0] sm:$0xff] %vm1082, %v1044
  %1110 = vst.msk [vmem:[#allocation2 + $0xd8] sm:$0xff] %vm1082, %v1045
  %1111 = vst.msk [vmem:[#allocation2 + $0xe0] sm:$0xff] %vm1082, %v1046
  %1112 = vst.msk [vmem:[#allocation2 + $0xe8] sm:$0xff] %vm1082, %v1047
  %1113 = vst.msk [vmem:[#allocation2 + $0xf0] sm:$0xff] %vm1082, %v1048
  %1114 = vst.msk [vmem:[#allocation2 + $0xf8] sm:$0xff] %vm1082, %v1049
  %1115 = vst.msk [vmem:[#allocation2 + $0x100] sm:$0xff] %vm1082, %v1050
  %1116 = vst.msk [vmem:[#allocation2 + $0x108] sm:$0xff] %vm1082, %v1051
  %1117 = vst.msk [vmem:[#allocation2 + $0x110] sm:$0xff] %vm1082, %v1052
  %1118 = vst.msk [vmem:[#allocation2 + $0x118] sm:$0xff] %vm1082, %v1053
  %1119 = vst.msk [vmem:[#allocation2 + $0x120] sm:$0xff] %vm1082, %v1054
  %1120 = vst.msk [vmem:[#allocation2 + $0x128] sm:$0xff] %vm1082, %v1055
  %1121 = vst.msk [vmem:[#allocation2 + $0x130] sm:$0xff] %vm1082, %v1056
  %1122 = vst.msk [vmem:[#allocation2 + $0x138] sm:$0xff] %vm1082, %v1057
  %1123 = vst.msk [vmem:[#allocation2 + $0x140] sm:$0xff] %vm1082, %v1058
  %1124 = vst.msk [vmem:[#allocation2 + $0x148] sm:$0xff] %vm1082, %v1059
  %1125 = vst.msk [vmem:[#allocation2 + $0x150] sm:$0xff] %vm1082, %v1060
  %1126 = vst.msk [vmem:[#allocation2 + $0x158] sm:$0xff] %vm1082, %v1061
  %1127 = vst.msk [vmem:[#allocation2 + $0x160] sm:$0xff] %vm1082, %v1062
  %1128 = vst.msk [vmem:[#allocation2 + $0x168] sm:$0xff] %vm1082, %v1063
  %1129 = vst.msk [vmem:[#allocation2 + $0x170] sm:$0xff] %vm1082, %v1064
  %1130 = vst.msk [vmem:[#allocation2 + $0x178] sm:$0xff] %vm1082, %v1065
  %1131 = vst.msk [vmem:[#allocation2 + $0x180] sm:$0xff] %vm1082, %v1066
  %1132 = vst.msk [vmem:[#allocation2 + $0x188] sm:$0xff] %vm1082, %v1067
  %1133 = vst.msk [vmem:[#allocation2 + $0x190] sm:$0xff] %vm1082, %v1068
  %1134 = vst.msk [vmem:[#allocation2 + $0x198] sm:$0xff] %vm1082, %v1069
  %1135 = vst.msk [vmem:[#allocation2 + $0x1a0] sm:$0xff] %vm1082, %v1070
  %1136 = vst.msk [vmem:[#allocation2 + $0x1a8] sm:$0xff] %vm1082, %v1071
  %1137 = vst.msk [vmem:[#allocation2 + $0x1b0] sm:$0xff] %vm1082, %v1072
  %1138 = vst.msk [vmem:[#allocation2 + $0x1b8] sm:$0xff] %vm1082, %v1073
  %1139 = vst.msk [vmem:[#allocation2 + $0x1c0] sm:$0xff] %vm1082, %v1074
  %1140 = vst.msk [vmem:[#allocation2 + $0x1c8] sm:$0xff] %vm1082, %v1075
  %1141 = vst.msk [vmem:[#allocation2 + $0x1d0] sm:$0xff] %vm1082, %v1076
  %1142 = vst.msk [vmem:[#allocation2 + $0x1d8] sm:$0xff] %vm1082, %v1077
  %1143 = vst.msk [vmem:[#allocation2 + $0x1e0] sm:$0xff] %vm1082, %v1078
  %1144 = vst.msk [vmem:[#allocation2 + $0x1e8] sm:$0xff] %vm1082, %v1079
  %1145 = vst.msk [vmem:[#allocation2 + $0x1f0] sm:$0xff] %vm1082, %v1080
  %1146 = vst.msk [vmem:[#allocation2 + $0x1f8] sm:$0xff] %vm1082, %v1081
  // Predicated region
  $region18: #{_lambda_.29} parent=0 // pred_check
    %p1147 = pneg %p15
  $region19: #{_lambda_.29} parent=0 // pred_check_branch
    %1149 = sbr.rel (%p1147) target = $region21
  $region20: #{_lambda_.29} parent=0 // pred_region
    %v1150 = vld [vmem:[#allocation2] sm:$0xff]
    %v1151 = vld [vmem:[#allocation2 + $0x8] sm:$0xff]
    %v1152 = vld [vmem:[#allocation2 + $0x10] sm:$0xff]
    %v1153 = vld [vmem:[#allocation2 + $0x18] sm:$0xff]
    %v1154 = vld [vmem:[#allocation2 + $0x20] sm:$0xff]
    %v1155 = vld [vmem:[#allocation2 + $0x28] sm:$0xff]
    %v1156 = vld [vmem:[#allocation2 + $0x30] sm:$0xff]
    %v1157 = vld [vmem:[#allocation2 + $0x38] sm:$0xff]
    %v1158 = vld [vmem:[#allocation2 + $0x40] sm:$0xff]
    %v1159 = vld [vmem:[#allocation2 + $0x48] sm:$0xff]
    %v1160 = vld [vmem:[#allocation2 + $0x50] sm:$0xff]
    %v1161 = vld [vmem:[#allocation2 + $0x58] sm:$0xff]
    %v1162 = vld [vmem:[#allocation2 + $0x60] sm:$0xff]
    %v1163 = vld [vmem:[#allocation2 + $0x68] sm:$0xff]
    %v1164 = vld [vmem:[#allocation2 + $0x70] sm:$0xff]
    %v1165 = vld [vmem:[#allocation2 + $0x78] sm:$0xff]
    %v1166 = vld [vmem:[#allocation2 + $0x80] sm:$0xff]
    %v1167 = vld [vmem:[#allocation2 + $0x88] sm:$0xff]
    %v1168 = vld [vmem:[#allocation2 + $0x90] sm:$0xff]
    %v1169 = vld [vmem:[#allocation2 + $0x98] sm:$0xff]
    %v1170 = vld [vmem:[#allocation2 + $0xa0] sm:$0xff]
    %v1171 = vld [vmem:[#allocation2 + $0xa8] sm:$0xff]
    %v1172 = vld [vmem:[#allocation2 + $0xb0] sm:$0xff]
    %v1173 = vld [vmem:[#allocation2 + $0xb8] sm:$0xff]
    %v1174 = vld [vmem:[#allocation2 + $0xc0] sm:$0xff]
    %v1175 = vld [vmem:[#allocation2 + $0xc8] sm:$0xff]
    %v1176 = vld [vmem:[#allocation2 + $0xd0] sm:$0xff]
    %v1177 = vld [vmem:[#allocation2 + $0xd8] sm:$0xff]
    %v1178 = vld [vmem:[#allocation2 + $0xe0] sm:$0xff]
    %v1179 = vld [vmem:[#allocation2 + $0xe8] sm:$0xff]
    %v1180 = vld [vmem:[#allocation2 + $0xf0] sm:$0xff]
    %v1181 = vld [vmem:[#allocation2 + $0xf8] sm:$0xff]
    %v1182 = vld [vmem:[#allocation2 + $0x100] sm:$0xff]
    %v1183 = vld [vmem:[#allocation2 + $0x108] sm:$0xff]
    %v1184 = vld [vmem:[#allocation2 + $0x110] sm:$0xff]
    %v1185 = vld [vmem:[#allocation2 + $0x118] sm:$0xff]
    %v1186 = vld [vmem:[#allocation2 + $0x120] sm:$0xff]
    %v1187 = vld [vmem:[#allocation2 + $0x128] sm:$0xff]
    %v1188 = vld [vmem:[#allocation2 + $0x130] sm:$0xff]
    %v1189 = vld [vmem:[#allocation2 + $0x138] sm:$0xff]
    %v1190 = vld [vmem:[#allocation2 + $0x140] sm:$0xff]
    %v1191 = vld [vmem:[#allocation2 + $0x148] sm:$0xff]
    %v1192 = vld [vmem:[#allocation2 + $0x150] sm:$0xff]
    %v1193 = vld [vmem:[#allocation2 + $0x158] sm:$0xff]
    %v1194 = vld [vmem:[#allocation2 + $0x160] sm:$0xff]
    %v1195 = vld [vmem:[#allocation2 + $0x168] sm:$0xff]
    %v1196 = vld [vmem:[#allocation2 + $0x170] sm:$0xff]
    %v1197 = vld [vmem:[#allocation2 + $0x178] sm:$0xff]
    %v1198 = vld [vmem:[#allocation2 + $0x180] sm:$0xff]
    %v1199 = vld [vmem:[#allocation2 + $0x188] sm:$0xff]
    %v1200 = vld [vmem:[#allocation2 + $0x190] sm:$0xff]
    %v1201 = vld [vmem:[#allocation2 + $0x198] sm:$0xff]
    %v1202 = vld [vmem:[#allocation2 + $0x1a0] sm:$0xff]
    %v1203 = vld [vmem:[#allocation2 + $0x1a8] sm:$0xff]
    %v1204 = vld [vmem:[#allocation2 + $0x1b0] sm:$0xff]
    %v1205 = vld [vmem:[#allocation2 + $0x1b8] sm:$0xff]
    %v1206 = vld [vmem:[#allocation2 + $0x1c0] sm:$0xff]
    %v1207 = vld [vmem:[#allocation2 + $0x1c8] sm:$0xff]
    %v1208 = vld [vmem:[#allocation2 + $0x1d0] sm:$0xff]
    %v1209 = vld [vmem:[#allocation2 + $0x1d8] sm:$0xff]
    %v1210 = vld [vmem:[#allocation2 + $0x1e0] sm:$0xff]
    %v1211 = vld [vmem:[#allocation2 + $0x1e8] sm:$0xff]
    %v1212 = vld [vmem:[#allocation2 + $0x1f0] sm:$0xff]
    %v1213 = vld [vmem:[#allocation2 + $0x1f8] sm:$0xff]
    %v1214 = vld [vmem:[%s2] sm:$0x1]
    %v1216 = vperm.slane %v1214, 0
    %v1218 = vadd.f32 %v1150, %v1216
    %v1219 = vadd.f32 %v1151, %v1216
    %v1220 = vadd.f32 %v1152, %v1216
    %v1221 = vadd.f32 %v1153, %v1216
    %v1222 = vadd.f32 %v1154, %v1216
    %v1223 = vadd.f32 %v1155, %v1216
    %v1224 = vadd.f32 %v1156, %v1216
    %v1225 = vadd.f32 %v1157, %v1216
    %v1226 = vadd.f32 %v1158, %v1216
    %v1227 = vadd.f32 %v1159, %v1216
    %v1228 = vadd.f32 %v1160, %v1216
    %v1229 = vadd.f32 %v1161, %v1216
    %v1230 = vadd.f32 %v1162, %v1216
    %v1231 = vadd.f32 %v1163, %v1216
    %v1232 = vadd.f32 %v1164, %v1216
    %v1233 = vadd.f32 %v1165, %v1216
    %v1234 = vadd.f32 %v1166, %v1216
    %v1235 = vadd.f32 %v1167, %v1216
    %v1236 = vadd.f32 %v1168, %v1216
    %v1237 = vadd.f32 %v1169, %v1216
    %v1238 = vadd.f32 %v1170, %v1216
    %v1239 = vadd.f32 %v1171, %v1216
    %v1240 = vadd.f32 %v1172, %v1216
    %v1241 = vadd.f32 %v1173, %v1216
    %v1242 = vadd.f32 %v1174, %v1216
    %v1243 = vadd.f32 %v1175, %v1216
    %v1244 = vadd.f32 %v1176, %v1216
    %v1245 = vadd.f32 %v1177, %v1216
    %v1246 = vadd.f32 %v1178, %v1216
    %v1247 = vadd.f32 %v1179, %v1216
    %v1248 = vadd.f32 %v1180, %v1216
    %v1249 = vadd.f32 %v1181, %v1216
    %v1250 = vadd.f32 %v1182, %v1216
    %v1251 = vadd.f32 %v1183, %v1216
    %v1252 = vadd.f32 %v1184, %v1216
    %v1253 = vadd.f32 %v1185, %v1216
    %v1254 = vadd.f32 %v1186, %v1216
    %v1255 = vadd.f32 %v1187, %v1216
    %v1256 = vadd.f32 %v1188, %v1216
    %v1257 = vadd.f32 %v1189, %v1216
    %v1258 = vadd.f32 %v1190, %v1216
    %v1259 = vadd.f32 %v1191, %v1216
    %v1260 = vadd.f32 %v1192, %v1216
    %v1261 = vadd.f32 %v1193, %v1216
    %v1262 = vadd.f32 %v1194, %v1216
    %v1263 = vadd.f32 %v1195, %v1216
    %v1264 = vadd.f32 %v1196, %v1216
    %v1265 = vadd.f32 %v1197, %v1216
    %v1266 = vadd.f32 %v1198, %v1216
    %v1267 = vadd.f32 %v1199, %v1216
    %v1268 = vadd.f32 %v1200, %v1216
    %v1269 = vadd.f32 %v1201, %v1216
    %v1270 = vadd.f32 %v1202, %v1216
    %v1271 = vadd.f32 %v1203, %v1216
    %v1272 = vadd.f32 %v1204, %v1216
    %v1273 = vadd.f32 %v1205, %v1216
    %v1274 = vadd.f32 %v1206, %v1216
    %v1275 = vadd.f32 %v1207, %v1216
    %v1276 = vadd.f32 %v1208, %v1216
    %v1277 = vadd.f32 %v1209, %v1216
    %v1278 = vadd.f32 %v1210, %v1216
    %v1279 = vadd.f32 %v1211, %v1216
    %v1280 = vadd.f32 %v1212, %v1216
    %v1281 = vadd.f32 %v1213, %v1216
    %v1282 = vmax.f32 %v1218, 0.0
    %v1283 = vmax.f32 %v1219, 0.0
    %v1284 = vmax.f32 %v1220, 0.0
    %v1285 = vmax.f32 %v1221, 0.0
    %v1286 = vmax.f32 %v1222, 0.0
    %v1287 = vmax.f32 %v1223, 0.0
    %v1288 = vmax.f32 %v1224, 0.0
    %v1289 = vmax.f32 %v1225, 0.0
    %v1290 = vmax.f32 %v1226, 0.0
    %v1291 = vmax.f32 %v1227, 0.0
    %v1292 = vmax.f32 %v1228, 0.0
    %v1293 = vmax.f32 %v1229, 0.0
    %v1294 = vmax.f32 %v1230, 0.0
    %v1295 = vmax.f32 %v1231, 0.0
    %v1296 = vmax.f32 %v1232, 0.0
    %v1297 = vmax.f32 %v1233, 0.0
    %v1298 = vmax.f32 %v1234, 0.0
    %v1299 = vmax.f32 %v1235, 0.0
    %v1300 = vmax.f32 %v1236, 0.0
    %v1301 = vmax.f32 %v1237, 0.0
    %v1302 = vmax.f32 %v1238, 0.0
    %v1303 = vmax.f32 %v1239, 0.0
    %v1304 = vmax.f32 %v1240, 0.0
    %v1305 = vmax.f32 %v1241, 0.0
    %v1306 = vmax.f32 %v1242, 0.0
    %v1307 = vmax.f32 %v1243, 0.0
    %v1308 = vmax.f32 %v1244, 0.0
    %v1309 = vmax.f32 %v1245, 0.0
    %v1310 = vmax.f32 %v1246, 0.0
    %v1311 = vmax.f32 %v1247, 0.0
    %v1312 = vmax.f32 %v1248, 0.0
    %v1313 = vmax.f32 %v1249, 0.0
    %v1314 = vmax.f32 %v1250, 0.0
    %v1315 = vmax.f32 %v1251, 0.0
    %v1316 = vmax.f32 %v1252, 0.0
    %v1317 = vmax.f32 %v1253, 0.0
    %v1318 = vmax.f32 %v1254, 0.0
    %v1319 = vmax.f32 %v1255, 0.0
    %v1320 = vmax.f32 %v1256, 0.0
    %v1321 = vmax.f32 %v1257, 0.0
    %v1322 = vmax.f32 %v1258, 0.0
    %v1323 = vmax.f32 %v1259, 0.0
    %v1324 = vmax.f32 %v1260, 0.0
    %v1325 = vmax.f32 %v1261, 0.0
    %v1326 = vmax.f32 %v1262, 0.0
    %v1327 = vmax.f32 %v1263, 0.0
    %v1328 = vmax.f32 %v1264, 0.0
    %v1329 = vmax.f32 %v1265, 0.0
    %v1330 = vmax.f32 %v1266, 0.0
    %v1331 = vmax.f32 %v1267, 0.0
    %v1332 = vmax.f32 %v1268, 0.0
    %v1333 = vmax.f32 %v1269, 0.0
    %v1334 = vmax.f32 %v1270, 0.0
    %v1335 = vmax.f32 %v1271, 0.0
    %v1336 = vmax.f32 %v1272, 0.0
    %v1337 = vmax.f32 %v1273, 0.0
    %v1338 = vmax.f32 %v1274, 0.0
    %v1339 = vmax.f32 %v1275, 0.0
    %v1340 = vmax.f32 %v1276, 0.0
    %v1341 = vmax.f32 %v1277, 0.0
    %v1342 = vmax.f32 %v1278, 0.0
    %v1343 = vmax.f32 %v1279, 0.0
    %v1344 = vmax.f32 %v1280, 0.0
    %v1345 = vmax.f32 %v1281, 0.0
    %v1346 = vpack.c.bf16 %v1282, %v1282
    %v1347 = vpack.c.bf16 %v1283, %v1283
    %v1348 = vpack.c.bf16 %v1284, %v1284
    %v1349 = vpack.c.bf16 %v1285, %v1285
    %v1350 = vpack.c.bf16 %v1286, %v1286
    %v1351 = vpack.c.bf16 %v1287, %v1287
    %v1352 = vpack.c.bf16 %v1288, %v1288
    %v1353 = vpack.c.bf16 %v1289, %v1289
    %v1354 = vpack.c.bf16 %v1290, %v1290
    %v1355 = vpack.c.bf16 %v1291, %v1291
    %v1356 = vpack.c.bf16 %v1292, %v1292
    %v1357 = vpack.c.bf16 %v1293, %v1293
    %v1358 = vpack.c.bf16 %v1294, %v1294
    %v1359 = vpack.c.bf16 %v1295, %v1295
    %v1360 = vpack.c.bf16 %v1296, %v1296
    %v1361 = vpack.c.bf16 %v1297, %v1297
    %v1362 = vpack.c.bf16 %v1298, %v1298
    %v1363 = vpack.c.bf16 %v1299, %v1299
    %v1364 = vpack.c.bf16 %v1300, %v1300
    %v1365 = vpack.c.bf16 %v1301, %v1301
    %v1366 = vpack.c.bf16 %v1302, %v1302
    %v1367 = vpack.c.bf16 %v1303, %v1303
    %v1368 = vpack.c.bf16 %v1304, %v1304
    %v1369 = vpack.c.bf16 %v1305, %v1305
    %v1370 = vpack.c.bf16 %v1306, %v1306
    %v1371 = vpack.c.bf16 %v1307, %v1307
    %v1372 = vpack.c.bf16 %v1308, %v1308
    %v1373 = vpack.c.bf16 %v1309, %v1309
    %v1374 = vpack.c.bf16 %v1310, %v1310
    %v1375 = vpack.c.bf16 %v1311, %v1311
    %v1376 = vpack.c.bf16 %v1312, %v1312
    %v1377 = vpack.c.bf16 %v1313, %v1313
    %v1378 = vpack.c.bf16 %v1314, %v1314
    %v1379 = vpack.c.bf16 %v1315, %v1315
    %v1380 = vpack.c.bf16 %v1316, %v1316
    %v1381 = vpack.c.bf16 %v1317, %v1317
    %v1382 = vpack.c.bf16 %v1318, %v1318
    %v1383 = vpack.c.bf16 %v1319, %v1319
    %v1384 = vpack.c.bf16 %v1320, %v1320
    %v1385 = vpack.c.bf16 %v1321, %v1321
    %v1386 = vpack.c.bf16 %v1322, %v1322
    %v1387 = vpack.c.bf16 %v1323, %v1323
    %v1388 = vpack.c.bf16 %v1324, %v1324
    %v1389 = vpack.c.bf16 %v1325, %v1325
    %v1390 = vpack.c.bf16 %v1326, %v1326
    %v1391 = vpack.c.bf16 %v1327, %v1327
    %v1392 = vpack.c.bf16 %v1328, %v1328
    %v1393 = vpack.c.bf16 %v1329, %v1329
    %v1394 = vpack.c.bf16 %v1330, %v1330
    %v1395 = vpack.c.bf16 %v1331, %v1331
    %v1396 = vpack.c.bf16 %v1332, %v1332
    %v1397 = vpack.c.bf16 %v1333, %v1333
    %v1398 = vpack.c.bf16 %v1334, %v1334
    %v1399 = vpack.c.bf16 %v1335, %v1335
    %v1400 = vpack.c.bf16 %v1336, %v1336
    %v1401 = vpack.c.bf16 %v1337, %v1337
    %v1402 = vpack.c.bf16 %v1338, %v1338
    %v1403 = vpack.c.bf16 %v1339, %v1339
    %v1404 = vpack.c.bf16 %v1340, %v1340
    %v1405 = vpack.c.bf16 %v1341, %v1341
    %v1406 = vpack.c.bf16 %v1342, %v1342
    %v1407 = vpack.c.bf16 %v1343, %v1343
    %v1408 = vpack.c.bf16 %v1344, %v1344
    %v1409 = vpack.c.bf16 %v1345, %v1345
    %vm1410 = vcmask 60416
    %1411 = vst.msk [vmem:[%s3] sm:$0xf] %vm1410, %v1346
    %1412 = vst.msk [vmem:[%s3 + $0x4] sm:$0xf] %vm1410, %v1347
    %1413 = vst.msk [vmem:[%s3 + $0x8] sm:$0xf] %vm1410, %v1348
    %1414 = vst.msk [vmem:[%s3 + $0xc] sm:$0xf] %vm1410, %v1349
    %1415 = vst.msk [vmem:[%s3 + $0x10] sm:$0xf] %vm1410, %v1350
    %1416 = vst.msk [vmem:[%s3 + $0x14] sm:$0xf] %vm1410, %v1351
    %1417 = vst.msk [vmem:[%s3 + $0x18] sm:$0xf] %vm1410, %v1352
    %1418 = vst.msk [vmem:[%s3 + $0x1c] sm:$0xf] %vm1410, %v1353
    %1419 = vst.msk [vmem:[%s3 + $0x20] sm:$0xf] %vm1410, %v1354
    %1420 = vst.msk [vmem:[%s3 + $0x24] sm:$0xf] %vm1410, %v1355
    %1421 = vst.msk [vmem:[%s3 + $0x28] sm:$0xf] %vm1410, %v1356
    %1422 = vst.msk [vmem:[%s3 + $0x2c] sm:$0xf] %vm1410, %v1357
    %1423 = vst.msk [vmem:[%s3 + $0x30] sm:$0xf] %vm1410, %v1358
    %1424 = vst.msk [vmem:[%s3 + $0x34] sm:$0xf] %vm1410, %v1359
    %1425 = vst.msk [vmem:[%s3 + $0x38] sm:$0xf] %vm1410, %v1360
    %1426 = vst.msk [vmem:[%s3 + $0x3c] sm:$0xf] %vm1410, %v1361
    %1427 = vst.msk [vmem:[%s3 + $0x40] sm:$0xf] %vm1410, %v1362
    %1428 = vst.msk [vmem:[%s3 + $0x44] sm:$0xf] %vm1410, %v1363
    %1429 = vst.msk [vmem:[%s3 + $0x48] sm:$0xf] %vm1410, %v1364
    %1430 = vst.msk [vmem:[%s3 + $0x4c] sm:$0xf] %vm1410, %v1365
    %1431 = vst.msk [vmem:[%s3 + $0x50] sm:$0xf] %vm1410, %v1366
    %1432 = vst.msk [vmem:[%s3 + $0x54] sm:$0xf] %vm1410, %v1367
    %1433 = vst.msk [vmem:[%s3 + $0x58] sm:$0xf] %vm1410, %v1368
    %1434 = vst.msk [vmem:[%s3 + $0x5c] sm:$0xf] %vm1410, %v1369
    %1435 = vst.msk [vmem:[%s3 + $0x60] sm:$0xf] %vm1410, %v1370
    %1436 = vst.msk [vmem:[%s3 + $0x64] sm:$0xf] %vm1410, %v1371
    %1437 = vst.msk [vmem:[%s3 + $0x68] sm:$0xf] %vm1410, %v1372
    %1438 = vst.msk [vmem:[%s3 + $0x6c] sm:$0xf] %vm1410, %v1373
    %1439 = vst.msk [vmem:[%s3 + $0x70] sm:$0xf] %vm1410, %v1374
    %1440 = vst.msk [vmem:[%s3 + $0x74] sm:$0xf] %vm1410, %v1375
    %1441 = vst.msk [vmem:[%s3 + $0x78] sm:$0xf] %vm1410, %v1376
    %1442 = vst.msk [vmem:[%s3 + $0x7c] sm:$0xf] %vm1410, %v1377
    %1443 = vst.msk [vmem:[%s3 + $0x80] sm:$0xf] %vm1410, %v1378
    %1444 = vst.msk [vmem:[%s3 + $0x84] sm:$0xf] %vm1410, %v1379
    %1445 = vst.msk [vmem:[%s3 + $0x88] sm:$0xf] %vm1410, %v1380
    %1446 = vst.msk [vmem:[%s3 + $0x8c] sm:$0xf] %vm1410, %v1381
    %1447 = vst.msk [vmem:[%s3 + $0x90] sm:$0xf] %vm1410, %v1382
    %1448 = vst.msk [vmem:[%s3 + $0x94] sm:$0xf] %vm1410, %v1383
    %1449 = vst.msk [vmem:[%s3 + $0x98] sm:$0xf] %vm1410, %v1384
    %1450 = vst.msk [vmem:[%s3 + $0x9c] sm:$0xf] %vm1410, %v1385
    %1451 = vst.msk [vmem:[%s3 + $0xa0] sm:$0xf] %vm1410, %v1386
    %1452 = vst.msk [vmem:[%s3 + $0xa4] sm:$0xf] %vm1410, %v1387
    %1453 = vst.msk [vmem:[%s3 + $0xa8] sm:$0xf] %vm1410, %v1388
    %1454 = vst.msk [vmem:[%s3 + $0xac] sm:$0xf] %vm1410, %v1389
    %1455 = vst.msk [vmem:[%s3 + $0xb0] sm:$0xf] %vm1410, %v1390
    %1456 = vst.msk [vmem:[%s3 + $0xb4] sm:$0xf] %vm1410, %v1391
    %1457 = vst.msk [vmem:[%s3 + $0xb8] sm:$0xf] %vm1410, %v1392
    %1458 = vst.msk [vmem:[%s3 + $0xbc] sm:$0xf] %vm1410, %v1393
    %1459 = vst.msk [vmem:[%s3 + $0xc0] sm:$0xf] %vm1410, %v1394
    %1460 = vst.msk [vmem:[%s3 + $0xc4] sm:$0xf] %vm1410, %v1395
    %1461 = vst.msk [vmem:[%s3 + $0xc8] sm:$0xf] %vm1410, %v1396
    %1462 = vst.msk [vmem:[%s3 + $0xcc] sm:$0xf] %vm1410, %v1397
    %1463 = vst.msk [vmem:[%s3 + $0xd0] sm:$0xf] %vm1410, %v1398
    %1464 = vst.msk [vmem:[%s3 + $0xd4] sm:$0xf] %vm1410, %v1399
    %1465 = vst.msk [vmem:[%s3 + $0xd8] sm:$0xf] %vm1410, %v1400
    %1466 = vst.msk [vmem:[%s3 + $0xdc] sm:$0xf] %vm1410, %v1401
    %1467 = vst.msk [vmem:[%s3 + $0xe0] sm:$0xf] %vm1410, %v1402
    %1468 = vst.msk [vmem:[%s3 + $0xe4] sm:$0xf] %vm1410, %v1403
    %1469 = vst.msk [vmem:[%s3 + $0xe8] sm:$0xf] %vm1410, %v1404
    %1470 = vst.msk [vmem:[%s3 + $0xec] sm:$0xf] %vm1410, %v1405
    %1471 = vst.msk [vmem:[%s3 + $0xf0] sm:$0xf] %vm1410, %v1406
    %1472 = vst.msk [vmem:[%s3 + $0xf4] sm:$0xf] %vm1410, %v1407
    %1473 = vst.msk [vmem:[%s3 + $0xf8] sm:$0xf] %vm1410, %v1408
    %1474 = vst.msk [vmem:[%s3 + $0xfc] sm:$0xf] %vm1410, %v1409
  $region21: #{_lambda_.29} parent=0 // pred_fallthru
    _
  // Predicated region
  $region22: #{_lambda_.29} parent=0 // pred_check
    _
  $region23: #{_lambda_.29} parent=0 // pred_check_branch
    %1476 = sbr.rel (0) target = $region25
  $region24: #{_lambda_.29} parent=0 // pred_region
    _
  $region25: #{_lambda_.29} parent=0 // pred_fallthru
    _
  // Predicated region
  $region26: #{_lambda_.29} parent=0 // pred_check
    _
  $region27: #{_lambda_.29} parent=0 // pred_check_branch
    %1478 = sbr.rel (0) target = $region29
  $region28: #{_lambda_.29} parent=0 // pred_region
    _
  $region29: #{_lambda_.29} parent=0 // pred_fallthru
    _

// kernel: _lambda_.33
$region0: #{_lambda_.33}
  #allocation0 [shape = 'u32[]', space=smem, size = 0x4, offset = 0x4, fixed_abs, tag = 'smem constant byte address 0x4 - core index']
  #allocation1 [shape = 'u32[72,128]{1,0:T(1,128)}', space=vmem, size = 0x9000, scoped, tag = 'internal scratch']
  #allocation2 [shape = 'f32[128,2]{1,0:T(8,128)}', space=vmem, size = 0x10000, scoped, tag = 'scratch operand']
  %s0 = inlined_call_operand.vmem [shape: bf16[128,18], index: 0, kind: input, shape index: {}]
  %s1 = inlined_call_operand.vmem [shape: bf16[18,2], index: 1, kind: input, shape index: {}]
  %s2 = inlined_call_operand.vmem [shape: f32[1,2], index: 2, kind: input, shape index: {}]
  %s3 = inlined_call_operand.vmem [shape: bf16[128,2], index: 3, kind: output, shape index: {}]
  %s4 = sld [smem:[#allocation0]]
  $region30: #{_lambda_.33} parent=0
    _
  %s6 = ssub.s32 1, %s4
  %s7 = scalar_select 0, %s6, %s4
  // Predicated region
  $region2: #{_lambda_.33} parent=0 // pred_check
    _
  $region3: #{_lambda_.33} parent=0 // pred_check_branch
    %9 = sbr.rel (0) target = $region5
  $region4: #{_lambda_.33} parent=0 // pred_region
    _
  $region5: #{_lambda_.33} parent=0 // pred_fallthru
    _
  // Predicated region
  $region6: #{_lambda_.33} parent=0 // pred_check
    _
  $region7: #{_lambda_.33} parent=0 // pred_check_branch
    %11 = sbr.rel (0) target = $region9
  $region8: #{_lambda_.33} parent=0 // pred_region
    _
  $region9: #{_lambda_.33} parent=0 // pred_fallthru
    _
  // Predicated region
  $region10: #{_lambda_.33} parent=0 // pred_check
    _
  $region11: #{_lambda_.33} parent=0 // pred_check_branch
    %13 = sbr.rel (0) target = $region13
  $region12: #{_lambda_.33} parent=0 // pred_region
    _
  $region13: #{_lambda_.33} parent=0 // pred_fallthru
    _
  %p15 = scmp.eq.s32.totalorder 0, 0
  // Predicated region
  $region14: #{_lambda_.33} parent=0 // pred_check
    %p16 = pneg %p15
  $region15: #{_lambda_.33} parent=0 // pred_check_branch
    %18 = sbr.rel (%p16) target = $region17
  $region16: #{_lambda_.33} parent=0 // pred_region
    %vm19 = vcmask 15360
    %20 = vst.msk [vmem:[#allocation2] sm:$0xff] %vm19, 0.0
    %21 = vst.msk [vmem:[#allocation2 + $0x8] sm:$0xff] %vm19, 0.0
    %22 = vst.msk [vmem:[#allocation2 + $0x10] sm:$0xff] %vm19, 0.0
    %23 = vst.msk [vmem:[#allocation2 + $0x18] sm:$0xff] %vm19, 0.0
    %24 = vst.msk [vmem:[#allocation2 + $0x20] sm:$0xff] %vm19, 0.0
    %25 = vst.msk [vmem:[#allocation2 + $0x28] sm:$0xff] %vm19, 0.0
    %26 = vst.msk [vmem:[#allocation2 + $0x30] sm:$0xff] %vm19, 0.0
    %27 = vst.msk [vmem:[#allocation2 + $0x38] sm:$0xff] %vm19, 0.0
    %28 = vst.msk [vmem:[#allocation2 + $0x40] sm:$0xff] %vm19, 0.0
    %29 = vst.msk [vmem:[#allocation2 + $0x48] sm:$0xff] %vm19, 0.0
    %30 = vst.msk [vmem:[#allocation2 + $0x50] sm:$0xff] %vm19, 0.0
    %31 = vst.msk [vmem:[#allocation2 + $0x58] sm:$0xff] %vm19, 0.0
    %32 = vst.msk [vmem:[#allocation2 + $0x60] sm:$0xff] %vm19, 0.0
    %33 = vst.msk [vmem:[#allocation2 + $0x68] sm:$0xff] %vm19, 0.0
    %34 = vst.msk [vmem:[#allocation2 + $0x70] sm:$0xff] %vm19, 0.0
    %35 = vst.msk [vmem:[#allocation2 + $0x78] sm:$0xff] %vm19, 0.0
  $region17: #{_lambda_.33} parent=0 // pred_fallthru
    _
  %v36 = vld [vmem:[%s0] sm:$0xf]
  %v37 = vld [vmem:[%s0 + $0x4] sm:$0xf]
  %v38 = vld [vmem:[%s0 + $0x8] sm:$0xf]
  %v39 = vld [vmem:[%s0 + $0xc] sm:$0xf]
  %v40 = vld [vmem:[%s0 + $0x10] sm:$0xf]
  %v41 = vld [vmem:[%s0 + $0x14] sm:$0xf]
  %v42 = vld [vmem:[%s0 + $0x18] sm:$0xf]
  %v43 = vld [vmem:[%s0 + $0x1c] sm:$0xf]
  %v44 = vld [vmem:[%s0 + $0x20] sm:$0xf]
  %v45 = vld [vmem:[%s0 + $0x24] sm:$0xf]
  %v46 = vld [vmem:[%s0 + $0x28] sm:$0xf]
  %v47 = vld [vmem:[%s0 + $0x2c] sm:$0xf]
  %v48 = vld [vmem:[%s0 + $0x30] sm:$0xf]
  %v49 = vld [vmem:[%s0 + $0x34] sm:$0xf]
  %v50 = vld [vmem:[%s0 + $0x38] sm:$0xf]
  %v51 = vld [vmem:[%s0 + $0x3c] sm:$0xf]
  %v52 = vld [vmem:[#allocation2] sm:$0xff]
  %v53 = vld [vmem:[#allocation2 + $0x8] sm:$0xff]
  %v54 = vld [vmem:[#allocation2 + $0x10] sm:$0xff]
  %v55 = vld [vmem:[#allocation2 + $0x18] sm:$0xff]
  %v56 = vld [vmem:[#allocation2 + $0x20] sm:$0xff]
  %v57 = vld [vmem:[#allocation2 + $0x28] sm:$0xff]
  %v58 = vld [vmem:[#allocation2 + $0x30] sm:$0xff]
  %v59 = vld [vmem:[#allocation2 + $0x38] sm:$0xff]
  %v60 = vld [vmem:[#allocation2 + $0x40] sm:$0xff]
  %v61 = vld [vmem:[#allocation2 + $0x48] sm:$0xff]
  %v62 = vld [vmem:[#allocation2 + $0x50] sm:$0xff]
  %v63 = vld [vmem:[#allocation2 + $0x58] sm:$0xff]
  %v64 = vld [vmem:[#allocation2 + $0x60] sm:$0xff]
  %v65 = vld [vmem:[#allocation2 + $0x68] sm:$0xff]
  %v66 = vld [vmem:[#allocation2 + $0x70] sm:$0xff]
  %v67 = vld [vmem:[#allocation2 + $0x78] sm:$0xff]
  %v68 = vld [vmem:[%s1] sm:$0xf]
  %v69 = vld [vmem:[%s1 + $0x4] sm:$0xf]
  %v70 = vld [vmem:[%s1 + $0x8] sm:$0x1]
  %v87 = vunpack.c.l.b16 %v36
  %v88 = vunpack.c.l.b16 %v37
  %v89 = vunpack.c.l.b16 %v38
  %v90 = vunpack.c.l.b16 %v39
  %v91 = vunpack.c.l.b16 %v40
  %v92 = vunpack.c.l.b16 %v41
  %v93 = vunpack.c.l.b16 %v42
  %v94 = vunpack.c.l.b16 %v43
  %v95 = vunpack.c.l.b16 %v44
  %v96 = vunpack.c.l.b16 %v45
  %v97 = vunpack.c.l.b16 %v46
  %v98 = vunpack.c.l.b16 %v47
  %v99 = vunpack.c.l.b16 %v48
  %v100 = vunpack.c.l.b16 %v49
  %v101 = vunpack.c.l.b16 %v50
  %v102 = vunpack.c.l.b16 %v51
  %v103 = vpack.c.b16 %v88, %v87
  %v104 = vpack.c.b16 %v90, %v89
  %v105 = vpack.c.b16 %v92, %v91
  %v106 = vpack.c.b16 %v94, %v93
  %v107 = vpack.c.b16 %v96, %v95
  %v108 = vpack.c.b16 %v98, %v97
  %v109 = vpack.c.b16 %v100, %v99
  %v110 = vpack.c.b16 %v102, %v101
  %v114 = vunpack.c.l.b16 %v68
  %v115 = vunpack.c.l.b16 %v69
  %v116 = vunpack.c.l.b16 %v70
  %v117 = vpack.c.b16 %v115, %v114
  %v118 = vpack.c.b16 %v116, %v116
  %vm120 = vcmask 146432
  %v122 = vsel %vm120, %v103, 0
  %v125 = vsel %vm120, %v104, 0
  %v128 = vsel %vm120, %v105, 0
  %v131 = vsel %vm120, %v106, 0
  %v134 = vsel %vm120, %v107, 0
  %v137 = vsel %vm120, %v108, 0
  %v140 = vsel %vm120, %v109, 0
  %v143 = vsel %vm120, %v110, 0
  %vm145 = vcmask 1040384
  %v147 = vsel %vm145, %v118, 0
  %149 = vmatpush.bf16.msra.mxu0 0
  %150 = vmatpush.bf16.msra.mxu0 0
  %151 = vmatpush.bf16.msra.mxu0 0
  %152 = vmatpush.bf16.msra.mxu0 0
  %153 = vmatpush.bf16.msra.mxu0 0
  %154 = vmatpush.bf16.msra.mxu0 0
  %155 = vmatpush.bf16.msra.mxu0 %v147
  %156 = vmatpush.bf16.msra.mxu0 %v117
  %157 = vmatmul.bf16.gmra.mxu0 %v122
  %v158 = vpop.f32.mrf.mxu0
  %v159 = vadd.f32 0.0, %v158
  %v160 = vpop.f32.mrf.mxu0
  %v161 = vadd.f32 0.0, %v160
  %162 = vmatmul.bf16.gmra.mxu0 %v125
  %v163 = vpop.f32.mrf.mxu0
  %v164 = vadd.f32 0.0, %v163
  %v165 = vpop.f32.mrf.mxu0
  %v166 = vadd.f32 0.0, %v165
  %167 = vmatmul.bf16.gmra.mxu0 %v128
  %v168 = vpop.f32.mrf.mxu0
  %v169 = vadd.f32 0.0, %v168
  %v170 = vpop.f32.mrf.mxu0
  %v171 = vadd.f32 0.0, %v170
  %172 = vmatmul.bf16.gmra.mxu0 %v131
  %v173 = vpop.f32.mrf.mxu0
  %v174 = vadd.f32 0.0, %v173
  %v175 = vpop.f32.mrf.mxu0
  %v176 = vadd.f32 0.0, %v175
  %177 = vmatmul.bf16.gmra.mxu0 %v134
  %v178 = vpop.f32.mrf.mxu0
  %v179 = vadd.f32 0.0, %v178
  %v180 = vpop.f32.mrf.mxu0
  %v181 = vadd.f32 0.0, %v180
  %182 = vmatmul.bf16.gmra.mxu0 %v137
  %v183 = vpop.f32.mrf.mxu0
  %v184 = vadd.f32 0.0, %v183
  %v185 = vpop.f32.mrf.mxu0
  %v186 = vadd.f32 0.0, %v185
  %187 = vmatmul.bf16.gmra.mxu0 %v140
  %v188 = vpop.f32.mrf.mxu0
  %v189 = vadd.f32 0.0, %v188
  %v190 = vpop.f32.mrf.mxu0
  %v191 = vadd.f32 0.0, %v190
  %192 = vmatmul.bf16.gmra.mxu0 %v143
  %v193 = vpop.f32.mrf.mxu0
  %v194 = vadd.f32 0.0, %v193
  %v195 = vpop.f32.mrf.mxu0
  %v196 = vadd.f32 0.0, %v195
  %197 = vdwg.mxu0
  %v198 = vadd.f32 %v52, %v159
  %v199 = vadd.f32 %v53, %v161
  %v200 = vadd.f32 %v54, %v164
  %v201 = vadd.f32 %v55, %v166
  %v202 = vadd.f32 %v56, %v169
  %v203 = vadd.f32 %v57, %v171
  %v204 = vadd.f32 %v58, %v174
  %v205 = vadd.f32 %v59, %v176
  %v206 = vadd.f32 %v60, %v179
  %v207 = vadd.f32 %v61, %v181
  %v208 = vadd.f32 %v62, %v184
  %v209 = vadd.f32 %v63, %v186
  %v210 = vadd.f32 %v64, %v189
  %v211 = vadd.f32 %v65, %v191
  %v212 = vadd.f32 %v66, %v194
  %v213 = vadd.f32 %v67, %v196
  %vm214 = vcmask 15360
  %215 = vst.msk [vmem:[#allocation2] sm:$0xff] %vm214, %v198
  %216 = vst.msk [vmem:[#allocation2 + $0x8] sm:$0xff] %vm214, %v199
  %217 = vst.msk [vmem:[#allocation2 + $0x10] sm:$0xff] %vm214, %v200
  %218 = vst.msk [vmem:[#allocation2 + $0x18] sm:$0xff] %vm214, %v201
  %219 = vst.msk [vmem:[#allocation2 + $0x20] sm:$0xff] %vm214, %v202
  %220 = vst.msk [vmem:[#allocation2 + $0x28] sm:$0xff] %vm214, %v203
  %221 = vst.msk [vmem:[#allocation2 + $0x30] sm:$0xff] %vm214, %v204
  %222 = vst.msk [vmem:[#allocation2 + $0x38] sm:$0xff] %vm214, %v205
  %223 = vst.msk [vmem:[#allocation2 + $0x40] sm:$0xff] %vm214, %v206
  %224 = vst.msk [vmem:[#allocation2 + $0x48] sm:$0xff] %vm214, %v207
  %225 = vst.msk [vmem:[#allocation2 + $0x50] sm:$0xff] %vm214, %v208
  %226 = vst.msk [vmem:[#allocation2 + $0x58] sm:$0xff] %vm214, %v209
  %227 = vst.msk [vmem:[#allocation2 + $0x60] sm:$0xff] %vm214, %v210
  %228 = vst.msk [vmem:[#allocation2 + $0x68] sm:$0xff] %vm214, %v211
  %229 = vst.msk [vmem:[#allocation2 + $0x70] sm:$0xff] %vm214, %v212
  %230 = vst.msk [vmem:[#allocation2 + $0x78] sm:$0xff] %vm214, %v213
  // Predicated region
  $region18: #{_lambda_.33} parent=0 // pred_check
    %p231 = pneg %p15
  $region19: #{_lambda_.33} parent=0 // pred_check_branch
    %233 = sbr.rel (%p231) target = $region21
  $region20: #{_lambda_.33} parent=0 // pred_region
    %v234 = vld [vmem:[#allocation2] sm:$0xff]
    %v235 = vld [vmem:[#allocation2 + $0x8] sm:$0xff]
    %v236 = vld [vmem:[#allocation2 + $0x10] sm:$0xff]
    %v237 = vld [vmem:[#allocation2 + $0x18] sm:$0xff]
    %v238 = vld [vmem:[#allocation2 + $0x20] sm:$0xff]
    %v239 = vld [vmem:[#allocation2 + $0x28] sm:$0xff]
    %v240 = vld [vmem:[#allocation2 + $0x30] sm:$0xff]
    %v241 = vld [vmem:[#allocation2 + $0x38] sm:$0xff]
    %v242 = vld [vmem:[#allocation2 + $0x40] sm:$0xff]
    %v243 = vld [vmem:[#allocation2 + $0x48] sm:$0xff]
    %v244 = vld [vmem:[#allocation2 + $0x50] sm:$0xff]
    %v245 = vld [vmem:[#allocation2 + $0x58] sm:$0xff]
    %v246 = vld [vmem:[#allocation2 + $0x60] sm:$0xff]
    %v247 = vld [vmem:[#allocation2 + $0x68] sm:$0xff]
    %v248 = vld [vmem:[#allocation2 + $0x70] sm:$0xff]
    %v249 = vld [vmem:[#allocation2 + $0x78] sm:$0xff]
    %v250 = vld [vmem:[%s2] sm:$0x1]
    %v252 = vperm.slane %v250, 0
    %v254 = vadd.f32 %v234, %v252
    %v255 = vadd.f32 %v235, %v252
    %v256 = vadd.f32 %v236, %v252
    %v257 = vadd.f32 %v237, %v252
    %v258 = vadd.f32 %v238, %v252
    %v259 = vadd.f32 %v239, %v252
    %v260 = vadd.f32 %v240, %v252
    %v261 = vadd.f32 %v241, %v252
    %v262 = vadd.f32 %v242, %v252
    %v263 = vadd.f32 %v243, %v252
    %v264 = vadd.f32 %v244, %v252
    %v265 = vadd.f32 %v245, %v252
    %v266 = vadd.f32 %v246, %v252
    %v267 = vadd.f32 %v247, %v252
    %v268 = vadd.f32 %v248, %v252
    %v269 = vadd.f32 %v249, %v252
    %v270 = vmax.f32 %v254, 0.0
    %v271 = vmax.f32 %v255, 0.0
    %v272 = vmax.f32 %v256, 0.0
    %v273 = vmax.f32 %v257, 0.0
    %v274 = vmax.f32 %v258, 0.0
    %v275 = vmax.f32 %v259, 0.0
    %v276 = vmax.f32 %v260, 0.0
    %v277 = vmax.f32 %v261, 0.0
    %v278 = vmax.f32 %v262, 0.0
    %v279 = vmax.f32 %v263, 0.0
    %v280 = vmax.f32 %v264, 0.0
    %v281 = vmax.f32 %v265, 0.0
    %v282 = vmax.f32 %v266, 0.0
    %v283 = vmax.f32 %v267, 0.0
    %v284 = vmax.f32 %v268, 0.0
    %v285 = vmax.f32 %v269, 0.0
    %v286 = vpack.c.bf16 %v270, %v270
    %v287 = vpack.c.bf16 %v271, %v271
    %v288 = vpack.c.bf16 %v272, %v272
    %v289 = vpack.c.bf16 %v273, %v273
    %v290 = vpack.c.bf16 %v274, %v274
    %v291 = vpack.c.bf16 %v275, %v275
    %v292 = vpack.c.bf16 %v276, %v276
    %v293 = vpack.c.bf16 %v277, %v277
    %v294 = vpack.c.bf16 %v278, %v278
    %v295 = vpack.c.bf16 %v279, %v279
    %v296 = vpack.c.bf16 %v280, %v280
    %v297 = vpack.c.bf16 %v281, %v281
    %v298 = vpack.c.bf16 %v282, %v282
    %v299 = vpack.c.bf16 %v283, %v283
    %v300 = vpack.c.bf16 %v284, %v284
    %v301 = vpack.c.bf16 %v285, %v285
    %vm302 = vcmask 11264
    %303 = vst.msk [vmem:[%s3] sm:$0xf] %vm302, %v286
    %304 = vst.msk [vmem:[%s3 + $0x4] sm:$0xf] %vm302, %v287
    %305 = vst.msk [vmem:[%s3 + $0x8] sm:$0xf] %vm302, %v288
    %306 = vst.msk [vmem:[%s3 + $0xc] sm:$0xf] %vm302, %v289
    %307 = vst.msk [vmem:[%s3 + $0x10] sm:$0xf] %vm302, %v290
    %308 = vst.msk [vmem:[%s3 + $0x14] sm:$0xf] %vm302, %v291
    %309 = vst.msk [vmem:[%s3 + $0x18] sm:$0xf] %vm302, %v292
    %310 = vst.msk [vmem:[%s3 + $0x1c] sm:$0xf] %vm302, %v293
    %311 = vst.msk [vmem:[%s3 + $0x20] sm:$0xf] %vm302, %v294
    %312 = vst.msk [vmem:[%s3 + $0x24] sm:$0xf] %vm302, %v295
    %313 = vst.msk [vmem:[%s3 + $0x28] sm:$0xf] %vm302, %v296
    %314 = vst.msk [vmem:[%s3 + $0x2c] sm:$0xf] %vm302, %v297
    %315 = vst.msk [vmem:[%s3 + $0x30] sm:$0xf] %vm302, %v298
    %316 = vst.msk [vmem:[%s3 + $0x34] sm:$0xf] %vm302, %v299
    %317 = vst.msk [vmem:[%s3 + $0x38] sm:$0xf] %vm302, %v300
    %318 = vst.msk [vmem:[%s3 + $0x3c] sm:$0xf] %vm302, %v301
  $region21: #{_lambda_.33} parent=0 // pred_fallthru
    _
  // Predicated region
  $region22: #{_lambda_.33} parent=0 // pred_check
    _
  $region23: #{_lambda_.33} parent=0 // pred_check_branch
    %320 = sbr.rel (0) target = $region25
  $region24: #{_lambda_.33} parent=0 // pred_region
    _
  $region25: #{_lambda_.33} parent=0 // pred_fallthru
    _
  // Predicated region
  $region26: #{_lambda_.33} parent=0 // pred_check
    _
  $region27: #{_lambda_.33} parent=0 // pred_check_branch
    %322 = sbr.rel (0) target = $region29
  $region28: #{_lambda_.33} parent=0 // pred_region
    _
  $region29: #{_lambda_.33} parent=0 // pred_fallthru
    _

// kernel: _lambda_.30
$region0: #{_lambda_.30}
  #allocation0 [shape = 'u32[]', space=smem, size = 0x4, offset = 0x4, fixed_abs, tag = 'smem constant byte address 0x4 - core index']
  #allocation1 [shape = 'u32[72,128]{1,0:T(1,128)}', space=vmem, size = 0x9000, scoped, tag = 'internal scratch']
  %s0 = inlined_call_operand.vmem [shape: bf16[2,18,18,8], index: 0, kind: input, shape index: {}]
  %s1 = inlined_call_operand.vmem [shape: bf16[2,16,16,8], index: 1, kind: output, shape index: {}]
  %s2 = sld [smem:[#allocation0]]
  $region37: #{_lambda_.30} parent=0
    _
  %s4 = ssub.s32 1, %s2
  %s5 = scalar_select 0, %s4, %s2
  loop: start=0, step=1, limit=4
  $region2: #{_lambda_.30} parent=0 // loop_pre_header
    _
  $region3: #{_lambda_.30} parent=0 // loop_header
    %s7 = sphi 0, %s11
    %p8 = scmp.ge.s32.totalorder %s7, 4
    %s17 = sphi 0, %s19
    %s20 = sphi 0, %s17
    %s21 = sphi 0, %s20
    %s37 = sphi 0, %s21
    %s43 = sphi 0, %s45
    %s46 = sphi 0, %s43
    %s47 = sphi 0, %s46
    %s63 = sphi 0, %s47
  $region4: #{_lambda_.30} parent=0 // loop_header_branch
    %10 = sbr.rel (%p8) target = $region8
  $region5: #{_lambda_.30} parent=0 // loop_body
    %s12 = ssub.s32 %s7, 1
    %s13 = ssub.s32 %s7, 2
    %s14 = sadd.s32 %s7, 1
    %s15 = ssub.s32 %s7, %s14
    %p16 = scmp.eq.s32.totalorder %s15, 0
    %s18 = sadd.s32 %s17, 1
    %s19 = scalar_select %p16, %s17, %s18
    %p22 = pneg %p16
    %p23 = scmp.eq.s32.totalorder %s7, 1
    %p24 = por %p22, %p23
    %p25 = scmp.ne.s32.totalorder %s17, %s20
    %p26 = scmp.eq.s32.totalorder %s7, 0
    %p27 = por %p25, %p26
    %p28 = scmp.ne.s32.totalorder %s17, %s20
    %p29 = scmp.eq.s32.totalorder %s12, 1
    %p30 = por %p28, %p29
    %p31 = scmp.ne.s32.totalorder %s20, %s21
    %p32 = scmp.eq.s32.totalorder %s12, 0
    %p33 = por %p31, %p32
    %p34 = scmp.ne.s32.totalorder %s20, %s21
    %p35 = scmp.eq.s32.totalorder %s13, 1
    %p36 = por %p34, %p35
    %p38 = scmp.ne.s32.totalorder %s21, %s37
    %p39 = scmp.eq.s32.totalorder %s13, 0
    %p40 = por %p38, %p39
    %s41 = ssub.s32 %s7, %s14
    %p42 = scmp.eq.s32.totalorder %s41, 0
    %s44 = sadd.s32 %s43, 1
    %s45 = scalar_select %p42, %s43, %s44
    %p48 = pneg %p42
    %p49 = scmp.eq.s32.totalorder %s7, 1
    %p50 = por %p48, %p49
    %p51 = scmp.ne.s32.totalorder %s43, %s46
    %p52 = scmp.eq.s32.totalorder %s7, 0
    %p53 = por %p51, %p52
    %p54 = scmp.ne.s32.totalorder %s43, %s46
    %p55 = scmp.eq.s32.totalorder %s12, 1
    %p56 = por %p54, %p55
    %p57 = scmp.ne.s32.totalorder %s46, %s47
    %p58 = scmp.eq.s32.totalorder %s12, 0
    %p59 = por %p57, %p58
    %p60 = scmp.ne.s32.totalorder %s46, %s47
    %p61 = scmp.eq.s32.totalorder %s13, 1
    %p62 = por %p60, %p61
    %p64 = scmp.ne.s32.totalorder %s47, %s63
    %p65 = scmp.eq.s32.totalorder %s13, 0
    %p66 = por %p64, %p65
    %p67 = scmp.le.s32.totalorder 1, %s7
    %p68 = scmp.lt.s32.totalorder %s7, 3
    %p69 = pnand %p67, %p68
    %p70 = pneg %p69
    // Predicated region
    $region9: #{_lambda_.30} parent=5 // pred_check
      _
    $region10: #{_lambda_.30} parent=5 // pred_check_branch
      %72 = sbr.rel (%p69) target = $region12
    $region11: #{_lambda_.30} parent=5 // pred_region
      %s73 = ssub.s32 %s7, 1
    $region12: #{_lambda_.30} parent=5 // pred_fallthru
      _
    %p74 = scmp.lt.s32.totalorder %s7, 2
    // Predicated region
    $region13: #{_lambda_.30} parent=5 // pred_check
      %p75 = pneg %p74
    $region14: #{_lambda_.30} parent=5 // pred_check_branch
      %77 = sbr.rel (%p75) target = $region16
    $region15: #{_lambda_.30} parent=5 // pred_region
      // Predicated region
      $region17: #{_lambda_.30} parent=15 // pred_check
        %p78 = pneg %p27
      $region18: #{_lambda_.30} parent=15 // pred_check_branch
        %80 = sbr.rel (%p78) target = $region20
      $region19: #{_lambda_.30} parent=15 // pred_region
        %p81 = scmp.lt.s32.totalorder %s7, 1
        %s82 = scalar_select %p81, %s7, 1
        %s83 = smul.addr %s82, 54
        %s84 = smul.addr %s83, 4
        %s85 = scalar_lea.vmem %s0, %s84
      $region20: #{_lambda_.30} parent=15 // pred_fallthru
        _
    $region16: #{_lambda_.30} parent=5 // pred_fallthru
      _
    %p86 = scmp.le.s32.totalorder 1, %s7
    %p87 = scmp.lt.s32.totalorder %s7, 3
    %p88 = pnand %p86, %p87
    %p89 = pneg %p88
    // Predicated region
    $region21: #{_lambda_.30} parent=5 // pred_check
      _
    $region22: #{_lambda_.30} parent=5 // pred_check_branch
      %91 = sbr.rel (%p88) target = $region24
    $region23: #{_lambda_.30} parent=5 // pred_region
      %s92 = ssub.s32 %s7, 1
      %p93 = scmp.lt.s32.totalorder %s12, 1
      %s94 = scalar_select %p93, %s12, 1
      %s95 = smul.addr %s94, 54
      %s96 = smul.addr %s95, 4
      %s97 = scalar_lea.vmem %s0, %s96
      %p98 = pneg %p33
      %p99 = pneg %p30
      %p100 = pneg %p59
      %p101 = pneg %p56
      %p102 = scmp.lt.s32.totalorder %s12, 1
      %s103 = scalar_select %p102, %s12, 1
      %s104 = smul.addr %s103, 32
      %s105 = smul.addr %s104, 4
      %s106 = scalar_lea.vmem %s1, %s105
      %p107 = scmp.lt.s32.totalorder %s12, 1
      %s108 = scalar_select %p107, %s12, 1
      %s109 = smul.addr %s108, 54
      %s110 = smul.addr %s109, 4
      %s111 = scalar_lea.vmem %s0, %s110
      %p112 = scmp.lt.s32.totalorder %s12, 1
      %s113 = scalar_select %p112, %s12, 1
      %s114 = smul.addr %s113, 32
      %s115 = smul.addr %s114, 4
      %s116 = scalar_lea.vmem %s1, %s115
      %v117 = vld [vmem:[%s111] sm:$0xf]
      %v118 = vld [vmem:[%s111 + $0x4] sm:$0xf]
      %v119 = vld [vmem:[%s111 + $0xc] sm:$0xf]
      %v120 = vld [vmem:[%s111 + $0x10] sm:$0xf]
      %v121 = vld [vmem:[%s111 + $0x18] sm:$0xf]
      %v122 = vld [vmem:[%s111 + $0x1c] sm:$0xf]
      %v123 = vld [vmem:[%s111 + $0x24] sm:$0xf]
      %v124 = vld [vmem:[%s111 + $0x28] sm:$0xf]
      %v125 = vld [vmem:[%s111 + $0x30] sm:$0xf]
      %v126 = vld [vmem:[%s111 + $0x34] sm:$0xf]
      %v127 = vld [vmem:[%s111 + $0x3c] sm:$0xf]
      %v128 = vld [vmem:[%s111 + $0x40] sm:$0xf]
      %v129 = vld [vmem:[%s111 + $0x48] sm:$0xf]
      %v130 = vld [vmem:[%s111 + $0x4c] sm:$0xf]
      %v131 = vld [vmem:[%s111 + $0x54] sm:$0xf]
      %v132 = vld [vmem:[%s111 + $0x58] sm:$0xf]
      %v133 = vld [vmem:[%s111 + $0x60] sm:$0xf]
      %v134 = vld [vmem:[%s111 + $0x64] sm:$0xf]
      %v135 = vld [vmem:[%s111 + $0x6c] sm:$0xf]
      %v136 = vld [vmem:[%s111 + $0x70] sm:$0xf]
      %v137 = vld [vmem:[%s111 + $0x78] sm:$0xf]
      %v138 = vld [vmem:[%s111 + $0x7c] sm:$0xf]
      %v139 = vld [vmem:[%s111 + $0x84] sm:$0xf]
      %v140 = vld [vmem:[%s111 + $0x88] sm:$0xf]
      %v141 = vld [vmem:[%s111 + $0x90] sm:$0xf]
      %v142 = vld [vmem:[%s111 + $0x94] sm:$0xf]
      %v143 = vld [vmem:[%s111 + $0x9c] sm:$0xf]
      %v144 = vld [vmem:[%s111 + $0xa0] sm:$0xf]
      %v145 = vld [vmem:[%s111 + $0xa8] sm:$0xf]
      %v146 = vld [vmem:[%s111 + $0xac] sm:$0xf]
      %v147 = vld [vmem:[%s111 + $0xb4] sm:$0xf]
      %v148 = vld [vmem:[%s111 + $0xb8] sm:$0xf]
      %v149 = vld [vmem:[%s111 + $0x8] sm:$0x1]
      %v150 = vld [vmem:[%s111 + $0x14] sm:$0x1]
      %v151 = vld [vmem:[%s111 + $0x20] sm:$0x1]
      %v152 = vld [vmem:[%s111 + $0x2c] sm:$0x1]
      %v153 = vld [vmem:[%s111 + $0x38] sm:$0x1]
      %v154 = vld [vmem:[%s111 + $0x44] sm:$0x1]
      %v155 = vld [vmem:[%s111 + $0x50] sm:$0x1]
      %v156 = vld [vmem:[%s111 + $0x5c] sm:$0x1]
      %v157 = vld [vmem:[%s111 + $0x68] sm:$0x1]
      %v158 = vld [vmem:[%s111 + $0x74] sm:$0x1]
      %v159 = vld [vmem:[%s111 + $0x80] sm:$0x1]
      %v160 = vld [vmem:[%s111 + $0x8c] sm:$0x1]
      %v161 = vld [vmem:[%s111 + $0x98] sm:$0x1]
      %v162 = vld [vmem:[%s111 + $0xa4] sm:$0x1]
      %v163 = vld [vmem:[%s111 + $0xb0] sm:$0x1]
      %v164 = vld [vmem:[%s111 + $0xbc] sm:$0x1]
      %v165 = vunpack.c.l.bf16 %v117
      %v166 = vunpack.c.l.bf16 %v118
      %v167 = vunpack.c.l.bf16 %v119
      %v168 = vunpack.c.l.bf16 %v120
      %v169 = vunpack.c.l.bf16 %v121
      %v170 = vunpack.c.l.bf16 %v122
      %v171 = vunpack.c.l.bf16 %v123
      %v172 = vunpack.c.l.bf16 %v124
      %v173 = vunpack.c.l.bf16 %v125
      %v174 = vunpack.c.l.bf16 %v126
      %v175 = vunpack.c.l.bf16 %v127
      %v176 = vunpack.c.l.bf16 %v128
      %v177 = vunpack.c.l.bf16 %v129
      %v178 = vunpack.c.l.bf16 %v130
      %v179 = vunpack.c.l.bf16 %v131
      %v180 = vunpack.c.l.bf16 %v132
      %v181 = vunpack.c.l.bf16 %v133
      %v182 = vunpack.c.l.bf16 %v134
      %v183 = vunpack.c.l.bf16 %v135
      %v184 = vunpack.c.l.bf16 %v136
      %v185 = vunpack.c.l.bf16 %v137
      %v186 = vunpack.c.l.bf16 %v138
      %v187 = vunpack.c.l.bf16 %v139
      %v188 = vunpack.c.l.bf16 %v140
      %v189 = vunpack.c.l.bf16 %v141
      %v190 = vunpack.c.l.bf16 %v142
      %v191 = vunpack.c.l.bf16 %v143
      %v192 = vunpack.c.l.bf16 %v144
      %v193 = vunpack.c.l.bf16 %v145
      %v194 = vunpack.c.l.bf16 %v146
      %v195 = vunpack.c.l.bf16 %v147
      %v196 = vunpack.c.l.bf16 %v148
      %v197 = vunpack.c.l.bf16 %v149
      %v198 = vunpack.c.l.bf16 %v150
      %v199 = vunpack.c.l.bf16 %v151
      %v200 = vunpack.c.l.bf16 %v152
      %v201 = vunpack.c.l.bf16 %v153
      %v202 = vunpack.c.l.bf16 %v154
      %v203 = vunpack.c.l.bf16 %v155
      %v204 = vunpack.c.l.bf16 %v156
      %v205 = vunpack.c.l.bf16 %v157
      %v206 = vunpack.c.l.bf16 %v158
      %v207 = vunpack.c.l.bf16 %v159
      %v208 = vunpack.c.l.bf16 %v160
      %v209 = vunpack.c.l.bf16 %v161
      %v210 = vunpack.c.l.bf16 %v162
      %v211 = vunpack.c.l.bf16 %v163
      %v212 = vunpack.c.l.bf16 %v164
      %vm261 = vcmask 1046528
      %v262 = vrot.slane %v165, 1
      %v263 = vrot.slane %v166, 1
      %v264 = vsel %vm261, %v262, %v263
      %v265 = vrot.slane %v197, 1
      %v266 = vsel %vm261, %v263, %v265
      %v267 = vrot.slane %v167, 1
      %v268 = vrot.slane %v168, 1
      %v269 = vsel %vm261, %v267, %v268
      %v270 = vrot.slane %v198, 1
      %v271 = vsel %vm261, %v268, %v270
      %v272 = vrot.slane %v169, 1
      %v273 = vrot.slane %v170, 1
      %v274 = vsel %vm261, %v272, %v273
      %v275 = vrot.slane %v199, 1
      %v276 = vsel %vm261, %v273, %v275
      %v277 = vrot.slane %v171, 1
      %v278 = vrot.slane %v172, 1
      %v279 = vsel %vm261, %v277, %v278
      %v280 = vrot.slane %v200, 1
      %v281 = vsel %vm261, %v278, %v280
      %v282 = vrot.slane %v173, 1
      %v283 = vrot.slane %v174, 1
      %v284 = vsel %vm261, %v282, %v283
      %v285 = vrot.slane %v201, 1
      %v286 = vsel %vm261, %v283, %v285
      %v287 = vrot.slane %v175, 1
      %v288 = vrot.slane %v176, 1
      %v289 = vsel %vm261, %v287, %v288
      %v290 = vrot.slane %v202, 1
      %v291 = vsel %vm261, %v288, %v290
      %v292 = vrot.slane %v177, 1
      %v293 = vrot.slane %v178, 1
      %v294 = vsel %vm261, %v292, %v293
      %v295 = vrot.slane %v203, 1
      %v296 = vsel %vm261, %v293, %v295
      %v297 = vrot.slane %v179, 1
      %v298 = vrot.slane %v180, 1
      %v299 = vsel %vm261, %v297, %v298
      %v300 = vrot.slane %v204, 1
      %v301 = vsel %vm261, %v298, %v300
      %v302 = vrot.slane %v181, 1
      %v303 = vrot.slane %v182, 1
      %v304 = vsel %vm261, %v302, %v303
      %v305 = vrot.slane %v205, 1
      %v306 = vsel %vm261, %v303, %v305
      %v307 = vrot.slane %v183, 1
      %v308 = vrot.slane %v184, 1
      %v309 = vsel %vm261, %v307, %v308
      %v310 = vrot.slane %v206, 1
      %v311 = vsel %vm261, %v308, %v310
      %v312 = vrot.slane %v185, 1
      %v313 = vrot.slane %v186, 1
      %v314 = vsel %vm261, %v312, %v313
      %v315 = vrot.slane %v207, 1
      %v316 = vsel %vm261, %v313, %v315
      %v317 = vrot.slane %v187, 1
      %v318 = vrot.slane %v188, 1
      %v319 = vsel %vm261, %v317, %v318
      %v320 = vrot.slane %v208, 1
      %v321 = vsel %vm261, %v318, %v320
      %v322 = vrot.slane %v189, 1
      %v323 = vrot.slane %v190, 1
      %v324 = vsel %vm261, %v322, %v323
      %v325 = vrot.slane %v209, 1
      %v326 = vsel %vm261, %v323, %v325
      %v327 = vrot.slane %v191, 1
      %v328 = vrot.slane %v192, 1
      %v329 = vsel %vm261, %v327, %v328
      %v330 = vrot.slane %v210, 1
      %v331 = vsel %vm261, %v328, %v330
      %v332 = vrot.slane %v193, 1
      %v333 = vrot.slane %v194, 1
      %v334 = vsel %vm261, %v332, %v333
      %v335 = vrot.slane %v211, 1
      %v336 = vsel %vm261, %v333, %v335
      %v337 = vrot.slane %v195, 1
      %v338 = vrot.slane %v196, 1
      %v339 = vsel %vm261, %v337, %v338
      %v340 = vrot.slane %v212, 1
      %v341 = vsel %vm261, %v338, %v340
      %v374 = vmax.f32 %v165, %v264
      %v375 = vmax.f32 %v166, %v266
      %v376 = vmax.f32 %v167, %v269
      %v377 = vmax.f32 %v168, %v271
      %v378 = vmax.f32 %v169, %v274
      %v379 = vmax.f32 %v170, %v276
      %v380 = vmax.f32 %v171, %v279
      %v381 = vmax.f32 %v172, %v281
      %v382 = vmax.f32 %v173, %v284
      %v383 = vmax.f32 %v174, %v286
      %v384 = vmax.f32 %v175, %v289
      %v385 = vmax.f32 %v176, %v291
      %v386 = vmax.f32 %v177, %v294
      %v387 = vmax.f32 %v178, %v296
      %v388 = vmax.f32 %v179, %v299
      %v389 = vmax.f32 %v180, %v301
      %v390 = vmax.f32 %v181, %v304
      %v391 = vmax.f32 %v182, %v306
      %v392 = vmax.f32 %v183, %v309
      %v393 = vmax.f32 %v184, %v311
      %v394 = vmax.f32 %v185, %v314
      %v395 = vmax.f32 %v186, %v316
      %v396 = vmax.f32 %v187, %v319
      %v397 = vmax.f32 %v188, %v321
      %v398 = vmax.f32 %v189, %v324
      %v399 = vmax.f32 %v190, %v326
      %v400 = vmax.f32 %v191, %v329
      %v401 = vmax.f32 %v192, %v331
      %v402 = vmax.f32 %v193, %v334
      %v403 = vmax.f32 %v194, %v336
      %v404 = vmax.f32 %v195, %v339
      %v405 = vmax.f32 %v196, %v341
      %v406 = vpack.c.bf16 %v374, %v374
      %v407 = vpack.c.bf16 %v375, %v375
      %v408 = vpack.c.bf16 %v376, %v376
      %v409 = vpack.c.bf16 %v377, %v377
      %v410 = vpack.c.bf16 %v378, %v378
      %v411 = vpack.c.bf16 %v379, %v379
      %v412 = vpack.c.bf16 %v380, %v380
      %v413 = vpack.c.bf16 %v381, %v381
      %v414 = vpack.c.bf16 %v382, %v382
      %v415 = vpack.c.bf16 %v383, %v383
      %v416 = vpack.c.bf16 %v384, %v384
      %v417 = vpack.c.bf16 %v385, %v385
      %v418 = vpack.c.bf16 %v386, %v386
      %v419 = vpack.c.bf16 %v387, %v387
      %v420 = vpack.c.bf16 %v388, %v388
      %v421 = vpack.c.bf16 %v389, %v389
      %v422 = vpack.c.bf16 %v390, %v390
      %v423 = vpack.c.bf16 %v391, %v391
      %v424 = vpack.c.bf16 %v392, %v392
      %v425 = vpack.c.bf16 %v393, %v393
      %v426 = vpack.c.bf16 %v394, %v394
      %v427 = vpack.c.bf16 %v395, %v395
      %v428 = vpack.c.bf16 %v396, %v396
      %v429 = vpack.c.bf16 %v397, %v397
      %v430 = vpack.c.bf16 %v398, %v398
      %v431 = vpack.c.bf16 %v399, %v399
      %v432 = vpack.c.bf16 %v400, %v400
      %v433 = vpack.c.bf16 %v401, %v401
      %v434 = vpack.c.bf16 %v402, %v402
      %v435 = vpack.c.bf16 %v403, %v403
      %v436 = vpack.c.bf16 %v404, %v404
      %v437 = vpack.c.bf16 %v405, %v405
      %v438 = vld [vmem:[%s111] sm:$0xe]
      %v439 = vld [vmem:[%s111 + $0xc] sm:$0xe]
      %v440 = vld [vmem:[%s111 + $0x18] sm:$0xe]
      %v441 = vld [vmem:[%s111 + $0x24] sm:$0xe]
      %v442 = vld [vmem:[%s111 + $0x30] sm:$0xe]
      %v443 = vld [vmem:[%s111 + $0x3c] sm:$0xe]
      %v444 = vld [vmem:[%s111 + $0x48] sm:$0xe]
      %v445 = vld [vmem:[%s111 + $0x54] sm:$0xe]
      %v446 = vld [vmem:[%s111 + $0x60] sm:$0xe]
      %v447 = vld [vmem:[%s111 + $0x6c] sm:$0xe]
      %v448 = vld [vmem:[%s111 + $0x78] sm:$0xe]
      %v449 = vld [vmem:[%s111 + $0x84] sm:$0xe]
      %v450 = vld [vmem:[%s111 + $0x90] sm:$0xe]
      %v451 = vld [vmem:[%s111 + $0x9c] sm:$0xe]
      %v452 = vld [vmem:[%s111 + $0xa8] sm:$0xe]
      %v453 = vld [vmem:[%s111 + $0xb4] sm:$0xe]
      %v454 = vunpack.c.l.bf16 %v406
      %v455 = vunpack.c.l.bf16 %v407
      %v456 = vunpack.c.l.bf16 %v408
      %v457 = vunpack.c.l.bf16 %v409
      %v458 = vunpack.c.l.bf16 %v410
      %v459 = vunpack.c.l.bf16 %v411
      %v460 = vunpack.c.l.bf16 %v412
      %v461 = vunpack.c.l.bf16 %v413
      %v462 = vunpack.c.l.bf16 %v414
      %v463 = vunpack.c.l.bf16 %v415
      %v464 = vunpack.c.l.bf16 %v416
      %v465 = vunpack.c.l.bf16 %v417
      %v466 = vunpack.c.l.bf16 %v418
      %v467 = vunpack.c.l.bf16 %v419
      %v468 = vunpack.c.l.bf16 %v420
      %v469 = vunpack.c.l.bf16 %v421
      %v470 = vunpack.c.l.bf16 %v422
      %v471 = vunpack.c.l.bf16 %v423
      %v472 = vunpack.c.l.bf16 %v424
      %v473 = vunpack.c.l.bf16 %v425
      %v474 = vunpack.c.l.bf16 %v426
      %v475 = vunpack.c.l.bf16 %v427
      %v476 = vunpack.c.l.bf16 %v428
      %v477 = vunpack.c.l.bf16 %v429
      %v478 = vunpack.c.l.bf16 %v430
      %v479 = vunpack.c.l.bf16 %v431
      %v480 = vunpack.c.l.bf16 %v432
      %v481 = vunpack.c.l.bf16 %v433
      %v482 = vunpack.c.l.bf16 %v434
      %v483 = vunpack.c.l.bf16 %v435
      %v484 = vunpack.c.l.bf16 %v436
      %v485 = vunpack.c.l.bf16 %v437
      %v486 = vunpack.c.l.bf16 %v438
      %v487 = vunpack.c.l.bf16 %v439
      %v488 = vunpack.c.l.bf16 %v440
      %v489 = vunpack.c.l.bf16 %v441
      %v490 = vunpack.c.l.bf16 %v442
      %v491 = vunpack.c.l.bf16 %v443
      %v492 = vunpack.c.l.bf16 %v444
      %v493 = vunpack.c.l.bf16 %v445
      %v494 = vunpack.c.l.bf16 %v446
      %v495 = vunpack.c.l.bf16 %v447
      %v496 = vunpack.c.l.bf16 %v448
      %v497 = vunpack.c.l.bf16 %v449
      %v498 = vunpack.c.l.bf16 %v450
      %v499 = vunpack.c.l.bf16 %v451
      %v500 = vunpack.c.l.bf16 %v452
      %v501 = vunpack.c.l.bf16 %v453
      %vm518 = vcmask 1045504
      %v519 = vrot.slane %v486, 2
      %v520 = vrot.slane %v166, 2
      %v521 = vsel %vm518, %v519, %v520
      %v522 = vrot.slane %v197, 2
      %v523 = vsel %vm518, %v520, %v522
      %v524 = vrot.slane %v487, 2
      %v525 = vrot.slane %v168, 2
      %v526 = vsel %vm518, %v524, %v525
      %v527 = vrot.slane %v198, 2
      %v528 = vsel %vm518, %v525, %v527
      %v529 = vrot.slane %v488, 2
      %v530 = vrot.slane %v170, 2
      %v531 = vsel %vm518, %v529, %v530
      %v532 = vrot.slane %v199, 2
      %v533 = vsel %vm518, %v530, %v532
      %v534 = vrot.slane %v489, 2
      %v535 = vrot.slane %v172, 2
      %v536 = vsel %vm518, %v534, %v535
      %v537 = vrot.slane %v200, 2
      %v538 = vsel %vm518, %v535, %v537
      %v539 = vrot.slane %v490, 2
      %v540 = vrot.slane %v174, 2
      %v541 = vsel %vm518, %v539, %v540
      %v542 = vrot.slane %v201, 2
      %v543 = vsel %vm518, %v540, %v542
      %v544 = vrot.slane %v491, 2
      %v545 = vrot.slane %v176, 2
      %v546 = vsel %vm518, %v544, %v545
      %v547 = vrot.slane %v202, 2
      %v548 = vsel %vm518, %v545, %v547
      %v549 = vrot.slane %v492, 2
      %v550 = vrot.slane %v178, 2
      %v551 = vsel %vm518, %v549, %v550
      %v552 = vrot.slane %v203, 2
      %v553 = vsel %vm518, %v550, %v552
      %v554 = vrot.slane %v493, 2
      %v555 = vrot.slane %v180, 2
      %v556 = vsel %vm518, %v554, %v555
      %v557 = vrot.slane %v204, 2
      %v558 = vsel %vm518, %v555, %v557
      %v559 = vrot.slane %v494, 2
      %v560 = vrot.slane %v182, 2
      %v561 = vsel %vm518, %v559, %v560
      %v562 = vrot.slane %v205, 2
      %v563 = vsel %vm518, %v560, %v562
      %v564 = vrot.slane %v495, 2
      %v565 = vrot.slane %v184, 2
      %v566 = vsel %vm518, %v564, %v565
      %v567 = vrot.slane %v206, 2
      %v568 = vsel %vm518, %v565, %v567
      %v569 = vrot.slane %v496, 2
      %v570 = vrot.slane %v186, 2
      %v571 = vsel %vm518, %v569, %v570
      %v572 = vrot.slane %v207, 2
      %v573 = vsel %vm518, %v570, %v572
      %v574 = vrot.slane %v497, 2
      %v575 = vrot.slane %v188, 2
      %v576 = vsel %vm518, %v574, %v575
      %v577 = vrot.slane %v208, 2
      %v578 = vsel %vm518, %v575, %v577
      %v579 = vrot.slane %v498, 2
      %v580 = vrot.slane %v190, 2
      %v581 = vsel %vm518, %v579, %v580
      %v582 = vrot.slane %v209, 2
      %v583 = vsel %vm518, %v580, %v582
      %v584 = vrot.slane %v499, 2
      %v585 = vrot.slane %v192, 2
      %v586 = vsel %vm518, %v584, %v585
      %v587 = vrot.slane %v210, 2
      %v588 = vsel %vm518, %v585, %v587
      %v589 = vrot.slane %v500, 2
      %v590 = vrot.slane %v194, 2
      %v591 = vsel %vm518, %v589, %v590
      %v592 = vrot.slane %v211, 2
      %v593 = vsel %vm518, %v590, %v592
      %v594 = vrot.slane %v501, 2
      %v595 = vrot.slane %v196, 2
      %v596 = vsel %vm518, %v594, %v595
      %v597 = vrot.slane %v212, 2
      %v598 = vsel %vm518, %v595, %v597
      %v631 = vmax.f32 %v454, %v521
      %v632 = vmax.f32 %v455, %v523
      %v633 = vmax.f32 %v456, %v526
      %v634 = vmax.f32 %v457, %v528
      %v635 = vmax.f32 %v458, %v531
      %v636 = vmax.f32 %v459, %v533
      %v637 = vmax.f32 %v460, %v536
      %v638 = vmax.f32 %v461, %v538
      %v639 = vmax.f32 %v462, %v541
      %v640 = vmax.f32 %v463, %v543
      %v641 = vmax.f32 %v464, %v546
      %v642 = vmax.f32 %v465, %v548
      %v643 = vmax.f32 %v466, %v551
      %v644 = vmax.f32 %v467, %v553
      %v645 = vmax.f32 %v468, %v556
      %v646 = vmax.f32 %v469, %v558
      %v647 = vmax.f32 %v470, %v561
      %v648 = vmax.f32 %v471, %v563
      %v649 = vmax.f32 %v472, %v566
      %v650 = vmax.f32 %v473, %v568
      %v651 = vmax.f32 %v474, %v571
      %v652 = vmax.f32 %v475, %v573
      %v653 = vmax.f32 %v476, %v576
      %v654 = vmax.f32 %v477, %v578
      %v655 = vmax.f32 %v478, %v581
      %v656 = vmax.f32 %v479, %v583
      %v657 = vmax.f32 %v480, %v586
      %v658 = vmax.f32 %v481, %v588
      %v659 = vmax.f32 %v482, %v591
      %v660 = vmax.f32 %v483, %v593
      %v661 = vmax.f32 %v484, %v596
      %v662 = vmax.f32 %v485, %v598
      %v663 = vpack.c.bf16 %v631, %v631
      %v664 = vpack.c.bf16 %v632, %v632
      %v665 = vpack.c.bf16 %v633, %v633
      %v666 = vpack.c.bf16 %v634, %v634
      %v667 = vpack.c.bf16 %v635, %v635
      %v668 = vpack.c.bf16 %v636, %v636
      %v669 = vpack.c.bf16 %v637, %v637
      %v670 = vpack.c.bf16 %v638, %v638
      %v671 = vpack.c.bf16 %v639, %v639
      %v672 = vpack.c.bf16 %v640, %v640
      %v673 = vpack.c.bf16 %v641, %v641
      %v674 = vpack.c.bf16 %v642, %v642
      %v675 = vpack.c.bf16 %v643, %v643
      %v676 = vpack.c.bf16 %v644, %v644
      %v677 = vpack.c.bf16 %v645, %v645
      %v678 = vpack.c.bf16 %v646, %v646
      %v679 = vpack.c.bf16 %v647, %v647
      %v680 = vpack.c.bf16 %v648, %v648
      %v681 = vpack.c.bf16 %v649, %v649
      %v682 = vpack.c.bf16 %v650, %v650
      %v683 = vpack.c.bf16 %v651, %v651
      %v684 = vpack.c.bf16 %v652, %v652
      %v685 = vpack.c.bf16 %v653, %v653
      %v686 = vpack.c.bf16 %v654, %v654
      %v687 = vpack.c.bf16 %v655, %v655
      %v688 = vpack.c.bf16 %v656, %v656
      %v689 = vpack.c.bf16 %v657, %v657
      %v690 = vpack.c.bf16 %v658, %v658
      %v691 = vpack.c.bf16 %v659, %v659
      %v692 = vpack.c.bf16 %v660, %v660
      %v693 = vpack.c.bf16 %v661, %v661
      %v694 = vpack.c.bf16 %v662, %v662
      %s695 = scalar_lea.vmem %s111, 12
      %v696 = vld [vmem:[%s695] sm:$0xf]
      %v697 = vld [vmem:[%s695 + $0x4] sm:$0xf]
      %v698 = vld [vmem:[%s695 + $0xc] sm:$0xf]
      %v699 = vld [vmem:[%s695 + $0x10] sm:$0xf]
      %v700 = vld [vmem:[%s695 + $0x18] sm:$0xf]
      %v701 = vld [vmem:[%s695 + $0x1c] sm:$0xf]
      %v702 = vld [vmem:[%s695 + $0x24] sm:$0xf]
      %v703 = vld [vmem:[%s695 + $0x28] sm:$0xf]
      %v704 = vld [vmem:[%s695 + $0x30] sm:$0xf]
      %v705 = vld [vmem:[%s695 + $0x34] sm:$0xf]
      %v706 = vld [vmem:[%s695 + $0x3c] sm:$0xf]
      %v707 = vld [vmem:[%s695 + $0x40] sm:$0xf]
      %v708 = vld [vmem:[%s695 + $0x48] sm:$0xf]
      %v709 = vld [vmem:[%s695 + $0x4c] sm:$0xf]
      %v710 = vld [vmem:[%s695 + $0x54] sm:$0xf]
      %v711 = vld [vmem:[%s695 + $0x58] sm:$0xf]
      %v712 = vld [vmem:[%s695 + $0x60] sm:$0xf]
      %v713 = vld [vmem:[%s695 + $0x64] sm:$0xf]
      %v714 = vld [vmem:[%s695 + $0x6c] sm:$0xf]
      %v715 = vld [vmem:[%s695 + $0x70] sm:$0xf]
      %v716 = vld [vmem:[%s695 + $0x78] sm:$0xf]
      %v717 = vld [vmem:[%s695 + $0x7c] sm:$0xf]
      %v718 = vld [vmem:[%s695 + $0x84] sm:$0xf]
      %v719 = vld [vmem:[%s695 + $0x88] sm:$0xf]
      %v720 = vld [vmem:[%s695 + $0x90] sm:$0xf]
      %v721 = vld [vmem:[%s695 + $0x94] sm:$0xf]
      %v722 = vld [vmem:[%s695 + $0x9c] sm:$0xf]
      %v723 = vld [vmem:[%s695 + $0xa0] sm:$0xf]
      %v724 = vld [vmem:[%s695 + $0xa8] sm:$0xf]
      %v725 = vld [vmem:[%s695 + $0xac] sm:$0xf]
      %v726 = vld [vmem:[%s695 + $0xb4] sm:$0xf]
      %v727 = vld [vmem:[%s695 + $0xb8] sm:$0xf]
      %v728 = vunpack.c.l.bf16 %v663
      %v729 = vunpack.c.l.bf16 %v664
      %v730 = vunpack.c.l.bf16 %v665
      %v731 = vunpack.c.l.bf16 %v666
      %v732 = vunpack.c.l.bf16 %v667
      %v733 = vunpack.c.l.bf16 %v668
      %v734 = vunpack.c.l.bf16 %v669
      %v735 = vunpack.c.l.bf16 %v670
      %v736 = vunpack.c.l.bf16 %v671
      %v737 = vunpack.c.l.bf16 %v672
      %v738 = vunpack.c.l.bf16 %v673
      %v739 = vunpack.c.l.bf16 %v674
      %v740 = vunpack.c.l.bf16 %v675
      %v741 = vunpack.c.l.bf16 %v676
      %v742 = vunpack.c.l.bf16 %v677
      %v743 = vunpack.c.l.bf16 %v678
      %v744 = vunpack.c.l.bf16 %v679
      %v745 = vunpack.c.l.bf16 %v680
      %v746 = vunpack.c.l.bf16 %v681
      %v747 = vunpack.c.l.bf16 %v682
      %v748 = vunpack.c.l.bf16 %v683
      %v749 = vunpack.c.l.bf16 %v684
      %v750 = vunpack.c.l.bf16 %v685
      %v751 = vunpack.c.l.bf16 %v686
      %v752 = vunpack.c.l.bf16 %v687
      %v753 = vunpack.c.l.bf16 %v688
      %v754 = vunpack.c.l.bf16 %v689
      %v755 = vunpack.c.l.bf16 %v690
      %v756 = vunpack.c.l.bf16 %v691
      %v757 = vunpack.c.l.bf16 %v692
      %v758 = vunpack.c.l.bf16 %v693
      %v759 = vunpack.c.l.bf16 %v694
      %v760 = vunpack.c.l.bf16 %v696
      %v761 = vunpack.c.l.bf16 %v697
      %v762 = vunpack.c.l.bf16 %v698
      %v763 = vunpack.c.l.bf16 %v699
      %v764 = vunpack.c.l.bf16 %v700
      %v765 = vunpack.c.l.bf16 %v701
      %v766 = vunpack.c.l.bf16 %v702
      %v767 = vunpack.c.l.bf16 %v703
      %v768 = vunpack.c.l.bf16 %v704
      %v769 = vunpack.c.l.bf16 %v705
      %v770 = vunpack.c.l.bf16 %v706
      %v771 = vunpack.c.l.bf16 %v707
      %v772 = vunpack.c.l.bf16 %v708
      %v773 = vunpack.c.l.bf16 %v709
      %v774 = vunpack.c.l.bf16 %v710
      %v775 = vunpack.c.l.bf16 %v711
      %v776 = vunpack.c.l.bf16 %v712
      %v777 = vunpack.c.l.bf16 %v713
      %v778 = vunpack.c.l.bf16 %v714
      %v779 = vunpack.c.l.bf16 %v715
      %v780 = vunpack.c.l.bf16 %v716
      %v781 = vunpack.c.l.bf16 %v717
      %v782 = vunpack.c.l.bf16 %v718
      %v783 = vunpack.c.l.bf16 %v719
      %v784 = vunpack.c.l.bf16 %v720
      %v785 = vunpack.c.l.bf16 %v721
      %v786 = vunpack.c.l.bf16 %v722
      %v787 = vunpack.c.l.bf16 %v723
      %v788 = vunpack.c.l.bf16 %v724
      %v789 = vunpack.c.l.bf16 %v725
      %v790 = vunpack.c.l.bf16 %v726
      %v791 = vunpack.c.l.bf16 %v727
      %v792 = vmax.f32 %v728, %v760
      %v793 = vmax.f32 %v729, %v761
      %v794 = vmax.f32 %v730, %v762
      %v795 = vmax.f32 %v731, %v763
      %v796 = vmax.f32 %v732, %v764
      %v797 = vmax.f32 %v733, %v765
      %v798 = vmax.f32 %v734, %v766
      %v799 = vmax.f32 %v735, %v767
      %v800 = vmax.f32 %v736, %v768
      %v801 = vmax.f32 %v737, %v769
      %v802 = vmax.f32 %v738, %v770
      %v803 = vmax.f32 %v739, %v771
      %v804 = vmax.f32 %v740, %v772
      %v805 = vmax.f32 %v741, %v773
      %v806 = vmax.f32 %v742, %v774
      %v807 = vmax.f32 %v743, %v775
      %v808 = vmax.f32 %v744, %v776
      %v809 = vmax.f32 %v745, %v777
      %v810 = vmax.f32 %v746, %v778
      %v811 = vmax.f32 %v747, %v779
      %v812 = vmax.f32 %v748, %v780
      %v813 = vmax.f32 %v749, %v781
      %v814 = vmax.f32 %v750, %v782
      %v815 = vmax.f32 %v751, %v783
      %v816 = vmax.f32 %v752, %v784
      %v817 = vmax.f32 %v753, %v785
      %v818 = vmax.f32 %v754, %v786
      %v819 = vmax.f32 %v755, %v787
      %v820 = vmax.f32 %v756, %v788
      %v821 = vmax.f32 %v757, %v789
      %v822 = vmax.f32 %v758, %v790
      %v823 = vmax.f32 %v759, %v791
      %v824 = vpack.c.bf16 %v792, %v792
      %v825 = vpack.c.bf16 %v793, %v793
      %v826 = vpack.c.bf16 %v794, %v794
      %v827 = vpack.c.bf16 %v795, %v795
      %v828 = vpack.c.bf16 %v796, %v796
      %v829 = vpack.c.bf16 %v797, %v797
      %v830 = vpack.c.bf16 %v798, %v798
      %v831 = vpack.c.bf16 %v799, %v799
      %v832 = vpack.c.bf16 %v800, %v800
      %v833 = vpack.c.bf16 %v801, %v801
      %v834 = vpack.c.bf16 %v802, %v802
      %v835 = vpack.c.bf16 %v803, %v803
      %v836 = vpack.c.bf16 %v804, %v804
      %v837 = vpack.c.bf16 %v805, %v805
      %v838 = vpack.c.bf16 %v806, %v806
      %v839 = vpack.c.bf16 %v807, %v807
      %v840 = vpack.c.bf16 %v808, %v808
      %v841 = vpack.c.bf16 %v809, %v809
      %v842 = vpack.c.bf16 %v810, %v810
      %v843 = vpack.c.bf16 %v811, %v811
      %v844 = vpack.c.bf16 %v812, %v812
      %v845 = vpack.c.bf16 %v813, %v813
      %v846 = vpack.c.bf16 %v814, %v814
      %v847 = vpack.c.bf16 %v815, %v815
      %v848 = vpack.c.bf16 %v816, %v816
      %v849 = vpack.c.bf16 %v817, %v817
      %v850 = vpack.c.bf16 %v818, %v818
      %v851 = vpack.c.bf16 %v819, %v819
      %v852 = vpack.c.bf16 %v820, %v820
      %v853 = vpack.c.bf16 %v821, %v821
      %v854 = vpack.c.bf16 %v822, %v822
      %v855 = vpack.c.bf16 %v823, %v823
      %v856 = vld [vmem:[%s695 + $0x8] sm:$0x1]
      %v857 = vld [vmem:[%s695 + $0x14] sm:$0x1]
      %v858 = vld [vmem:[%s695 + $0x20] sm:$0x1]
      %v859 = vld [vmem:[%s695 + $0x2c] sm:$0x1]
      %v860 = vld [vmem:[%s695 + $0x38] sm:$0x1]
      %v861 = vld [vmem:[%s695 + $0x44] sm:$0x1]
      %v862 = vld [vmem:[%s695 + $0x50] sm:$0x1]
      %v863 = vld [vmem:[%s695 + $0x5c] sm:$0x1]
      %v864 = vld [vmem:[%s695 + $0x68] sm:$0x1]
      %v865 = vld [vmem:[%s695 + $0x74] sm:$0x1]
      %v866 = vld [vmem:[%s695 + $0x80] sm:$0x1]
      %v867 = vld [vmem:[%s695 + $0x8c] sm:$0x1]
      %v868 = vld [vmem:[%s695 + $0x98] sm:$0x1]
      %v869 = vld [vmem:[%s695 + $0xa4] sm:$0x1]
      %v870 = vld [vmem:[%s695 + $0xb0] sm:$0x1]
      %v871 = vld [vmem:[%s695 + $0xbc] sm:$0x1]
      %v872 = vunpack.c.l.bf16 %v824
      %v873 = vunpack.c.l.bf16 %v825
      %v874 = vunpack.c.l.bf16 %v826
      %v875 = vunpack.c.l.bf16 %v827
      %v876 = vunpack.c.l.bf16 %v828
      %v877 = vunpack.c.l.bf16 %v829
      %v878 = vunpack.c.l.bf16 %v830
      %v879 = vunpack.c.l.bf16 %v831
      %v880 = vunpack.c.l.bf16 %v832
      %v881 = vunpack.c.l.bf16 %v833
      %v882 = vunpack.c.l.bf16 %v834
      %v883 = vunpack.c.l.bf16 %v835
      %v884 = vunpack.c.l.bf16 %v836
      %v885 = vunpack.c.l.bf16 %v837
      %v886 = vunpack.c.l.bf16 %v838
      %v887 = vunpack.c.l.bf16 %v839
      %v888 = vunpack.c.l.bf16 %v840
      %v889 = vunpack.c.l.bf16 %v841
      %v890 = vunpack.c.l.bf16 %v842
      %v891 = vunpack.c.l.bf16 %v843
      %v892 = vunpack.c.l.bf16 %v844
      %v893 = vunpack.c.l.bf16 %v845
      %v894 = vunpack.c.l.bf16 %v846
      %v895 = vunpack.c.l.bf16 %v847
      %v896 = vunpack.c.l.bf16 %v848
      %v897 = vunpack.c.l.bf16 %v849
      %v898 = vunpack.c.l.bf16 %v850
      %v899 = vunpack.c.l.bf16 %v851
      %v900 = vunpack.c.l.bf16 %v852
      %v901 = vunpack.c.l.bf16 %v853
      %v902 = vunpack.c.l.bf16 %v854
      %v903 = vunpack.c.l.bf16 %v855
      %v904 = vunpack.c.l.bf16 %v856
      %v905 = vunpack.c.l.bf16 %v857
      %v906 = vunpack.c.l.bf16 %v858
      %v907 = vunpack.c.l.bf16 %v859
      %v908 = vunpack.c.l.bf16 %v860
      %v909 = vunpack.c.l.bf16 %v861
      %v910 = vunpack.c.l.bf16 %v862
      %v911 = vunpack.c.l.bf16 %v863
      %v912 = vunpack.c.l.bf16 %v864
      %v913 = vunpack.c.l.bf16 %v865
      %v914 = vunpack.c.l.bf16 %v866
      %v915 = vunpack.c.l.bf16 %v867
      %v916 = vunpack.c.l.bf16 %v868
      %v917 = vunpack.c.l.bf16 %v869
      %v918 = vunpack.c.l.bf16 %v870
      %v919 = vunpack.c.l.bf16 %v871
      %v968 = vrot.slane %v760, 1
      %v969 = vrot.slane %v761, 1
      %v970 = vsel %vm261, %v968, %v969
      %v971 = vrot.slane %v904, 1
      %v972 = vsel %vm261, %v969, %v971
      %v973 = vrot.slane %v762, 1
      %v974 = vrot.slane %v763, 1
      %v975 = vsel %vm261, %v973, %v974
      %v976 = vrot.slane %v905, 1
      %v977 = vsel %vm261, %v974, %v976
      %v978 = vrot.slane %v764, 1
      %v979 = vrot.slane %v765, 1
      %v980 = vsel %vm261, %v978, %v979
      %v981 = vrot.slane %v906, 1
      %v982 = vsel %vm261, %v979, %v981
      %v983 = vrot.slane %v766, 1
      %v984 = vrot.slane %v767, 1
      %v985 = vsel %vm261, %v983, %v984
      %v986 = vrot.slane %v907, 1
      %v987 = vsel %vm261, %v984, %v986
      %v988 = vrot.slane %v768, 1
      %v989 = vrot.slane %v769, 1
      %v990 = vsel %vm261, %v988, %v989
      %v991 = vrot.slane %v908, 1
      %v992 = vsel %vm261, %v989, %v991
      %v993 = vrot.slane %v770, 1
      %v994 = vrot.slane %v771, 1
      %v995 = vsel %vm261, %v993, %v994
      %v996 = vrot.slane %v909, 1
      %v997 = vsel %vm261, %v994, %v996
      %v998 = vrot.slane %v772, 1
      %v999 = vrot.slane %v773, 1
      %v1000 = vsel %vm261, %v998, %v999
      %v1001 = vrot.slane %v910, 1
      %v1002 = vsel %vm261, %v999, %v1001
      %v1003 = vrot.slane %v774, 1
      %v1004 = vrot.slane %v775, 1
      %v1005 = vsel %vm261, %v1003, %v1004
      %v1006 = vrot.slane %v911, 1
      %v1007 = vsel %vm261, %v1004, %v1006
      %v1008 = vrot.slane %v776, 1
      %v1009 = vrot.slane %v777, 1
      %v1010 = vsel %vm261, %v1008, %v1009
      %v1011 = vrot.slane %v912, 1
      %v1012 = vsel %vm261, %v1009, %v1011
      %v1013 = vrot.slane %v778, 1
      %v1014 = vrot.slane %v779, 1
      %v1015 = vsel %vm261, %v1013, %v1014
      %v1016 = vrot.slane %v913, 1
      %v1017 = vsel %vm261, %v1014, %v1016
      %v1018 = vrot.slane %v780, 1
      %v1019 = vrot.slane %v781, 1
      %v1020 = vsel %vm261, %v1018, %v1019
      %v1021 = vrot.slane %v914, 1
      %v1022 = vsel %vm261, %v1019, %v1021
      %v1023 = vrot.slane %v782, 1
      %v1024 = vrot.slane %v783, 1
      %v1025 = vsel %vm261, %v1023, %v1024
      %v1026 = vrot.slane %v915, 1
      %v1027 = vsel %vm261, %v1024, %v1026
      %v1028 = vrot.slane %v784, 1
      %v1029 = vrot.slane %v785, 1
      %v1030 = vsel %vm261, %v1028, %v1029
      %v1031 = vrot.slane %v916, 1
      %v1032 = vsel %vm261, %v1029, %v1031
      %v1033 = vrot.slane %v786, 1
      %v1034 = vrot.slane %v787, 1
      %v1035 = vsel %vm261, %v1033, %v1034
      %v1036 = vrot.slane %v917, 1
      %v1037 = vsel %vm261, %v1034, %v1036
      %v1038 = vrot.slane %v788, 1
      %v1039 = vrot.slane %v789, 1
      %v1040 = vsel %vm261, %v1038, %v1039
      %v1041 = vrot.slane %v918, 1
      %v1042 = vsel %vm261, %v1039, %v1041
      %v1043 = vrot.slane %v790, 1
      %v1044 = vrot.slane %v791, 1
      %v1045 = vsel %vm261, %v1043, %v1044
      %v1046 = vrot.slane %v919, 1
      %v1047 = vsel %vm261, %v1044, %v1046
      %v1080 = vmax.f32 %v872, %v970
      %v1081 = vmax.f32 %v873, %v972
      %v1082 = vmax.f32 %v874, %v975
      %v1083 = vmax.f32 %v875, %v977
      %v1084 = vmax.f32 %v876, %v980
      %v1085 = vmax.f32 %v877, %v982
      %v1086 = vmax.f32 %v878, %v985
      %v1087 = vmax.f32 %v879, %v987
      %v1088 = vmax.f32 %v880, %v990
      %v1089 = vmax.f32 %v881, %v992
      %v1090 = vmax.f32 %v882, %v995
      %v1091 = vmax.f32 %v883, %v997
      %v1092 = vmax.f32 %v884, %v1000
      %v1093 = vmax.f32 %v885, %v1002
      %v1094 = vmax.f32 %v886, %v1005
      %v1095 = vmax.f32 %v887, %v1007
      %v1096 = vmax.f32 %v888, %v1010
      %v1097 = vmax.f32 %v889, %v1012
      %v1098 = vmax.f32 %v890, %v1015
      %v1099 = vmax.f32 %v891, %v1017
      %v1100 = vmax.f32 %v892, %v1020
      %v1101 = vmax.f32 %v893, %v1022
      %v1102 = vmax.f32 %v894, %v1025
      %v1103 = vmax.f32 %v895, %v1027
      %v1104 = vmax.f32 %v896, %v1030
      %v1105 = vmax.f32 %v897, %v1032
      %v1106 = vmax.f32 %v898, %v1035
      %v1107 = vmax.f32 %v899, %v1037
      %v1108 = vmax.f32 %v900, %v1040
      %v1109 = vmax.f32 %v901, %v1042
      %v1110 = vmax.f32 %v902, %v1045
      %v1111 = vmax.f32 %v903, %v1047
      %v1112 = vpack.c.bf16 %v1080, %v1080
      %v1113 = vpack.c.bf16 %v1081, %v1081
      %v1114 = vpack.c.bf16 %v1082, %v1082
      %v1115 = vpack.c.bf16 %v1083, %v1083
      %v1116 = vpack.c.bf16 %v1084, %v1084
      %v1117 = vpack.c.bf16 %v1085, %v1085
      %v1118 = vpack.c.bf16 %v1086, %v1086
      %v1119 = vpack.c.bf16 %v1087, %v1087
      %v1120 = vpack.c.bf16 %v1088, %v1088
      %v1121 = vpack.c.bf16 %v1089, %v1089
      %v1122 = vpack.c.bf16 %v1090, %v1090
      %v1123 = vpack.c.bf16 %v1091, %v1091
      %v1124 = vpack.c.bf16 %v1092, %v1092
      %v1125 = vpack.c.bf16 %v1093, %v1093
      %v1126 = vpack.c.bf16 %v1094, %v1094
      %v1127 = vpack.c.bf16 %v1095, %v1095
      %v1128 = vpack.c.bf16 %v1096, %v1096
      %v1129 = vpack.c.bf16 %v1097, %v1097
      %v1130 = vpack.c.bf16 %v1098, %v1098
      %v1131 = vpack.c.bf16 %v1099, %v1099
      %v1132 = vpack.c.bf16 %v1100, %v1100
      %v1133 = vpack.c.bf16 %v1101, %v1101
      %v1134 = vpack.c.bf16 %v1102, %v1102
      %v1135 = vpack.c.bf16 %v1103, %v1103
      %v1136 = vpack.c.bf16 %v1104, %v1104
      %v1137 = vpack.c.bf16 %v1105, %v1105
      %v1138 = vpack.c.bf16 %v1106, %v1106
      %v1139 = vpack.c.bf16 %v1107, %v1107
      %v1140 = vpack.c.bf16 %v1108, %v1108
      %v1141 = vpack.c.bf16 %v1109, %v1109
      %v1142 = vpack.c.bf16 %v1110, %v1110
      %v1143 = vpack.c.bf16 %v1111, %v1111
      %v1144 = vld [vmem:[%s695] sm:$0xe]
      %v1145 = vld [vmem:[%s695 + $0xc] sm:$0xe]
      %v1146 = vld [vmem:[%s695 + $0x18] sm:$0xe]
      %v1147 = vld [vmem:[%s695 + $0x24] sm:$0xe]
      %v1148 = vld [vmem:[%s695 + $0x30] sm:$0xe]
      %v1149 = vld [vmem:[%s695 + $0x3c] sm:$0xe]
      %v1150 = vld [vmem:[%s695 + $0x48] sm:$0xe]
      %v1151 = vld [vmem:[%s695 + $0x54] sm:$0xe]
      %v1152 = vld [vmem:[%s695 + $0x60] sm:$0xe]
      %v1153 = vld [vmem:[%s695 + $0x6c] sm:$0xe]
      %v1154 = vld [vmem:[%s695 + $0x78] sm:$0xe]
      %v1155 = vld [vmem:[%s695 + $0x84] sm:$0xe]
      %v1156 = vld [vmem:[%s695 + $0x90] sm:$0xe]
      %v1157 = vld [vmem:[%s695 + $0x9c] sm:$0xe]
      %v1158 = vld [vmem:[%s695 + $0xa8] sm:$0xe]
      %v1159 = vld [vmem:[%s695 + $0xb4] sm:$0xe]
      %v1160 = vunpack.c.l.bf16 %v1112
      %v1161 = vunpack.c.l.bf16 %v1113
      %v1162 = vunpack.c.l.bf16 %v1114
      %v1163 = vunpack.c.l.bf16 %v1115
      %v1164 = vunpack.c.l.bf16 %v1116
      %v1165 = vunpack.c.l.bf16 %v1117
      %v1166 = vunpack.c.l.bf16 %v1118
      %v1167 = vunpack.c.l.bf16 %v1119
      %v1168 = vunpack.c.l.bf16 %v1120
      %v1169 = vunpack.c.l.bf16 %v1121
      %v1170 = vunpack.c.l.bf16 %v1122
      %v1171 = vunpack.c.l.bf16 %v1123
      %v1172 = vunpack.c.l.bf16 %v1124
      %v1173 = vunpack.c.l.bf16 %v1125
      %v1174 = vunpack.c.l.bf16 %v1126
      %v1175 = vunpack.c.l.bf16 %v1127
      %v1176 = vunpack.c.l.bf16 %v1128
      %v1177 = vunpack.c.l.bf16 %v1129
      %v1178 = vunpack.c.l.bf16 %v1130
      %v1179 = vunpack.c.l.bf16 %v1131
      %v1180 = vunpack.c.l.bf16 %v1132
      %v1181 = vunpack.c.l.bf16 %v1133
      %v1182 = vunpack.c.l.bf16 %v1134
      %v1183 = vunpack.c.l.bf16 %v1135
      %v1184 = vunpack.c.l.bf16 %v1136
      %v1185 = vunpack.c.l.bf16 %v1137
      %v1186 = vunpack.c.l.bf16 %v1138
      %v1187 = vunpack.c.l.bf16 %v1139
      %v1188 = vunpack.c.l.bf16 %v1140
      %v1189 = vunpack.c.l.bf16 %v1141
      %v1190 = vunpack.c.l.bf16 %v1142
      %v1191 = vunpack.c.l.bf16 %v1143
      %v1192 = vunpack.c.l.bf16 %v1144
      %v1193 = vunpack.c.l.bf16 %v1145
      %v1194 = vunpack.c.l.bf16 %v1146
      %v1195 = vunpack.c.l.bf16 %v1147
      %v1196 = vunpack.c.l.bf16 %v1148
      %v1197 = vunpack.c.l.bf16 %v1149
      %v1198 = vunpack.c.l.bf16 %v1150
      %v1199 = vunpack.c.l.bf16 %v1151
      %v1200 = vunpack.c.l.bf16 %v1152
      %v1201 = vunpack.c.l.bf16 %v1153
      %v1202 = vunpack.c.l.bf16 %v1154
      %v1203 = vunpack.c.l.bf16 %v1155
      %v1204 = vunpack.c.l.bf16 %v1156
      %v1205 = vunpack.c.l.bf16 %v1157
      %v1206 = vunpack.c.l.bf16 %v1158
      %v1207 = vunpack.c.l.bf16 %v1159
      %v1224 = vrot.slane %v1192, 2
      %v1225 = vrot.slane %v761, 2
      %v1226 = vsel %vm518, %v1224, %v1225
      %v1227 = vrot.slane %v904, 2
      %v1228 = vsel %vm518, %v1225, %v1227
      %v1229 = vrot.slane %v1193, 2
      %v1230 = vrot.slane %v763, 2
      %v1231 = vsel %vm518, %v1229, %v1230
      %v1232 = vrot.slane %v905, 2
      %v1233 = vsel %vm518, %v1230, %v1232
      %v1234 = vrot.slane %v1194, 2
      %v1235 = vrot.slane %v765, 2
      %v1236 = vsel %vm518, %v1234, %v1235
      %v1237 = vrot.slane %v906, 2
      %v1238 = vsel %vm518, %v1235, %v1237
      %v1239 = vrot.slane %v1195, 2
      %v1240 = vrot.slane %v767, 2
      %v1241 = vsel %vm518, %v1239, %v1240
      %v1242 = vrot.slane %v907, 2
      %v1243 = vsel %vm518, %v1240, %v1242
      %v1244 = vrot.slane %v1196, 2
      %v1245 = vrot.slane %v769, 2
      %v1246 = vsel %vm518, %v1244, %v1245
      %v1247 = vrot.slane %v908, 2
      %v1248 = vsel %vm518, %v1245, %v1247
      %v1249 = vrot.slane %v1197, 2
      %v1250 = vrot.slane %v771, 2
      %v1251 = vsel %vm518, %v1249, %v1250
      %v1252 = vrot.slane %v909, 2
      %v1253 = vsel %vm518, %v1250, %v1252
      %v1254 = vrot.slane %v1198, 2
      %v1255 = vrot.slane %v773, 2
      %v1256 = vsel %vm518, %v1254, %v1255
      %v1257 = vrot.slane %v910, 2
      %v1258 = vsel %vm518, %v1255, %v1257
      %v1259 = vrot.slane %v1199, 2
      %v1260 = vrot.slane %v775, 2
      %v1261 = vsel %vm518, %v1259, %v1260
      %v1262 = vrot.slane %v911, 2
      %v1263 = vsel %vm518, %v1260, %v1262
      %v1264 = vrot.slane %v1200, 2
      %v1265 = vrot.slane %v777, 2
      %v1266 = vsel %vm518, %v1264, %v1265
      %v1267 = vrot.slane %v912, 2
      %v1268 = vsel %vm518, %v1265, %v1267
      %v1269 = vrot.slane %v1201, 2
      %v1270 = vrot.slane %v779, 2
      %v1271 = vsel %vm518, %v1269, %v1270
      %v1272 = vrot.slane %v913, 2
      %v1273 = vsel %vm518, %v1270, %v1272
      %v1274 = vrot.slane %v1202, 2
      %v1275 = vrot.slane %v781, 2
      %v1276 = vsel %vm518, %v1274, %v1275
      %v1277 = vrot.slane %v914, 2
      %v1278 = vsel %vm518, %v1275, %v1277
      %v1279 = vrot.slane %v1203, 2
      %v1280 = vrot.slane %v783, 2
      %v1281 = vsel %vm518, %v1279, %v1280
      %v1282 = vrot.slane %v915, 2
      %v1283 = vsel %vm518, %v1280, %v1282
      %v1284 = vrot.slane %v1204, 2
      %v1285 = vrot.slane %v785, 2
      %v1286 = vsel %vm518, %v1284, %v1285
      %v1287 = vrot.slane %v916, 2
      %v1288 = vsel %vm518, %v1285, %v1287
      %v1289 = vrot.slane %v1205, 2
      %v1290 = vrot.slane %v787, 2
      %v1291 = vsel %vm518, %v1289, %v1290
      %v1292 = vrot.slane %v917, 2
      %v1293 = vsel %vm518, %v1290, %v1292
      %v1294 = vrot.slane %v1206, 2
      %v1295 = vrot.slane %v789, 2
      %v1296 = vsel %vm518, %v1294, %v1295
      %v1297 = vrot.slane %v918, 2
      %v1298 = vsel %vm518, %v1295, %v1297
      %v1299 = vrot.slane %v1207, 2
      %v1300 = vrot.slane %v791, 2
      %v1301 = vsel %vm518, %v1299, %v1300
      %v1302 = vrot.slane %v919, 2
      %v1303 = vsel %vm518, %v1300, %v1302
      %v1336 = vmax.f32 %v1160, %v1226
      %v1337 = vmax.f32 %v1161, %v1228
      %v1338 = vmax.f32 %v1162, %v1231
      %v1339 = vmax.f32 %v1163, %v1233
      %v1340 = vmax.f32 %v1164, %v1236
      %v1341 = vmax.f32 %v1165, %v1238
      %v1342 = vmax.f32 %v1166, %v1241
      %v1343 = vmax.f32 %v1167, %v1243
      %v1344 = vmax.f32 %v1168, %v1246
      %v1345 = vmax.f32 %v1169, %v1248
      %v1346 = vmax.f32 %v1170, %v1251
      %v1347 = vmax.f32 %v1171, %v1253
      %v1348 = vmax.f32 %v1172, %v1256
      %v1349 = vmax.f32 %v1173, %v1258
      %v1350 = vmax.f32 %v1174, %v1261
      %v1351 = vmax.f32 %v1175, %v1263
      %v1352 = vmax.f32 %v1176, %v1266
      %v1353 = vmax.f32 %v1177, %v1268
      %v1354 = vmax.f32 %v1178, %v1271
      %v1355 = vmax.f32 %v1179, %v1273
      %v1356 = vmax.f32 %v1180, %v1276
      %v1357 = vmax.f32 %v1181, %v1278
      %v1358 = vmax.f32 %v1182, %v1281
      %v1359 = vmax.f32 %v1183, %v1283
      %v1360 = vmax.f32 %v1184, %v1286
      %v1361 = vmax.f32 %v1185, %v1288
      %v1362 = vmax.f32 %v1186, %v1291
      %v1363 = vmax.f32 %v1187, %v1293
      %v1364 = vmax.f32 %v1188, %v1296
      %v1365 = vmax.f32 %v1189, %v1298
      %v1366 = vmax.f32 %v1190, %v1301
      %v1367 = vmax.f32 %v1191, %v1303
      %v1368 = vpack.c.bf16 %v1336, %v1336
      %v1369 = vpack.c.bf16 %v1337, %v1337
      %v1370 = vpack.c.bf16 %v1338, %v1338
      %v1371 = vpack.c.bf16 %v1339, %v1339
      %v1372 = vpack.c.bf16 %v1340, %v1340
      %v1373 = vpack.c.bf16 %v1341, %v1341
      %v1374 = vpack.c.bf16 %v1342, %v1342
      %v1375 = vpack.c.bf16 %v1343, %v1343
      %v1376 = vpack.c.bf16 %v1344, %v1344
      %v1377 = vpack.c.bf16 %v1345, %v1345
      %v1378 = vpack.c.bf16 %v1346, %v1346
      %v1379 = vpack.c.bf16 %v1347, %v1347
      %v1380 = vpack.c.bf16 %v1348, %v1348
      %v1381 = vpack.c.bf16 %v1349, %v1349
      %v1382 = vpack.c.bf16 %v1350, %v1350
      %v1383 = vpack.c.bf16 %v1351, %v1351
      %v1384 = vpack.c.bf16 %v1352, %v1352
      %v1385 = vpack.c.bf16 %v1353, %v1353
      %v1386 = vpack.c.bf16 %v1354, %v1354
      %v1387 = vpack.c.bf16 %v1355, %v1355
      %v1388 = vpack.c.bf16 %v1356, %v1356
      %v1389 = vpack.c.bf16 %v1357, %v1357
      %v1390 = vpack.c.bf16 %v1358, %v1358
      %v1391 = vpack.c.bf16 %v1359, %v1359
      %v1392 = vpack.c.bf16 %v1360, %v1360
      %v1393 = vpack.c.bf16 %v1361, %v1361
      %v1394 = vpack.c.bf16 %v1362, %v1362
      %v1395 = vpack.c.bf16 %v1363, %v1363
      %v1396 = vpack.c.bf16 %v1364, %v1364
      %v1397 = vpack.c.bf16 %v1365, %v1365
      %v1398 = vpack.c.bf16 %v1366, %v1366
      %v1399 = vpack.c.bf16 %v1367, %v1367
      %s1400 = scalar_lea.vmem %s111, 24
      %v1401 = vld [vmem:[%s1400] sm:$0xf]
      %v1402 = vld [vmem:[%s1400 + $0x4] sm:$0xf]
      %v1403 = vld [vmem:[%s1400 + $0xc] sm:$0xf]
      %v1404 = vld [vmem:[%s1400 + $0x10] sm:$0xf]
      %v1405 = vld [vmem:[%s1400 + $0x18] sm:$0xf]
      %v1406 = vld [vmem:[%s1400 + $0x1c] sm:$0xf]
      %v1407 = vld [vmem:[%s1400 + $0x24] sm:$0xf]
      %v1408 = vld [vmem:[%s1400 + $0x28] sm:$0xf]
      %v1409 = vld [vmem:[%s1400 + $0x30] sm:$0xf]
      %v1410 = vld [vmem:[%s1400 + $0x34] sm:$0xf]
      %v1411 = vld [vmem:[%s1400 + $0x3c] sm:$0xf]
      %v1412 = vld [vmem:[%s1400 + $0x40] sm:$0xf]
      %v1413 = vld [vmem:[%s1400 + $0x48] sm:$0xf]
      %v1414 = vld [vmem:[%s1400 + $0x4c] sm:$0xf]
      %v1415 = vld [vmem:[%s1400 + $0x54] sm:$0xf]
      %v1416 = vld [vmem:[%s1400 + $0x58] sm:$0xf]
      %v1417 = vld [vmem:[%s1400 + $0x60] sm:$0xf]
      %v1418 = vld [vmem:[%s1400 + $0x64] sm:$0xf]
      %v1419 = vld [vmem:[%s1400 + $0x6c] sm:$0xf]
      %v1420 = vld [vmem:[%s1400 + $0x70] sm:$0xf]
      %v1421 = vld [vmem:[%s1400 + $0x78] sm:$0xf]
      %v1422 = vld [vmem:[%s1400 + $0x7c] sm:$0xf]
      %v1423 = vld [vmem:[%s1400 + $0x84] sm:$0xf]
      %v1424 = vld [vmem:[%s1400 + $0x88] sm:$0xf]
      %v1425 = vld [vmem:[%s1400 + $0x90] sm:$0xf]
      %v1426 = vld [vmem:[%s1400 + $0x94] sm:$0xf]
      %v1427 = vld [vmem:[%s1400 + $0x9c] sm:$0xf]
      %v1428 = vld [vmem:[%s1400 + $0xa0] sm:$0xf]
      %v1429 = vld [vmem:[%s1400 + $0xa8] sm:$0xf]
      %v1430 = vld [vmem:[%s1400 + $0xac] sm:$0xf]
      %v1431 = vld [vmem:[%s1400 + $0xb4] sm:$0xf]
      %v1432 = vld [vmem:[%s1400 + $0xb8] sm:$0xf]
      %v1433 = vunpack.c.l.bf16 %v1368
      %v1434 = vunpack.c.l.bf16 %v1369
      %v1435 = vunpack.c.l.bf16 %v1370
      %v1436 = vunpack.c.l.bf16 %v1371
      %v1437 = vunpack.c.l.bf16 %v1372
      %v1438 = vunpack.c.l.bf16 %v1373
      %v1439 = vunpack.c.l.bf16 %v1374
      %v1440 = vunpack.c.l.bf16 %v1375
      %v1441 = vunpack.c.l.bf16 %v1376
      %v1442 = vunpack.c.l.bf16 %v1377
      %v1443 = vunpack.c.l.bf16 %v1378
      %v1444 = vunpack.c.l.bf16 %v1379
      %v1445 = vunpack.c.l.bf16 %v1380
      %v1446 = vunpack.c.l.bf16 %v1381
      %v1447 = vunpack.c.l.bf16 %v1382
      %v1448 = vunpack.c.l.bf16 %v1383
      %v1449 = vunpack.c.l.bf16 %v1384
      %v1450 = vunpack.c.l.bf16 %v1385
      %v1451 = vunpack.c.l.bf16 %v1386
      %v1452 = vunpack.c.l.bf16 %v1387
      %v1453 = vunpack.c.l.bf16 %v1388
      %v1454 = vunpack.c.l.bf16 %v1389
      %v1455 = vunpack.c.l.bf16 %v1390
      %v1456 = vunpack.c.l.bf16 %v1391
      %v1457 = vunpack.c.l.bf16 %v1392
      %v1458 = vunpack.c.l.bf16 %v1393
      %v1459 = vunpack.c.l.bf16 %v1394
      %v1460 = vunpack.c.l.bf16 %v1395
      %v1461 = vunpack.c.l.bf16 %v1396
      %v1462 = vunpack.c.l.bf16 %v1397
      %v1463 = vunpack.c.l.bf16 %v1398
      %v1464 = vunpack.c.l.bf16 %v1399
      %v1465 = vunpack.c.l.bf16 %v1401
      %v1466 = vunpack.c.l.bf16 %v1402
      %v1467 = vunpack.c.l.bf16 %v1403
      %v1468 = vunpack.c.l.bf16 %v1404
      %v1469 = vunpack.c.l.bf16 %v1405
      %v1470 = vunpack.c.l.bf16 %v1406
      %v1471 = vunpack.c.l.bf16 %v1407
      %v1472 = vunpack.c.l.bf16 %v1408
      %v1473 = vunpack.c.l.bf16 %v1409
      %v1474 = vunpack.c.l.bf16 %v1410
      %v1475 = vunpack.c.l.bf16 %v1411
      %v1476 = vunpack.c.l.bf16 %v1412
      %v1477 = vunpack.c.l.bf16 %v1413
      %v1478 = vunpack.c.l.bf16 %v1414
      %v1479 = vunpack.c.l.bf16 %v1415
      %v1480 = vunpack.c.l.bf16 %v1416
      %v1481 = vunpack.c.l.bf16 %v1417
      %v1482 = vunpack.c.l.bf16 %v1418
      %v1483 = vunpack.c.l.bf16 %v1419
      %v1484 = vunpack.c.l.bf16 %v1420
      %v1485 = vunpack.c.l.bf16 %v1421
      %v1486 = vunpack.c.l.bf16 %v1422
      %v1487 = vunpack.c.l.bf16 %v1423
      %v1488 = vunpack.c.l.bf16 %v1424
      %v1489 = vunpack.c.l.bf16 %v1425
      %v1490 = vunpack.c.l.bf16 %v1426
      %v1491 = vunpack.c.l.bf16 %v1427
      %v1492 = vunpack.c.l.bf16 %v1428
      %v1493 = vunpack.c.l.bf16 %v1429
      %v1494 = vunpack.c.l.bf16 %v1430
      %v1495 = vunpack.c.l.bf16 %v1431
      %v1496 = vunpack.c.l.bf16 %v1432
      %v1497 = vmax.f32 %v1433, %v1465
      %v1498 = vmax.f32 %v1434, %v1466
      %v1499 = vmax.f32 %v1435, %v1467
      %v1500 = vmax.f32 %v1436, %v1468
      %v1501 = vmax.f32 %v1437, %v1469
      %v1502 = vmax.f32 %v1438, %v1470
      %v1503 = vmax.f32 %v1439, %v1471
      %v1504 = vmax.f32 %v1440, %v1472
      %v1505 = vmax.f32 %v1441, %v1473
      %v1506 = vmax.f32 %v1442, %v1474
      %v1507 = vmax.f32 %v1443, %v1475
      %v1508 = vmax.f32 %v1444, %v1476
      %v1509 = vmax.f32 %v1445, %v1477
      %v1510 = vmax.f32 %v1446, %v1478
      %v1511 = vmax.f32 %v1447, %v1479
      %v1512 = vmax.f32 %v1448, %v1480
      %v1513 = vmax.f32 %v1449, %v1481
      %v1514 = vmax.f32 %v1450, %v1482
      %v1515 = vmax.f32 %v1451, %v1483
      %v1516 = vmax.f32 %v1452, %v1484
      %v1517 = vmax.f32 %v1453, %v1485
      %v1518 = vmax.f32 %v1454, %v1486
      %v1519 = vmax.f32 %v1455, %v1487
      %v1520 = vmax.f32 %v1456, %v1488
      %v1521 = vmax.f32 %v1457, %v1489
      %v1522 = vmax.f32 %v1458, %v1490
      %v1523 = vmax.f32 %v1459, %v1491
      %v1524 = vmax.f32 %v1460, %v1492
      %v1525 = vmax.f32 %v1461, %v1493
      %v1526 = vmax.f32 %v1462, %v1494
      %v1527 = vmax.f32 %v1463, %v1495
      %v1528 = vmax.f32 %v1464, %v1496
      %v1529 = vpack.c.bf16 %v1497, %v1497
      %v1530 = vpack.c.bf16 %v1498, %v1498
      %v1531 = vpack.c.bf16 %v1499, %v1499
      %v1532 = vpack.c.bf16 %v1500, %v1500
      %v1533 = vpack.c.bf16 %v1501, %v1501
      %v1534 = vpack.c.bf16 %v1502, %v1502
      %v1535 = vpack.c.bf16 %v1503, %v1503
      %v1536 = vpack.c.bf16 %v1504, %v1504
      %v1537 = vpack.c.bf16 %v1505, %v1505
      %v1538 = vpack.c.bf16 %v1506, %v1506
      %v1539 = vpack.c.bf16 %v1507, %v1507
      %v1540 = vpack.c.bf16 %v1508, %v1508
      %v1541 = vpack.c.bf16 %v1509, %v1509
      %v1542 = vpack.c.bf16 %v1510, %v1510
      %v1543 = vpack.c.bf16 %v1511, %v1511
      %v1544 = vpack.c.bf16 %v1512, %v1512
      %v1545 = vpack.c.bf16 %v1513, %v1513
      %v1546 = vpack.c.bf16 %v1514, %v1514
      %v1547 = vpack.c.bf16 %v1515, %v1515
      %v1548 = vpack.c.bf16 %v1516, %v1516
      %v1549 = vpack.c.bf16 %v1517, %v1517
      %v1550 = vpack.c.bf16 %v1518, %v1518
      %v1551 = vpack.c.bf16 %v1519, %v1519
      %v1552 = vpack.c.bf16 %v1520, %v1520
      %v1553 = vpack.c.bf16 %v1521, %v1521
      %v1554 = vpack.c.bf16 %v1522, %v1522
      %v1555 = vpack.c.bf16 %v1523, %v1523
      %v1556 = vpack.c.bf16 %v1524, %v1524
      %v1557 = vpack.c.bf16 %v1525, %v1525
      %v1558 = vpack.c.bf16 %v1526, %v1526
      %v1559 = vpack.c.bf16 %v1527, %v1527
      %v1560 = vpack.c.bf16 %v1528, %v1528
      %v1561 = vld [vmem:[%s1400 + $0x8] sm:$0x1]
      %v1562 = vld [vmem:[%s1400 + $0x14] sm:$0x1]
      %v1563 = vld [vmem:[%s1400 + $0x20] sm:$0x1]
      %v1564 = vld [vmem:[%s1400 + $0x2c] sm:$0x1]
      %v1565 = vld [vmem:[%s1400 + $0x38] sm:$0x1]
      %v1566 = vld [vmem:[%s1400 + $0x44] sm:$0x1]
      %v1567 = vld [vmem:[%s1400 + $0x50] sm:$0x1]
      %v1568 = vld [vmem:[%s1400 + $0x5c] sm:$0x1]
      %v1569 = vld [vmem:[%s1400 + $0x68] sm:$0x1]
      %v1570 = vld [vmem:[%s1400 + $0x74] sm:$0x1]
      %v1571 = vld [vmem:[%s1400 + $0x80] sm:$0x1]
      %v1572 = vld [vmem:[%s1400 + $0x8c] sm:$0x1]
      %v1573 = vld [vmem:[%s1400 + $0x98] sm:$0x1]
      %v1574 = vld [vmem:[%s1400 + $0xa4] sm:$0x1]
      %v1575 = vld [vmem:[%s1400 + $0xb0] sm:$0x1]
      %v1576 = vld [vmem:[%s1400 + $0xbc] sm:$0x1]
      %v1577 = vunpack.c.l.bf16 %v1529
      %v1578 = vunpack.c.l.bf16 %v1530
      %v1579 = vunpack.c.l.bf16 %v1531
      %v1580 = vunpack.c.l.bf16 %v1532
      %v1581 = vunpack.c.l.bf16 %v1533
      %v1582 = vunpack.c.l.bf16 %v1534
      %v1583 = vunpack.c.l.bf16 %v1535
      %v1584 = vunpack.c.l.bf16 %v1536
      %v1585 = vunpack.c.l.bf16 %v1537
      %v1586 = vunpack.c.l.bf16 %v1538
      %v1587 = vunpack.c.l.bf16 %v1539
      %v1588 = vunpack.c.l.bf16 %v1540
      %v1589 = vunpack.c.l.bf16 %v1541
      %v1590 = vunpack.c.l.bf16 %v1542
      %v1591 = vunpack.c.l.bf16 %v1543
      %v1592 = vunpack.c.l.bf16 %v1544
      %v1593 = vunpack.c.l.bf16 %v1545
      %v1594 = vunpack.c.l.bf16 %v1546
      %v1595 = vunpack.c.l.bf16 %v1547
      %v1596 = vunpack.c.l.bf16 %v1548
      %v1597 = vunpack.c.l.bf16 %v1549
      %v1598 = vunpack.c.l.bf16 %v1550
      %v1599 = vunpack.c.l.bf16 %v1551
      %v1600 = vunpack.c.l.bf16 %v1552
      %v1601 = vunpack.c.l.bf16 %v1553
      %v1602 = vunpack.c.l.bf16 %v1554
      %v1603 = vunpack.c.l.bf16 %v1555
      %v1604 = vunpack.c.l.bf16 %v1556
      %v1605 = vunpack.c.l.bf16 %v1557
      %v1606 = vunpack.c.l.bf16 %v1558
      %v1607 = vunpack.c.l.bf16 %v1559
      %v1608 = vunpack.c.l.bf16 %v1560
      %v1609 = vunpack.c.l.bf16 %v1561
      %v1610 = vunpack.c.l.bf16 %v1562
      %v1611 = vunpack.c.l.bf16 %v1563
      %v1612 = vunpack.c.l.bf16 %v1564
      %v1613 = vunpack.c.l.bf16 %v1565
      %v1614 = vunpack.c.l.bf16 %v1566
      %v1615 = vunpack.c.l.bf16 %v1567
      %v1616 = vunpack.c.l.bf16 %v1568
      %v1617 = vunpack.c.l.bf16 %v1569
      %v1618 = vunpack.c.l.bf16 %v1570
      %v1619 = vunpack.c.l.bf16 %v1571
      %v1620 = vunpack.c.l.bf16 %v1572
      %v1621 = vunpack.c.l.bf16 %v1573
      %v1622 = vunpack.c.l.bf16 %v1574
      %v1623 = vunpack.c.l.bf16 %v1575
      %v1624 = vunpack.c.l.bf16 %v1576
      %v1673 = vrot.slane %v1465, 1
      %v1674 = vrot.slane %v1466, 1
      %v1675 = vsel %vm261, %v1673, %v1674
      %v1676 = vrot.slane %v1609, 1
      %v1677 = vsel %vm261, %v1674, %v1676
      %v1678 = vrot.slane %v1467, 1
      %v1679 = vrot.slane %v1468, 1
      %v1680 = vsel %vm261, %v1678, %v1679
      %v1681 = vrot.slane %v1610, 1
      %v1682 = vsel %vm261, %v1679, %v1681
      %v1683 = vrot.slane %v1469, 1
      %v1684 = vrot.slane %v1470, 1
      %v1685 = vsel %vm261, %v1683, %v1684
      %v1686 = vrot.slane %v1611, 1
      %v1687 = vsel %vm261, %v1684, %v1686
      %v1688 = vrot.slane %v1471, 1
      %v1689 = vrot.slane %v1472, 1
      %v1690 = vsel %vm261, %v1688, %v1689
      %v1691 = vrot.slane %v1612, 1
      %v1692 = vsel %vm261, %v1689, %v1691
      %v1693 = vrot.slane %v1473, 1
      %v1694 = vrot.slane %v1474, 1
      %v1695 = vsel %vm261, %v1693, %v1694
      %v1696 = vrot.slane %v1613, 1
      %v1697 = vsel %vm261, %v1694, %v1696
      %v1698 = vrot.slane %v1475, 1
      %v1699 = vrot.slane %v1476, 1
      %v1700 = vsel %vm261, %v1698, %v1699
      %v1701 = vrot.slane %v1614, 1
      %v1702 = vsel %vm261, %v1699, %v1701
      %v1703 = vrot.slane %v1477, 1
      %v1704 = vrot.slane %v1478, 1
      %v1705 = vsel %vm261, %v1703, %v1704
      %v1706 = vrot.slane %v1615, 1
      %v1707 = vsel %vm261, %v1704, %v1706
      %v1708 = vrot.slane %v1479, 1
      %v1709 = vrot.slane %v1480, 1
      %v1710 = vsel %vm261, %v1708, %v1709
      %v1711 = vrot.slane %v1616, 1
      %v1712 = vsel %vm261, %v1709, %v1711
      %v1713 = vrot.slane %v1481, 1
      %v1714 = vrot.slane %v1482, 1
      %v1715 = vsel %vm261, %v1713, %v1714
      %v1716 = vrot.slane %v1617, 1
      %v1717 = vsel %vm261, %v1714, %v1716
      %v1718 = vrot.slane %v1483, 1
      %v1719 = vrot.slane %v1484, 1
      %v1720 = vsel %vm261, %v1718, %v1719
      %v1721 = vrot.slane %v1618, 1
      %v1722 = vsel %vm261, %v1719, %v1721
      %v1723 = vrot.slane %v1485, 1
      %v1724 = vrot.slane %v1486, 1
      %v1725 = vsel %vm261, %v1723, %v1724
      %v1726 = vrot.slane %v1619, 1
      %v1727 = vsel %vm261, %v1724, %v1726
      %v1728 = vrot.slane %v1487, 1
      %v1729 = vrot.slane %v1488, 1
      %v1730 = vsel %vm261, %v1728, %v1729
      %v1731 = vrot.slane %v1620, 1
      %v1732 = vsel %vm261, %v1729, %v1731
      %v1733 = vrot.slane %v1489, 1
      %v1734 = vrot.slane %v1490, 1
      %v1735 = vsel %vm261, %v1733, %v1734
      %v1736 = vrot.slane %v1621, 1
      %v1737 = vsel %vm261, %v1734, %v1736
      %v1738 = vrot.slane %v1491, 1
      %v1739 = vrot.slane %v1492, 1
      %v1740 = vsel %vm261, %v1738, %v1739
      %v1741 = vrot.slane %v1622, 1
      %v1742 = vsel %vm261, %v1739, %v1741
      %v1743 = vrot.slane %v1493, 1
      %v1744 = vrot.slane %v1494, 1
      %v1745 = vsel %vm261, %v1743, %v1744
      %v1746 = vrot.slane %v1623, 1
      %v1747 = vsel %vm261, %v1744, %v1746
      %v1748 = vrot.slane %v1495, 1
      %v1749 = vrot.slane %v1496, 1
      %v1750 = vsel %vm261, %v1748, %v1749
      %v1751 = vrot.slane %v1624, 1
      %v1752 = vsel %vm261, %v1749, %v1751
      %v1785 = vmax.f32 %v1577, %v1675
      %v1786 = vmax.f32 %v1578, %v1677
      %v1787 = vmax.f32 %v1579, %v1680
      %v1788 = vmax.f32 %v1580, %v1682
      %v1789 = vmax.f32 %v1581, %v1685
      %v1790 = vmax.f32 %v1582, %v1687
      %v1791 = vmax.f32 %v1583, %v1690
      %v1792 = vmax.f32 %v1584, %v1692
      %v1793 = vmax.f32 %v1585, %v1695
      %v1794 = vmax.f32 %v1586, %v1697
      %v1795 = vmax.f32 %v1587, %v1700
      %v1796 = vmax.f32 %v1588, %v1702
      %v1797 = vmax.f32 %v1589, %v1705
      %v1798 = vmax.f32 %v1590, %v1707
      %v1799 = vmax.f32 %v1591, %v1710
      %v1800 = vmax.f32 %v1592, %v1712
      %v1801 = vmax.f32 %v1593, %v1715
      %v1802 = vmax.f32 %v1594, %v1717
      %v1803 = vmax.f32 %v1595, %v1720
      %v1804 = vmax.f32 %v1596, %v1722
      %v1805 = vmax.f32 %v1597, %v1725
      %v1806 = vmax.f32 %v1598, %v1727
      %v1807 = vmax.f32 %v1599, %v1730
      %v1808 = vmax.f32 %v1600, %v1732
      %v1809 = vmax.f32 %v1601, %v1735
      %v1810 = vmax.f32 %v1602, %v1737
      %v1811 = vmax.f32 %v1603, %v1740
      %v1812 = vmax.f32 %v1604, %v1742
      %v1813 = vmax.f32 %v1605, %v1745
      %v1814 = vmax.f32 %v1606, %v1747
      %v1815 = vmax.f32 %v1607, %v1750
      %v1816 = vmax.f32 %v1608, %v1752
      %v1817 = vpack.c.bf16 %v1785, %v1785
      %v1818 = vpack.c.bf16 %v1786, %v1786
      %v1819 = vpack.c.bf16 %v1787, %v1787
      %v1820 = vpack.c.bf16 %v1788, %v1788
      %v1821 = vpack.c.bf16 %v1789, %v1789
      %v1822 = vpack.c.bf16 %v1790, %v1790
      %v1823 = vpack.c.bf16 %v1791, %v1791
      %v1824 = vpack.c.bf16 %v1792, %v1792
      %v1825 = vpack.c.bf16 %v1793, %v1793
      %v1826 = vpack.c.bf16 %v1794, %v1794
      %v1827 = vpack.c.bf16 %v1795, %v1795
      %v1828 = vpack.c.bf16 %v1796, %v1796
      %v1829 = vpack.c.bf16 %v1797, %v1797
      %v1830 = vpack.c.bf16 %v1798, %v1798
      %v1831 = vpack.c.bf16 %v1799, %v1799
      %v1832 = vpack.c.bf16 %v1800, %v1800
      %v1833 = vpack.c.bf16 %v1801, %v1801
      %v1834 = vpack.c.bf16 %v1802, %v1802
      %v1835 = vpack.c.bf16 %v1803, %v1803
      %v1836 = vpack.c.bf16 %v1804, %v1804
      %v1837 = vpack.c.bf16 %v1805, %v1805
      %v1838 = vpack.c.bf16 %v1806, %v1806
      %v1839 = vpack.c.bf16 %v1807, %v1807
      %v1840 = vpack.c.bf16 %v1808, %v1808
      %v1841 = vpack.c.bf16 %v1809, %v1809
      %v1842 = vpack.c.bf16 %v1810, %v1810
      %v1843 = vpack.c.bf16 %v1811, %v1811
      %v1844 = vpack.c.bf16 %v1812, %v1812
      %v1845 = vpack.c.bf16 %v1813, %v1813
      %v1846 = vpack.c.bf16 %v1814, %v1814
      %v1847 = vpack.c.bf16 %v1815, %v1815
      %v1848 = vpack.c.bf16 %v1816, %v1816
      %v1849 = vld [vmem:[%s1400] sm:$0xe]
      %v1850 = vld [vmem:[%s1400 + $0xc] sm:$0xe]
      %v1851 = vld [vmem:[%s1400 + $0x18] sm:$0xe]
      %v1852 = vld [vmem:[%s1400 + $0x24] sm:$0xe]
      %v1853 = vld [vmem:[%s1400 + $0x30] sm:$0xe]
      %v1854 = vld [vmem:[%s1400 + $0x3c] sm:$0xe]
      %v1855 = vld [vmem:[%s1400 + $0x48] sm:$0xe]
      %v1856 = vld [vmem:[%s1400 + $0x54] sm:$0xe]
      %v1857 = vld [vmem:[%s1400 + $0x60] sm:$0xe]
      %v1858 = vld [vmem:[%s1400 + $0x6c] sm:$0xe]
      %v1859 = vld [vmem:[%s1400 + $0x78] sm:$0xe]
      %v1860 = vld [vmem:[%s1400 + $0x84] sm:$0xe]
      %v1861 = vld [vmem:[%s1400 + $0x90] sm:$0xe]
      %v1862 = vld [vmem:[%s1400 + $0x9c] sm:$0xe]
      %v1863 = vld [vmem:[%s1400 + $0xa8] sm:$0xe]
      %v1864 = vld [vmem:[%s1400 + $0xb4] sm:$0xe]
      %v1865 = vunpack.c.l.bf16 %v1817
      %v1866 = vunpack.c.l.bf16 %v1818
      %v1867 = vunpack.c.l.bf16 %v1819
      %v1868 = vunpack.c.l.bf16 %v1820
      %v1869 = vunpack.c.l.bf16 %v1821
      %v1870 = vunpack.c.l.bf16 %v1822
      %v1871 = vunpack.c.l.bf16 %v1823
      %v1872 = vunpack.c.l.bf16 %v1824
      %v1873 = vunpack.c.l.bf16 %v1825
      %v1874 = vunpack.c.l.bf16 %v1826
      %v1875 = vunpack.c.l.bf16 %v1827
      %v1876 = vunpack.c.l.bf16 %v1828
      %v1877 = vunpack.c.l.bf16 %v1829
      %v1878 = vunpack.c.l.bf16 %v1830
      %v1879 = vunpack.c.l.bf16 %v1831
      %v1880 = vunpack.c.l.bf16 %v1832
      %v1881 = vunpack.c.l.bf16 %v1833
      %v1882 = vunpack.c.l.bf16 %v1834
      %v1883 = vunpack.c.l.bf16 %v1835
      %v1884 = vunpack.c.l.bf16 %v1836
      %v1885 = vunpack.c.l.bf16 %v1837
      %v1886 = vunpack.c.l.bf16 %v1838
      %v1887 = vunpack.c.l.bf16 %v1839
      %v1888 = vunpack.c.l.bf16 %v1840
      %v1889 = vunpack.c.l.bf16 %v1841
      %v1890 = vunpack.c.l.bf16 %v1842
      %v1891 = vunpack.c.l.bf16 %v1843
      %v1892 = vunpack.c.l.bf16 %v1844
      %v1893 = vunpack.c.l.bf16 %v1845
      %v1894 = vunpack.c.l.bf16 %v1846
      %v1895 = vunpack.c.l.bf16 %v1847
      %v1896 = vunpack.c.l.bf16 %v1848
      %v1897 = vunpack.c.l.bf16 %v1849
      %v1898 = vunpack.c.l.bf16 %v1850
      %v1899 = vunpack.c.l.bf16 %v1851
      %v1900 = vunpack.c.l.bf16 %v1852
      %v1901 = vunpack.c.l.bf16 %v1853
      %v1902 = vunpack.c.l.bf16 %v1854
      %v1903 = vunpack.c.l.bf16 %v1855
      %v1904 = vunpack.c.l.bf16 %v1856
      %v1905 = vunpack.c.l.bf16 %v1857
      %v1906 = vunpack.c.l.bf16 %v1858
      %v1907 = vunpack.c.l.bf16 %v1859
      %v1908 = vunpack.c.l.bf16 %v1860
      %v1909 = vunpack.c.l.bf16 %v1861
      %v1910 = vunpack.c.l.bf16 %v1862
      %v1911 = vunpack.c.l.bf16 %v1863
      %v1912 = vunpack.c.l.bf16 %v1864
      %v1929 = vrot.slane %v1897, 2
      %v1930 = vrot.slane %v1466, 2
      %v1931 = vsel %vm518, %v1929, %v1930
      %v1932 = vrot.slane %v1609, 2
      %v1933 = vsel %vm518, %v1930, %v1932
      %v1934 = vrot.slane %v1898, 2
      %v1935 = vrot.slane %v1468, 2
      %v1936 = vsel %vm518, %v1934, %v1935
      %v1937 = vrot.slane %v1610, 2
      %v1938 = vsel %vm518, %v1935, %v1937
      %v1939 = vrot.slane %v1899, 2
      %v1940 = vrot.slane %v1470, 2
      %v1941 = vsel %vm518, %v1939, %v1940
      %v1942 = vrot.slane %v1611, 2
      %v1943 = vsel %vm518, %v1940, %v1942
      %v1944 = vrot.slane %v1900, 2
      %v1945 = vrot.slane %v1472, 2
      %v1946 = vsel %vm518, %v1944, %v1945
      %v1947 = vrot.slane %v1612, 2
      %v1948 = vsel %vm518, %v1945, %v1947
      %v1949 = vrot.slane %v1901, 2
      %v1950 = vrot.slane %v1474, 2
      %v1951 = vsel %vm518, %v1949, %v1950
      %v1952 = vrot.slane %v1613, 2
      %v1953 = vsel %vm518, %v1950, %v1952
      %v1954 = vrot.slane %v1902, 2
      %v1955 = vrot.slane %v1476, 2
      %v1956 = vsel %vm518, %v1954, %v1955
      %v1957 = vrot.slane %v1614, 2
      %v1958 = vsel %vm518, %v1955, %v1957
      %v1959 = vrot.slane %v1903, 2
      %v1960 = vrot.slane %v1478, 2
      %v1961 = vsel %vm518, %v1959, %v1960
      %v1962 = vrot.slane %v1615, 2
      %v1963 = vsel %vm518, %v1960, %v1962
      %v1964 = vrot.slane %v1904, 2
      %v1965 = vrot.slane %v1480, 2
      %v1966 = vsel %vm518, %v1964, %v1965
      %v1967 = vrot.slane %v1616, 2
      %v1968 = vsel %vm518, %v1965, %v1967
      %v1969 = vrot.slane %v1905, 2
      %v1970 = vrot.slane %v1482, 2
      %v1971 = vsel %vm518, %v1969, %v1970
      %v1972 = vrot.slane %v1617, 2
      %v1973 = vsel %vm518, %v1970, %v1972
      %v1974 = vrot.slane %v1906, 2
      %v1975 = vrot.slane %v1484, 2
      %v1976 = vsel %vm518, %v1974, %v1975
      %v1977 = vrot.slane %v1618, 2
      %v1978 = vsel %vm518, %v1975, %v1977
      %v1979 = vrot.slane %v1907, 2
      %v1980 = vrot.slane %v1486, 2
      %v1981 = vsel %vm518, %v1979, %v1980
      %v1982 = vrot.slane %v1619, 2
      %v1983 = vsel %vm518, %v1980, %v1982
      %v1984 = vrot.slane %v1908, 2
      %v1985 = vrot.slane %v1488, 2
      %v1986 = vsel %vm518, %v1984, %v1985
      %v1987 = vrot.slane %v1620, 2
      %v1988 = vsel %vm518, %v1985, %v1987
      %v1989 = vrot.slane %v1909, 2
      %v1990 = vrot.slane %v1490, 2
      %v1991 = vsel %vm518, %v1989, %v1990
      %v1992 = vrot.slane %v1621, 2
      %v1993 = vsel %vm518, %v1990, %v1992
      %v1994 = vrot.slane %v1910, 2
      %v1995 = vrot.slane %v1492, 2
      %v1996 = vsel %vm518, %v1994, %v1995
      %v1997 = vrot.slane %v1622, 2
      %v1998 = vsel %vm518, %v1995, %v1997
      %v1999 = vrot.slane %v1911, 2
      %v2000 = vrot.slane %v1494, 2
      %v2001 = vsel %vm518, %v1999, %v2000
      %v2002 = vrot.slane %v1623, 2
      %v2003 = vsel %vm518, %v2000, %v2002
      %v2004 = vrot.slane %v1912, 2
      %v2005 = vrot.slane %v1496, 2
      %v2006 = vsel %vm518, %v2004, %v2005
      %v2007 = vrot.slane %v1624, 2
      %v2008 = vsel %vm518, %v2005, %v2007
      %v2041 = vmax.f32 %v1865, %v1931
      %v2042 = vmax.f32 %v1866, %v1933
      %v2043 = vmax.f32 %v1867, %v1936
      %v2044 = vmax.f32 %v1868, %v1938
      %v2045 = vmax.f32 %v1869, %v1941
      %v2046 = vmax.f32 %v1870, %v1943
      %v2047 = vmax.f32 %v1871, %v1946
      %v2048 = vmax.f32 %v1872, %v1948
      %v2049 = vmax.f32 %v1873, %v1951
      %v2050 = vmax.f32 %v1874, %v1953
      %v2051 = vmax.f32 %v1875, %v1956
      %v2052 = vmax.f32 %v1876, %v1958
      %v2053 = vmax.f32 %v1877, %v1961
      %v2054 = vmax.f32 %v1878, %v1963
      %v2055 = vmax.f32 %v1879, %v1966
      %v2056 = vmax.f32 %v1880, %v1968
      %v2057 = vmax.f32 %v1881, %v1971
      %v2058 = vmax.f32 %v1882, %v1973
      %v2059 = vmax.f32 %v1883, %v1976
      %v2060 = vmax.f32 %v1884, %v1978
      %v2061 = vmax.f32 %v1885, %v1981
      %v2062 = vmax.f32 %v1886, %v1983
      %v2063 = vmax.f32 %v1887, %v1986
      %v2064 = vmax.f32 %v1888, %v1988
      %v2065 = vmax.f32 %v1889, %v1991
      %v2066 = vmax.f32 %v1890, %v1993
      %v2067 = vmax.f32 %v1891, %v1996
      %v2068 = vmax.f32 %v1892, %v1998
      %v2069 = vmax.f32 %v1893, %v2001
      %v2070 = vmax.f32 %v1894, %v2003
      %v2071 = vmax.f32 %v1895, %v2006
      %v2072 = vmax.f32 %v1896, %v2008
      %v2073 = vpack.c.bf16 %v2041, %v2041
      %v2074 = vpack.c.bf16 %v2042, %v2042
      %v2075 = vpack.c.bf16 %v2043, %v2043
      %v2076 = vpack.c.bf16 %v2044, %v2044
      %v2077 = vpack.c.bf16 %v2045, %v2045
      %v2078 = vpack.c.bf16 %v2046, %v2046
      %v2079 = vpack.c.bf16 %v2047, %v2047
      %v2080 = vpack.c.bf16 %v2048, %v2048
      %v2081 = vpack.c.bf16 %v2049, %v2049
      %v2082 = vpack.c.bf16 %v2050, %v2050
      %v2083 = vpack.c.bf16 %v2051, %v2051
      %v2084 = vpack.c.bf16 %v2052, %v2052
      %v2085 = vpack.c.bf16 %v2053, %v2053
      %v2086 = vpack.c.bf16 %v2054, %v2054
      %v2087 = vpack.c.bf16 %v2055, %v2055
      %v2088 = vpack.c.bf16 %v2056, %v2056
      %v2089 = vpack.c.bf16 %v2057, %v2057
      %v2090 = vpack.c.bf16 %v2058, %v2058
      %v2091 = vpack.c.bf16 %v2059, %v2059
      %v2092 = vpack.c.bf16 %v2060, %v2060
      %v2093 = vpack.c.bf16 %v2061, %v2061
      %v2094 = vpack.c.bf16 %v2062, %v2062
      %v2095 = vpack.c.bf16 %v2063, %v2063
      %v2096 = vpack.c.bf16 %v2064, %v2064
      %v2097 = vpack.c.bf16 %v2065, %v2065
      %v2098 = vpack.c.bf16 %v2066, %v2066
      %v2099 = vpack.c.bf16 %v2067, %v2067
      %v2100 = vpack.c.bf16 %v2068, %v2068
      %v2101 = vpack.c.bf16 %v2069, %v2069
      %v2102 = vpack.c.bf16 %v2070, %v2070
      %v2103 = vpack.c.bf16 %v2071, %v2071
      %v2104 = vpack.c.bf16 %v2072, %v2072
      %vm2105 = vcmask 60416
      %2106 = vst.msk [vmem:[%s116] sm:$0xf] %vm2105, %v2073
      %2107 = vst.msk [vmem:[%s116 + $0x4] sm:$0xf] %vm2105, %v2074
      %2108 = vst.msk [vmem:[%s116 + $0x8] sm:$0xf] %vm2105, %v2075
      %2109 = vst.msk [vmem:[%s116 + $0xc] sm:$0xf] %vm2105, %v2076
      %2110 = vst.msk [vmem:[%s116 + $0x10] sm:$0xf] %vm2105, %v2077
      %2111 = vst.msk [vmem:[%s116 + $0x14] sm:$0xf] %vm2105, %v2078
      %2112 = vst.msk [vmem:[%s116 + $0x18] sm:$0xf] %vm2105, %v2079
      %2113 = vst.msk [vmem:[%s116 + $0x1c] sm:$0xf] %vm2105, %v2080
      %2114 = vst.msk [vmem:[%s116 + $0x20] sm:$0xf] %vm2105, %v2081
      %2115 = vst.msk [vmem:[%s116 + $0x24] sm:$0xf] %vm2105, %v2082
      %2116 = vst.msk [vmem:[%s116 + $0x28] sm:$0xf] %vm2105, %v2083
      %2117 = vst.msk [vmem:[%s116 + $0x2c] sm:$0xf] %vm2105, %v2084
      %2118 = vst.msk [vmem:[%s116 + $0x30] sm:$0xf] %vm2105, %v2085
      %2119 = vst.msk [vmem:[%s116 + $0x34] sm:$0xf] %vm2105, %v2086
      %2120 = vst.msk [vmem:[%s116 + $0x38] sm:$0xf] %vm2105, %v2087
      %2121 = vst.msk [vmem:[%s116 + $0x3c] sm:$0xf] %vm2105, %v2088
      %2122 = vst.msk [vmem:[%s116 + $0x40] sm:$0xf] %vm2105, %v2089
      %2123 = vst.msk [vmem:[%s116 + $0x44] sm:$0xf] %vm2105, %v2090
      %2124 = vst.msk [vmem:[%s116 + $0x48] sm:$0xf] %vm2105, %v2091
      %2125 = vst.msk [vmem:[%s116 + $0x4c] sm:$0xf] %vm2105, %v2092
      %2126 = vst.msk [vmem:[%s116 + $0x50] sm:$0xf] %vm2105, %v2093
      %2127 = vst.msk [vmem:[%s116 + $0x54] sm:$0xf] %vm2105, %v2094
      %2128 = vst.msk [vmem:[%s116 + $0x58] sm:$0xf] %vm2105, %v2095
      %2129 = vst.msk [vmem:[%s116 + $0x5c] sm:$0xf] %vm2105, %v2096
      %2130 = vst.msk [vmem:[%s116 + $0x60] sm:$0xf] %vm2105, %v2097
      %2131 = vst.msk [vmem:[%s116 + $0x64] sm:$0xf] %vm2105, %v2098
      %2132 = vst.msk [vmem:[%s116 + $0x68] sm:$0xf] %vm2105, %v2099
      %2133 = vst.msk [vmem:[%s116 + $0x6c] sm:$0xf] %vm2105, %v2100
      %2134 = vst.msk [vmem:[%s116 + $0x70] sm:$0xf] %vm2105, %v2101
      %2135 = vst.msk [vmem:[%s116 + $0x74] sm:$0xf] %vm2105, %v2102
      %2136 = vst.msk [vmem:[%s116 + $0x78] sm:$0xf] %vm2105, %v2103
      %2137 = vst.msk [vmem:[%s116 + $0x7c] sm:$0xf] %vm2105, %v2104
      %p2138 = scmp.lt.s32.totalorder %s12, 1
      %s2139 = scalar_select %p2138, %s12, 1
      %s2140 = smul.addr %s2139, 32
      %s2141 = smul.addr %s2140, 4
      %s2142 = scalar_lea.vmem %s1, %s2141
      // Predicated region
      $region25: #{_lambda_.30} parent=23 // pred_check
        %p2143 = pneg %p56
      $region26: #{_lambda_.30} parent=23 // pred_check_branch
        %2145 = sbr.rel (%p2143) target = $region28
      $region27: #{_lambda_.30} parent=23 // pred_region
        _
      $region28: #{_lambda_.30} parent=23 // pred_fallthru
        _
    $region24: #{_lambda_.30} parent=5 // pred_fallthru
      _
    %p2146 = scmp.le.s32.totalorder 2, %s7
    // Predicated region
    $region29: #{_lambda_.30} parent=5 // pred_check
      %p2147 = pneg %p2146
    $region30: #{_lambda_.30} parent=5 // pred_check_branch
      %2149 = sbr.rel (%p2147) target = $region32
    $region31: #{_lambda_.30} parent=5 // pred_region
      %s2150 = ssub.s32 %s7, 2
      // Predicated region
      $region33: #{_lambda_.30} parent=31 // pred_check
        %p2151 = pneg %p62
      $region34: #{_lambda_.30} parent=31 // pred_check_branch
        %2153 = sbr.rel (%p2151) target = $region36
      $region35: #{_lambda_.30} parent=31 // pred_region
        %p2154 = scmp.lt.s32.totalorder %s13, 1
        %s2155 = scalar_select %p2154, %s13, 1
        %s2156 = smul.addr %s2155, 32
        %s2157 = smul.addr %s2156, 4
        %s2158 = scalar_lea.vmem %s1, %s2157
      $region36: #{_lambda_.30} parent=31 // pred_fallthru
        _
    $region32: #{_lambda_.30} parent=5 // pred_fallthru
      _
  $region6: #{_lambda_.30} parent=0 // loop_footer
    %s11 = sadd.s32 1, %s7
  $region7: #{_lambda_.30} parent=0 // loop_footer_branch
    %6 = sbr.rel target = $region3
  $region8: #{_lambda_.30} parent=0 // loop_exit
    _

// kernel: _lambda_.35
$region0: #{_lambda_.35}
  #allocation0 [shape = 'u32[]', space=smem, size = 0x4, offset = 0x4, fixed_abs, tag = 'smem constant byte address 0x4 - core index']
  #allocation1 [shape = 'u32[72,128]{1,0:T(1,128)}', space=vmem, size = 0x9000, scoped, tag = 'internal scratch']
  %s0 = inlined_call_operand.vmem [shape: bf16[2,10,10,8], index: 0, kind: input, shape index: {}]
  %s1 = inlined_call_operand.vmem [shape: bf16[2,8,8,8], index: 1, kind: output, shape index: {}]
  %s2 = sld [smem:[#allocation0]]
  $region37: #{_lambda_.35} parent=0
    _
  %s4 = ssub.s32 1, %s2
  %s5 = scalar_select 0, %s4, %s2
  loop: start=0, step=1, limit=4
  $region2: #{_lambda_.35} parent=0 // loop_pre_header
    _
  $region3: #{_lambda_.35} parent=0 // loop_header
    %s7 = sphi 0, %s11
    %p8 = scmp.ge.s32.totalorder %s7, 4
    %s17 = sphi 0, %s19
    %s20 = sphi 0, %s17
    %s21 = sphi 0, %s20
    %s37 = sphi 0, %s21
    %s43 = sphi 0, %s45
    %s46 = sphi 0, %s43
    %s47 = sphi 0, %s46
    %s63 = sphi 0, %s47
  $region4: #{_lambda_.35} parent=0 // loop_header_branch
    %10 = sbr.rel (%p8) target = $region8
  $region5: #{_lambda_.35} parent=0 // loop_body
    %s12 = ssub.s32 %s7, 1
    %s13 = ssub.s32 %s7, 2
    %s14 = sadd.s32 %s7, 1
    %s15 = ssub.s32 %s7, %s14
    %p16 = scmp.eq.s32.totalorder %s15, 0
    %s18 = sadd.s32 %s17, 1
    %s19 = scalar_select %p16, %s17, %s18
    %p22 = pneg %p16
    %p23 = scmp.eq.s32.totalorder %s7, 1
    %p24 = por %p22, %p23
    %p25 = scmp.ne.s32.totalorder %s17, %s20
    %p26 = scmp.eq.s32.totalorder %s7, 0
    %p27 = por %p25, %p26
    %p28 = scmp.ne.s32.totalorder %s17, %s20
    %p29 = scmp.eq.s32.totalorder %s12, 1
    %p30 = por %p28, %p29
    %p31 = scmp.ne.s32.totalorder %s20, %s21
    %p32 = scmp.eq.s32.totalorder %s12, 0
    %p33 = por %p31, %p32
    %p34 = scmp.ne.s32.totalorder %s20, %s21
    %p35 = scmp.eq.s32.totalorder %s13, 1
    %p36 = por %p34, %p35
    %p38 = scmp.ne.s32.totalorder %s21, %s37
    %p39 = scmp.eq.s32.totalorder %s13, 0
    %p40 = por %p38, %p39
    %s41 = ssub.s32 %s7, %s14
    %p42 = scmp.eq.s32.totalorder %s41, 0
    %s44 = sadd.s32 %s43, 1
    %s45 = scalar_select %p42, %s43, %s44
    %p48 = pneg %p42
    %p49 = scmp.eq.s32.totalorder %s7, 1
    %p50 = por %p48, %p49
    %p51 = scmp.ne.s32.totalorder %s43, %s46
    %p52 = scmp.eq.s32.totalorder %s7, 0
    %p53 = por %p51, %p52
    %p54 = scmp.ne.s32.totalorder %s43, %s46
    %p55 = scmp.eq.s32.totalorder %s12, 1
    %p56 = por %p54, %p55
    %p57 = scmp.ne.s32.totalorder %s46, %s47
    %p58 = scmp.eq.s32.totalorder %s12, 0
    %p59 = por %p57, %p58
    %p60 = scmp.ne.s32.totalorder %s46, %s47
    %p61 = scmp.eq.s32.totalorder %s13, 1
    %p62 = por %p60, %p61
    %p64 = scmp.ne.s32.totalorder %s47, %s63
    %p65 = scmp.eq.s32.totalorder %s13, 0
    %p66 = por %p64, %p65
    %p67 = scmp.le.s32.totalorder 1, %s7
    %p68 = scmp.lt.s32.totalorder %s7, 3
    %p69 = pnand %p67, %p68
    %p70 = pneg %p69
    // Predicated region
    $region9: #{_lambda_.35} parent=5 // pred_check
      _
    $region10: #{_lambda_.35} parent=5 // pred_check_branch
      %72 = sbr.rel (%p69) target = $region12
    $region11: #{_lambda_.35} parent=5 // pred_region
      %s73 = ssub.s32 %s7, 1
    $region12: #{_lambda_.35} parent=5 // pred_fallthru
      _
    %p74 = scmp.lt.s32.totalorder %s7, 2
    // Predicated region
    $region13: #{_lambda_.35} parent=5 // pred_check
      %p75 = pneg %p74
    $region14: #{_lambda_.35} parent=5 // pred_check_branch
      %77 = sbr.rel (%p75) target = $region16
    $region15: #{_lambda_.35} parent=5 // pred_region
      // Predicated region
      $region17: #{_lambda_.35} parent=15 // pred_check
        %p78 = pneg %p27
      $region18: #{_lambda_.35} parent=15 // pred_check_branch
        %80 = sbr.rel (%p78) target = $region20
      $region19: #{_lambda_.35} parent=15 // pred_region
        %p81 = scmp.lt.s32.totalorder %s7, 1
        %s82 = scalar_select %p81, %s7, 1
        %s83 = smul.addr %s82, 20
        %s84 = smul.addr %s83, 4
        %s85 = scalar_lea.vmem %s0, %s84
      $region20: #{_lambda_.35} parent=15 // pred_fallthru
        _
    $region16: #{_lambda_.35} parent=5 // pred_fallthru
      _
    %p86 = scmp.le.s32.totalorder 1, %s7
    %p87 = scmp.lt.s32.totalorder %s7, 3
    %p88 = pnand %p86, %p87
    %p89 = pneg %p88
    // Predicated region
    $region21: #{_lambda_.35} parent=5 // pred_check
      _
    $region22: #{_lambda_.35} parent=5 // pred_check_branch
      %91 = sbr.rel (%p88) target = $region24
    $region23: #{_lambda_.35} parent=5 // pred_region
      %s92 = ssub.s32 %s7, 1
      %p93 = scmp.lt.s32.totalorder %s12, 1
      %s94 = scalar_select %p93, %s12, 1
      %s95 = smul.addr %s94, 20
      %s96 = smul.addr %s95, 4
      %s97 = scalar_lea.vmem %s0, %s96
      %p98 = pneg %p33
      %p99 = pneg %p30
      %p100 = pneg %p59
      %p101 = pneg %p56
      %p102 = scmp.lt.s32.totalorder %s12, 1
      %s103 = scalar_select %p102, %s12, 1
      %s104 = smul.addr %s103, 8
      %s105 = smul.addr %s104, 4
      %s106 = scalar_lea.vmem %s1, %s105
      %p107 = scmp.lt.s32.totalorder %s12, 1
      %s108 = scalar_select %p107, %s12, 1
      %s109 = smul.addr %s108, 20
      %s110 = smul.addr %s109, 4
      %s111 = scalar_lea.vmem %s0, %s110
      %p112 = scmp.lt.s32.totalorder %s12, 1
      %s113 = scalar_select %p112, %s12, 1
      %s114 = smul.addr %s113, 8
      %s115 = smul.addr %s114, 4
      %s116 = scalar_lea.vmem %s1, %s115
      %v117 = vld [vmem:[%s111] sm:$0xf]
      %v118 = vld [vmem:[%s111 + $0x8] sm:$0xf]
      %v119 = vld [vmem:[%s111 + $0x10] sm:$0xf]
      %v120 = vld [vmem:[%s111 + $0x18] sm:$0xf]
      %v121 = vld [vmem:[%s111 + $0x20] sm:$0xf]
      %v122 = vld [vmem:[%s111 + $0x28] sm:$0xf]
      %v123 = vld [vmem:[%s111 + $0x30] sm:$0xf]
      %v124 = vld [vmem:[%s111 + $0x38] sm:$0xf]
      %v125 = vld [vmem:[%s111 + $0x4] sm:$0x1]
      %v126 = vld [vmem:[%s111 + $0xc] sm:$0x1]
      %v127 = vld [vmem:[%s111 + $0x14] sm:$0x1]
      %v128 = vld [vmem:[%s111 + $0x1c] sm:$0x1]
      %v129 = vld [vmem:[%s111 + $0x24] sm:$0x1]
      %v130 = vld [vmem:[%s111 + $0x2c] sm:$0x1]
      %v131 = vld [vmem:[%s111 + $0x34] sm:$0x1]
      %v132 = vld [vmem:[%s111 + $0x3c] sm:$0x1]
      %v133 = vunpack.c.l.bf16 %v117
      %v134 = vunpack.c.l.bf16 %v118
      %v135 = vunpack.c.l.bf16 %v119
      %v136 = vunpack.c.l.bf16 %v120
      %v137 = vunpack.c.l.bf16 %v121
      %v138 = vunpack.c.l.bf16 %v122
      %v139 = vunpack.c.l.bf16 %v123
      %v140 = vunpack.c.l.bf16 %v124
      %v141 = vunpack.c.l.bf16 %v125
      %v142 = vunpack.c.l.bf16 %v126
      %v143 = vunpack.c.l.bf16 %v127
      %v144 = vunpack.c.l.bf16 %v128
      %v145 = vunpack.c.l.bf16 %v129
      %v146 = vunpack.c.l.bf16 %v130
      %v147 = vunpack.c.l.bf16 %v131
      %v148 = vunpack.c.l.bf16 %v132
      %vm165 = vcmask 1046528
      %v166 = vrot.slane %v133, 1
      %v167 = vrot.slane %v141, 1
      %v168 = vsel %vm165, %v166, %v167
      %v169 = vrot.slane %v134, 1
      %v170 = vrot.slane %v142, 1
      %v171 = vsel %vm165, %v169, %v170
      %v172 = vrot.slane %v135, 1
      %v173 = vrot.slane %v143, 1
      %v174 = vsel %vm165, %v172, %v173
      %v175 = vrot.slane %v136, 1
      %v176 = vrot.slane %v144, 1
      %v177 = vsel %vm165, %v175, %v176
      %v178 = vrot.slane %v137, 1
      %v179 = vrot.slane %v145, 1
      %v180 = vsel %vm165, %v178, %v179
      %v181 = vrot.slane %v138, 1
      %v182 = vrot.slane %v146, 1
      %v183 = vsel %vm165, %v181, %v182
      %v184 = vrot.slane %v139, 1
      %v185 = vrot.slane %v147, 1
      %v186 = vsel %vm165, %v184, %v185
      %v187 = vrot.slane %v140, 1
      %v188 = vrot.slane %v148, 1
      %v189 = vsel %vm165, %v187, %v188
      %v198 = vmax.f32 %v133, %v168
      %v199 = vmax.f32 %v134, %v171
      %v200 = vmax.f32 %v135, %v174
      %v201 = vmax.f32 %v136, %v177
      %v202 = vmax.f32 %v137, %v180
      %v203 = vmax.f32 %v138, %v183
      %v204 = vmax.f32 %v139, %v186
      %v205 = vmax.f32 %v140, %v189
      %v206 = vpack.c.bf16 %v198, %v198
      %v207 = vpack.c.bf16 %v199, %v199
      %v208 = vpack.c.bf16 %v200, %v200
      %v209 = vpack.c.bf16 %v201, %v201
      %v210 = vpack.c.bf16 %v202, %v202
      %v211 = vpack.c.bf16 %v203, %v203
      %v212 = vpack.c.bf16 %v204, %v204
      %v213 = vpack.c.bf16 %v205, %v205
      %v214 = vld [vmem:[%s111] sm:$0xe]
      %v215 = vld [vmem:[%s111 + $0x8] sm:$0xe]
      %v216 = vld [vmem:[%s111 + $0x10] sm:$0xe]
      %v217 = vld [vmem:[%s111 + $0x18] sm:$0xe]
      %v218 = vld [vmem:[%s111 + $0x20] sm:$0xe]
      %v219 = vld [vmem:[%s111 + $0x28] sm:$0xe]
      %v220 = vld [vmem:[%s111 + $0x30] sm:$0xe]
      %v221 = vld [vmem:[%s111 + $0x38] sm:$0xe]
      %v222 = vunpack.c.l.bf16 %v206
      %v223 = vunpack.c.l.bf16 %v207
      %v224 = vunpack.c.l.bf16 %v208
      %v225 = vunpack.c.l.bf16 %v209
      %v226 = vunpack.c.l.bf16 %v210
      %v227 = vunpack.c.l.bf16 %v211
      %v228 = vunpack.c.l.bf16 %v212
      %v229 = vunpack.c.l.bf16 %v213
      %v230 = vunpack.c.l.bf16 %v214
      %v231 = vunpack.c.l.bf16 %v215
      %v232 = vunpack.c.l.bf16 %v216
      %v233 = vunpack.c.l.bf16 %v217
      %v234 = vunpack.c.l.bf16 %v218
      %v235 = vunpack.c.l.bf16 %v219
      %v236 = vunpack.c.l.bf16 %v220
      %v237 = vunpack.c.l.bf16 %v221
      %vm246 = vcmask 1045504
      %v247 = vrot.slane %v230, 2
      %v248 = vrot.slane %v141, 2
      %v249 = vsel %vm246, %v247, %v248
      %v250 = vrot.slane %v231, 2
      %v251 = vrot.slane %v142, 2
      %v252 = vsel %vm246, %v250, %v251
      %v253 = vrot.slane %v232, 2
      %v254 = vrot.slane %v143, 2
      %v255 = vsel %vm246, %v253, %v254
      %v256 = vrot.slane %v233, 2
      %v257 = vrot.slane %v144, 2
      %v258 = vsel %vm246, %v256, %v257
      %v259 = vrot.slane %v234, 2
      %v260 = vrot.slane %v145, 2
      %v261 = vsel %vm246, %v259, %v260
      %v262 = vrot.slane %v235, 2
      %v263 = vrot.slane %v146, 2
      %v264 = vsel %vm246, %v262, %v263
      %v265 = vrot.slane %v236, 2
      %v266 = vrot.slane %v147, 2
      %v267 = vsel %vm246, %v265, %v266
      %v268 = vrot.slane %v237, 2
      %v269 = vrot.slane %v148, 2
      %v270 = vsel %vm246, %v268, %v269
      %v279 = vmax.f32 %v222, %v249
      %v280 = vmax.f32 %v223, %v252
      %v281 = vmax.f32 %v224, %v255
      %v282 = vmax.f32 %v225, %v258
      %v283 = vmax.f32 %v226, %v261
      %v284 = vmax.f32 %v227, %v264
      %v285 = vmax.f32 %v228, %v267
      %v286 = vmax.f32 %v229, %v270
      %v287 = vpack.c.bf16 %v279, %v279
      %v288 = vpack.c.bf16 %v280, %v280
      %v289 = vpack.c.bf16 %v281, %v281
      %v290 = vpack.c.bf16 %v282, %v282
      %v291 = vpack.c.bf16 %v283, %v283
      %v292 = vpack.c.bf16 %v284, %v284
      %v293 = vpack.c.bf16 %v285, %v285
      %v294 = vpack.c.bf16 %v286, %v286
      %s295 = scalar_lea.vmem %s111, 8
      %v296 = vld [vmem:[%s295] sm:$0xf]
      %v297 = vld [vmem:[%s295 + $0x8] sm:$0xf]
      %v298 = vld [vmem:[%s295 + $0x10] sm:$0xf]
      %v299 = vld [vmem:[%s295 + $0x18] sm:$0xf]
      %v300 = vld [vmem:[%s295 + $0x20] sm:$0xf]
      %v301 = vld [vmem:[%s295 + $0x28] sm:$0xf]
      %v302 = vld [vmem:[%s295 + $0x30] sm:$0xf]
      %v303 = vld [vmem:[%s295 + $0x38] sm:$0xf]
      %v304 = vunpack.c.l.bf16 %v287
      %v305 = vunpack.c.l.bf16 %v288
      %v306 = vunpack.c.l.bf16 %v289
      %v307 = vunpack.c.l.bf16 %v290
      %v308 = vunpack.c.l.bf16 %v291
      %v309 = vunpack.c.l.bf16 %v292
      %v310 = vunpack.c.l.bf16 %v293
      %v311 = vunpack.c.l.bf16 %v294
      %v312 = vunpack.c.l.bf16 %v296
      %v313 = vunpack.c.l.bf16 %v297
      %v314 = vunpack.c.l.bf16 %v298
      %v315 = vunpack.c.l.bf16 %v299
      %v316 = vunpack.c.l.bf16 %v300
      %v317 = vunpack.c.l.bf16 %v301
      %v318 = vunpack.c.l.bf16 %v302
      %v319 = vunpack.c.l.bf16 %v303
      %v320 = vmax.f32 %v304, %v312
      %v321 = vmax.f32 %v305, %v313
      %v322 = vmax.f32 %v306, %v314
      %v323 = vmax.f32 %v307, %v315
      %v324 = vmax.f32 %v308, %v316
      %v325 = vmax.f32 %v309, %v317
      %v326 = vmax.f32 %v310, %v318
      %v327 = vmax.f32 %v311, %v319
      %v328 = vpack.c.bf16 %v320, %v320
      %v329 = vpack.c.bf16 %v321, %v321
      %v330 = vpack.c.bf16 %v322, %v322
      %v331 = vpack.c.bf16 %v323, %v323
      %v332 = vpack.c.bf16 %v324, %v324
      %v333 = vpack.c.bf16 %v325, %v325
      %v334 = vpack.c.bf16 %v326, %v326
      %v335 = vpack.c.bf16 %v327, %v327
      %v336 = vld [vmem:[%s295 + $0x4] sm:$0x1]
      %v337 = vld [vmem:[%s295 + $0xc] sm:$0x1]
      %v338 = vld [vmem:[%s295 + $0x14] sm:$0x1]
      %v339 = vld [vmem:[%s295 + $0x1c] sm:$0x1]
      %v340 = vld [vmem:[%s295 + $0x24] sm:$0x1]
      %v341 = vld [vmem:[%s295 + $0x2c] sm:$0x1]
      %v342 = vld [vmem:[%s295 + $0x34] sm:$0x1]
      %v343 = vld [vmem:[%s295 + $0x3c] sm:$0x1]
      %v344 = vunpack.c.l.bf16 %v328
      %v345 = vunpack.c.l.bf16 %v329
      %v346 = vunpack.c.l.bf16 %v330
      %v347 = vunpack.c.l.bf16 %v331
      %v348 = vunpack.c.l.bf16 %v332
      %v349 = vunpack.c.l.bf16 %v333
      %v350 = vunpack.c.l.bf16 %v334
      %v351 = vunpack.c.l.bf16 %v335
      %v352 = vunpack.c.l.bf16 %v336
      %v353 = vunpack.c.l.bf16 %v337
      %v354 = vunpack.c.l.bf16 %v338
      %v355 = vunpack.c.l.bf16 %v339
      %v356 = vunpack.c.l.bf16 %v340
      %v357 = vunpack.c.l.bf16 %v341
      %v358 = vunpack.c.l.bf16 %v342
      %v359 = vunpack.c.l.bf16 %v343
      %v376 = vrot.slane %v312, 1
      %v377 = vrot.slane %v352, 1
      %v378 = vsel %vm165, %v376, %v377
      %v379 = vrot.slane %v313, 1
      %v380 = vrot.slane %v353, 1
      %v381 = vsel %vm165, %v379, %v380
      %v382 = vrot.slane %v314, 1
      %v383 = vrot.slane %v354, 1
      %v384 = vsel %vm165, %v382, %v383
      %v385 = vrot.slane %v315, 1
      %v386 = vrot.slane %v355, 1
      %v387 = vsel %vm165, %v385, %v386
      %v388 = vrot.slane %v316, 1
      %v389 = vrot.slane %v356, 1
      %v390 = vsel %vm165, %v388, %v389
      %v391 = vrot.slane %v317, 1
      %v392 = vrot.slane %v357, 1
      %v393 = vsel %vm165, %v391, %v392
      %v394 = vrot.slane %v318, 1
      %v395 = vrot.slane %v358, 1
      %v396 = vsel %vm165, %v394, %v395
      %v397 = vrot.slane %v319, 1
      %v398 = vrot.slane %v359, 1
      %v399 = vsel %vm165, %v397, %v398
      %v408 = vmax.f32 %v344, %v378
      %v409 = vmax.f32 %v345, %v381
      %v410 = vmax.f32 %v346, %v384
      %v411 = vmax.f32 %v347, %v387
      %v412 = vmax.f32 %v348, %v390
      %v413 = vmax.f32 %v349, %v393
      %v414 = vmax.f32 %v350, %v396
      %v415 = vmax.f32 %v351, %v399
      %v416 = vpack.c.bf16 %v408, %v408
      %v417 = vpack.c.bf16 %v409, %v409
      %v418 = vpack.c.bf16 %v410, %v410
      %v419 = vpack.c.bf16 %v411, %v411
      %v420 = vpack.c.bf16 %v412, %v412
      %v421 = vpack.c.bf16 %v413, %v413
      %v422 = vpack.c.bf16 %v414, %v414
      %v423 = vpack.c.bf16 %v415, %v415
      %v424 = vld [vmem:[%s295] sm:$0xe]
      %v425 = vld [vmem:[%s295 + $0x8] sm:$0xe]
      %v426 = vld [vmem:[%s295 + $0x10] sm:$0xe]
      %v427 = vld [vmem:[%s295 + $0x18] sm:$0xe]
      %v428 = vld [vmem:[%s295 + $0x20] sm:$0xe]
      %v429 = vld [vmem:[%s295 + $0x28] sm:$0xe]
      %v430 = vld [vmem:[%s295 + $0x30] sm:$0xe]
      %v431 = vld [vmem:[%s295 + $0x38] sm:$0xe]
      %v432 = vunpack.c.l.bf16 %v416
      %v433 = vunpack.c.l.bf16 %v417
      %v434 = vunpack.c.l.bf16 %v418
      %v435 = vunpack.c.l.bf16 %v419
      %v436 = vunpack.c.l.bf16 %v420
      %v437 = vunpack.c.l.bf16 %v421
      %v438 = vunpack.c.l.bf16 %v422
      %v439 = vunpack.c.l.bf16 %v423
      %v440 = vunpack.c.l.bf16 %v424
      %v441 = vunpack.c.l.bf16 %v425
      %v442 = vunpack.c.l.bf16 %v426
      %v443 = vunpack.c.l.bf16 %v427
      %v444 = vunpack.c.l.bf16 %v428
      %v445 = vunpack.c.l.bf16 %v429
      %v446 = vunpack.c.l.bf16 %v430
      %v447 = vunpack.c.l.bf16 %v431
      %v456 = vrot.slane %v440, 2
      %v457 = vrot.slane %v352, 2
      %v458 = vsel %vm246, %v456, %v457
      %v459 = vrot.slane %v441, 2
      %v460 = vrot.slane %v353, 2
      %v461 = vsel %vm246, %v459, %v460
      %v462 = vrot.slane %v442, 2
      %v463 = vrot.slane %v354, 2
      %v464 = vsel %vm246, %v462, %v463
      %v465 = vrot.slane %v443, 2
      %v466 = vrot.slane %v355, 2
      %v467 = vsel %vm246, %v465, %v466
      %v468 = vrot.slane %v444, 2
      %v469 = vrot.slane %v356, 2
      %v470 = vsel %vm246, %v468, %v469
      %v471 = vrot.slane %v445, 2
      %v472 = vrot.slane %v357, 2
      %v473 = vsel %vm246, %v471, %v472
      %v474 = vrot.slane %v446, 2
      %v475 = vrot.slane %v358, 2
      %v476 = vsel %vm246, %v474, %v475
      %v477 = vrot.slane %v447, 2
      %v478 = vrot.slane %v359, 2
      %v479 = vsel %vm246, %v477, %v478
      %v488 = vmax.f32 %v432, %v458
      %v489 = vmax.f32 %v433, %v461
      %v490 = vmax.f32 %v434, %v464
      %v491 = vmax.f32 %v435, %v467
      %v492 = vmax.f32 %v436, %v470
      %v493 = vmax.f32 %v437, %v473
      %v494 = vmax.f32 %v438, %v476
      %v495 = vmax.f32 %v439, %v479
      %v496 = vpack.c.bf16 %v488, %v488
      %v497 = vpack.c.bf16 %v489, %v489
      %v498 = vpack.c.bf16 %v490, %v490
      %v499 = vpack.c.bf16 %v491, %v491
      %v500 = vpack.c.bf16 %v492, %v492
      %v501 = vpack.c.bf16 %v493, %v493
      %v502 = vpack.c.bf16 %v494, %v494
      %v503 = vpack.c.bf16 %v495, %v495
      %s504 = scalar_lea.vmem %s111, 16
      %v505 = vld [vmem:[%s504] sm:$0xf]
      %v506 = vld [vmem:[%s504 + $0x8] sm:$0xf]
      %v507 = vld [vmem:[%s504 + $0x10] sm:$0xf]
      %v508 = vld [vmem:[%s504 + $0x18] sm:$0xf]
      %v509 = vld [vmem:[%s504 + $0x20] sm:$0xf]
      %v510 = vld [vmem:[%s504 + $0x28] sm:$0xf]
      %v511 = vld [vmem:[%s504 + $0x30] sm:$0xf]
      %v512 = vld [vmem:[%s504 + $0x38] sm:$0xf]
      %v513 = vunpack.c.l.bf16 %v496
      %v514 = vunpack.c.l.bf16 %v497
      %v515 = vunpack.c.l.bf16 %v498
      %v516 = vunpack.c.l.bf16 %v499
      %v517 = vunpack.c.l.bf16 %v500
      %v518 = vunpack.c.l.bf16 %v501
      %v519 = vunpack.c.l.bf16 %v502
      %v520 = vunpack.c.l.bf16 %v503
      %v521 = vunpack.c.l.bf16 %v505
      %v522 = vunpack.c.l.bf16 %v506
      %v523 = vunpack.c.l.bf16 %v507
      %v524 = vunpack.c.l.bf16 %v508
      %v525 = vunpack.c.l.bf16 %v509
      %v526 = vunpack.c.l.bf16 %v510
      %v527 = vunpack.c.l.bf16 %v511
      %v528 = vunpack.c.l.bf16 %v512
      %v529 = vmax.f32 %v513, %v521
      %v530 = vmax.f32 %v514, %v522
      %v531 = vmax.f32 %v515, %v523
      %v532 = vmax.f32 %v516, %v524
      %v533 = vmax.f32 %v517, %v525
      %v534 = vmax.f32 %v518, %v526
      %v535 = vmax.f32 %v519, %v527
      %v536 = vmax.f32 %v520, %v528
      %v537 = vpack.c.bf16 %v529, %v529
      %v538 = vpack.c.bf16 %v530, %v530
      %v539 = vpack.c.bf16 %v531, %v531
      %v540 = vpack.c.bf16 %v532, %v532
      %v541 = vpack.c.bf16 %v533, %v533
      %v542 = vpack.c.bf16 %v534, %v534
      %v543 = vpack.c.bf16 %v535, %v535
      %v544 = vpack.c.bf16 %v536, %v536
      %v545 = vld [vmem:[%s504 + $0x4] sm:$0x1]
      %v546 = vld [vmem:[%s504 + $0xc] sm:$0x1]
      %v547 = vld [vmem:[%s504 + $0x14] sm:$0x1]
      %v548 = vld [vmem:[%s504 + $0x1c] sm:$0x1]
      %v549 = vld [vmem:[%s504 + $0x24] sm:$0x1]
      %v550 = vld [vmem:[%s504 + $0x2c] sm:$0x1]
      %v551 = vld [vmem:[%s504 + $0x34] sm:$0x1]
      %v552 = vld [vmem:[%s504 + $0x3c] sm:$0x1]
      %v553 = vunpack.c.l.bf16 %v537
      %v554 = vunpack.c.l.bf16 %v538
      %v555 = vunpack.c.l.bf16 %v539
      %v556 = vunpack.c.l.bf16 %v540
      %v557 = vunpack.c.l.bf16 %v541
      %v558 = vunpack.c.l.bf16 %v542
      %v559 = vunpack.c.l.bf16 %v543
      %v560 = vunpack.c.l.bf16 %v544
      %v561 = vunpack.c.l.bf16 %v545
      %v562 = vunpack.c.l.bf16 %v546
      %v563 = vunpack.c.l.bf16 %v547
      %v564 = vunpack.c.l.bf16 %v548
      %v565 = vunpack.c.l.bf16 %v549
      %v566 = vunpack.c.l.bf16 %v550
      %v567 = vunpack.c.l.bf16 %v551
      %v568 = vunpack.c.l.bf16 %v552
      %v585 = vrot.slane %v521, 1
      %v586 = vrot.slane %v561, 1
      %v587 = vsel %vm165, %v585, %v586
      %v588 = vrot.slane %v522, 1
      %v589 = vrot.slane %v562, 1
      %v590 = vsel %vm165, %v588, %v589
      %v591 = vrot.slane %v523, 1
      %v592 = vrot.slane %v563, 1
      %v593 = vsel %vm165, %v591, %v592
      %v594 = vrot.slane %v524, 1
      %v595 = vrot.slane %v564, 1
      %v596 = vsel %vm165, %v594, %v595
      %v597 = vrot.slane %v525, 1
      %v598 = vrot.slane %v565, 1
      %v599 = vsel %vm165, %v597, %v598
      %v600 = vrot.slane %v526, 1
      %v601 = vrot.slane %v566, 1
      %v602 = vsel %vm165, %v600, %v601
      %v603 = vrot.slane %v527, 1
      %v604 = vrot.slane %v567, 1
      %v605 = vsel %vm165, %v603, %v604
      %v606 = vrot.slane %v528, 1
      %v607 = vrot.slane %v568, 1
      %v608 = vsel %vm165, %v606, %v607
      %v617 = vmax.f32 %v553, %v587
      %v618 = vmax.f32 %v554, %v590
      %v619 = vmax.f32 %v555, %v593
      %v620 = vmax.f32 %v556, %v596
      %v621 = vmax.f32 %v557, %v599
      %v622 = vmax.f32 %v558, %v602
      %v623 = vmax.f32 %v559, %v605
      %v624 = vmax.f32 %v560, %v608
      %v625 = vpack.c.bf16 %v617, %v617
      %v626 = vpack.c.bf16 %v618, %v618
      %v627 = vpack.c.bf16 %v619, %v619
      %v628 = vpack.c.bf16 %v620, %v620
      %v629 = vpack.c.bf16 %v621, %v621
      %v630 = vpack.c.bf16 %v622, %v622
      %v631 = vpack.c.bf16 %v623, %v623
      %v632 = vpack.c.bf16 %v624, %v624
      %v633 = vld [vmem:[%s504] sm:$0xe]
      %v634 = vld [vmem:[%s504 + $0x8] sm:$0xe]
      %v635 = vld [vmem:[%s504 + $0x10] sm:$0xe]
      %v636 = vld [vmem:[%s504 + $0x18] sm:$0xe]
      %v637 = vld [vmem:[%s504 + $0x20] sm:$0xe]
      %v638 = vld [vmem:[%s504 + $0x28] sm:$0xe]
      %v639 = vld [vmem:[%s504 + $0x30] sm:$0xe]
      %v640 = vld [vmem:[%s504 + $0x38] sm:$0xe]
      %v641 = vunpack.c.l.bf16 %v625
      %v642 = vunpack.c.l.bf16 %v626
      %v643 = vunpack.c.l.bf16 %v627
      %v644 = vunpack.c.l.bf16 %v628
      %v645 = vunpack.c.l.bf16 %v629
      %v646 = vunpack.c.l.bf16 %v630
      %v647 = vunpack.c.l.bf16 %v631
      %v648 = vunpack.c.l.bf16 %v632
      %v649 = vunpack.c.l.bf16 %v633
      %v650 = vunpack.c.l.bf16 %v634
      %v651 = vunpack.c.l.bf16 %v635
      %v652 = vunpack.c.l.bf16 %v636
      %v653 = vunpack.c.l.bf16 %v637
      %v654 = vunpack.c.l.bf16 %v638
      %v655 = vunpack.c.l.bf16 %v639
      %v656 = vunpack.c.l.bf16 %v640
      %v665 = vrot.slane %v649, 2
      %v666 = vrot.slane %v561, 2
      %v667 = vsel %vm246, %v665, %v666
      %v668 = vrot.slane %v650, 2
      %v669 = vrot.slane %v562, 2
      %v670 = vsel %vm246, %v668, %v669
      %v671 = vrot.slane %v651, 2
      %v672 = vrot.slane %v563, 2
      %v673 = vsel %vm246, %v671, %v672
      %v674 = vrot.slane %v652, 2
      %v675 = vrot.slane %v564, 2
      %v676 = vsel %vm246, %v674, %v675
      %v677 = vrot.slane %v653, 2
      %v678 = vrot.slane %v565, 2
      %v679 = vsel %vm246, %v677, %v678
      %v680 = vrot.slane %v654, 2
      %v681 = vrot.slane %v566, 2
      %v682 = vsel %vm246, %v680, %v681
      %v683 = vrot.slane %v655, 2
      %v684 = vrot.slane %v567, 2
      %v685 = vsel %vm246, %v683, %v684
      %v686 = vrot.slane %v656, 2
      %v687 = vrot.slane %v568, 2
      %v688 = vsel %vm246, %v686, %v687
      %v697 = vmax.f32 %v641, %v667
      %v698 = vmax.f32 %v642, %v670
      %v699 = vmax.f32 %v643, %v673
      %v700 = vmax.f32 %v644, %v676
      %v701 = vmax.f32 %v645, %v679
      %v702 = vmax.f32 %v646, %v682
      %v703 = vmax.f32 %v647, %v685
      %v704 = vmax.f32 %v648, %v688
      %v705 = vpack.c.bf16 %v697, %v697
      %v706 = vpack.c.bf16 %v698, %v698
      %v707 = vpack.c.bf16 %v699, %v699
      %v708 = vpack.c.bf16 %v700, %v700
      %v709 = vpack.c.bf16 %v701, %v701
      %v710 = vpack.c.bf16 %v702, %v702
      %v711 = vpack.c.bf16 %v703, %v703
      %v712 = vpack.c.bf16 %v704, %v704
      %vm713 = vcmask 60416
      %714 = vst.msk [vmem:[%s116] sm:$0xf] %vm713, %v705
      %715 = vst.msk [vmem:[%s116 + $0x4] sm:$0xf] %vm713, %v706
      %716 = vst.msk [vmem:[%s116 + $0x8] sm:$0xf] %vm713, %v707
      %717 = vst.msk [vmem:[%s116 + $0xc] sm:$0xf] %vm713, %v708
      %718 = vst.msk [vmem:[%s116 + $0x10] sm:$0xf] %vm713, %v709
      %719 = vst.msk [vmem:[%s116 + $0x14] sm:$0xf] %vm713, %v710
      %720 = vst.msk [vmem:[%s116 + $0x18] sm:$0xf] %vm713, %v711
      %721 = vst.msk [vmem:[%s116 + $0x1c] sm:$0xf] %vm713, %v712
      %p722 = scmp.lt.s32.totalorder %s12, 1
      %s723 = scalar_select %p722, %s12, 1
      %s724 = smul.addr %s723, 8
      %s725 = smul.addr %s724, 4
      %s726 = scalar_lea.vmem %s1, %s725
      // Predicated region
      $region25: #{_lambda_.35} parent=23 // pred_check
        %p727 = pneg %p56
      $region26: #{_lambda_.35} parent=23 // pred_check_branch
        %729 = sbr.rel (%p727) target = $region28
      $region27: #{_lambda_.35} parent=23 // pred_region
        _
      $region28: #{_lambda_.35} parent=23 // pred_fallthru
        _
    $region24: #{_lambda_.35} parent=5 // pred_fallthru
      _
    %p730 = scmp.le.s32.totalorder 2, %s7
    // Predicated region
    $region29: #{_lambda_.35} parent=5 // pred_check
      %p731 = pneg %p730
    $region30: #{_lambda_.35} parent=5 // pred_check_branch
      %733 = sbr.rel (%p731) target = $region32
    $region31: #{_lambda_.35} parent=5 // pred_region
      %s734 = ssub.s32 %s7, 2
      // Predicated region
      $region33: #{_lambda_.35} parent=31 // pred_check
        %p735 = pneg %p62
      $region34: #{_lambda_.35} parent=31 // pred_check_branch
        %737 = sbr.rel (%p735) target = $region36
      $region35: #{_lambda_.35} parent=31 // pred_region
        %p738 = scmp.lt.s32.totalorder %s13, 1
        %s739 = scalar_select %p738, %s13, 1
        %s740 = smul.addr %s739, 8
        %s741 = smul.addr %s740, 4
        %s742 = scalar_lea.vmem %s1, %s741
      $region36: #{_lambda_.35} parent=31 // pred_fallthru
        _
    $region32: #{_lambda_.35} parent=5 // pred_fallthru
      _
  $region6: #{_lambda_.35} parent=0 // loop_footer
    %s11 = sadd.s32 1, %s7
  $region7: #{_lambda_.35} parent=0 // loop_footer_branch
    %6 = sbr.rel target = $region3
  $region8: #{_lambda_.35} parent=0 // loop_exit
    _

// kernel: _lambda_.36
$region0: #{_lambda_.36}
  #allocation0 [shape = 'u32[]', space=smem, size = 0x4, offset = 0x4, fixed_abs, tag = 'smem constant byte address 0x4 - core index']
  #allocation1 [shape = 'u32[72,128]{1,0:T(1,128)}', space=vmem, size = 0x9000, scoped, tag = 'internal scratch']
  #allocation2 [shape = 'f32[128,2]{1,0:T(8,128)}', space=vmem, size = 0x10000, scoped, tag = 'scratch operand']
  %s0 = inlined_call_operand.vmem [shape: bf16[128,8], index: 0, kind: input, shape index: {}]
  %s1 = inlined_call_operand.vmem [shape: bf16[8,2], index: 1, kind: input, shape index: {}]
  %s2 = inlined_call_operand.vmem [shape: f32[1,2], index: 2, kind: input, shape index: {}]
  %s3 = inlined_call_operand.vmem [shape: bf16[128,2], index: 3, kind: output, shape index: {}]
  %s4 = sld [smem:[#allocation0]]
  $region30: #{_lambda_.36} parent=0
    _
  %s6 = ssub.s32 1, %s4
  %s7 = scalar_select 0, %s6, %s4
  // Predicated region
  $region2: #{_lambda_.36} parent=0 // pred_check
    _
  $region3: #{_lambda_.36} parent=0 // pred_check_branch
    %9 = sbr.rel (0) target = $region5
  $region4: #{_lambda_.36} parent=0 // pred_region
    _
  $region5: #{_lambda_.36} parent=0 // pred_fallthru
    _
  // Predicated region
  $region6: #{_lambda_.36} parent=0 // pred_check
    _
  $region7: #{_lambda_.36} parent=0 // pred_check_branch
    %11 = sbr.rel (0) target = $region9
  $region8: #{_lambda_.36} parent=0 // pred_region
    _
  $region9: #{_lambda_.36} parent=0 // pred_fallthru
    _
  // Predicated region
  $region10: #{_lambda_.36} parent=0 // pred_check
    _
  $region11: #{_lambda_.36} parent=0 // pred_check_branch
    %13 = sbr.rel (0) target = $region13
  $region12: #{_lambda_.36} parent=0 // pred_region
    _
  $region13: #{_lambda_.36} parent=0 // pred_fallthru
    _
  %p15 = scmp.eq.s32.totalorder 0, 0
  // Predicated region
  $region14: #{_lambda_.36} parent=0 // pred_check
    %p16 = pneg %p15
  $region15: #{_lambda_.36} parent=0 // pred_check_branch
    %18 = sbr.rel (%p16) target = $region17
  $region16: #{_lambda_.36} parent=0 // pred_region
    %vm19 = vcmask 15360
    %20 = vst.msk [vmem:[#allocation2] sm:$0xff] %vm19, 0.0
    %21 = vst.msk [vmem:[#allocation2 + $0x8] sm:$0xff] %vm19, 0.0
    %22 = vst.msk [vmem:[#allocation2 + $0x10] sm:$0xff] %vm19, 0.0
    %23 = vst.msk [vmem:[#allocation2 + $0x18] sm:$0xff] %vm19, 0.0
    %24 = vst.msk [vmem:[#allocation2 + $0x20] sm:$0xff] %vm19, 0.0
    %25 = vst.msk [vmem:[#allocation2 + $0x28] sm:$0xff] %vm19, 0.0
    %26 = vst.msk [vmem:[#allocation2 + $0x30] sm:$0xff] %vm19, 0.0
    %27 = vst.msk [vmem:[#allocation2 + $0x38] sm:$0xff] %vm19, 0.0
    %28 = vst.msk [vmem:[#allocation2 + $0x40] sm:$0xff] %vm19, 0.0
    %29 = vst.msk [vmem:[#allocation2 + $0x48] sm:$0xff] %vm19, 0.0
    %30 = vst.msk [vmem:[#allocation2 + $0x50] sm:$0xff] %vm19, 0.0
    %31 = vst.msk [vmem:[#allocation2 + $0x58] sm:$0xff] %vm19, 0.0
    %32 = vst.msk [vmem:[#allocation2 + $0x60] sm:$0xff] %vm19, 0.0
    %33 = vst.msk [vmem:[#allocation2 + $0x68] sm:$0xff] %vm19, 0.0
    %34 = vst.msk [vmem:[#allocation2 + $0x70] sm:$0xff] %vm19, 0.0
    %35 = vst.msk [vmem:[#allocation2 + $0x78] sm:$0xff] %vm19, 0.0
  $region17: #{_lambda_.36} parent=0 // pred_fallthru
    _
  %v36 = vld [vmem:[%s0] sm:$0xf]
  %v37 = vld [vmem:[%s0 + $0x4] sm:$0xf]
  %v38 = vld [vmem:[%s0 + $0x8] sm:$0xf]
  %v39 = vld [vmem:[%s0 + $0xc] sm:$0xf]
  %v40 = vld [vmem:[%s0 + $0x10] sm:$0xf]
  %v41 = vld [vmem:[%s0 + $0x14] sm:$0xf]
  %v42 = vld [vmem:[%s0 + $0x18] sm:$0xf]
  %v43 = vld [vmem:[%s0 + $0x1c] sm:$0xf]
  %v44 = vld [vmem:[%s0 + $0x20] sm:$0xf]
  %v45 = vld [vmem:[%s0 + $0x24] sm:$0xf]
  %v46 = vld [vmem:[%s0 + $0x28] sm:$0xf]
  %v47 = vld [vmem:[%s0 + $0x2c] sm:$0xf]
  %v48 = vld [vmem:[%s0 + $0x30] sm:$0xf]
  %v49 = vld [vmem:[%s0 + $0x34] sm:$0xf]
  %v50 = vld [vmem:[%s0 + $0x38] sm:$0xf]
  %v51 = vld [vmem:[%s0 + $0x3c] sm:$0xf]
  %v52 = vld [vmem:[#allocation2] sm:$0xff]
  %v53 = vld [vmem:[#allocation2 + $0x8] sm:$0xff]
  %v54 = vld [vmem:[#allocation2 + $0x10] sm:$0xff]
  %v55 = vld [vmem:[#allocation2 + $0x18] sm:$0xff]
  %v56 = vld [vmem:[#allocation2 + $0x20] sm:$0xff]
  %v57 = vld [vmem:[#allocation2 + $0x28] sm:$0xff]
  %v58 = vld [vmem:[#allocation2 + $0x30] sm:$0xff]
  %v59 = vld [vmem:[#allocation2 + $0x38] sm:$0xff]
  %v60 = vld [vmem:[#allocation2 + $0x40] sm:$0xff]
  %v61 = vld [vmem:[#allocation2 + $0x48] sm:$0xff]
  %v62 = vld [vmem:[#allocation2 + $0x50] sm:$0xff]
  %v63 = vld [vmem:[#allocation2 + $0x58] sm:$0xff]
  %v64 = vld [vmem:[#allocation2 + $0x60] sm:$0xff]
  %v65 = vld [vmem:[#allocation2 + $0x68] sm:$0xff]
  %v66 = vld [vmem:[#allocation2 + $0x70] sm:$0xff]
  %v67 = vld [vmem:[#allocation2 + $0x78] sm:$0xff]
  %v68 = vld [vmem:[%s1] sm:$0xf]
  %v85 = vunpack.c.l.b16 %v36
  %v86 = vunpack.c.l.b16 %v37
  %v87 = vunpack.c.l.b16 %v38
  %v88 = vunpack.c.l.b16 %v39
  %v89 = vunpack.c.l.b16 %v40
  %v90 = vunpack.c.l.b16 %v41
  %v91 = vunpack.c.l.b16 %v42
  %v92 = vunpack.c.l.b16 %v43
  %v93 = vunpack.c.l.b16 %v44
  %v94 = vunpack.c.l.b16 %v45
  %v95 = vunpack.c.l.b16 %v46
  %v96 = vunpack.c.l.b16 %v47
  %v97 = vunpack.c.l.b16 %v48
  %v98 = vunpack.c.l.b16 %v49
  %v99 = vunpack.c.l.b16 %v50
  %v100 = vunpack.c.l.b16 %v51
  %v101 = vpack.c.b16 %v86, %v85
  %v102 = vpack.c.b16 %v88, %v87
  %v103 = vpack.c.b16 %v90, %v89
  %v104 = vpack.c.b16 %v92, %v91
  %v105 = vpack.c.b16 %v94, %v93
  %v106 = vpack.c.b16 %v96, %v95
  %v107 = vpack.c.b16 %v98, %v97
  %v108 = vpack.c.b16 %v100, %v99
  %vm109 = vcmask 64512
  %v111 = vsel %vm109, %v101, 0
  %v114 = vsel %vm109, %v102, 0
  %v117 = vsel %vm109, %v103, 0
  %v120 = vsel %vm109, %v104, 0
  %v123 = vsel %vm109, %v105, 0
  %v126 = vsel %vm109, %v106, 0
  %v129 = vsel %vm109, %v107, 0
  %v132 = vsel %vm109, %v108, 0
  %vm134 = vcmask 1043456
  %v136 = vsel %vm134, %v68, 0
  %138 = vmatpush.bf16.msra.mxu0 0
  %139 = vmatpush.bf16.msra.mxu0 0
  %140 = vmatpush.bf16.msra.mxu0 0
  %141 = vmatpush.bf16.msra.mxu0 0
  %142 = vmatpush.bf16.msra.mxu0 0
  %143 = vmatpush.bf16.msra.mxu0 0
  %144 = vmatpush.bf16.msra.mxu0 0
  %145 = vmatpush.bf16.msra.mxu0 %v136
  %146 = vmatmul.bf16.gmra.mxu0 %v111
  %v147 = vpop.f32.mrf.mxu0
  %v148 = vadd.f32 0.0, %v147
  %v149 = vpop.f32.mrf.mxu0
  %v150 = vadd.f32 0.0, %v149
  %151 = vmatmul.bf16.gmra.mxu0 %v114
  %v152 = vpop.f32.mrf.mxu0
  %v153 = vadd.f32 0.0, %v152
  %v154 = vpop.f32.mrf.mxu0
  %v155 = vadd.f32 0.0, %v154
  %156 = vmatmul.bf16.gmra.mxu0 %v117
  %v157 = vpop.f32.mrf.mxu0
  %v158 = vadd.f32 0.0, %v157
  %v159 = vpop.f32.mrf.mxu0
  %v160 = vadd.f32 0.0, %v159
  %161 = vmatmul.bf16.gmra.mxu0 %v120
  %v162 = vpop.f32.mrf.mxu0
  %v163 = vadd.f32 0.0, %v162
  %v164 = vpop.f32.mrf.mxu0
  %v165 = vadd.f32 0.0, %v164
  %166 = vmatmul.bf16.gmra.mxu0 %v123
  %v167 = vpop.f32.mrf.mxu0
  %v168 = vadd.f32 0.0, %v167
  %v169 = vpop.f32.mrf.mxu0
  %v170 = vadd.f32 0.0, %v169
  %171 = vmatmul.bf16.gmra.mxu0 %v126
  %v172 = vpop.f32.mrf.mxu0
  %v173 = vadd.f32 0.0, %v172
  %v174 = vpop.f32.mrf.mxu0
  %v175 = vadd.f32 0.0, %v174
  %176 = vmatmul.bf16.gmra.mxu0 %v129
  %v177 = vpop.f32.mrf.mxu0
  %v178 = vadd.f32 0.0, %v177
  %v179 = vpop.f32.mrf.mxu0
  %v180 = vadd.f32 0.0, %v179
  %181 = vmatmul.bf16.gmra.mxu0 %v132
  %v182 = vpop.f32.mrf.mxu0
  %v183 = vadd.f32 0.0, %v182
  %v184 = vpop.f32.mrf.mxu0
  %v185 = vadd.f32 0.0, %v184
  %186 = vdwg.mxu0
  %v187 = vadd.f32 %v52, %v148
  %v188 = vadd.f32 %v53, %v150
  %v189 = vadd.f32 %v54, %v153
  %v190 = vadd.f32 %v55, %v155
  %v191 = vadd.f32 %v56, %v158
  %v192 = vadd.f32 %v57, %v160
  %v193 = vadd.f32 %v58, %v163
  %v194 = vadd.f32 %v59, %v165
  %v195 = vadd.f32 %v60, %v168
  %v196 = vadd.f32 %v61, %v170
  %v197 = vadd.f32 %v62, %v173
  %v198 = vadd.f32 %v63, %v175
  %v199 = vadd.f32 %v64, %v178
  %v200 = vadd.f32 %v65, %v180
  %v201 = vadd.f32 %v66, %v183
  %v202 = vadd.f32 %v67, %v185
  %vm203 = vcmask 15360
  %204 = vst.msk [vmem:[#allocation2] sm:$0xff] %vm203, %v187
  %205 = vst.msk [vmem:[#allocation2 + $0x8] sm:$0xff] %vm203, %v188
  %206 = vst.msk [vmem:[#allocation2 + $0x10] sm:$0xff] %vm203, %v189
  %207 = vst.msk [vmem:[#allocation2 + $0x18] sm:$0xff] %vm203, %v190
  %208 = vst.msk [vmem:[#allocation2 + $0x20] sm:$0xff] %vm203, %v191
  %209 = vst.msk [vmem:[#allocation2 + $0x28] sm:$0xff] %vm203, %v192
  %210 = vst.msk [vmem:[#allocation2 + $0x30] sm:$0xff] %vm203, %v193
  %211 = vst.msk [vmem:[#allocation2 + $0x38] sm:$0xff] %vm203, %v194
  %212 = vst.msk [vmem:[#allocation2 + $0x40] sm:$0xff] %vm203, %v195
  %213 = vst.msk [vmem:[#allocation2 + $0x48] sm:$0xff] %vm203, %v196
  %214 = vst.msk [vmem:[#allocation2 + $0x50] sm:$0xff] %vm203, %v197
  %215 = vst.msk [vmem:[#allocation2 + $0x58] sm:$0xff] %vm203, %v198
  %216 = vst.msk [vmem:[#allocation2 + $0x60] sm:$0xff] %vm203, %v199
  %217 = vst.msk [vmem:[#allocation2 + $0x68] sm:$0xff] %vm203, %v200
  %218 = vst.msk [vmem:[#allocation2 + $0x70] sm:$0xff] %vm203, %v201
  %219 = vst.msk [vmem:[#allocation2 + $0x78] sm:$0xff] %vm203, %v202
  // Predicated region
  $region18: #{_lambda_.36} parent=0 // pred_check
    %p220 = pneg %p15
  $region19: #{_lambda_.36} parent=0 // pred_check_branch
    %222 = sbr.rel (%p220) target = $region21
  $region20: #{_lambda_.36} parent=0 // pred_region
    %v223 = vld [vmem:[#allocation2] sm:$0xff]
    %v224 = vld [vmem:[#allocation2 + $0x8] sm:$0xff]
    %v225 = vld [vmem:[#allocation2 + $0x10] sm:$0xff]
    %v226 = vld [vmem:[#allocation2 + $0x18] sm:$0xff]
    %v227 = vld [vmem:[#allocation2 + $0x20] sm:$0xff]
    %v228 = vld [vmem:[#allocation2 + $0x28] sm:$0xff]
    %v229 = vld [vmem:[#allocation2 + $0x30] sm:$0xff]
    %v230 = vld [vmem:[#allocation2 + $0x38] sm:$0xff]
    %v231 = vld [vmem:[#allocation2 + $0x40] sm:$0xff]
    %v232 = vld [vmem:[#allocation2 + $0x48] sm:$0xff]
    %v233 = vld [vmem:[#allocation2 + $0x50] sm:$0xff]
    %v234 = vld [vmem:[#allocation2 + $0x58] sm:$0xff]
    %v235 = vld [vmem:[#allocation2 + $0x60] sm:$0xff]
    %v236 = vld [vmem:[#allocation2 + $0x68] sm:$0xff]
    %v237 = vld [vmem:[#allocation2 + $0x70] sm:$0xff]
    %v238 = vld [vmem:[#allocation2 + $0x78] sm:$0xff]
    %v239 = vld [vmem:[%s2] sm:$0x1]
    %v241 = vperm.slane %v239, 0
    %v243 = vadd.f32 %v223, %v241
    %v244 = vadd.f32 %v224, %v241
    %v245 = vadd.f32 %v225, %v241
    %v246 = vadd.f32 %v226, %v241
    %v247 = vadd.f32 %v227, %v241
    %v248 = vadd.f32 %v228, %v241
    %v249 = vadd.f32 %v229, %v241
    %v250 = vadd.f32 %v230, %v241
    %v251 = vadd.f32 %v231, %v241
    %v252 = vadd.f32 %v232, %v241
    %v253 = vadd.f32 %v233, %v241
    %v254 = vadd.f32 %v234, %v241
    %v255 = vadd.f32 %v235, %v241
    %v256 = vadd.f32 %v236, %v241
    %v257 = vadd.f32 %v237, %v241
    %v258 = vadd.f32 %v238, %v241
    %v259 = vmax.f32 %v243, 0.0
    %v260 = vmax.f32 %v244, 0.0
    %v261 = vmax.f32 %v245, 0.0
    %v262 = vmax.f32 %v246, 0.0
    %v263 = vmax.f32 %v247, 0.0
    %v264 = vmax.f32 %v248, 0.0
    %v265 = vmax.f32 %v249, 0.0
    %v266 = vmax.f32 %v250, 0.0
    %v267 = vmax.f32 %v251, 0.0
    %v268 = vmax.f32 %v252, 0.0
    %v269 = vmax.f32 %v253, 0.0
    %v270 = vmax.f32 %v254, 0.0
    %v271 = vmax.f32 %v255, 0.0
    %v272 = vmax.f32 %v256, 0.0
    %v273 = vmax.f32 %v257, 0.0
    %v274 = vmax.f32 %v258, 0.0
    %v275 = vpack.c.bf16 %v259, %v259
    %v276 = vpack.c.bf16 %v260, %v260
    %v277 = vpack.c.bf16 %v261, %v261
    %v278 = vpack.c.bf16 %v262, %v262
    %v279 = vpack.c.bf16 %v263, %v263
    %v280 = vpack.c.bf16 %v264, %v264
    %v281 = vpack.c.bf16 %v265, %v265
    %v282 = vpack.c.bf16 %v266, %v266
    %v283 = vpack.c.bf16 %v267, %v267
    %v284 = vpack.c.bf16 %v268, %v268
    %v285 = vpack.c.bf16 %v269, %v269
    %v286 = vpack.c.bf16 %v270, %v270
    %v287 = vpack.c.bf16 %v271, %v271
    %v288 = vpack.c.bf16 %v272, %v272
    %v289 = vpack.c.bf16 %v273, %v273
    %v290 = vpack.c.bf16 %v274, %v274
    %vm291 = vcmask 11264
    %292 = vst.msk [vmem:[%s3] sm:$0xf] %vm291, %v275
    %293 = vst.msk [vmem:[%s3 + $0x4] sm:$0xf] %vm291, %v276
    %294 = vst.msk [vmem:[%s3 + $0x8] sm:$0xf] %vm291, %v277
    %295 = vst.msk [vmem:[%s3 + $0xc] sm:$0xf] %vm291, %v278
    %296 = vst.msk [vmem:[%s3 + $0x10] sm:$0xf] %vm291, %v279
    %297 = vst.msk [vmem:[%s3 + $0x14] sm:$0xf] %vm291, %v280
    %298 = vst.msk [vmem:[%s3 + $0x18] sm:$0xf] %vm291, %v281
    %299 = vst.msk [vmem:[%s3 + $0x1c] sm:$0xf] %vm291, %v282
    %300 = vst.msk [vmem:[%s3 + $0x20] sm:$0xf] %vm291, %v283
    %301 = vst.msk [vmem:[%s3 + $0x24] sm:$0xf] %vm291, %v284
    %302 = vst.msk [vmem:[%s3 + $0x28] sm:$0xf] %vm291, %v285
    %303 = vst.msk [vmem:[%s3 + $0x2c] sm:$0xf] %vm291, %v286
    %304 = vst.msk [vmem:[%s3 + $0x30] sm:$0xf] %vm291, %v287
    %305 = vst.msk [vmem:[%s3 + $0x34] sm:$0xf] %vm291, %v288
    %306 = vst.msk [vmem:[%s3 + $0x38] sm:$0xf] %vm291, %v289
    %307 = vst.msk [vmem:[%s3 + $0x3c] sm:$0xf] %vm291, %v290
  $region21: #{_lambda_.36} parent=0 // pred_fallthru
    _
  // Predicated region
  $region22: #{_lambda_.36} parent=0 // pred_check
    _
  $region23: #{_lambda_.36} parent=0 // pred_check_branch
    %309 = sbr.rel (0) target = $region25
  $region24: #{_lambda_.36} parent=0 // pred_region
    _
  $region25: #{_lambda_.36} parent=0 // pred_fallthru
    _
  // Predicated region
  $region26: #{_lambda_.36} parent=0 // pred_check
    _
  $region27: #{_lambda_.36} parent=0 // pred_check_branch
    %311 = sbr.rel (0) target = $region29
  $region28: #{_lambda_.36} parent=0 // pred_region
    _
  $region29: #{_lambda_.36} parent=0 // pred_fallthru
    _

// kernel: _lambda_.41
$region0: #{_lambda_.41}
  #allocation0 [shape = 'u32[]', space=smem, size = 0x4, offset = 0x4, fixed_abs, tag = 'smem constant byte address 0x4 - core index']
  #allocation1 [shape = 'u32[72,128]{1,0:T(1,128)}', space=vmem, size = 0x9000, scoped, tag = 'internal scratch']
  %s0 = inlined_call_operand.vmem [shape: bf16[2,10,10,16], index: 0, kind: input, shape index: {}]
  %s1 = inlined_call_operand.vmem [shape: bf16[2,8,8,16], index: 1, kind: output, shape index: {}]
  %s2 = sld [smem:[#allocation0]]
  $region37: #{_lambda_.41} parent=0
    _
  %s4 = ssub.s32 1, %s2
  %s5 = scalar_select 0, %s4, %s2
  loop: start=0, step=1, limit=4
  $region2: #{_lambda_.41} parent=0 // loop_pre_header
    _
  $region3: #{_lambda_.41} parent=0 // loop_header
    %s7 = sphi 0, %s11
    %p8 = scmp.ge.s32.totalorder %s7, 4
    %s17 = sphi 0, %s19
    %s20 = sphi 0, %s17
    %s21 = sphi 0, %s20
    %s37 = sphi 0, %s21
    %s43 = sphi 0, %s45
    %s46 = sphi 0, %s43
    %s47 = sphi 0, %s46
    %s63 = sphi 0, %s47
  $region4: #{_lambda_.41} parent=0 // loop_header_branch
    %10 = sbr.rel (%p8) target = $region8
  $region5: #{_lambda_.41} parent=0 // loop_body
    %s12 = ssub.s32 %s7, 1
    %s13 = ssub.s32 %s7, 2
    %s14 = sadd.s32 %s7, 1
    %s15 = ssub.s32 %s7, %s14
    %p16 = scmp.eq.s32.totalorder %s15, 0
    %s18 = sadd.s32 %s17, 1
    %s19 = scalar_select %p16, %s17, %s18
    %p22 = pneg %p16
    %p23 = scmp.eq.s32.totalorder %s7, 1
    %p24 = por %p22, %p23
    %p25 = scmp.ne.s32.totalorder %s17, %s20
    %p26 = scmp.eq.s32.totalorder %s7, 0
    %p27 = por %p25, %p26
    %p28 = scmp.ne.s32.totalorder %s17, %s20
    %p29 = scmp.eq.s32.totalorder %s12, 1
    %p30 = por %p28, %p29
    %p31 = scmp.ne.s32.totalorder %s20, %s21
    %p32 = scmp.eq.s32.totalorder %s12, 0
    %p33 = por %p31, %p32
    %p34 = scmp.ne.s32.totalorder %s20, %s21
    %p35 = scmp.eq.s32.totalorder %s13, 1
    %p36 = por %p34, %p35
    %p38 = scmp.ne.s32.totalorder %s21, %s37
    %p39 = scmp.eq.s32.totalorder %s13, 0
    %p40 = por %p38, %p39
    %s41 = ssub.s32 %s7, %s14
    %p42 = scmp.eq.s32.totalorder %s41, 0
    %s44 = sadd.s32 %s43, 1
    %s45 = scalar_select %p42, %s43, %s44
    %p48 = pneg %p42
    %p49 = scmp.eq.s32.totalorder %s7, 1
    %p50 = por %p48, %p49
    %p51 = scmp.ne.s32.totalorder %s43, %s46
    %p52 = scmp.eq.s32.totalorder %s7, 0
    %p53 = por %p51, %p52
    %p54 = scmp.ne.s32.totalorder %s43, %s46
    %p55 = scmp.eq.s32.totalorder %s12, 1
    %p56 = por %p54, %p55
    %p57 = scmp.ne.s32.totalorder %s46, %s47
    %p58 = scmp.eq.s32.totalorder %s12, 0
    %p59 = por %p57, %p58
    %p60 = scmp.ne.s32.totalorder %s46, %s47
    %p61 = scmp.eq.s32.totalorder %s13, 1
    %p62 = por %p60, %p61
    %p64 = scmp.ne.s32.totalorder %s47, %s63
    %p65 = scmp.eq.s32.totalorder %s13, 0
    %p66 = por %p64, %p65
    %p67 = scmp.le.s32.totalorder 1, %s7
    %p68 = scmp.lt.s32.totalorder %s7, 3
    %p69 = pnand %p67, %p68
    %p70 = pneg %p69
    // Predicated region
    $region9: #{_lambda_.41} parent=5 // pred_check
      _
    $region10: #{_lambda_.41} parent=5 // pred_check_branch
      %72 = sbr.rel (%p69) target = $region12
    $region11: #{_lambda_.41} parent=5 // pred_region
      %s73 = ssub.s32 %s7, 1
    $region12: #{_lambda_.41} parent=5 // pred_fallthru
      _
    %p74 = scmp.lt.s32.totalorder %s7, 2
    // Predicated region
    $region13: #{_lambda_.41} parent=5 // pred_check
      %p75 = pneg %p74
    $region14: #{_lambda_.41} parent=5 // pred_check_branch
      %77 = sbr.rel (%p75) target = $region16
    $region15: #{_lambda_.41} parent=5 // pred_region
      // Predicated region
      $region17: #{_lambda_.41} parent=15 // pred_check
        %p78 = pneg %p27
      $region18: #{_lambda_.41} parent=15 // pred_check_branch
        %80 = sbr.rel (%p78) target = $region20
      $region19: #{_lambda_.41} parent=15 // pred_region
        %p81 = scmp.lt.s32.totalorder %s7, 1
        %s82 = scalar_select %p81, %s7, 1
        %s83 = smul.addr %s82, 20
        %s84 = smul.addr %s83, 4
        %s85 = scalar_lea.vmem %s0, %s84
      $region20: #{_lambda_.41} parent=15 // pred_fallthru
        _
    $region16: #{_lambda_.41} parent=5 // pred_fallthru
      _
    %p86 = scmp.le.s32.totalorder 1, %s7
    %p87 = scmp.lt.s32.totalorder %s7, 3
    %p88 = pnand %p86, %p87
    %p89 = pneg %p88
    // Predicated region
    $region21: #{_lambda_.41} parent=5 // pred_check
      _
    $region22: #{_lambda_.41} parent=5 // pred_check_branch
      %91 = sbr.rel (%p88) target = $region24
    $region23: #{_lambda_.41} parent=5 // pred_region
      %s92 = ssub.s32 %s7, 1
      %p93 = scmp.lt.s32.totalorder %s12, 1
      %s94 = scalar_select %p93, %s12, 1
      %s95 = smul.addr %s94, 20
      %s96 = smul.addr %s95, 4
      %s97 = scalar_lea.vmem %s0, %s96
      %p98 = pneg %p33
      %p99 = pneg %p30
      %p100 = pneg %p59
      %p101 = pneg %p56
      %p102 = scmp.lt.s32.totalorder %s12, 1
      %s103 = scalar_select %p102, %s12, 1
      %s104 = smul.addr %s103, 8
      %s105 = smul.addr %s104, 4
      %s106 = scalar_lea.vmem %s1, %s105
      %p107 = scmp.lt.s32.totalorder %s12, 1
      %s108 = scalar_select %p107, %s12, 1
      %s109 = smul.addr %s108, 20
      %s110 = smul.addr %s109, 4
      %s111 = scalar_lea.vmem %s0, %s110
      %p112 = scmp.lt.s32.totalorder %s12, 1
      %s113 = scalar_select %p112, %s12, 1
      %s114 = smul.addr %s113, 8
      %s115 = smul.addr %s114, 4
      %s116 = scalar_lea.vmem %s1, %s115
      %v117 = vld [vmem:[%s111] sm:$0xf]
      %v118 = vld [vmem:[%s111 + $0x8] sm:$0xf]
      %v119 = vld [vmem:[%s111 + $0x10] sm:$0xf]
      %v120 = vld [vmem:[%s111 + $0x18] sm:$0xf]
      %v121 = vld [vmem:[%s111 + $0x20] sm:$0xf]
      %v122 = vld [vmem:[%s111 + $0x28] sm:$0xf]
      %v123 = vld [vmem:[%s111 + $0x30] sm:$0xf]
      %v124 = vld [vmem:[%s111 + $0x38] sm:$0xf]
      %v125 = vld [vmem:[%s111 + $0x4] sm:$0x1]
      %v126 = vld [vmem:[%s111 + $0xc] sm:$0x1]
      %v127 = vld [vmem:[%s111 + $0x14] sm:$0x1]
      %v128 = vld [vmem:[%s111 + $0x1c] sm:$0x1]
      %v129 = vld [vmem:[%s111 + $0x24] sm:$0x1]
      %v130 = vld [vmem:[%s111 + $0x2c] sm:$0x1]
      %v131 = vld [vmem:[%s111 + $0x34] sm:$0x1]
      %v132 = vld [vmem:[%s111 + $0x3c] sm:$0x1]
      %v133 = vunpack.c.l.bf16 %v117
      %v134 = vunpack.c.l.bf16 %v118
      %v135 = vunpack.c.l.bf16 %v119
      %v136 = vunpack.c.l.bf16 %v120
      %v137 = vunpack.c.l.bf16 %v121
      %v138 = vunpack.c.l.bf16 %v122
      %v139 = vunpack.c.l.bf16 %v123
      %v140 = vunpack.c.l.bf16 %v124
      %v141 = vunpack.c.l.bf16 %v125
      %v142 = vunpack.c.l.bf16 %v126
      %v143 = vunpack.c.l.bf16 %v127
      %v144 = vunpack.c.l.bf16 %v128
      %v145 = vunpack.c.l.bf16 %v129
      %v146 = vunpack.c.l.bf16 %v130
      %v147 = vunpack.c.l.bf16 %v131
      %v148 = vunpack.c.l.bf16 %v132
      %vm165 = vcmask 1046528
      %v166 = vrot.slane %v133, 1
      %v167 = vrot.slane %v141, 1
      %v168 = vsel %vm165, %v166, %v167
      %v169 = vrot.slane %v134, 1
      %v170 = vrot.slane %v142, 1
      %v171 = vsel %vm165, %v169, %v170
      %v172 = vrot.slane %v135, 1
      %v173 = vrot.slane %v143, 1
      %v174 = vsel %vm165, %v172, %v173
      %v175 = vrot.slane %v136, 1
      %v176 = vrot.slane %v144, 1
      %v177 = vsel %vm165, %v175, %v176
      %v178 = vrot.slane %v137, 1
      %v179 = vrot.slane %v145, 1
      %v180 = vsel %vm165, %v178, %v179
      %v181 = vrot.slane %v138, 1
      %v182 = vrot.slane %v146, 1
      %v183 = vsel %vm165, %v181, %v182
      %v184 = vrot.slane %v139, 1
      %v185 = vrot.slane %v147, 1
      %v186 = vsel %vm165, %v184, %v185
      %v187 = vrot.slane %v140, 1
      %v188 = vrot.slane %v148, 1
      %v189 = vsel %vm165, %v187, %v188
      %v198 = vmax.f32 %v133, %v168
      %v199 = vmax.f32 %v134, %v171
      %v200 = vmax.f32 %v135, %v174
      %v201 = vmax.f32 %v136, %v177
      %v202 = vmax.f32 %v137, %v180
      %v203 = vmax.f32 %v138, %v183
      %v204 = vmax.f32 %v139, %v186
      %v205 = vmax.f32 %v140, %v189
      %v206 = vpack.c.bf16 %v198, %v198
      %v207 = vpack.c.bf16 %v199, %v199
      %v208 = vpack.c.bf16 %v200, %v200
      %v209 = vpack.c.bf16 %v201, %v201
      %v210 = vpack.c.bf16 %v202, %v202
      %v211 = vpack.c.bf16 %v203, %v203
      %v212 = vpack.c.bf16 %v204, %v204
      %v213 = vpack.c.bf16 %v205, %v205
      %v214 = vld [vmem:[%s111] sm:$0xe]
      %v215 = vld [vmem:[%s111 + $0x8] sm:$0xe]
      %v216 = vld [vmem:[%s111 + $0x10] sm:$0xe]
      %v217 = vld [vmem:[%s111 + $0x18] sm:$0xe]
      %v218 = vld [vmem:[%s111 + $0x20] sm:$0xe]
      %v219 = vld [vmem:[%s111 + $0x28] sm:$0xe]
      %v220 = vld [vmem:[%s111 + $0x30] sm:$0xe]
      %v221 = vld [vmem:[%s111 + $0x38] sm:$0xe]
      %v222 = vunpack.c.l.bf16 %v206
      %v223 = vunpack.c.l.bf16 %v207
      %v224 = vunpack.c.l.bf16 %v208
      %v225 = vunpack.c.l.bf16 %v209
      %v226 = vunpack.c.l.bf16 %v210
      %v227 = vunpack.c.l.bf16 %v211
      %v228 = vunpack.c.l.bf16 %v212
      %v229 = vunpack.c.l.bf16 %v213
      %v230 = vunpack.c.l.bf16 %v214
      %v231 = vunpack.c.l.bf16 %v215
      %v232 = vunpack.c.l.bf16 %v216
      %v233 = vunpack.c.l.bf16 %v217
      %v234 = vunpack.c.l.bf16 %v218
      %v235 = vunpack.c.l.bf16 %v219
      %v236 = vunpack.c.l.bf16 %v220
      %v237 = vunpack.c.l.bf16 %v221
      %vm246 = vcmask 1045504
      %v247 = vrot.slane %v230, 2
      %v248 = vrot.slane %v141, 2
      %v249 = vsel %vm246, %v247, %v248
      %v250 = vrot.slane %v231, 2
      %v251 = vrot.slane %v142, 2
      %v252 = vsel %vm246, %v250, %v251
      %v253 = vrot.slane %v232, 2
      %v254 = vrot.slane %v143, 2
      %v255 = vsel %vm246, %v253, %v254
      %v256 = vrot.slane %v233, 2
      %v257 = vrot.slane %v144, 2
      %v258 = vsel %vm246, %v256, %v257
      %v259 = vrot.slane %v234, 2
      %v260 = vrot.slane %v145, 2
      %v261 = vsel %vm246, %v259, %v260
      %v262 = vrot.slane %v235, 2
      %v263 = vrot.slane %v146, 2
      %v264 = vsel %vm246, %v262, %v263
      %v265 = vrot.slane %v236, 2
      %v266 = vrot.slane %v147, 2
      %v267 = vsel %vm246, %v265, %v266
      %v268 = vrot.slane %v237, 2
      %v269 = vrot.slane %v148, 2
      %v270 = vsel %vm246, %v268, %v269
      %v279 = vmax.f32 %v222, %v249
      %v280 = vmax.f32 %v223, %v252
      %v281 = vmax.f32 %v224, %v255
      %v282 = vmax.f32 %v225, %v258
      %v283 = vmax.f32 %v226, %v261
      %v284 = vmax.f32 %v227, %v264
      %v285 = vmax.f32 %v228, %v267
      %v286 = vmax.f32 %v229, %v270
      %v287 = vpack.c.bf16 %v279, %v279
      %v288 = vpack.c.bf16 %v280, %v280
      %v289 = vpack.c.bf16 %v281, %v281
      %v290 = vpack.c.bf16 %v282, %v282
      %v291 = vpack.c.bf16 %v283, %v283
      %v292 = vpack.c.bf16 %v284, %v284
      %v293 = vpack.c.bf16 %v285, %v285
      %v294 = vpack.c.bf16 %v286, %v286
      %s295 = scalar_lea.vmem %s111, 8
      %v296 = vld [vmem:[%s295] sm:$0xf]
      %v297 = vld [vmem:[%s295 + $0x8] sm:$0xf]
      %v298 = vld [vmem:[%s295 + $0x10] sm:$0xf]
      %v299 = vld [vmem:[%s295 + $0x18] sm:$0xf]
      %v300 = vld [vmem:[%s295 + $0x20] sm:$0xf]
      %v301 = vld [vmem:[%s295 + $0x28] sm:$0xf]
      %v302 = vld [vmem:[%s295 + $0x30] sm:$0xf]
      %v303 = vld [vmem:[%s295 + $0x38] sm:$0xf]
      %v304 = vunpack.c.l.bf16 %v287
      %v305 = vunpack.c.l.bf16 %v288
      %v306 = vunpack.c.l.bf16 %v289
      %v307 = vunpack.c.l.bf16 %v290
      %v308 = vunpack.c.l.bf16 %v291
      %v309 = vunpack.c.l.bf16 %v292
      %v310 = vunpack.c.l.bf16 %v293
      %v311 = vunpack.c.l.bf16 %v294
      %v312 = vunpack.c.l.bf16 %v296
      %v313 = vunpack.c.l.bf16 %v297
      %v314 = vunpack.c.l.bf16 %v298
      %v315 = vunpack.c.l.bf16 %v299
      %v316 = vunpack.c.l.bf16 %v300
      %v317 = vunpack.c.l.bf16 %v301
      %v318 = vunpack.c.l.bf16 %v302
      %v319 = vunpack.c.l.bf16 %v303
      %v320 = vmax.f32 %v304, %v312
      %v321 = vmax.f32 %v305, %v313
      %v322 = vmax.f32 %v306, %v314
      %v323 = vmax.f32 %v307, %v315
      %v324 = vmax.f32 %v308, %v316
      %v325 = vmax.f32 %v309, %v317
      %v326 = vmax.f32 %v310, %v318
      %v327 = vmax.f32 %v311, %v319
      %v328 = vpack.c.bf16 %v320, %v320
      %v329 = vpack.c.bf16 %v321, %v321
      %v330 = vpack.c.bf16 %v322, %v322
      %v331 = vpack.c.bf16 %v323, %v323
      %v332 = vpack.c.bf16 %v324, %v324
      %v333 = vpack.c.bf16 %v325, %v325
      %v334 = vpack.c.bf16 %v326, %v326
      %v335 = vpack.c.bf16 %v327, %v327
      %v336 = vld [vmem:[%s295 + $0x4] sm:$0x1]
      %v337 = vld [vmem:[%s295 + $0xc] sm:$0x1]
      %v338 = vld [vmem:[%s295 + $0x14] sm:$0x1]
      %v339 = vld [vmem:[%s295 + $0x1c] sm:$0x1]
      %v340 = vld [vmem:[%s295 + $0x24] sm:$0x1]
      %v341 = vld [vmem:[%s295 + $0x2c] sm:$0x1]
      %v342 = vld [vmem:[%s295 + $0x34] sm:$0x1]
      %v343 = vld [vmem:[%s295 + $0x3c] sm:$0x1]
      %v344 = vunpack.c.l.bf16 %v328
      %v345 = vunpack.c.l.bf16 %v329
      %v346 = vunpack.c.l.bf16 %v330
      %v347 = vunpack.c.l.bf16 %v331
      %v348 = vunpack.c.l.bf16 %v332
      %v349 = vunpack.c.l.bf16 %v333
      %v350 = vunpack.c.l.bf16 %v334
      %v351 = vunpack.c.l.bf16 %v335
      %v352 = vunpack.c.l.bf16 %v336
      %v353 = vunpack.c.l.bf16 %v337
      %v354 = vunpack.c.l.bf16 %v338
      %v355 = vunpack.c.l.bf16 %v339
      %v356 = vunpack.c.l.bf16 %v340
      %v357 = vunpack.c.l.bf16 %v341
      %v358 = vunpack.c.l.bf16 %v342
      %v359 = vunpack.c.l.bf16 %v343
      %v376 = vrot.slane %v312, 1
      %v377 = vrot.slane %v352, 1
      %v378 = vsel %vm165, %v376, %v377
      %v379 = vrot.slane %v313, 1
      %v380 = vrot.slane %v353, 1
      %v381 = vsel %vm165, %v379, %v380
      %v382 = vrot.slane %v314, 1
      %v383 = vrot.slane %v354, 1
      %v384 = vsel %vm165, %v382, %v383
      %v385 = vrot.slane %v315, 1
      %v386 = vrot.slane %v355, 1
      %v387 = vsel %vm165, %v385, %v386
      %v388 = vrot.slane %v316, 1
      %v389 = vrot.slane %v356, 1
      %v390 = vsel %vm165, %v388, %v389
      %v391 = vrot.slane %v317, 1
      %v392 = vrot.slane %v357, 1
      %v393 = vsel %vm165, %v391, %v392
      %v394 = vrot.slane %v318, 1
      %v395 = vrot.slane %v358, 1
      %v396 = vsel %vm165, %v394, %v395
      %v397 = vrot.slane %v319, 1
      %v398 = vrot.slane %v359, 1
      %v399 = vsel %vm165, %v397, %v398
      %v408 = vmax.f32 %v344, %v378
      %v409 = vmax.f32 %v345, %v381
      %v410 = vmax.f32 %v346, %v384
      %v411 = vmax.f32 %v347, %v387
      %v412 = vmax.f32 %v348, %v390
      %v413 = vmax.f32 %v349, %v393
      %v414 = vmax.f32 %v350, %v396
      %v415 = vmax.f32 %v351, %v399
      %v416 = vpack.c.bf16 %v408, %v408
      %v417 = vpack.c.bf16 %v409, %v409
      %v418 = vpack.c.bf16 %v410, %v410
      %v419 = vpack.c.bf16 %v411, %v411
      %v420 = vpack.c.bf16 %v412, %v412
      %v421 = vpack.c.bf16 %v413, %v413
      %v422 = vpack.c.bf16 %v414, %v414
      %v423 = vpack.c.bf16 %v415, %v415
      %v424 = vld [vmem:[%s295] sm:$0xe]
      %v425 = vld [vmem:[%s295 + $0x8] sm:$0xe]
      %v426 = vld [vmem:[%s295 + $0x10] sm:$0xe]
      %v427 = vld [vmem:[%s295 + $0x18] sm:$0xe]
      %v428 = vld [vmem:[%s295 + $0x20] sm:$0xe]
      %v429 = vld [vmem:[%s295 + $0x28] sm:$0xe]
      %v430 = vld [vmem:[%s295 + $0x30] sm:$0xe]
      %v431 = vld [vmem:[%s295 + $0x38] sm:$0xe]
      %v432 = vunpack.c.l.bf16 %v416
      %v433 = vunpack.c.l.bf16 %v417
      %v434 = vunpack.c.l.bf16 %v418
      %v435 = vunpack.c.l.bf16 %v419
      %v436 = vunpack.c.l.bf16 %v420
      %v437 = vunpack.c.l.bf16 %v421
      %v438 = vunpack.c.l.bf16 %v422
      %v439 = vunpack.c.l.bf16 %v423
      %v440 = vunpack.c.l.bf16 %v424
      %v441 = vunpack.c.l.bf16 %v425
      %v442 = vunpack.c.l.bf16 %v426
      %v443 = vunpack.c.l.bf16 %v427
      %v444 = vunpack.c.l.bf16 %v428
      %v445 = vunpack.c.l.bf16 %v429
      %v446 = vunpack.c.l.bf16 %v430
      %v447 = vunpack.c.l.bf16 %v431
      %v456 = vrot.slane %v440, 2
      %v457 = vrot.slane %v352, 2
      %v458 = vsel %vm246, %v456, %v457
      %v459 = vrot.slane %v441, 2
      %v460 = vrot.slane %v353, 2
      %v461 = vsel %vm246, %v459, %v460
      %v462 = vrot.slane %v442, 2
      %v463 = vrot.slane %v354, 2
      %v464 = vsel %vm246, %v462, %v463
      %v465 = vrot.slane %v443, 2
      %v466 = vrot.slane %v355, 2
      %v467 = vsel %vm246, %v465, %v466
      %v468 = vrot.slane %v444, 2
      %v469 = vrot.slane %v356, 2
      %v470 = vsel %vm246, %v468, %v469
      %v471 = vrot.slane %v445, 2
      %v472 = vrot.slane %v357, 2
      %v473 = vsel %vm246, %v471, %v472
      %v474 = vrot.slane %v446, 2
      %v475 = vrot.slane %v358, 2
      %v476 = vsel %vm246, %v474, %v475
      %v477 = vrot.slane %v447, 2
      %v478 = vrot.slane %v359, 2
      %v479 = vsel %vm246, %v477, %v478
      %v488 = vmax.f32 %v432, %v458
      %v489 = vmax.f32 %v433, %v461
      %v490 = vmax.f32 %v434, %v464
      %v491 = vmax.f32 %v435, %v467
      %v492 = vmax.f32 %v436, %v470
      %v493 = vmax.f32 %v437, %v473
      %v494 = vmax.f32 %v438, %v476
      %v495 = vmax.f32 %v439, %v479
      %v496 = vpack.c.bf16 %v488, %v488
      %v497 = vpack.c.bf16 %v489, %v489
      %v498 = vpack.c.bf16 %v490, %v490
      %v499 = vpack.c.bf16 %v491, %v491
      %v500 = vpack.c.bf16 %v492, %v492
      %v501 = vpack.c.bf16 %v493, %v493
      %v502 = vpack.c.bf16 %v494, %v494
      %v503 = vpack.c.bf16 %v495, %v495
      %s504 = scalar_lea.vmem %s111, 16
      %v505 = vld [vmem:[%s504] sm:$0xf]
      %v506 = vld [vmem:[%s504 + $0x8] sm:$0xf]
      %v507 = vld [vmem:[%s504 + $0x10] sm:$0xf]
      %v508 = vld [vmem:[%s504 + $0x18] sm:$0xf]
      %v509 = vld [vmem:[%s504 + $0x20] sm:$0xf]
      %v510 = vld [vmem:[%s504 + $0x28] sm:$0xf]
      %v511 = vld [vmem:[%s504 + $0x30] sm:$0xf]
      %v512 = vld [vmem:[%s504 + $0x38] sm:$0xf]
      %v513 = vunpack.c.l.bf16 %v496
      %v514 = vunpack.c.l.bf16 %v497
      %v515 = vunpack.c.l.bf16 %v498
      %v516 = vunpack.c.l.bf16 %v499
      %v517 = vunpack.c.l.bf16 %v500
      %v518 = vunpack.c.l.bf16 %v501
      %v519 = vunpack.c.l.bf16 %v502
      %v520 = vunpack.c.l.bf16 %v503
      %v521 = vunpack.c.l.bf16 %v505
      %v522 = vunpack.c.l.bf16 %v506
      %v523 = vunpack.c.l.bf16 %v507
      %v524 = vunpack.c.l.bf16 %v508
      %v525 = vunpack.c.l.bf16 %v509
      %v526 = vunpack.c.l.bf16 %v510
      %v527 = vunpack.c.l.bf16 %v511
      %v528 = vunpack.c.l.bf16 %v512
      %v529 = vmax.f32 %v513, %v521
      %v530 = vmax.f32 %v514, %v522
      %v531 = vmax.f32 %v515, %v523
      %v532 = vmax.f32 %v516, %v524
      %v533 = vmax.f32 %v517, %v525
      %v534 = vmax.f32 %v518, %v526
      %v535 = vmax.f32 %v519, %v527
      %v536 = vmax.f32 %v520, %v528
      %v537 = vpack.c.bf16 %v529, %v529
      %v538 = vpack.c.bf16 %v530, %v530
      %v539 = vpack.c.bf16 %v531, %v531
      %v540 = vpack.c.bf16 %v532, %v532
      %v541 = vpack.c.bf16 %v533, %v533
      %v542 = vpack.c.bf16 %v534, %v534
      %v543 = vpack.c.bf16 %v535, %v535
      %v544 = vpack.c.bf16 %v536, %v536
      %v545 = vld [vmem:[%s504 + $0x4] sm:$0x1]
      %v546 = vld [vmem:[%s504 + $0xc] sm:$0x1]
      %v547 = vld [vmem:[%s504 + $0x14] sm:$0x1]
      %v548 = vld [vmem:[%s504 + $0x1c] sm:$0x1]
      %v549 = vld [vmem:[%s504 + $0x24] sm:$0x1]
      %v550 = vld [vmem:[%s504 + $0x2c] sm:$0x1]
      %v551 = vld [vmem:[%s504 + $0x34] sm:$0x1]
      %v552 = vld [vmem:[%s504 + $0x3c] sm:$0x1]
      %v553 = vunpack.c.l.bf16 %v537
      %v554 = vunpack.c.l.bf16 %v538
      %v555 = vunpack.c.l.bf16 %v539
      %v556 = vunpack.c.l.bf16 %v540
      %v557 = vunpack.c.l.bf16 %v541
      %v558 = vunpack.c.l.bf16 %v542
      %v559 = vunpack.c.l.bf16 %v543
      %v560 = vunpack.c.l.bf16 %v544
      %v561 = vunpack.c.l.bf16 %v545
      %v562 = vunpack.c.l.bf16 %v546
      %v563 = vunpack.c.l.bf16 %v547
      %v564 = vunpack.c.l.bf16 %v548
      %v565 = vunpack.c.l.bf16 %v549
      %v566 = vunpack.c.l.bf16 %v550
      %v567 = vunpack.c.l.bf16 %v551
      %v568 = vunpack.c.l.bf16 %v552
      %v585 = vrot.slane %v521, 1
      %v586 = vrot.slane %v561, 1
      %v587 = vsel %vm165, %v585, %v586
      %v588 = vrot.slane %v522, 1
      %v589 = vrot.slane %v562, 1
      %v590 = vsel %vm165, %v588, %v589
      %v591 = vrot.slane %v523, 1
      %v592 = vrot.slane %v563, 1
      %v593 = vsel %vm165, %v591, %v592
      %v594 = vrot.slane %v524, 1
      %v595 = vrot.slane %v564, 1
      %v596 = vsel %vm165, %v594, %v595
      %v597 = vrot.slane %v525, 1
      %v598 = vrot.slane %v565, 1
      %v599 = vsel %vm165, %v597, %v598
      %v600 = vrot.slane %v526, 1
      %v601 = vrot.slane %v566, 1
      %v602 = vsel %vm165, %v600, %v601
      %v603 = vrot.slane %v527, 1
      %v604 = vrot.slane %v567, 1
      %v605 = vsel %vm165, %v603, %v604
      %v606 = vrot.slane %v528, 1
      %v607 = vrot.slane %v568, 1
      %v608 = vsel %vm165, %v606, %v607
      %v617 = vmax.f32 %v553, %v587
      %v618 = vmax.f32 %v554, %v590
      %v619 = vmax.f32 %v555, %v593
      %v620 = vmax.f32 %v556, %v596
      %v621 = vmax.f32 %v557, %v599
      %v622 = vmax.f32 %v558, %v602
      %v623 = vmax.f32 %v559, %v605
      %v624 = vmax.f32 %v560, %v608
      %v625 = vpack.c.bf16 %v617, %v617
      %v626 = vpack.c.bf16 %v618, %v618
      %v627 = vpack.c.bf16 %v619, %v619
      %v628 = vpack.c.bf16 %v620, %v620
      %v629 = vpack.c.bf16 %v621, %v621
      %v630 = vpack.c.bf16 %v622, %v622
      %v631 = vpack.c.bf16 %v623, %v623
      %v632 = vpack.c.bf16 %v624, %v624
      %v633 = vld [vmem:[%s504] sm:$0xe]
      %v634 = vld [vmem:[%s504 + $0x8] sm:$0xe]
      %v635 = vld [vmem:[%s504 + $0x10] sm:$0xe]
      %v636 = vld [vmem:[%s504 + $0x18] sm:$0xe]
      %v637 = vld [vmem:[%s504 + $0x20] sm:$0xe]
      %v638 = vld [vmem:[%s504 + $0x28] sm:$0xe]
      %v639 = vld [vmem:[%s504 + $0x30] sm:$0xe]
      %v640 = vld [vmem:[%s504 + $0x38] sm:$0xe]
      %v641 = vunpack.c.l.bf16 %v625
      %v642 = vunpack.c.l.bf16 %v626
      %v643 = vunpack.c.l.bf16 %v627
      %v644 = vunpack.c.l.bf16 %v628
      %v645 = vunpack.c.l.bf16 %v629
      %v646 = vunpack.c.l.bf16 %v630
      %v647 = vunpack.c.l.bf16 %v631
      %v648 = vunpack.c.l.bf16 %v632
      %v649 = vunpack.c.l.bf16 %v633
      %v650 = vunpack.c.l.bf16 %v634
      %v651 = vunpack.c.l.bf16 %v635
      %v652 = vunpack.c.l.bf16 %v636
      %v653 = vunpack.c.l.bf16 %v637
      %v654 = vunpack.c.l.bf16 %v638
      %v655 = vunpack.c.l.bf16 %v639
      %v656 = vunpack.c.l.bf16 %v640
      %v665 = vrot.slane %v649, 2
      %v666 = vrot.slane %v561, 2
      %v667 = vsel %vm246, %v665, %v666
      %v668 = vrot.slane %v650, 2
      %v669 = vrot.slane %v562, 2
      %v670 = vsel %vm246, %v668, %v669
      %v671 = vrot.slane %v651, 2
      %v672 = vrot.slane %v563, 2
      %v673 = vsel %vm246, %v671, %v672
      %v674 = vrot.slane %v652, 2
      %v675 = vrot.slane %v564, 2
      %v676 = vsel %vm246, %v674, %v675
      %v677 = vrot.slane %v653, 2
      %v678 = vrot.slane %v565, 2
      %v679 = vsel %vm246, %v677, %v678
      %v680 = vrot.slane %v654, 2
      %v681 = vrot.slane %v566, 2
      %v682 = vsel %vm246, %v680, %v681
      %v683 = vrot.slane %v655, 2
      %v684 = vrot.slane %v567, 2
      %v685 = vsel %vm246, %v683, %v684
      %v686 = vrot.slane %v656, 2
      %v687 = vrot.slane %v568, 2
      %v688 = vsel %vm246, %v686, %v687
      %v697 = vmax.f32 %v641, %v667
      %v698 = vmax.f32 %v642, %v670
      %v699 = vmax.f32 %v643, %v673
      %v700 = vmax.f32 %v644, %v676
      %v701 = vmax.f32 %v645, %v679
      %v702 = vmax.f32 %v646, %v682
      %v703 = vmax.f32 %v647, %v685
      %v704 = vmax.f32 %v648, %v688
      %v705 = vpack.c.bf16 %v697, %v697
      %v706 = vpack.c.bf16 %v698, %v698
      %v707 = vpack.c.bf16 %v699, %v699
      %v708 = vpack.c.bf16 %v700, %v700
      %v709 = vpack.c.bf16 %v701, %v701
      %v710 = vpack.c.bf16 %v702, %v702
      %v711 = vpack.c.bf16 %v703, %v703
      %v712 = vpack.c.bf16 %v704, %v704
      %vm713 = vcmask 125952
      %714 = vst.msk [vmem:[%s116] sm:$0xf] %vm713, %v705
      %715 = vst.msk [vmem:[%s116 + $0x4] sm:$0xf] %vm713, %v706
      %716 = vst.msk [vmem:[%s116 + $0x8] sm:$0xf] %vm713, %v707
      %717 = vst.msk [vmem:[%s116 + $0xc] sm:$0xf] %vm713, %v708
      %718 = vst.msk [vmem:[%s116 + $0x10] sm:$0xf] %vm713, %v709
      %719 = vst.msk [vmem:[%s116 + $0x14] sm:$0xf] %vm713, %v710
      %720 = vst.msk [vmem:[%s116 + $0x18] sm:$0xf] %vm713, %v711
      %721 = vst.msk [vmem:[%s116 + $0x1c] sm:$0xf] %vm713, %v712
      %p722 = scmp.lt.s32.totalorder %s12, 1
      %s723 = scalar_select %p722, %s12, 1
      %s724 = smul.addr %s723, 8
      %s725 = smul.addr %s724, 4
      %s726 = scalar_lea.vmem %s1, %s725
      // Predicated region
      $region25: #{_lambda_.41} parent=23 // pred_check
        %p727 = pneg %p56
      $region26: #{_lambda_.41} parent=23 // pred_check_branch
        %729 = sbr.rel (%p727) target = $region28
      $region27: #{_lambda_.41} parent=23 // pred_region
        _
      $region28: #{_lambda_.41} parent=23 // pred_fallthru
        _
    $region24: #{_lambda_.41} parent=5 // pred_fallthru
      _
    %p730 = scmp.le.s32.totalorder 2, %s7
    // Predicated region
    $region29: #{_lambda_.41} parent=5 // pred_check
      %p731 = pneg %p730
    $region30: #{_lambda_.41} parent=5 // pred_check_branch
      %733 = sbr.rel (%p731) target = $region32
    $region31: #{_lambda_.41} parent=5 // pred_region
      %s734 = ssub.s32 %s7, 2
      // Predicated region
      $region33: #{_lambda_.41} parent=31 // pred_check
        %p735 = pneg %p62
      $region34: #{_lambda_.41} parent=31 // pred_check_branch
        %737 = sbr.rel (%p735) target = $region36
      $region35: #{_lambda_.41} parent=31 // pred_region
        %p738 = scmp.lt.s32.totalorder %s13, 1
        %s739 = scalar_select %p738, %s13, 1
        %s740 = smul.addr %s739, 8
        %s741 = smul.addr %s740, 4
        %s742 = scalar_lea.vmem %s1, %s741
      $region36: #{_lambda_.41} parent=31 // pred_fallthru
        _
    $region32: #{_lambda_.41} parent=5 // pred_fallthru
      _
  $region6: #{_lambda_.41} parent=0 // loop_footer
    %s11 = sadd.s32 1, %s7
  $region7: #{_lambda_.41} parent=0 // loop_footer_branch
    %6 = sbr.rel target = $region3
  $region8: #{_lambda_.41} parent=0 // loop_exit
    _

// kernel: _lambda_.42
$region0: #{_lambda_.42}
  #allocation0 [shape = 'u32[]', space=smem, size = 0x4, offset = 0x4, fixed_abs, tag = 'smem constant byte address 0x4 - core index']
  #allocation1 [shape = 'u32[72,128]{1,0:T(1,128)}', space=vmem, size = 0x9000, scoped, tag = 'internal scratch']
  #allocation2 [shape = 'f32[128,2]{1,0:T(8,128)}', space=vmem, size = 0x10000, scoped, tag = 'scratch operand']
  %s0 = inlined_call_operand.vmem [shape: bf16[128,16], index: 0, kind: input, shape index: {}]
  %s1 = inlined_call_operand.vmem [shape: bf16[16,2], index: 1, kind: input, shape index: {}]
  %s2 = inlined_call_operand.vmem [shape: f32[1,2], index: 2, kind: input, shape index: {}]
  %s3 = inlined_call_operand.vmem [shape: bf16[128,2], index: 3, kind: output, shape index: {}]
  %s4 = sld [smem:[#allocation0]]
  $region30: #{_lambda_.42} parent=0
    _
  %s6 = ssub.s32 1, %s4
  %s7 = scalar_select 0, %s6, %s4
  // Predicated region
  $region2: #{_lambda_.42} parent=0 // pred_check
    _
  $region3: #{_lambda_.42} parent=0 // pred_check_branch
    %9 = sbr.rel (0) target = $region5
  $region4: #{_lambda_.42} parent=0 // pred_region
    _
  $region5: #{_lambda_.42} parent=0 // pred_fallthru
    _
  // Predicated region
  $region6: #{_lambda_.42} parent=0 // pred_check
    _
  $region7: #{_lambda_.42} parent=0 // pred_check_branch
    %11 = sbr.rel (0) target = $region9
  $region8: #{_lambda_.42} parent=0 // pred_region
    _
  $region9: #{_lambda_.42} parent=0 // pred_fallthru
    _
  // Predicated region
  $region10: #{_lambda_.42} parent=0 // pred_check
    _
  $region11: #{_lambda_.42} parent=0 // pred_check_branch
    %13 = sbr.rel (0) target = $region13
  $region12: #{_lambda_.42} parent=0 // pred_region
    _
  $region13: #{_lambda_.42} parent=0 // pred_fallthru
    _
  %p15 = scmp.eq.s32.totalorder 0, 0
  // Predicated region
  $region14: #{_lambda_.42} parent=0 // pred_check
    %p16 = pneg %p15
  $region15: #{_lambda_.42} parent=0 // pred_check_branch
    %18 = sbr.rel (%p16) target = $region17
  $region16: #{_lambda_.42} parent=0 // pred_region
    %vm19 = vcmask 15360
    %20 = vst.msk [vmem:[#allocation2] sm:$0xff] %vm19, 0.0
    %21 = vst.msk [vmem:[#allocation2 + $0x8] sm:$0xff] %vm19, 0.0
    %22 = vst.msk [vmem:[#allocation2 + $0x10] sm:$0xff] %vm19, 0.0
    %23 = vst.msk [vmem:[#allocation2 + $0x18] sm:$0xff] %vm19, 0.0
    %24 = vst.msk [vmem:[#allocation2 + $0x20] sm:$0xff] %vm19, 0.0
    %25 = vst.msk [vmem:[#allocation2 + $0x28] sm:$0xff] %vm19, 0.0
    %26 = vst.msk [vmem:[#allocation2 + $0x30] sm:$0xff] %vm19, 0.0
    %27 = vst.msk [vmem:[#allocation2 + $0x38] sm:$0xff] %vm19, 0.0
    %28 = vst.msk [vmem:[#allocation2 + $0x40] sm:$0xff] %vm19, 0.0
    %29 = vst.msk [vmem:[#allocation2 + $0x48] sm:$0xff] %vm19, 0.0
    %30 = vst.msk [vmem:[#allocation2 + $0x50] sm:$0xff] %vm19, 0.0
    %31 = vst.msk [vmem:[#allocation2 + $0x58] sm:$0xff] %vm19, 0.0
    %32 = vst.msk [vmem:[#allocation2 + $0x60] sm:$0xff] %vm19, 0.0
    %33 = vst.msk [vmem:[#allocation2 + $0x68] sm:$0xff] %vm19, 0.0
    %34 = vst.msk [vmem:[#allocation2 + $0x70] sm:$0xff] %vm19, 0.0
    %35 = vst.msk [vmem:[#allocation2 + $0x78] sm:$0xff] %vm19, 0.0
  $region17: #{_lambda_.42} parent=0 // pred_fallthru
    _
  %v36 = vld [vmem:[%s0] sm:$0xf]
  %v37 = vld [vmem:[%s0 + $0x4] sm:$0xf]
  %v38 = vld [vmem:[%s0 + $0x8] sm:$0xf]
  %v39 = vld [vmem:[%s0 + $0xc] sm:$0xf]
  %v40 = vld [vmem:[%s0 + $0x10] sm:$0xf]
  %v41 = vld [vmem:[%s0 + $0x14] sm:$0xf]
  %v42 = vld [vmem:[%s0 + $0x18] sm:$0xf]
  %v43 = vld [vmem:[%s0 + $0x1c] sm:$0xf]
  %v44 = vld [vmem:[%s0 + $0x20] sm:$0xf]
  %v45 = vld [vmem:[%s0 + $0x24] sm:$0xf]
  %v46 = vld [vmem:[%s0 + $0x28] sm:$0xf]
  %v47 = vld [vmem:[%s0 + $0x2c] sm:$0xf]
  %v48 = vld [vmem:[%s0 + $0x30] sm:$0xf]
  %v49 = vld [vmem:[%s0 + $0x34] sm:$0xf]
  %v50 = vld [vmem:[%s0 + $0x38] sm:$0xf]
  %v51 = vld [vmem:[%s0 + $0x3c] sm:$0xf]
  %v52 = vld [vmem:[#allocation2] sm:$0xff]
  %v53 = vld [vmem:[#allocation2 + $0x8] sm:$0xff]
  %v54 = vld [vmem:[#allocation2 + $0x10] sm:$0xff]
  %v55 = vld [vmem:[#allocation2 + $0x18] sm:$0xff]
  %v56 = vld [vmem:[#allocation2 + $0x20] sm:$0xff]
  %v57 = vld [vmem:[#allocation2 + $0x28] sm:$0xff]
  %v58 = vld [vmem:[#allocation2 + $0x30] sm:$0xff]
  %v59 = vld [vmem:[#allocation2 + $0x38] sm:$0xff]
  %v60 = vld [vmem:[#allocation2 + $0x40] sm:$0xff]
  %v61 = vld [vmem:[#allocation2 + $0x48] sm:$0xff]
  %v62 = vld [vmem:[#allocation2 + $0x50] sm:$0xff]
  %v63 = vld [vmem:[#allocation2 + $0x58] sm:$0xff]
  %v64 = vld [vmem:[#allocation2 + $0x60] sm:$0xff]
  %v65 = vld [vmem:[#allocation2 + $0x68] sm:$0xff]
  %v66 = vld [vmem:[#allocation2 + $0x70] sm:$0xff]
  %v67 = vld [vmem:[#allocation2 + $0x78] sm:$0xff]
  %v68 = vld [vmem:[%s1] sm:$0xf]
  %v69 = vld [vmem:[%s1 + $0x4] sm:$0xf]
  %v86 = vunpack.c.l.b16 %v36
  %v87 = vunpack.c.l.b16 %v37
  %v88 = vunpack.c.l.b16 %v38
  %v89 = vunpack.c.l.b16 %v39
  %v90 = vunpack.c.l.b16 %v40
  %v91 = vunpack.c.l.b16 %v41
  %v92 = vunpack.c.l.b16 %v42
  %v93 = vunpack.c.l.b16 %v43
  %v94 = vunpack.c.l.b16 %v44
  %v95 = vunpack.c.l.b16 %v45
  %v96 = vunpack.c.l.b16 %v46
  %v97 = vunpack.c.l.b16 %v47
  %v98 = vunpack.c.l.b16 %v48
  %v99 = vunpack.c.l.b16 %v49
  %v100 = vunpack.c.l.b16 %v50
  %v101 = vunpack.c.l.b16 %v51
  %v102 = vpack.c.b16 %v87, %v86
  %v103 = vpack.c.b16 %v89, %v88
  %v104 = vpack.c.b16 %v91, %v90
  %v105 = vpack.c.b16 %v93, %v92
  %v106 = vpack.c.b16 %v95, %v94
  %v107 = vpack.c.b16 %v97, %v96
  %v108 = vpack.c.b16 %v99, %v98
  %v109 = vpack.c.b16 %v101, %v100
  %v112 = vunpack.c.l.b16 %v68
  %v113 = vunpack.c.l.b16 %v69
  %v114 = vpack.c.b16 %v113, %v112
  %vm116 = vcmask 130048
  %v118 = vsel %vm116, %v102, 0
  %v121 = vsel %vm116, %v103, 0
  %v124 = vsel %vm116, %v104, 0
  %v127 = vsel %vm116, %v105, 0
  %v130 = vsel %vm116, %v106, 0
  %v133 = vsel %vm116, %v107, 0
  %v136 = vsel %vm116, %v108, 0
  %v139 = vsel %vm116, %v109, 0
  %141 = vmatpush.bf16.msra.mxu0 0
  %142 = vmatpush.bf16.msra.mxu0 0
  %143 = vmatpush.bf16.msra.mxu0 0
  %144 = vmatpush.bf16.msra.mxu0 0
  %145 = vmatpush.bf16.msra.mxu0 0
  %146 = vmatpush.bf16.msra.mxu0 0
  %147 = vmatpush.bf16.msra.mxu0 0
  %148 = vmatpush.bf16.msra.mxu0 %v114
  %149 = vmatmul.bf16.gmra.mxu0 %v118
  %v150 = vpop.f32.mrf.mxu0
  %v151 = vadd.f32 0.0, %v150
  %v152 = vpop.f32.mrf.mxu0
  %v153 = vadd.f32 0.0, %v152
  %154 = vmatmul.bf16.gmra.mxu0 %v121
  %v155 = vpop.f32.mrf.mxu0
  %v156 = vadd.f32 0.0, %v155
  %v157 = vpop.f32.mrf.mxu0
  %v158 = vadd.f32 0.0, %v157
  %159 = vmatmul.bf16.gmra.mxu0 %v124
  %v160 = vpop.f32.mrf.mxu0
  %v161 = vadd.f32 0.0, %v160
  %v162 = vpop.f32.mrf.mxu0
  %v163 = vadd.f32 0.0, %v162
  %164 = vmatmul.bf16.gmra.mxu0 %v127
  %v165 = vpop.f32.mrf.mxu0
  %v166 = vadd.f32 0.0, %v165
  %v167 = vpop.f32.mrf.mxu0
  %v168 = vadd.f32 0.0, %v167
  %169 = vmatmul.bf16.gmra.mxu0 %v130
  %v170 = vpop.f32.mrf.mxu0
  %v171 = vadd.f32 0.0, %v170
  %v172 = vpop.f32.mrf.mxu0
  %v173 = vadd.f32 0.0, %v172
  %174 = vmatmul.bf16.gmra.mxu0 %v133
  %v175 = vpop.f32.mrf.mxu0
  %v176 = vadd.f32 0.0, %v175
  %v177 = vpop.f32.mrf.mxu0
  %v178 = vadd.f32 0.0, %v177
  %179 = vmatmul.bf16.gmra.mxu0 %v136
  %v180 = vpop.f32.mrf.mxu0
  %v181 = vadd.f32 0.0, %v180
  %v182 = vpop.f32.mrf.mxu0
  %v183 = vadd.f32 0.0, %v182
  %184 = vmatmul.bf16.gmra.mxu0 %v139
  %v185 = vpop.f32.mrf.mxu0
  %v186 = vadd.f32 0.0, %v185
  %v187 = vpop.f32.mrf.mxu0
  %v188 = vadd.f32 0.0, %v187
  %189 = vdwg.mxu0
  %v190 = vadd.f32 %v52, %v151
  %v191 = vadd.f32 %v53, %v153
  %v192 = vadd.f32 %v54, %v156
  %v193 = vadd.f32 %v55, %v158
  %v194 = vadd.f32 %v56, %v161
  %v195 = vadd.f32 %v57, %v163
  %v196 = vadd.f32 %v58, %v166
  %v197 = vadd.f32 %v59, %v168
  %v198 = vadd.f32 %v60, %v171
  %v199 = vadd.f32 %v61, %v173
  %v200 = vadd.f32 %v62, %v176
  %v201 = vadd.f32 %v63, %v178
  %v202 = vadd.f32 %v64, %v181
  %v203 = vadd.f32 %v65, %v183
  %v204 = vadd.f32 %v66, %v186
  %v205 = vadd.f32 %v67, %v188
  %vm206 = vcmask 15360
  %207 = vst.msk [vmem:[#allocation2] sm:$0xff] %vm206, %v190
  %208 = vst.msk [vmem:[#allocation2 + $0x8] sm:$0xff] %vm206, %v191
  %209 = vst.msk [vmem:[#allocation2 + $0x10] sm:$0xff] %vm206, %v192
  %210 = vst.msk [vmem:[#allocation2 + $0x18] sm:$0xff] %vm206, %v193
  %211 = vst.msk [vmem:[#allocation2 + $0x20] sm:$0xff] %vm206, %v194
  %212 = vst.msk [vmem:[#allocation2 + $0x28] sm:$0xff] %vm206, %v195
  %213 = vst.msk [vmem:[#allocation2 + $0x30] sm:$0xff] %vm206, %v196
  %214 = vst.msk [vmem:[#allocation2 + $0x38] sm:$0xff] %vm206, %v197
  %215 = vst.msk [vmem:[#allocation2 + $0x40] sm:$0xff] %vm206, %v198
  %216 = vst.msk [vmem:[#allocation2 + $0x48] sm:$0xff] %vm206, %v199
  %217 = vst.msk [vmem:[#allocation2 + $0x50] sm:$0xff] %vm206, %v200
  %218 = vst.msk [vmem:[#allocation2 + $0x58] sm:$0xff] %vm206, %v201
  %219 = vst.msk [vmem:[#allocation2 + $0x60] sm:$0xff] %vm206, %v202
  %220 = vst.msk [vmem:[#allocation2 + $0x68] sm:$0xff] %vm206, %v203
  %221 = vst.msk [vmem:[#allocation2 + $0x70] sm:$0xff] %vm206, %v204
  %222 = vst.msk [vmem:[#allocation2 + $0x78] sm:$0xff] %vm206, %v205
  // Predicated region
  $region18: #{_lambda_.42} parent=0 // pred_check
    %p223 = pneg %p15
  $region19: #{_lambda_.42} parent=0 // pred_check_branch
    %225 = sbr.rel (%p223) target = $region21
  $region20: #{_lambda_.42} parent=0 // pred_region
    %v226 = vld [vmem:[#allocation2] sm:$0xff]
    %v227 = vld [vmem:[#allocation2 + $0x8] sm:$0xff]
    %v228 = vld [vmem:[#allocation2 + $0x10] sm:$0xff]
    %v229 = vld [vmem:[#allocation2 + $0x18] sm:$0xff]
    %v230 = vld [vmem:[#allocation2 + $0x20] sm:$0xff]
    %v231 = vld [vmem:[#allocation2 + $0x28] sm:$0xff]
    %v232 = vld [vmem:[#allocation2 + $0x30] sm:$0xff]
    %v233 = vld [vmem:[#allocation2 + $0x38] sm:$0xff]
    %v234 = vld [vmem:[#allocation2 + $0x40] sm:$0xff]
    %v235 = vld [vmem:[#allocation2 + $0x48] sm:$0xff]
    %v236 = vld [vmem:[#allocation2 + $0x50] sm:$0xff]
    %v237 = vld [vmem:[#allocation2 + $0x58] sm:$0xff]
    %v238 = vld [vmem:[#allocation2 + $0x60] sm:$0xff]
    %v239 = vld [vmem:[#allocation2 + $0x68] sm:$0xff]
    %v240 = vld [vmem:[#allocation2 + $0x70] sm:$0xff]
    %v241 = vld [vmem:[#allocation2 + $0x78] sm:$0xff]
    %v242 = vld [vmem:[%s2] sm:$0x1]
    %v244 = vperm.slane %v242, 0
    %v246 = vadd.f32 %v226, %v244
    %v247 = vadd.f32 %v227, %v244
    %v248 = vadd.f32 %v228, %v244
    %v249 = vadd.f32 %v229, %v244
    %v250 = vadd.f32 %v230, %v244
    %v251 = vadd.f32 %v231, %v244
    %v252 = vadd.f32 %v232, %v244
    %v253 = vadd.f32 %v233, %v244
    %v254 = vadd.f32 %v234, %v244
    %v255 = vadd.f32 %v235, %v244
    %v256 = vadd.f32 %v236, %v244
    %v257 = vadd.f32 %v237, %v244
    %v258 = vadd.f32 %v238, %v244
    %v259 = vadd.f32 %v239, %v244
    %v260 = vadd.f32 %v240, %v244
    %v261 = vadd.f32 %v241, %v244
    %v262 = vmax.f32 %v246, 0.0
    %v263 = vmax.f32 %v247, 0.0
    %v264 = vmax.f32 %v248, 0.0
    %v265 = vmax.f32 %v249, 0.0
    %v266 = vmax.f32 %v250, 0.0
    %v267 = vmax.f32 %v251, 0.0
    %v268 = vmax.f32 %v252, 0.0
    %v269 = vmax.f32 %v253, 0.0
    %v270 = vmax.f32 %v254, 0.0
    %v271 = vmax.f32 %v255, 0.0
    %v272 = vmax.f32 %v256, 0.0
    %v273 = vmax.f32 %v257, 0.0
    %v274 = vmax.f32 %v258, 0.0
    %v275 = vmax.f32 %v259, 0.0
    %v276 = vmax.f32 %v260, 0.0
    %v277 = vmax.f32 %v261, 0.0
    %v278 = vpack.c.bf16 %v262, %v262
    %v279 = vpack.c.bf16 %v263, %v263
    %v280 = vpack.c.bf16 %v264, %v264
    %v281 = vpack.c.bf16 %v265, %v265
    %v282 = vpack.c.bf16 %v266, %v266
    %v283 = vpack.c.bf16 %v267, %v267
    %v284 = vpack.c.bf16 %v268, %v268
    %v285 = vpack.c.bf16 %v269, %v269
    %v286 = vpack.c.bf16 %v270, %v270
    %v287 = vpack.c.bf16 %v271, %v271
    %v288 = vpack.c.bf16 %v272, %v272
    %v289 = vpack.c.bf16 %v273, %v273
    %v290 = vpack.c.bf16 %v274, %v274
    %v291 = vpack.c.bf16 %v275, %v275
    %v292 = vpack.c.bf16 %v276, %v276
    %v293 = vpack.c.bf16 %v277, %v277
    %vm294 = vcmask 11264
    %295 = vst.msk [vmem:[%s3] sm:$0xf] %vm294, %v278
    %296 = vst.msk [vmem:[%s3 + $0x4] sm:$0xf] %vm294, %v279
    %297 = vst.msk [vmem:[%s3 + $0x8] sm:$0xf] %vm294, %v280
    %298 = vst.msk [vmem:[%s3 + $0xc] sm:$0xf] %vm294, %v281
    %299 = vst.msk [vmem:[%s3 + $0x10] sm:$0xf] %vm294, %v282
    %300 = vst.msk [vmem:[%s3 + $0x14] sm:$0xf] %vm294, %v283
    %301 = vst.msk [vmem:[%s3 + $0x18] sm:$0xf] %vm294, %v284
    %302 = vst.msk [vmem:[%s3 + $0x1c] sm:$0xf] %vm294, %v285
    %303 = vst.msk [vmem:[%s3 + $0x20] sm:$0xf] %vm294, %v286
    %304 = vst.msk [vmem:[%s3 + $0x24] sm:$0xf] %vm294, %v287
    %305 = vst.msk [vmem:[%s3 + $0x28] sm:$0xf] %vm294, %v288
    %306 = vst.msk [vmem:[%s3 + $0x2c] sm:$0xf] %vm294, %v289
    %307 = vst.msk [vmem:[%s3 + $0x30] sm:$0xf] %vm294, %v290
    %308 = vst.msk [vmem:[%s3 + $0x34] sm:$0xf] %vm294, %v291
    %309 = vst.msk [vmem:[%s3 + $0x38] sm:$0xf] %vm294, %v292
    %310 = vst.msk [vmem:[%s3 + $0x3c] sm:$0xf] %vm294, %v293
  $region21: #{_lambda_.42} parent=0 // pred_fallthru
    _
  // Predicated region
  $region22: #{_lambda_.42} parent=0 // pred_check
    _
  $region23: #{_lambda_.42} parent=0 // pred_check_branch
    %312 = sbr.rel (0) target = $region25
  $region24: #{_lambda_.42} parent=0 // pred_region
    _
  $region25: #{_lambda_.42} parent=0 // pred_fallthru
    _
  // Predicated region
  $region26: #{_lambda_.42} parent=0 // pred_check
    _
  $region27: #{_lambda_.42} parent=0 // pred_check_branch
    %314 = sbr.rel (0) target = $region29
  $region28: #{_lambda_.42} parent=0 // pred_region
    _
  $region29: #{_lambda_.42} parent=0 // pred_fallthru
    _

// kernel: _lambda_.37
$region0: #{_lambda_.37}
  #allocation0 [shape = 'u32[]', space=smem, size = 0x4, offset = 0x4, fixed_abs, tag = 'smem constant byte address 0x4 - core index']
  #allocation1 [shape = 'u32[72,128]{1,0:T(1,128)}', space=vmem, size = 0x9000, scoped, tag = 'internal scratch']
  #allocation2 [shape = 'f32[128,6]{1,0:T(8,128)}', space=vmem, size = 0x10000, scoped, tag = 'scratch operand']
  %s0 = inlined_call_operand.vmem [shape: bf16[128,16], index: 0, kind: input, shape index: {}]
  %s1 = inlined_call_operand.vmem [shape: bf16[16,6], index: 1, kind: input, shape index: {}]
  %s2 = inlined_call_operand.vmem [shape: f32[1,6], index: 2, kind: input, shape index: {}]
  %s3 = inlined_call_operand.vmem [shape: bf16[128,6], index: 3, kind: output, shape index: {}]
  %s4 = sld [smem:[#allocation0]]
  $region30: #{_lambda_.37} parent=0
    _
  %s6 = ssub.s32 1, %s4
  %s7 = scalar_select 0, %s6, %s4
  // Predicated region
  $region2: #{_lambda_.37} parent=0 // pred_check
    _
  $region3: #{_lambda_.37} parent=0 // pred_check_branch
    %9 = sbr.rel (0) target = $region5
  $region4: #{_lambda_.37} parent=0 // pred_region
    _
  $region5: #{_lambda_.37} parent=0 // pred_fallthru
    _
  // Predicated region
  $region6: #{_lambda_.37} parent=0 // pred_check
    _
  $region7: #{_lambda_.37} parent=0 // pred_check_branch
    %11 = sbr.rel (0) target = $region9
  $region8: #{_lambda_.37} parent=0 // pred_region
    _
  $region9: #{_lambda_.37} parent=0 // pred_fallthru
    _
  // Predicated region
  $region10: #{_lambda_.37} parent=0 // pred_check
    _
  $region11: #{_lambda_.37} parent=0 // pred_check_branch
    %13 = sbr.rel (0) target = $region13
  $region12: #{_lambda_.37} parent=0 // pred_region
    _
  $region13: #{_lambda_.37} parent=0 // pred_fallthru
    _
  %p15 = scmp.eq.s32.totalorder 0, 0
  // Predicated region
  $region14: #{_lambda_.37} parent=0 // pred_check
    %p16 = pneg %p15
  $region15: #{_lambda_.37} parent=0 // pred_check_branch
    %18 = sbr.rel (%p16) target = $region17
  $region16: #{_lambda_.37} parent=0 // pred_region
    %vm19 = vcmask 48128
    %20 = vst.msk [vmem:[#allocation2] sm:$0xff] %vm19, 0.0
    %21 = vst.msk [vmem:[#allocation2 + $0x8] sm:$0xff] %vm19, 0.0
    %22 = vst.msk [vmem:[#allocation2 + $0x10] sm:$0xff] %vm19, 0.0
    %23 = vst.msk [vmem:[#allocation2 + $0x18] sm:$0xff] %vm19, 0.0
    %24 = vst.msk [vmem:[#allocation2 + $0x20] sm:$0xff] %vm19, 0.0
    %25 = vst.msk [vmem:[#allocation2 + $0x28] sm:$0xff] %vm19, 0.0
    %26 = vst.msk [vmem:[#allocation2 + $0x30] sm:$0xff] %vm19, 0.0
    %27 = vst.msk [vmem:[#allocation2 + $0x38] sm:$0xff] %vm19, 0.0
    %28 = vst.msk [vmem:[#allocation2 + $0x40] sm:$0xff] %vm19, 0.0
    %29 = vst.msk [vmem:[#allocation2 + $0x48] sm:$0xff] %vm19, 0.0
    %30 = vst.msk [vmem:[#allocation2 + $0x50] sm:$0xff] %vm19, 0.0
    %31 = vst.msk [vmem:[#allocation2 + $0x58] sm:$0xff] %vm19, 0.0
    %32 = vst.msk [vmem:[#allocation2 + $0x60] sm:$0xff] %vm19, 0.0
    %33 = vst.msk [vmem:[#allocation2 + $0x68] sm:$0xff] %vm19, 0.0
    %34 = vst.msk [vmem:[#allocation2 + $0x70] sm:$0xff] %vm19, 0.0
    %35 = vst.msk [vmem:[#allocation2 + $0x78] sm:$0xff] %vm19, 0.0
  $region17: #{_lambda_.37} parent=0 // pred_fallthru
    _
  %v36 = vld [vmem:[%s0] sm:$0xf]
  %v37 = vld [vmem:[%s0 + $0x4] sm:$0xf]
  %v38 = vld [vmem:[%s0 + $0x8] sm:$0xf]
  %v39 = vld [vmem:[%s0 + $0xc] sm:$0xf]
  %v40 = vld [vmem:[%s0 + $0x10] sm:$0xf]
  %v41 = vld [vmem:[%s0 + $0x14] sm:$0xf]
  %v42 = vld [vmem:[%s0 + $0x18] sm:$0xf]
  %v43 = vld [vmem:[%s0 + $0x1c] sm:$0xf]
  %v44 = vld [vmem:[%s0 + $0x20] sm:$0xf]
  %v45 = vld [vmem:[%s0 + $0x24] sm:$0xf]
  %v46 = vld [vmem:[%s0 + $0x28] sm:$0xf]
  %v47 = vld [vmem:[%s0 + $0x2c] sm:$0xf]
  %v48 = vld [vmem:[%s0 + $0x30] sm:$0xf]
  %v49 = vld [vmem:[%s0 + $0x34] sm:$0xf]
  %v50 = vld [vmem:[%s0 + $0x38] sm:$0xf]
  %v51 = vld [vmem:[%s0 + $0x3c] sm:$0xf]
  %v52 = vld [vmem:[#allocation2] sm:$0xff]
  %v53 = vld [vmem:[#allocation2 + $0x8] sm:$0xff]
  %v54 = vld [vmem:[#allocation2 + $0x10] sm:$0xff]
  %v55 = vld [vmem:[#allocation2 + $0x18] sm:$0xff]
  %v56 = vld [vmem:[#allocation2 + $0x20] sm:$0xff]
  %v57 = vld [vmem:[#allocation2 + $0x28] sm:$0xff]
  %v58 = vld [vmem:[#allocation2 + $0x30] sm:$0xff]
  %v59 = vld [vmem:[#allocation2 + $0x38] sm:$0xff]
  %v60 = vld [vmem:[#allocation2 + $0x40] sm:$0xff]
  %v61 = vld [vmem:[#allocation2 + $0x48] sm:$0xff]
  %v62 = vld [vmem:[#allocation2 + $0x50] sm:$0xff]
  %v63 = vld [vmem:[#allocation2 + $0x58] sm:$0xff]
  %v64 = vld [vmem:[#allocation2 + $0x60] sm:$0xff]
  %v65 = vld [vmem:[#allocation2 + $0x68] sm:$0xff]
  %v66 = vld [vmem:[#allocation2 + $0x70] sm:$0xff]
  %v67 = vld [vmem:[#allocation2 + $0x78] sm:$0xff]
  %v68 = vld [vmem:[%s1] sm:$0xf]
  %v69 = vld [vmem:[%s1 + $0x4] sm:$0xf]
  %v86 = vunpack.c.l.b16 %v36
  %v87 = vunpack.c.l.b16 %v37
  %v88 = vunpack.c.l.b16 %v38
  %v89 = vunpack.c.l.b16 %v39
  %v90 = vunpack.c.l.b16 %v40
  %v91 = vunpack.c.l.b16 %v41
  %v92 = vunpack.c.l.b16 %v42
  %v93 = vunpack.c.l.b16 %v43
  %v94 = vunpack.c.l.b16 %v44
  %v95 = vunpack.c.l.b16 %v45
  %v96 = vunpack.c.l.b16 %v46
  %v97 = vunpack.c.l.b16 %v47
  %v98 = vunpack.c.l.b16 %v48
  %v99 = vunpack.c.l.b16 %v49
  %v100 = vunpack.c.l.b16 %v50
  %v101 = vunpack.c.l.b16 %v51
  %v102 = vpack.c.b16 %v87, %v86
  %v103 = vpack.c.b16 %v89, %v88
  %v104 = vpack.c.b16 %v91, %v90
  %v105 = vpack.c.b16 %v93, %v92
  %v106 = vpack.c.b16 %v95, %v94
  %v107 = vpack.c.b16 %v97, %v96
  %v108 = vpack.c.b16 %v99, %v98
  %v109 = vpack.c.b16 %v101, %v100
  %v112 = vunpack.c.l.b16 %v68
  %v113 = vunpack.c.l.b16 %v69
  %v114 = vpack.c.b16 %v113, %v112
  %vm116 = vcmask 130048
  %v118 = vsel %vm116, %v102, 0
  %v121 = vsel %vm116, %v103, 0
  %v124 = vsel %vm116, %v104, 0
  %v127 = vsel %vm116, %v105, 0
  %v130 = vsel %vm116, %v106, 0
  %v133 = vsel %vm116, %v107, 0
  %v136 = vsel %vm116, %v108, 0
  %v139 = vsel %vm116, %v109, 0
  %141 = vmatpush.bf16.msra.mxu0 0
  %142 = vmatpush.bf16.msra.mxu0 0
  %143 = vmatpush.bf16.msra.mxu0 0
  %144 = vmatpush.bf16.msra.mxu0 0
  %145 = vmatpush.bf16.msra.mxu0 0
  %146 = vmatpush.bf16.msra.mxu0 0
  %147 = vmatpush.bf16.msra.mxu0 0
  %148 = vmatpush.bf16.msra.mxu0 %v114
  %149 = vmatmul.bf16.gmra.mxu0 %v118
  %v150 = vpop.f32.mrf.mxu0
  %v151 = vadd.f32 0.0, %v150
  %v152 = vpop.f32.mrf.mxu0
  %v153 = vadd.f32 0.0, %v152
  %154 = vmatmul.bf16.gmra.mxu0 %v121
  %v155 = vpop.f32.mrf.mxu0
  %v156 = vadd.f32 0.0, %v155
  %v157 = vpop.f32.mrf.mxu0
  %v158 = vadd.f32 0.0, %v157
  %159 = vmatmul.bf16.gmra.mxu0 %v124
  %v160 = vpop.f32.mrf.mxu0
  %v161 = vadd.f32 0.0, %v160
  %v162 = vpop.f32.mrf.mxu0
  %v163 = vadd.f32 0.0, %v162
  %164 = vmatmul.bf16.gmra.mxu0 %v127
  %v165 = vpop.f32.mrf.mxu0
  %v166 = vadd.f32 0.0, %v165
  %v167 = vpop.f32.mrf.mxu0
  %v168 = vadd.f32 0.0, %v167
  %169 = vmatmul.bf16.gmra.mxu0 %v130
  %v170 = vpop.f32.mrf.mxu0
  %v171 = vadd.f32 0.0, %v170
  %v172 = vpop.f32.mrf.mxu0
  %v173 = vadd.f32 0.0, %v172
  %174 = vmatmul.bf16.gmra.mxu0 %v133
  %v175 = vpop.f32.mrf.mxu0
  %v176 = vadd.f32 0.0, %v175
  %v177 = vpop.f32.mrf.mxu0
  %v178 = vadd.f32 0.0, %v177
  %179 = vmatmul.bf16.gmra.mxu0 %v136
  %v180 = vpop.f32.mrf.mxu0
  %v181 = vadd.f32 0.0, %v180
  %v182 = vpop.f32.mrf.mxu0
  %v183 = vadd.f32 0.0, %v182
  %184 = vmatmul.bf16.gmra.mxu0 %v139
  %v185 = vpop.f32.mrf.mxu0
  %v186 = vadd.f32 0.0, %v185
  %v187 = vpop.f32.mrf.mxu0
  %v188 = vadd.f32 0.0, %v187
  %189 = vdwg.mxu0
  %v190 = vadd.f32 %v52, %v151
  %v191 = vadd.f32 %v53, %v153
  %v192 = vadd.f32 %v54, %v156
  %v193 = vadd.f32 %v55, %v158
  %v194 = vadd.f32 %v56, %v161
  %v195 = vadd.f32 %v57, %v163
  %v196 = vadd.f32 %v58, %v166
  %v197 = vadd.f32 %v59, %v168
  %v198 = vadd.f32 %v60, %v171
  %v199 = vadd.f32 %v61, %v173
  %v200 = vadd.f32 %v62, %v176
  %v201 = vadd.f32 %v63, %v178
  %v202 = vadd.f32 %v64, %v181
  %v203 = vadd.f32 %v65, %v183
  %v204 = vadd.f32 %v66, %v186
  %v205 = vadd.f32 %v67, %v188
  %vm206 = vcmask 48128
  %207 = vst.msk [vmem:[#allocation2] sm:$0xff] %vm206, %v190
  %208 = vst.msk [vmem:[#allocation2 + $0x8] sm:$0xff] %vm206, %v191
  %209 = vst.msk [vmem:[#allocation2 + $0x10] sm:$0xff] %vm206, %v192
  %210 = vst.msk [vmem:[#allocation2 + $0x18] sm:$0xff] %vm206, %v193
  %211 = vst.msk [vmem:[#allocation2 + $0x20] sm:$0xff] %vm206, %v194
  %212 = vst.msk [vmem:[#allocation2 + $0x28] sm:$0xff] %vm206, %v195
  %213 = vst.msk [vmem:[#allocation2 + $0x30] sm:$0xff] %vm206, %v196
  %214 = vst.msk [vmem:[#allocation2 + $0x38] sm:$0xff] %vm206, %v197
  %215 = vst.msk [vmem:[#allocation2 + $0x40] sm:$0xff] %vm206, %v198
  %216 = vst.msk [vmem:[#allocation2 + $0x48] sm:$0xff] %vm206, %v199
  %217 = vst.msk [vmem:[#allocation2 + $0x50] sm:$0xff] %vm206, %v200
  %218 = vst.msk [vmem:[#allocation2 + $0x58] sm:$0xff] %vm206, %v201
  %219 = vst.msk [vmem:[#allocation2 + $0x60] sm:$0xff] %vm206, %v202
  %220 = vst.msk [vmem:[#allocation2 + $0x68] sm:$0xff] %vm206, %v203
  %221 = vst.msk [vmem:[#allocation2 + $0x70] sm:$0xff] %vm206, %v204
  %222 = vst.msk [vmem:[#allocation2 + $0x78] sm:$0xff] %vm206, %v205
  // Predicated region
  $region18: #{_lambda_.37} parent=0 // pred_check
    %p223 = pneg %p15
  $region19: #{_lambda_.37} parent=0 // pred_check_branch
    %225 = sbr.rel (%p223) target = $region21
  $region20: #{_lambda_.37} parent=0 // pred_region
    %v226 = vld [vmem:[#allocation2] sm:$0xff]
    %v227 = vld [vmem:[#allocation2 + $0x8] sm:$0xff]
    %v228 = vld [vmem:[#allocation2 + $0x10] sm:$0xff]
    %v229 = vld [vmem:[#allocation2 + $0x18] sm:$0xff]
    %v230 = vld [vmem:[#allocation2 + $0x20] sm:$0xff]
    %v231 = vld [vmem:[#allocation2 + $0x28] sm:$0xff]
    %v232 = vld [vmem:[#allocation2 + $0x30] sm:$0xff]
    %v233 = vld [vmem:[#allocation2 + $0x38] sm:$0xff]
    %v234 = vld [vmem:[#allocation2 + $0x40] sm:$0xff]
    %v235 = vld [vmem:[#allocation2 + $0x48] sm:$0xff]
    %v236 = vld [vmem:[#allocation2 + $0x50] sm:$0xff]
    %v237 = vld [vmem:[#allocation2 + $0x58] sm:$0xff]
    %v238 = vld [vmem:[#allocation2 + $0x60] sm:$0xff]
    %v239 = vld [vmem:[#allocation2 + $0x68] sm:$0xff]
    %v240 = vld [vmem:[#allocation2 + $0x70] sm:$0xff]
    %v241 = vld [vmem:[#allocation2 + $0x78] sm:$0xff]
    %v242 = vld [vmem:[%s2] sm:$0x1]
    %v244 = vperm.slane %v242, 0
    %v246 = vadd.f32 %v226, %v244
    %v247 = vadd.f32 %v227, %v244
    %v248 = vadd.f32 %v228, %v244
    %v249 = vadd.f32 %v229, %v244
    %v250 = vadd.f32 %v230, %v244
    %v251 = vadd.f32 %v231, %v244
    %v252 = vadd.f32 %v232, %v244
    %v253 = vadd.f32 %v233, %v244
    %v254 = vadd.f32 %v234, %v244
    %v255 = vadd.f32 %v235, %v244
    %v256 = vadd.f32 %v236, %v244
    %v257 = vadd.f32 %v237, %v244
    %v258 = vadd.f32 %v238, %v244
    %v259 = vadd.f32 %v239, %v244
    %v260 = vadd.f32 %v240, %v244
    %v261 = vadd.f32 %v241, %v244
    %v262 = vmax.f32 %v246, 0.0
    %v263 = vmax.f32 %v247, 0.0
    %v264 = vmax.f32 %v248, 0.0
    %v265 = vmax.f32 %v249, 0.0
    %v266 = vmax.f32 %v250, 0.0
    %v267 = vmax.f32 %v251, 0.0
    %v268 = vmax.f32 %v252, 0.0
    %v269 = vmax.f32 %v253, 0.0
    %v270 = vmax.f32 %v254, 0.0
    %v271 = vmax.f32 %v255, 0.0
    %v272 = vmax.f32 %v256, 0.0
    %v273 = vmax.f32 %v257, 0.0
    %v274 = vmax.f32 %v258, 0.0
    %v275 = vmax.f32 %v259, 0.0
    %v276 = vmax.f32 %v260, 0.0
    %v277 = vmax.f32 %v261, 0.0
    %v278 = vpack.c.bf16 %v262, %v262
    %v279 = vpack.c.bf16 %v263, %v263
    %v280 = vpack.c.bf16 %v264, %v264
    %v281 = vpack.c.bf16 %v265, %v265
    %v282 = vpack.c.bf16 %v266, %v266
    %v283 = vpack.c.bf16 %v267, %v267
    %v284 = vpack.c.bf16 %v268, %v268
    %v285 = vpack.c.bf16 %v269, %v269
    %v286 = vpack.c.bf16 %v270, %v270
    %v287 = vpack.c.bf16 %v271, %v271
    %v288 = vpack.c.bf16 %v272, %v272
    %v289 = vpack.c.bf16 %v273, %v273
    %v290 = vpack.c.bf16 %v274, %v274
    %v291 = vpack.c.bf16 %v275, %v275
    %v292 = vpack.c.bf16 %v276, %v276
    %v293 = vpack.c.bf16 %v277, %v277
    %vm294 = vcmask 44032
    %295 = vst.msk [vmem:[%s3] sm:$0xf] %vm294, %v278
    %296 = vst.msk [vmem:[%s3 + $0x4] sm:$0xf] %vm294, %v279
    %297 = vst.msk [vmem:[%s3 + $0x8] sm:$0xf] %vm294, %v280
    %298 = vst.msk [vmem:[%s3 + $0xc] sm:$0xf] %vm294, %v281
    %299 = vst.msk [vmem:[%s3 + $0x10] sm:$0xf] %vm294, %v282
    %300 = vst.msk [vmem:[%s3 + $0x14] sm:$0xf] %vm294, %v283
    %301 = vst.msk [vmem:[%s3 + $0x18] sm:$0xf] %vm294, %v284
    %302 = vst.msk [vmem:[%s3 + $0x1c] sm:$0xf] %vm294, %v285
    %303 = vst.msk [vmem:[%s3 + $0x20] sm:$0xf] %vm294, %v286
    %304 = vst.msk [vmem:[%s3 + $0x24] sm:$0xf] %vm294, %v287
    %305 = vst.msk [vmem:[%s3 + $0x28] sm:$0xf] %vm294, %v288
    %306 = vst.msk [vmem:[%s3 + $0x2c] sm:$0xf] %vm294, %v289
    %307 = vst.msk [vmem:[%s3 + $0x30] sm:$0xf] %vm294, %v290
    %308 = vst.msk [vmem:[%s3 + $0x34] sm:$0xf] %vm294, %v291
    %309 = vst.msk [vmem:[%s3 + $0x38] sm:$0xf] %vm294, %v292
    %310 = vst.msk [vmem:[%s3 + $0x3c] sm:$0xf] %vm294, %v293
  $region21: #{_lambda_.37} parent=0 // pred_fallthru
    _
  // Predicated region
  $region22: #{_lambda_.37} parent=0 // pred_check
    _
  $region23: #{_lambda_.37} parent=0 // pred_check_branch
    %312 = sbr.rel (0) target = $region25
  $region24: #{_lambda_.37} parent=0 // pred_region
    _
  $region25: #{_lambda_.37} parent=0 // pred_fallthru
    _
  // Predicated region
  $region26: #{_lambda_.37} parent=0 // pred_check
    _
  $region27: #{_lambda_.37} parent=0 // pred_check_branch
    %314 = sbr.rel (0) target = $region29
  $region28: #{_lambda_.37} parent=0 // pred_region
    _
  $region29: #{_lambda_.37} parent=0 // pred_fallthru
    _

// kernel: _lambda_.44
$region0: #{_lambda_.44}
  #allocation0 [shape = 'u32[]', space=smem, size = 0x4, offset = 0x4, fixed_abs, tag = 'smem constant byte address 0x4 - core index']
  #allocation1 [shape = 'u32[72,128]{1,0:T(1,128)}', space=vmem, size = 0x9000, scoped, tag = 'internal scratch']
  %s0 = inlined_call_operand.vmem [shape: bf16[2,8,8,12], index: 0, kind: input, shape index: {}]
  %s1 = inlined_call_operand.vmem [shape: bf16[2,7,7,12], index: 1, kind: output, shape index: {}]
  %s2 = sld [smem:[#allocation0]]
  $region37: #{_lambda_.44} parent=0
    _
  %s4 = ssub.s32 1, %s2
  %s5 = scalar_select 0, %s4, %s2
  loop: start=0, step=1, limit=4
  $region2: #{_lambda_.44} parent=0 // loop_pre_header
    _
  $region3: #{_lambda_.44} parent=0 // loop_header
    %s7 = sphi 0, %s11
    %p8 = scmp.ge.s32.totalorder %s7, 4
    %s17 = sphi 0, %s19
    %s20 = sphi 0, %s17
    %s21 = sphi 0, %s20
    %s37 = sphi 0, %s21
    %s43 = sphi 0, %s45
    %s46 = sphi 0, %s43
    %s47 = sphi 0, %s46
    %s63 = sphi 0, %s47
  $region4: #{_lambda_.44} parent=0 // loop_header_branch
    %10 = sbr.rel (%p8) target = $region8
  $region5: #{_lambda_.44} parent=0 // loop_body
    %s12 = ssub.s32 %s7, 1
    %s13 = ssub.s32 %s7, 2
    %s14 = sadd.s32 %s7, 1
    %s15 = ssub.s32 %s7, %s14
    %p16 = scmp.eq.s32.totalorder %s15, 0
    %s18 = sadd.s32 %s17, 1
    %s19 = scalar_select %p16, %s17, %s18
    %p22 = pneg %p16
    %p23 = scmp.eq.s32.totalorder %s7, 1
    %p24 = por %p22, %p23
    %p25 = scmp.ne.s32.totalorder %s17, %s20
    %p26 = scmp.eq.s32.totalorder %s7, 0
    %p27 = por %p25, %p26
    %p28 = scmp.ne.s32.totalorder %s17, %s20
    %p29 = scmp.eq.s32.totalorder %s12, 1
    %p30 = por %p28, %p29
    %p31 = scmp.ne.s32.totalorder %s20, %s21
    %p32 = scmp.eq.s32.totalorder %s12, 0
    %p33 = por %p31, %p32
    %p34 = scmp.ne.s32.totalorder %s20, %s21
    %p35 = scmp.eq.s32.totalorder %s13, 1
    %p36 = por %p34, %p35
    %p38 = scmp.ne.s32.totalorder %s21, %s37
    %p39 = scmp.eq.s32.totalorder %s13, 0
    %p40 = por %p38, %p39
    %s41 = ssub.s32 %s7, %s14
    %p42 = scmp.eq.s32.totalorder %s41, 0
    %s44 = sadd.s32 %s43, 1
    %s45 = scalar_select %p42, %s43, %s44
    %p48 = pneg %p42
    %p49 = scmp.eq.s32.totalorder %s7, 1
    %p50 = por %p48, %p49
    %p51 = scmp.ne.s32.totalorder %s43, %s46
    %p52 = scmp.eq.s32.totalorder %s7, 0
    %p53 = por %p51, %p52
    %p54 = scmp.ne.s32.totalorder %s43, %s46
    %p55 = scmp.eq.s32.totalorder %s12, 1
    %p56 = por %p54, %p55
    %p57 = scmp.ne.s32.totalorder %s46, %s47
    %p58 = scmp.eq.s32.totalorder %s12, 0
    %p59 = por %p57, %p58
    %p60 = scmp.ne.s32.totalorder %s46, %s47
    %p61 = scmp.eq.s32.totalorder %s13, 1
    %p62 = por %p60, %p61
    %p64 = scmp.ne.s32.totalorder %s47, %s63
    %p65 = scmp.eq.s32.totalorder %s13, 0
    %p66 = por %p64, %p65
    %p67 = scmp.le.s32.totalorder 1, %s7
    %p68 = scmp.lt.s32.totalorder %s7, 3
    %p69 = pnand %p67, %p68
    %p70 = pneg %p69
    // Predicated region
    $region9: #{_lambda_.44} parent=5 // pred_check
      _
    $region10: #{_lambda_.44} parent=5 // pred_check_branch
      %72 = sbr.rel (%p69) target = $region12
    $region11: #{_lambda_.44} parent=5 // pred_region
      %s73 = ssub.s32 %s7, 1
    $region12: #{_lambda_.44} parent=5 // pred_fallthru
      _
    %p74 = scmp.lt.s32.totalorder %s7, 2
    // Predicated region
    $region13: #{_lambda_.44} parent=5 // pred_check
      %p75 = pneg %p74
    $region14: #{_lambda_.44} parent=5 // pred_check_branch
      %77 = sbr.rel (%p75) target = $region16
    $region15: #{_lambda_.44} parent=5 // pred_region
      // Predicated region
      $region17: #{_lambda_.44} parent=15 // pred_check
        %p78 = pneg %p27
      $region18: #{_lambda_.44} parent=15 // pred_check_branch
        %80 = sbr.rel (%p78) target = $region20
      $region19: #{_lambda_.44} parent=15 // pred_region
        %p81 = scmp.lt.s32.totalorder %s7, 1
        %s82 = scalar_select %p81, %s7, 1
        %s83 = smul.addr %s82, 8
        %s84 = smul.addr %s83, 4
        %s85 = scalar_lea.vmem %s0, %s84
      $region20: #{_lambda_.44} parent=15 // pred_fallthru
        _
    $region16: #{_lambda_.44} parent=5 // pred_fallthru
      _
    %p86 = scmp.le.s32.totalorder 1, %s7
    %p87 = scmp.lt.s32.totalorder %s7, 3
    %p88 = pnand %p86, %p87
    %p89 = pneg %p88
    // Predicated region
    $region21: #{_lambda_.44} parent=5 // pred_check
      _
    $region22: #{_lambda_.44} parent=5 // pred_check_branch
      %91 = sbr.rel (%p88) target = $region24
    $region23: #{_lambda_.44} parent=5 // pred_region
      %s92 = ssub.s32 %s7, 1
      %p93 = scmp.lt.s32.totalorder %s12, 1
      %s94 = scalar_select %p93, %s12, 1
      %s95 = smul.addr %s94, 8
      %s96 = smul.addr %s95, 4
      %s97 = scalar_lea.vmem %s0, %s96
      %p98 = pneg %p33
      %p99 = pneg %p30
      %p100 = pneg %p59
      %p101 = pneg %p56
      %p102 = scmp.lt.s32.totalorder %s12, 1
      %s103 = scalar_select %p102, %s12, 1
      %s104 = smul.addr %s103, 7
      %s105 = smul.addr %s104, 4
      %s106 = scalar_lea.vmem %s1, %s105
      %p107 = scmp.lt.s32.totalorder %s12, 1
      %s108 = scalar_select %p107, %s12, 1
      %s109 = smul.addr %s108, 8
      %s110 = smul.addr %s109, 4
      %s111 = scalar_lea.vmem %s0, %s110
      %p112 = scmp.lt.s32.totalorder %s12, 1
      %s113 = scalar_select %p112, %s12, 1
      %s114 = smul.addr %s113, 7
      %s115 = smul.addr %s114, 4
      %s116 = scalar_lea.vmem %s1, %s115
      %v117 = vld [vmem:[%s111] sm:$0xf]
      %v118 = vld [vmem:[%s111 + $0x4] sm:$0xf]
      %v119 = vld [vmem:[%s111 + $0x8] sm:$0xf]
      %v120 = vld [vmem:[%s111 + $0xc] sm:$0xf]
      %v121 = vld [vmem:[%s111 + $0x10] sm:$0xf]
      %v122 = vld [vmem:[%s111 + $0x14] sm:$0xf]
      %v123 = vld [vmem:[%s111 + $0x18] sm:$0xf]
      %v124 = vunpack.c.l.bf16 %v117
      %v125 = vunpack.c.l.bf16 %v118
      %v126 = vunpack.c.l.bf16 %v119
      %v127 = vunpack.c.l.bf16 %v120
      %v128 = vunpack.c.l.bf16 %v121
      %v129 = vunpack.c.l.bf16 %v122
      %v130 = vunpack.c.l.bf16 %v123
      %v138 = vrot.slane %v124, 1
      %v139 = vrot.slane %v125, 1
      %v140 = vrot.slane %v126, 1
      %v141 = vrot.slane %v127, 1
      %v142 = vrot.slane %v128, 1
      %v143 = vrot.slane %v129, 1
      %v144 = vrot.slane %v130, 1
      %v152 = vadd.f32 %v124, %v138
      %v153 = vadd.f32 %v125, %v139
      %v154 = vadd.f32 %v126, %v140
      %v155 = vadd.f32 %v127, %v141
      %v156 = vadd.f32 %v128, %v142
      %v157 = vadd.f32 %v129, %v143
      %v158 = vadd.f32 %v130, %v144
      %s159 = scalar_lea.vmem %s111, 4
      %v160 = vld [vmem:[%s159] sm:$0xf]
      %v161 = vld [vmem:[%s159 + $0x4] sm:$0xf]
      %v162 = vld [vmem:[%s159 + $0x8] sm:$0xf]
      %v163 = vld [vmem:[%s159 + $0xc] sm:$0xf]
      %v164 = vld [vmem:[%s159 + $0x10] sm:$0xf]
      %v165 = vld [vmem:[%s159 + $0x14] sm:$0xf]
      %v166 = vld [vmem:[%s159 + $0x18] sm:$0xf]
      %v167 = vunpack.c.l.bf16 %v160
      %v168 = vunpack.c.l.bf16 %v161
      %v169 = vunpack.c.l.bf16 %v162
      %v170 = vunpack.c.l.bf16 %v163
      %v171 = vunpack.c.l.bf16 %v164
      %v172 = vunpack.c.l.bf16 %v165
      %v173 = vunpack.c.l.bf16 %v166
      %v174 = vadd.f32 %v152, %v167
      %v175 = vadd.f32 %v153, %v168
      %v176 = vadd.f32 %v154, %v169
      %v177 = vadd.f32 %v155, %v170
      %v178 = vadd.f32 %v156, %v171
      %v179 = vadd.f32 %v157, %v172
      %v180 = vadd.f32 %v158, %v173
      %v188 = vrot.slane %v167, 1
      %v189 = vrot.slane %v168, 1
      %v190 = vrot.slane %v169, 1
      %v191 = vrot.slane %v170, 1
      %v192 = vrot.slane %v171, 1
      %v193 = vrot.slane %v172, 1
      %v194 = vrot.slane %v173, 1
      %v202 = vadd.f32 %v174, %v188
      %v203 = vadd.f32 %v175, %v189
      %v204 = vadd.f32 %v176, %v190
      %v205 = vadd.f32 %v177, %v191
      %v206 = vadd.f32 %v178, %v192
      %v207 = vadd.f32 %v179, %v193
      %v208 = vadd.f32 %v180, %v194
      %v209 = vmul.f32 %v202, 0.25
      %v210 = vmul.f32 %v203, 0.25
      %v211 = vmul.f32 %v204, 0.25
      %v212 = vmul.f32 %v205, 0.25
      %v213 = vmul.f32 %v206, 0.25
      %v214 = vmul.f32 %v207, 0.25
      %v215 = vmul.f32 %v208, 0.25
      %v216 = vpack.c.bf16 %v209, %v209
      %v217 = vpack.c.bf16 %v210, %v210
      %v218 = vpack.c.bf16 %v211, %v211
      %v219 = vpack.c.bf16 %v212, %v212
      %v220 = vpack.c.bf16 %v213, %v213
      %v221 = vpack.c.bf16 %v214, %v214
      %v222 = vpack.c.bf16 %v215, %v215
      %vm223 = vcmask 93184
      %vm224 = vsmask.f32 3328
      %vm225 = vmand %vm223, %vm224
      %v226 = vld [vmem:[%s116] sm:$0xf]
      %v227 = vsel %vm225, %v216, %v226
      %228 = vst [vmem:[%s116] sm:$0xf] %v227
      %v229 = vld [vmem:[%s116 + $0x4] sm:$0xf]
      %v230 = vsel %vm225, %v217, %v229
      %231 = vst [vmem:[%s116 + $0x4] sm:$0xf] %v230
      %v232 = vld [vmem:[%s116 + $0x8] sm:$0xf]
      %v233 = vsel %vm225, %v218, %v232
      %234 = vst [vmem:[%s116 + $0x8] sm:$0xf] %v233
      %v235 = vld [vmem:[%s116 + $0xc] sm:$0xf]
      %v236 = vsel %vm225, %v219, %v235
      %237 = vst [vmem:[%s116 + $0xc] sm:$0xf] %v236
      %v238 = vld [vmem:[%s116 + $0x10] sm:$0xf]
      %v239 = vsel %vm225, %v220, %v238
      %240 = vst [vmem:[%s116 + $0x10] sm:$0xf] %v239
      %v241 = vld [vmem:[%s116 + $0x14] sm:$0xf]
      %v242 = vsel %vm225, %v221, %v241
      %243 = vst [vmem:[%s116 + $0x14] sm:$0xf] %v242
      %v244 = vld [vmem:[%s116 + $0x18] sm:$0xf]
      %v245 = vsel %vm225, %v222, %v244
      %246 = vst [vmem:[%s116 + $0x18] sm:$0xf] %v245
      %p247 = scmp.lt.s32.totalorder %s12, 1
      %s248 = scalar_select %p247, %s12, 1
      %s249 = smul.addr %s248, 7
      %s250 = smul.addr %s249, 4
      %s251 = scalar_lea.vmem %s1, %s250
      // Predicated region
      $region25: #{_lambda_.44} parent=23 // pred_check
        %p252 = pneg %p56
      $region26: #{_lambda_.44} parent=23 // pred_check_branch
        %254 = sbr.rel (%p252) target = $region28
      $region27: #{_lambda_.44} parent=23 // pred_region
        _
      $region28: #{_lambda_.44} parent=23 // pred_fallthru
        _
    $region24: #{_lambda_.44} parent=5 // pred_fallthru
      _
    %p255 = scmp.le.s32.totalorder 2, %s7
    // Predicated region
    $region29: #{_lambda_.44} parent=5 // pred_check
      %p256 = pneg %p255
    $region30: #{_lambda_.44} parent=5 // pred_check_branch
      %258 = sbr.rel (%p256) target = $region32
    $region31: #{_lambda_.44} parent=5 // pred_region
      %s259 = ssub.s32 %s7, 2
      // Predicated region
      $region33: #{_lambda_.44} parent=31 // pred_check
        %p260 = pneg %p62
      $region34: #{_lambda_.44} parent=31 // pred_check_branch
        %262 = sbr.rel (%p260) target = $region36
      $region35: #{_lambda_.44} parent=31 // pred_region
        %p263 = scmp.lt.s32.totalorder %s13, 1
        %s264 = scalar_select %p263, %s13, 1
        %s265 = smul.addr %s264, 7
        %s266 = smul.addr %s265, 4
        %s267 = scalar_lea.vmem %s1, %s266
      $region36: #{_lambda_.44} parent=31 // pred_fallthru
        _
    $region32: #{_lambda_.44} parent=5 // pred_fallthru
      _
  $region6: #{_lambda_.44} parent=0 // loop_footer
    %s11 = sadd.s32 1, %s7
  $region7: #{_lambda_.44} parent=0 // loop_footer_branch
    %6 = sbr.rel target = $region3
  $region8: #{_lambda_.44} parent=0 // loop_exit
    _

// kernel: _lambda_.43
$region0: #{_lambda_.43}
  #allocation0 [shape = 'u32[]', space=smem, size = 0x4, offset = 0x4, fixed_abs, tag = 'smem constant byte address 0x4 - core index']
  #allocation1 [shape = 'u32[72,128]{1,0:T(1,128)}', space=vmem, size = 0x9000, scoped, tag = 'internal scratch']
  #allocation2 [shape = 'f32[128,12]{1,0:T(8,128)}', space=vmem, size = 0x10000, scoped, tag = 'scratch operand']
  %s0 = inlined_call_operand.vmem [shape: bf16[128,24], index: 0, kind: input, shape index: {}]
  %s1 = inlined_call_operand.vmem [shape: bf16[24,12], index: 1, kind: input, shape index: {}]
  %s2 = inlined_call_operand.vmem [shape: f32[1,12], index: 2, kind: input, shape index: {}]
  %s3 = inlined_call_operand.vmem [shape: bf16[128,12], index: 3, kind: output, shape index: {}]
  %s4 = sld [smem:[#allocation0]]
  $region30: #{_lambda_.43} parent=0
    _
  %s6 = ssub.s32 1, %s4
  %s7 = scalar_select 0, %s6, %s4
  // Predicated region
  $region2: #{_lambda_.43} parent=0 // pred_check
    _
  $region3: #{_lambda_.43} parent=0 // pred_check_branch
    %9 = sbr.rel (0) target = $region5
  $region4: #{_lambda_.43} parent=0 // pred_region
    _
  $region5: #{_lambda_.43} parent=0 // pred_fallthru
    _
  // Predicated region
  $region6: #{_lambda_.43} parent=0 // pred_check
    _
  $region7: #{_lambda_.43} parent=0 // pred_check_branch
    %11 = sbr.rel (0) target = $region9
  $region8: #{_lambda_.43} parent=0 // pred_region
    _
  $region9: #{_lambda_.43} parent=0 // pred_fallthru
    _
  // Predicated region
  $region10: #{_lambda_.43} parent=0 // pred_check
    _
  $region11: #{_lambda_.43} parent=0 // pred_check_branch
    %13 = sbr.rel (0) target = $region13
  $region12: #{_lambda_.43} parent=0 // pred_region
    _
  $region13: #{_lambda_.43} parent=0 // pred_fallthru
    _
  %p15 = scmp.eq.s32.totalorder 0, 0
  // Predicated region
  $region14: #{_lambda_.43} parent=0 // pred_check
    %p16 = pneg %p15
  $region15: #{_lambda_.43} parent=0 // pred_check_branch
    %18 = sbr.rel (%p16) target = $region17
  $region16: #{_lambda_.43} parent=0 // pred_region
    %vm19 = vcmask 97280
    %20 = vst.msk [vmem:[#allocation2] sm:$0xff] %vm19, 0.0
    %21 = vst.msk [vmem:[#allocation2 + $0x8] sm:$0xff] %vm19, 0.0
    %22 = vst.msk [vmem:[#allocation2 + $0x10] sm:$0xff] %vm19, 0.0
    %23 = vst.msk [vmem:[#allocation2 + $0x18] sm:$0xff] %vm19, 0.0
    %24 = vst.msk [vmem:[#allocation2 + $0x20] sm:$0xff] %vm19, 0.0
    %25 = vst.msk [vmem:[#allocation2 + $0x28] sm:$0xff] %vm19, 0.0
    %26 = vst.msk [vmem:[#allocation2 + $0x30] sm:$0xff] %vm19, 0.0
    %27 = vst.msk [vmem:[#allocation2 + $0x38] sm:$0xff] %vm19, 0.0
    %28 = vst.msk [vmem:[#allocation2 + $0x40] sm:$0xff] %vm19, 0.0
    %29 = vst.msk [vmem:[#allocation2 + $0x48] sm:$0xff] %vm19, 0.0
    %30 = vst.msk [vmem:[#allocation2 + $0x50] sm:$0xff] %vm19, 0.0
    %31 = vst.msk [vmem:[#allocation2 + $0x58] sm:$0xff] %vm19, 0.0
    %32 = vst.msk [vmem:[#allocation2 + $0x60] sm:$0xff] %vm19, 0.0
    %33 = vst.msk [vmem:[#allocation2 + $0x68] sm:$0xff] %vm19, 0.0
    %34 = vst.msk [vmem:[#allocation2 + $0x70] sm:$0xff] %vm19, 0.0
    %35 = vst.msk [vmem:[#allocation2 + $0x78] sm:$0xff] %vm19, 0.0
  $region17: #{_lambda_.43} parent=0 // pred_fallthru
    _
  %v36 = vld [vmem:[%s0] sm:$0xf]
  %v37 = vld [vmem:[%s0 + $0x4] sm:$0xf]
  %v38 = vld [vmem:[%s0 + $0x8] sm:$0xf]
  %v39 = vld [vmem:[%s0 + $0xc] sm:$0xf]
  %v40 = vld [vmem:[%s0 + $0x10] sm:$0xf]
  %v41 = vld [vmem:[%s0 + $0x14] sm:$0xf]
  %v42 = vld [vmem:[%s0 + $0x18] sm:$0xf]
  %v43 = vld [vmem:[%s0 + $0x1c] sm:$0xf]
  %v44 = vld [vmem:[%s0 + $0x20] sm:$0xf]
  %v45 = vld [vmem:[%s0 + $0x24] sm:$0xf]
  %v46 = vld [vmem:[%s0 + $0x28] sm:$0xf]
  %v47 = vld [vmem:[%s0 + $0x2c] sm:$0xf]
  %v48 = vld [vmem:[%s0 + $0x30] sm:$0xf]
  %v49 = vld [vmem:[%s0 + $0x34] sm:$0xf]
  %v50 = vld [vmem:[%s0 + $0x38] sm:$0xf]
  %v51 = vld [vmem:[%s0 + $0x3c] sm:$0xf]
  %v52 = vunpack.c.l.bf16 %v36
  %v53 = vunpack.c.l.bf16 %v37
  %v54 = vunpack.c.l.bf16 %v38
  %v55 = vunpack.c.l.bf16 %v39
  %v56 = vunpack.c.l.bf16 %v40
  %v57 = vunpack.c.l.bf16 %v41
  %v58 = vunpack.c.l.bf16 %v42
  %v59 = vunpack.c.l.bf16 %v43
  %v60 = vunpack.c.l.bf16 %v44
  %v61 = vunpack.c.l.bf16 %v45
  %v62 = vunpack.c.l.bf16 %v46
  %v63 = vunpack.c.l.bf16 %v47
  %v64 = vunpack.c.l.bf16 %v48
  %v65 = vunpack.c.l.bf16 %v49
  %v66 = vunpack.c.l.bf16 %v50
  %v67 = vunpack.c.l.bf16 %v51
  %v68 = vmax.f32 %v52, 0.0
  %v69 = vmax.f32 %v53, 0.0
  %v70 = vmax.f32 %v54, 0.0
  %v71 = vmax.f32 %v55, 0.0
  %v72 = vmax.f32 %v56, 0.0
  %v73 = vmax.f32 %v57, 0.0
  %v74 = vmax.f32 %v58, 0.0
  %v75 = vmax.f32 %v59, 0.0
  %v76 = vmax.f32 %v60, 0.0
  %v77 = vmax.f32 %v61, 0.0
  %v78 = vmax.f32 %v62, 0.0
  %v79 = vmax.f32 %v63, 0.0
  %v80 = vmax.f32 %v64, 0.0
  %v81 = vmax.f32 %v65, 0.0
  %v82 = vmax.f32 %v66, 0.0
  %v83 = vmax.f32 %v67, 0.0
  %v84 = vpack.c.bf16 %v69, %v68
  %v85 = vpack.c.bf16 %v71, %v70
  %v86 = vpack.c.bf16 %v73, %v72
  %v87 = vpack.c.bf16 %v75, %v74
  %v88 = vpack.c.bf16 %v77, %v76
  %v89 = vpack.c.bf16 %v79, %v78
  %v90 = vpack.c.bf16 %v81, %v80
  %v91 = vpack.c.bf16 %v83, %v82
  %v92 = vld [vmem:[#allocation2] sm:$0xff]
  %v93 = vld [vmem:[#allocation2 + $0x8] sm:$0xff]
  %v94 = vld [vmem:[#allocation2 + $0x10] sm:$0xff]
  %v95 = vld [vmem:[#allocation2 + $0x18] sm:$0xff]
  %v96 = vld [vmem:[#allocation2 + $0x20] sm:$0xff]
  %v97 = vld [vmem:[#allocation2 + $0x28] sm:$0xff]
  %v98 = vld [vmem:[#allocation2 + $0x30] sm:$0xff]
  %v99 = vld [vmem:[#allocation2 + $0x38] sm:$0xff]
  %v100 = vld [vmem:[#allocation2 + $0x40] sm:$0xff]
  %v101 = vld [vmem:[#allocation2 + $0x48] sm:$0xff]
  %v102 = vld [vmem:[#allocation2 + $0x50] sm:$0xff]
  %v103 = vld [vmem:[#allocation2 + $0x58] sm:$0xff]
  %v104 = vld [vmem:[#allocation2 + $0x60] sm:$0xff]
  %v105 = vld [vmem:[#allocation2 + $0x68] sm:$0xff]
  %v106 = vld [vmem:[#allocation2 + $0x70] sm:$0xff]
  %v107 = vld [vmem:[#allocation2 + $0x78] sm:$0xff]
  %v108 = vld [vmem:[%s1] sm:$0xf]
  %v109 = vld [vmem:[%s1 + $0x4] sm:$0xf]
  %v110 = vld [vmem:[%s1 + $0x8] sm:$0xf]
  %v114 = vunpack.c.l.b16 %v108
  %v115 = vunpack.c.l.b16 %v109
  %v116 = vunpack.c.l.b16 %v110
  %v117 = vpack.c.b16 %v115, %v114
  %v118 = vpack.c.b16 %v116, %v116
  %vm120 = vcmask 195584
  %v122 = vsel %vm120, %v84, 0
  %v125 = vsel %vm120, %v85, 0
  %v128 = vsel %vm120, %v86, 0
  %v131 = vsel %vm120, %v87, 0
  %v134 = vsel %vm120, %v88, 0
  %v137 = vsel %vm120, %v89, 0
  %v140 = vsel %vm120, %v90, 0
  %v143 = vsel %vm120, %v91, 0
  %vm145 = vcmask 1043456
  %v147 = vsel %vm145, %v118, 0
  %149 = vmatpush.bf16.msra.mxu0 0
  %150 = vmatpush.bf16.msra.mxu0 0
  %151 = vmatpush.bf16.msra.mxu0 0
  %152 = vmatpush.bf16.msra.mxu0 0
  %153 = vmatpush.bf16.msra.mxu0 0
  %154 = vmatpush.bf16.msra.mxu0 0
  %155 = vmatpush.bf16.msra.mxu0 %v147
  %156 = vmatpush.bf16.msra.mxu0 %v117
  %157 = vmatmul.bf16.gmra.mxu0 %v122
  %v158 = vpop.f32.mrf.mxu0
  %v159 = vadd.f32 0.0, %v158
  %v160 = vpop.f32.mrf.mxu0
  %v161 = vadd.f32 0.0, %v160
  %162 = vmatmul.bf16.gmra.mxu0 %v125
  %v163 = vpop.f32.mrf.mxu0
  %v164 = vadd.f32 0.0, %v163
  %v165 = vpop.f32.mrf.mxu0
  %v166 = vadd.f32 0.0, %v165
  %167 = vmatmul.bf16.gmra.mxu0 %v128
  %v168 = vpop.f32.mrf.mxu0
  %v169 = vadd.f32 0.0, %v168
  %v170 = vpop.f32.mrf.mxu0
  %v171 = vadd.f32 0.0, %v170
  %172 = vmatmul.bf16.gmra.mxu0 %v131
  %v173 = vpop.f32.mrf.mxu0
  %v174 = vadd.f32 0.0, %v173
  %v175 = vpop.f32.mrf.mxu0
  %v176 = vadd.f32 0.0, %v175
  %177 = vmatmul.bf16.gmra.mxu0 %v134
  %v178 = vpop.f32.mrf.mxu0
  %v179 = vadd.f32 0.0, %v178
  %v180 = vpop.f32.mrf.mxu0
  %v181 = vadd.f32 0.0, %v180
  %182 = vmatmul.bf16.gmra.mxu0 %v137
  %v183 = vpop.f32.mrf.mxu0
  %v184 = vadd.f32 0.0, %v183
  %v185 = vpop.f32.mrf.mxu0
  %v186 = vadd.f32 0.0, %v185
  %187 = vmatmul.bf16.gmra.mxu0 %v140
  %v188 = vpop.f32.mrf.mxu0
  %v189 = vadd.f32 0.0, %v188
  %v190 = vpop.f32.mrf.mxu0
  %v191 = vadd.f32 0.0, %v190
  %192 = vmatmul.bf16.gmra.mxu0 %v143
  %v193 = vpop.f32.mrf.mxu0
  %v194 = vadd.f32 0.0, %v193
  %v195 = vpop.f32.mrf.mxu0
  %v196 = vadd.f32 0.0, %v195
  %197 = vdwg.mxu0
  %v198 = vadd.f32 %v92, %v159
  %v199 = vadd.f32 %v93, %v161
  %v200 = vadd.f32 %v94, %v164
  %v201 = vadd.f32 %v95, %v166
  %v202 = vadd.f32 %v96, %v169
  %v203 = vadd.f32 %v97, %v171
  %v204 = vadd.f32 %v98, %v174
  %v205 = vadd.f32 %v99, %v176
  %v206 = vadd.f32 %v100, %v179
  %v207 = vadd.f32 %v101, %v181
  %v208 = vadd.f32 %v102, %v184
  %v209 = vadd.f32 %v103, %v186
  %v210 = vadd.f32 %v104, %v189
  %v211 = vadd.f32 %v105, %v191
  %v212 = vadd.f32 %v106, %v194
  %v213 = vadd.f32 %v107, %v196
  %vm214 = vcmask 97280
  %215 = vst.msk [vmem:[#allocation2] sm:$0xff] %vm214, %v198
  %216 = vst.msk [vmem:[#allocation2 + $0x8] sm:$0xff] %vm214, %v199
  %217 = vst.msk [vmem:[#allocation2 + $0x10] sm:$0xff] %vm214, %v200
  %218 = vst.msk [vmem:[#allocation2 + $0x18] sm:$0xff] %vm214, %v201
  %219 = vst.msk [vmem:[#allocation2 + $0x20] sm:$0xff] %vm214, %v202
  %220 = vst.msk [vmem:[#allocation2 + $0x28] sm:$0xff] %vm214, %v203
  %221 = vst.msk [vmem:[#allocation2 + $0x30] sm:$0xff] %vm214, %v204
  %222 = vst.msk [vmem:[#allocation2 + $0x38] sm:$0xff] %vm214, %v205
  %223 = vst.msk [vmem:[#allocation2 + $0x40] sm:$0xff] %vm214, %v206
  %224 = vst.msk [vmem:[#allocation2 + $0x48] sm:$0xff] %vm214, %v207
  %225 = vst.msk [vmem:[#allocation2 + $0x50] sm:$0xff] %vm214, %v208
  %226 = vst.msk [vmem:[#allocation2 + $0x58] sm:$0xff] %vm214, %v209
  %227 = vst.msk [vmem:[#allocation2 + $0x60] sm:$0xff] %vm214, %v210
  %228 = vst.msk [vmem:[#allocation2 + $0x68] sm:$0xff] %vm214, %v211
  %229 = vst.msk [vmem:[#allocation2 + $0x70] sm:$0xff] %vm214, %v212
  %230 = vst.msk [vmem:[#allocation2 + $0x78] sm:$0xff] %vm214, %v213
  // Predicated region
  $region18: #{_lambda_.43} parent=0 // pred_check
    %p231 = pneg %p15
  $region19: #{_lambda_.43} parent=0 // pred_check_branch
    %233 = sbr.rel (%p231) target = $region21
  $region20: #{_lambda_.43} parent=0 // pred_region
    %v234 = vld [vmem:[#allocation2] sm:$0xff]
    %v235 = vld [vmem:[#allocation2 + $0x8] sm:$0xff]
    %v236 = vld [vmem:[#allocation2 + $0x10] sm:$0xff]
    %v237 = vld [vmem:[#allocation2 + $0x18] sm:$0xff]
    %v238 = vld [vmem:[#allocation2 + $0x20] sm:$0xff]
    %v239 = vld [vmem:[#allocation2 + $0x28] sm:$0xff]
    %v240 = vld [vmem:[#allocation2 + $0x30] sm:$0xff]
    %v241 = vld [vmem:[#allocation2 + $0x38] sm:$0xff]
    %v242 = vld [vmem:[#allocation2 + $0x40] sm:$0xff]
    %v243 = vld [vmem:[#allocation2 + $0x48] sm:$0xff]
    %v244 = vld [vmem:[#allocation2 + $0x50] sm:$0xff]
    %v245 = vld [vmem:[#allocation2 + $0x58] sm:$0xff]
    %v246 = vld [vmem:[#allocation2 + $0x60] sm:$0xff]
    %v247 = vld [vmem:[#allocation2 + $0x68] sm:$0xff]
    %v248 = vld [vmem:[#allocation2 + $0x70] sm:$0xff]
    %v249 = vld [vmem:[#allocation2 + $0x78] sm:$0xff]
    %v250 = vld [vmem:[%s2] sm:$0x1]
    %v252 = vperm.slane %v250, 0
    %v254 = vadd.f32 %v234, %v252
    %v255 = vadd.f32 %v235, %v252
    %v256 = vadd.f32 %v236, %v252
    %v257 = vadd.f32 %v237, %v252
    %v258 = vadd.f32 %v238, %v252
    %v259 = vadd.f32 %v239, %v252
    %v260 = vadd.f32 %v240, %v252
    %v261 = vadd.f32 %v241, %v252
    %v262 = vadd.f32 %v242, %v252
    %v263 = vadd.f32 %v243, %v252
    %v264 = vadd.f32 %v244, %v252
    %v265 = vadd.f32 %v245, %v252
    %v266 = vadd.f32 %v246, %v252
    %v267 = vadd.f32 %v247, %v252
    %v268 = vadd.f32 %v248, %v252
    %v269 = vadd.f32 %v249, %v252
    %v270 = vpack.c.bf16 %v254, %v254
    %v271 = vpack.c.bf16 %v255, %v255
    %v272 = vpack.c.bf16 %v256, %v256
    %v273 = vpack.c.bf16 %v257, %v257
    %v274 = vpack.c.bf16 %v258, %v258
    %v275 = vpack.c.bf16 %v259, %v259
    %v276 = vpack.c.bf16 %v260, %v260
    %v277 = vpack.c.bf16 %v261, %v261
    %v278 = vpack.c.bf16 %v262, %v262
    %v279 = vpack.c.bf16 %v263, %v263
    %v280 = vpack.c.bf16 %v264, %v264
    %v281 = vpack.c.bf16 %v265, %v265
    %v282 = vpack.c.bf16 %v266, %v266
    %v283 = vpack.c.bf16 %v267, %v267
    %v284 = vpack.c.bf16 %v268, %v268
    %v285 = vpack.c.bf16 %v269, %v269
    %vm286 = vcmask 93184
    %287 = vst.msk [vmem:[%s3] sm:$0xf] %vm286, %v270
    %288 = vst.msk [vmem:[%s3 + $0x4] sm:$0xf] %vm286, %v271
    %289 = vst.msk [vmem:[%s3 + $0x8] sm:$0xf] %vm286, %v272
    %290 = vst.msk [vmem:[%s3 + $0xc] sm:$0xf] %vm286, %v273
    %291 = vst.msk [vmem:[%s3 + $0x10] sm:$0xf] %vm286, %v274
    %292 = vst.msk [vmem:[%s3 + $0x14] sm:$0xf] %vm286, %v275
    %293 = vst.msk [vmem:[%s3 + $0x18] sm:$0xf] %vm286, %v276
    %294 = vst.msk [vmem:[%s3 + $0x1c] sm:$0xf] %vm286, %v277
    %295 = vst.msk [vmem:[%s3 + $0x20] sm:$0xf] %vm286, %v278
    %296 = vst.msk [vmem:[%s3 + $0x24] sm:$0xf] %vm286, %v279
    %297 = vst.msk [vmem:[%s3 + $0x28] sm:$0xf] %vm286, %v280
    %298 = vst.msk [vmem:[%s3 + $0x2c] sm:$0xf] %vm286, %v281
    %299 = vst.msk [vmem:[%s3 + $0x30] sm:$0xf] %vm286, %v282
    %300 = vst.msk [vmem:[%s3 + $0x34] sm:$0xf] %vm286, %v283
    %301 = vst.msk [vmem:[%s3 + $0x38] sm:$0xf] %vm286, %v284
    %302 = vst.msk [vmem:[%s3 + $0x3c] sm:$0xf] %vm286, %v285
  $region21: #{_lambda_.43} parent=0 // pred_fallthru
    _
  // Predicated region
  $region22: #{_lambda_.43} parent=0 // pred_check
    _
  $region23: #{_lambda_.43} parent=0 // pred_check_branch
    %304 = sbr.rel (0) target = $region25
  $region24: #{_lambda_.43} parent=0 // pred_region
    _
  $region25: #{_lambda_.43} parent=0 // pred_fallthru
    _
  // Predicated region
  $region26: #{_lambda_.43} parent=0 // pred_check
    _
  $region27: #{_lambda_.43} parent=0 // pred_check_branch
    %306 = sbr.rel (0) target = $region29
  $region28: #{_lambda_.43} parent=0 // pred_region
    _
  $region29: #{_lambda_.43} parent=0 // pred_fallthru
    _

// kernel: _lambda_.45
$region0: #{_lambda_.45}
  #allocation0 [shape = 'u32[]', space=smem, size = 0x4, offset = 0x4, fixed_abs, tag = 'smem constant byte address 0x4 - core index']
  #allocation1 [shape = 'u32[72,128]{1,0:T(1,128)}', space=vmem, size = 0x9000, scoped, tag = 'internal scratch']
  #allocation2 [shape = 'f32[32,6]{1,0:T(8,128)}', space=vmem, size = 0x4000, scoped, tag = 'scratch operand']
  %s0 = inlined_call_operand.vmem [shape: bf16[32,12], index: 0, kind: input, shape index: {}]
  %s1 = inlined_call_operand.vmem [shape: bf16[12,6], index: 1, kind: input, shape index: {}]
  %s2 = inlined_call_operand.vmem [shape: f32[1,6], index: 2, kind: input, shape index: {}]
  %s3 = inlined_call_operand.vmem [shape: bf16[32,6], index: 3, kind: output, shape index: {}]
  %s4 = sld [smem:[#allocation0]]
  $region30: #{_lambda_.45} parent=0
    _
  %s6 = ssub.s32 1, %s4
  %s7 = scalar_select 0, %s6, %s4
  // Predicated region
  $region2: #{_lambda_.45} parent=0 // pred_check
    _
  $region3: #{_lambda_.45} parent=0 // pred_check_branch
    %9 = sbr.rel (0) target = $region5
  $region4: #{_lambda_.45} parent=0 // pred_region
    _
  $region5: #{_lambda_.45} parent=0 // pred_fallthru
    _
  // Predicated region
  $region6: #{_lambda_.45} parent=0 // pred_check
    _
  $region7: #{_lambda_.45} parent=0 // pred_check_branch
    %11 = sbr.rel (0) target = $region9
  $region8: #{_lambda_.45} parent=0 // pred_region
    _
  $region9: #{_lambda_.45} parent=0 // pred_fallthru
    _
  // Predicated region
  $region10: #{_lambda_.45} parent=0 // pred_check
    _
  $region11: #{_lambda_.45} parent=0 // pred_check_branch
    %13 = sbr.rel (0) target = $region13
  $region12: #{_lambda_.45} parent=0 // pred_region
    _
  $region13: #{_lambda_.45} parent=0 // pred_fallthru
    _
  %p15 = scmp.eq.s32.totalorder 0, 0
  // Predicated region
  $region14: #{_lambda_.45} parent=0 // pred_check
    %p16 = pneg %p15
  $region15: #{_lambda_.45} parent=0 // pred_check_branch
    %18 = sbr.rel (%p16) target = $region17
  $region16: #{_lambda_.45} parent=0 // pred_region
    %vm19 = vcmask 48128
    %20 = vst.msk [vmem:[#allocation2] sm:$0xff] %vm19, 0.0
    %21 = vst.msk [vmem:[#allocation2 + $0x8] sm:$0xff] %vm19, 0.0
    %22 = vst.msk [vmem:[#allocation2 + $0x10] sm:$0xff] %vm19, 0.0
    %23 = vst.msk [vmem:[#allocation2 + $0x18] sm:$0xff] %vm19, 0.0
  $region17: #{_lambda_.45} parent=0 // pred_fallthru
    _
  %v24 = vld [vmem:[%s0] sm:$0xf]
  %v25 = vld [vmem:[%s0 + $0x4] sm:$0xf]
  %v26 = vld [vmem:[%s0 + $0x8] sm:$0xf]
  %v27 = vld [vmem:[%s0 + $0xc] sm:$0xf]
  %v28 = vld [vmem:[#allocation2] sm:$0xff]
  %v29 = vld [vmem:[#allocation2 + $0x8] sm:$0xff]
  %v30 = vld [vmem:[#allocation2 + $0x10] sm:$0xff]
  %v31 = vld [vmem:[#allocation2 + $0x18] sm:$0xff]
  %v32 = vld [vmem:[%s1] sm:$0xf]
  %v33 = vld [vmem:[%s1 + $0x4] sm:$0x3]
  %v38 = vunpack.c.l.b16 %v24
  %v39 = vunpack.c.l.b16 %v25
  %v40 = vunpack.c.l.b16 %v26
  %v41 = vunpack.c.l.b16 %v27
  %v42 = vpack.c.b16 %v39, %v38
  %v43 = vpack.c.b16 %v41, %v40
  %v46 = vunpack.c.l.b16 %v32
  %v47 = vunpack.c.l.b16 %v33
  %v48 = vpack.c.b16 %v47, %v46
  %vm49 = vcmask 97280
  %v51 = vsel %vm49, %v42, 0
  %v54 = vsel %vm49, %v43, 0
  %vm56 = vcmask 1045504
  %v58 = vsel %vm56, %v48, 0
  %60 = vmatpush.bf16.msra.mxu0 0
  %61 = vmatpush.bf16.msra.mxu0 0
  %62 = vmatpush.bf16.msra.mxu0 0
  %63 = vmatpush.bf16.msra.mxu0 0
  %64 = vmatpush.bf16.msra.mxu0 0
  %65 = vmatpush.bf16.msra.mxu0 0
  %66 = vmatpush.bf16.msra.mxu0 0
  %67 = vmatpush.bf16.msra.mxu0 %v58
  %68 = vmatmul.bf16.gmra.mxu0 %v51
  %v69 = vpop.f32.mrf.mxu0
  %v70 = vadd.f32 0.0, %v69
  %v71 = vpop.f32.mrf.mxu0
  %v72 = vadd.f32 0.0, %v71
  %73 = vmatmul.bf16.gmra.mxu0 %v54
  %v74 = vpop.f32.mrf.mxu0
  %v75 = vadd.f32 0.0, %v74
  %v76 = vpop.f32.mrf.mxu0
  %v77 = vadd.f32 0.0, %v76
  %78 = vdwg.mxu0
  %v79 = vadd.f32 %v28, %v70
  %v80 = vadd.f32 %v29, %v72
  %v81 = vadd.f32 %v30, %v75
  %v82 = vadd.f32 %v31, %v77
  %vm83 = vcmask 48128
  %84 = vst.msk [vmem:[#allocation2] sm:$0xff] %vm83, %v79
  %85 = vst.msk [vmem:[#allocation2 + $0x8] sm:$0xff] %vm83, %v80
  %86 = vst.msk [vmem:[#allocation2 + $0x10] sm:$0xff] %vm83, %v81
  %87 = vst.msk [vmem:[#allocation2 + $0x18] sm:$0xff] %vm83, %v82
  // Predicated region
  $region18: #{_lambda_.45} parent=0 // pred_check
    %p88 = pneg %p15
  $region19: #{_lambda_.45} parent=0 // pred_check_branch
    %90 = sbr.rel (%p88) target = $region21
  $region20: #{_lambda_.45} parent=0 // pred_region
    %v91 = vld [vmem:[#allocation2] sm:$0xff]
    %v92 = vld [vmem:[#allocation2 + $0x8] sm:$0xff]
    %v93 = vld [vmem:[#allocation2 + $0x10] sm:$0xff]
    %v94 = vld [vmem:[#allocation2 + $0x18] sm:$0xff]
    %v95 = vld [vmem:[%s2] sm:$0x1]
    %v97 = vperm.slane %v95, 0
    %v99 = vadd.f32 %v91, %v97
    %v100 = vadd.f32 %v92, %v97
    %v101 = vadd.f32 %v93, %v97
    %v102 = vadd.f32 %v94, %v97
    %v103 = vmax.f32 %v99, 0.0
    %v104 = vmax.f32 %v100, 0.0
    %v105 = vmax.f32 %v101, 0.0
    %v106 = vmax.f32 %v102, 0.0
    %v107 = vpack.c.bf16 %v103, %v103
    %v108 = vpack.c.bf16 %v104, %v104
    %v109 = vpack.c.bf16 %v105, %v105
    %v110 = vpack.c.bf16 %v106, %v106
    %vm111 = vcmask 44032
    %112 = vst.msk [vmem:[%s3] sm:$0xf] %vm111, %v107
    %113 = vst.msk [vmem:[%s3 + $0x4] sm:$0xf] %vm111, %v108
    %114 = vst.msk [vmem:[%s3 + $0x8] sm:$0xf] %vm111, %v109
    %115 = vst.msk [vmem:[%s3 + $0xc] sm:$0xf] %vm111, %v110
  $region21: #{_lambda_.45} parent=0 // pred_fallthru
    _
  // Predicated region
  $region22: #{_lambda_.45} parent=0 // pred_check
    _
  $region23: #{_lambda_.45} parent=0 // pred_check_branch
    %117 = sbr.rel (0) target = $region25
  $region24: #{_lambda_.45} parent=0 // pred_region
    _
  $region25: #{_lambda_.45} parent=0 // pred_fallthru
    _
  // Predicated region
  $region26: #{_lambda_.45} parent=0 // pred_check
    _
  $region27: #{_lambda_.45} parent=0 // pred_check_branch
    %119 = sbr.rel (0) target = $region29
  $region28: #{_lambda_.45} parent=0 // pred_region
    _
  $region29: #{_lambda_.45} parent=0 // pred_fallthru
    _

// kernel: _lambda_.47
$region0: #{_lambda_.47}
  #allocation0 [shape = 'u32[]', space=smem, size = 0x4, offset = 0x4, fixed_abs, tag = 'smem constant byte address 0x4 - core index']
  #allocation1 [shape = 'u32[72,128]{1,0:T(1,128)}', space=vmem, size = 0x9000, scoped, tag = 'internal scratch']
  #allocation2 [shape = 'f32[32,2]{1,0:T(8,128)}', space=vmem, size = 0x4000, scoped, tag = 'scratch operand']
  %s0 = inlined_call_operand.vmem [shape: bf16[32,18], index: 0, kind: input, shape index: {}]
  %s1 = inlined_call_operand.vmem [shape: bf16[18,2], index: 1, kind: input, shape index: {}]
  %s2 = inlined_call_operand.vmem [shape: f32[1,2], index: 2, kind: input, shape index: {}]
  %s3 = inlined_call_operand.vmem [shape: bf16[32,2], index: 3, kind: output, shape index: {}]
  %s4 = sld [smem:[#allocation0]]
  $region30: #{_lambda_.47} parent=0
    _
  %s6 = ssub.s32 1, %s4
  %s7 = scalar_select 0, %s6, %s4
  // Predicated region
  $region2: #{_lambda_.47} parent=0 // pred_check
    _
  $region3: #{_lambda_.47} parent=0 // pred_check_branch
    %9 = sbr.rel (0) target = $region5
  $region4: #{_lambda_.47} parent=0 // pred_region
    _
  $region5: #{_lambda_.47} parent=0 // pred_fallthru
    _
  // Predicated region
  $region6: #{_lambda_.47} parent=0 // pred_check
    _
  $region7: #{_lambda_.47} parent=0 // pred_check_branch
    %11 = sbr.rel (0) target = $region9
  $region8: #{_lambda_.47} parent=0 // pred_region
    _
  $region9: #{_lambda_.47} parent=0 // pred_fallthru
    _
  // Predicated region
  $region10: #{_lambda_.47} parent=0 // pred_check
    _
  $region11: #{_lambda_.47} parent=0 // pred_check_branch
    %13 = sbr.rel (0) target = $region13
  $region12: #{_lambda_.47} parent=0 // pred_region
    _
  $region13: #{_lambda_.47} parent=0 // pred_fallthru
    _
  %p15 = scmp.eq.s32.totalorder 0, 0
  // Predicated region
  $region14: #{_lambda_.47} parent=0 // pred_check
    %p16 = pneg %p15
  $region15: #{_lambda_.47} parent=0 // pred_check_branch
    %18 = sbr.rel (%p16) target = $region17
  $region16: #{_lambda_.47} parent=0 // pred_region
    %vm19 = vcmask 15360
    %20 = vst.msk [vmem:[#allocation2] sm:$0xff] %vm19, 0.0
    %21 = vst.msk [vmem:[#allocation2 + $0x8] sm:$0xff] %vm19, 0.0
    %22 = vst.msk [vmem:[#allocation2 + $0x10] sm:$0xff] %vm19, 0.0
    %23 = vst.msk [vmem:[#allocation2 + $0x18] sm:$0xff] %vm19, 0.0
  $region17: #{_lambda_.47} parent=0 // pred_fallthru
    _
  %v24 = vld [vmem:[%s0] sm:$0xf]
  %v25 = vld [vmem:[%s0 + $0x4] sm:$0xf]
  %v26 = vld [vmem:[%s0 + $0x8] sm:$0xf]
  %v27 = vld [vmem:[%s0 + $0xc] sm:$0xf]
  %v28 = vld [vmem:[#allocation2] sm:$0xff]
  %v29 = vld [vmem:[#allocation2 + $0x8] sm:$0xff]
  %v30 = vld [vmem:[#allocation2 + $0x10] sm:$0xff]
  %v31 = vld [vmem:[#allocation2 + $0x18] sm:$0xff]
  %v32 = vld [vmem:[%s1] sm:$0xf]
  %v33 = vld [vmem:[%s1 + $0x4] sm:$0xf]
  %v34 = vld [vmem:[%s1 + $0x8] sm:$0x1]
  %v39 = vunpack.c.l.b16 %v24
  %v40 = vunpack.c.l.b16 %v25
  %v41 = vunpack.c.l.b16 %v26
  %v42 = vunpack.c.l.b16 %v27
  %v43 = vpack.c.b16 %v40, %v39
  %v44 = vpack.c.b16 %v42, %v41
  %v48 = vunpack.c.l.b16 %v32
  %v49 = vunpack.c.l.b16 %v33
  %v50 = vunpack.c.l.b16 %v34
  %v51 = vpack.c.b16 %v49, %v48
  %v52 = vpack.c.b16 %v50, %v50
  %vm54 = vcmask 146432
  %v56 = vsel %vm54, %v43, 0
  %v59 = vsel %vm54, %v44, 0
  %vm61 = vcmask 1040384
  %v63 = vsel %vm61, %v52, 0
  %65 = vmatpush.bf16.msra.mxu0 0
  %66 = vmatpush.bf16.msra.mxu0 0
  %67 = vmatpush.bf16.msra.mxu0 0
  %68 = vmatpush.bf16.msra.mxu0 0
  %69 = vmatpush.bf16.msra.mxu0 0
  %70 = vmatpush.bf16.msra.mxu0 0
  %71 = vmatpush.bf16.msra.mxu0 %v63
  %72 = vmatpush.bf16.msra.mxu0 %v51
  %73 = vmatmul.bf16.gmra.mxu0 %v56
  %v74 = vpop.f32.mrf.mxu0
  %v75 = vadd.f32 0.0, %v74
  %v76 = vpop.f32.mrf.mxu0
  %v77 = vadd.f32 0.0, %v76
  %78 = vmatmul.bf16.gmra.mxu0 %v59
  %v79 = vpop.f32.mrf.mxu0
  %v80 = vadd.f32 0.0, %v79
  %v81 = vpop.f32.mrf.mxu0
  %v82 = vadd.f32 0.0, %v81
  %83 = vdwg.mxu0
  %v84 = vadd.f32 %v28, %v75
  %v85 = vadd.f32 %v29, %v77
  %v86 = vadd.f32 %v30, %v80
  %v87 = vadd.f32 %v31, %v82
  %vm88 = vcmask 15360
  %89 = vst.msk [vmem:[#allocation2] sm:$0xff] %vm88, %v84
  %90 = vst.msk [vmem:[#allocation2 + $0x8] sm:$0xff] %vm88, %v85
  %91 = vst.msk [vmem:[#allocation2 + $0x10] sm:$0xff] %vm88, %v86
  %92 = vst.msk [vmem:[#allocation2 + $0x18] sm:$0xff] %vm88, %v87
  // Predicated region
  $region18: #{_lambda_.47} parent=0 // pred_check
    %p93 = pneg %p15
  $region19: #{_lambda_.47} parent=0 // pred_check_branch
    %95 = sbr.rel (%p93) target = $region21
  $region20: #{_lambda_.47} parent=0 // pred_region
    %v96 = vld [vmem:[#allocation2] sm:$0xff]
    %v97 = vld [vmem:[#allocation2 + $0x8] sm:$0xff]
    %v98 = vld [vmem:[#allocation2 + $0x10] sm:$0xff]
    %v99 = vld [vmem:[#allocation2 + $0x18] sm:$0xff]
    %v100 = vld [vmem:[%s2] sm:$0x1]
    %v102 = vperm.slane %v100, 0
    %v104 = vadd.f32 %v96, %v102
    %v105 = vadd.f32 %v97, %v102
    %v106 = vadd.f32 %v98, %v102
    %v107 = vadd.f32 %v99, %v102
    %v108 = vmax.f32 %v104, 0.0
    %v109 = vmax.f32 %v105, 0.0
    %v110 = vmax.f32 %v106, 0.0
    %v111 = vmax.f32 %v107, 0.0
    %v112 = vpack.c.bf16 %v108, %v108
    %v113 = vpack.c.bf16 %v109, %v109
    %v114 = vpack.c.bf16 %v110, %v110
    %v115 = vpack.c.bf16 %v111, %v111
    %vm116 = vcmask 11264
    %117 = vst.msk [vmem:[%s3] sm:$0xf] %vm116, %v112
    %118 = vst.msk [vmem:[%s3 + $0x4] sm:$0xf] %vm116, %v113
    %119 = vst.msk [vmem:[%s3 + $0x8] sm:$0xf] %vm116, %v114
    %120 = vst.msk [vmem:[%s3 + $0xc] sm:$0xf] %vm116, %v115
  $region21: #{_lambda_.47} parent=0 // pred_fallthru
    _
  // Predicated region
  $region22: #{_lambda_.47} parent=0 // pred_check
    _
  $region23: #{_lambda_.47} parent=0 // pred_check_branch
    %122 = sbr.rel (0) target = $region25
  $region24: #{_lambda_.47} parent=0 // pred_region
    _
  $region25: #{_lambda_.47} parent=0 // pred_fallthru
    _
  // Predicated region
  $region26: #{_lambda_.47} parent=0 // pred_check
    _
  $region27: #{_lambda_.47} parent=0 // pred_check_branch
    %124 = sbr.rel (0) target = $region29
  $region28: #{_lambda_.47} parent=0 // pred_region
    _
  $region29: #{_lambda_.47} parent=0 // pred_fallthru
    _

// kernel: _lambda_.49
$region0: #{_lambda_.49}
  #allocation0 [shape = 'u32[]', space=smem, size = 0x4, offset = 0x4, fixed_abs, tag = 'smem constant byte address 0x4 - core index']
  #allocation1 [shape = 'u32[72,128]{1,0:T(1,128)}', space=vmem, size = 0x9000, scoped, tag = 'internal scratch']
  %s0 = inlined_call_operand.vmem [shape: bf16[2,6,6,12], index: 0, kind: input, shape index: {}]
  %s1 = inlined_call_operand.vmem [shape: bf16[2,4,4,12], index: 1, kind: output, shape index: {}]
  %s2 = sld [smem:[#allocation0]]
  $region37: #{_lambda_.49} parent=0
    _
  %s4 = ssub.s32 1, %s2
  %s5 = scalar_select 0, %s4, %s2
  loop: start=0, step=1, limit=4
  $region2: #{_lambda_.49} parent=0 // loop_pre_header
    _
  $region3: #{_lambda_.49} parent=0 // loop_header
    %s7 = sphi 0, %s11
    %p8 = scmp.ge.s32.totalorder %s7, 4
    %s17 = sphi 0, %s19
    %s20 = sphi 0, %s17
    %s21 = sphi 0, %s20
    %s37 = sphi 0, %s21
    %s43 = sphi 0, %s45
    %s46 = sphi 0, %s43
    %s47 = sphi 0, %s46
    %s63 = sphi 0, %s47
  $region4: #{_lambda_.49} parent=0 // loop_header_branch
    %10 = sbr.rel (%p8) target = $region8
  $region5: #{_lambda_.49} parent=0 // loop_body
    %s12 = ssub.s32 %s7, 1
    %s13 = ssub.s32 %s7, 2
    %s14 = sadd.s32 %s7, 1
    %s15 = ssub.s32 %s7, %s14
    %p16 = scmp.eq.s32.totalorder %s15, 0
    %s18 = sadd.s32 %s17, 1
    %s19 = scalar_select %p16, %s17, %s18
    %p22 = pneg %p16
    %p23 = scmp.eq.s32.totalorder %s7, 1
    %p24 = por %p22, %p23
    %p25 = scmp.ne.s32.totalorder %s17, %s20
    %p26 = scmp.eq.s32.totalorder %s7, 0
    %p27 = por %p25, %p26
    %p28 = scmp.ne.s32.totalorder %s17, %s20
    %p29 = scmp.eq.s32.totalorder %s12, 1
    %p30 = por %p28, %p29
    %p31 = scmp.ne.s32.totalorder %s20, %s21
    %p32 = scmp.eq.s32.totalorder %s12, 0
    %p33 = por %p31, %p32
    %p34 = scmp.ne.s32.totalorder %s20, %s21
    %p35 = scmp.eq.s32.totalorder %s13, 1
    %p36 = por %p34, %p35
    %p38 = scmp.ne.s32.totalorder %s21, %s37
    %p39 = scmp.eq.s32.totalorder %s13, 0
    %p40 = por %p38, %p39
    %s41 = ssub.s32 %s7, %s14
    %p42 = scmp.eq.s32.totalorder %s41, 0
    %s44 = sadd.s32 %s43, 1
    %s45 = scalar_select %p42, %s43, %s44
    %p48 = pneg %p42
    %p49 = scmp.eq.s32.totalorder %s7, 1
    %p50 = por %p48, %p49
    %p51 = scmp.ne.s32.totalorder %s43, %s46
    %p52 = scmp.eq.s32.totalorder %s7, 0
    %p53 = por %p51, %p52
    %p54 = scmp.ne.s32.totalorder %s43, %s46
    %p55 = scmp.eq.s32.totalorder %s12, 1
    %p56 = por %p54, %p55
    %p57 = scmp.ne.s32.totalorder %s46, %s47
    %p58 = scmp.eq.s32.totalorder %s12, 0
    %p59 = por %p57, %p58
    %p60 = scmp.ne.s32.totalorder %s46, %s47
    %p61 = scmp.eq.s32.totalorder %s13, 1
    %p62 = por %p60, %p61
    %p64 = scmp.ne.s32.totalorder %s47, %s63
    %p65 = scmp.eq.s32.totalorder %s13, 0
    %p66 = por %p64, %p65
    %p67 = scmp.le.s32.totalorder 1, %s7
    %p68 = scmp.lt.s32.totalorder %s7, 3
    %p69 = pnand %p67, %p68
    %p70 = pneg %p69
    // Predicated region
    $region9: #{_lambda_.49} parent=5 // pred_check
      _
    $region10: #{_lambda_.49} parent=5 // pred_check_branch
      %72 = sbr.rel (%p69) target = $region12
    $region11: #{_lambda_.49} parent=5 // pred_region
      %s73 = ssub.s32 %s7, 1
    $region12: #{_lambda_.49} parent=5 // pred_fallthru
      _
    %p74 = scmp.lt.s32.totalorder %s7, 2
    // Predicated region
    $region13: #{_lambda_.49} parent=5 // pred_check
      %p75 = pneg %p74
    $region14: #{_lambda_.49} parent=5 // pred_check_branch
      %77 = sbr.rel (%p75) target = $region16
    $region15: #{_lambda_.49} parent=5 // pred_region
      // Predicated region
      $region17: #{_lambda_.49} parent=15 // pred_check
        %p78 = pneg %p27
      $region18: #{_lambda_.49} parent=15 // pred_check_branch
        %80 = sbr.rel (%p78) target = $region20
      $region19: #{_lambda_.49} parent=15 // pred_region
        %p81 = scmp.lt.s32.totalorder %s7, 1
        %s82 = scalar_select %p81, %s7, 1
        %s83 = smul.addr %s82, 6
        %s84 = smul.addr %s83, 4
        %s85 = scalar_lea.vmem %s0, %s84
      $region20: #{_lambda_.49} parent=15 // pred_fallthru
        _
    $region16: #{_lambda_.49} parent=5 // pred_fallthru
      _
    %p86 = scmp.le.s32.totalorder 1, %s7
    %p87 = scmp.lt.s32.totalorder %s7, 3
    %p88 = pnand %p86, %p87
    %p89 = pneg %p88
    // Predicated region
    $region21: #{_lambda_.49} parent=5 // pred_check
      _
    $region22: #{_lambda_.49} parent=5 // pred_check_branch
      %91 = sbr.rel (%p88) target = $region24
    $region23: #{_lambda_.49} parent=5 // pred_region
      %s92 = ssub.s32 %s7, 1
      %p93 = scmp.lt.s32.totalorder %s12, 1
      %s94 = scalar_select %p93, %s12, 1
      %s95 = smul.addr %s94, 6
      %s96 = smul.addr %s95, 4
      %s97 = scalar_lea.vmem %s0, %s96
      %p98 = pneg %p33
      %p99 = pneg %p30
      %p100 = pneg %p59
      %p101 = pneg %p56
      %p102 = scmp.lt.s32.totalorder %s12, 1
      %s103 = scalar_select %p102, %s12, 1
      %s104 = smul.addr %s103, 4
      %s105 = smul.addr %s104, 2
      %s106 = scalar_lea.vmem %s1, %s105
      %p107 = scmp.lt.s32.totalorder %s12, 1
      %s108 = scalar_select %p107, %s12, 1
      %s109 = smul.addr %s108, 6
      %s110 = smul.addr %s109, 4
      %s111 = scalar_lea.vmem %s0, %s110
      %p112 = scmp.lt.s32.totalorder %s12, 1
      %s113 = scalar_select %p112, %s12, 1
      %s114 = smul.addr %s113, 4
      %s115 = smul.addr %s114, 2
      %s116 = scalar_lea.vmem %s1, %s115
      %v117 = vld [vmem:[%s111] sm:$0x3]
      %v118 = vld [vmem:[%s111 + $0x4] sm:$0x3]
      %v119 = vld [vmem:[%s111 + $0x8] sm:$0x3]
      %v120 = vld [vmem:[%s111 + $0xc] sm:$0x3]
      %v121 = vld [vmem:[%s111] sm:$0x7]
      %v122 = vld [vmem:[%s111 + $0x4] sm:$0x7]
      %v123 = vld [vmem:[%s111 + $0x8] sm:$0x7]
      %v124 = vld [vmem:[%s111 + $0xc] sm:$0x7]
      %v125 = vunpack.c.l.bf16 %v117
      %v126 = vunpack.c.l.bf16 %v118
      %v127 = vunpack.c.l.bf16 %v119
      %v128 = vunpack.c.l.bf16 %v120
      %v129 = vunpack.c.l.bf16 %v121
      %v130 = vunpack.c.l.bf16 %v122
      %v131 = vunpack.c.l.bf16 %v123
      %v132 = vunpack.c.l.bf16 %v124
      %v137 = vrot.slane %v129, 1
      %v138 = vrot.slane %v130, 1
      %v139 = vrot.slane %v131, 1
      %v140 = vrot.slane %v132, 1
      %v145 = vmax.f32 %v125, %v137
      %v146 = vmax.f32 %v126, %v138
      %v147 = vmax.f32 %v127, %v139
      %v148 = vmax.f32 %v128, %v140
      %v149 = vpack.c.bf16 %v145, %v145
      %v150 = vpack.c.bf16 %v146, %v146
      %v151 = vpack.c.bf16 %v147, %v147
      %v152 = vpack.c.bf16 %v148, %v148
      %v153 = vld [vmem:[%s111] sm:$0x6]
      %v154 = vld [vmem:[%s111 + $0x4] sm:$0x6]
      %v155 = vld [vmem:[%s111 + $0x8] sm:$0x6]
      %v156 = vld [vmem:[%s111 + $0xc] sm:$0x6]
      %v157 = vunpack.c.l.bf16 %v149
      %v158 = vunpack.c.l.bf16 %v150
      %v159 = vunpack.c.l.bf16 %v151
      %v160 = vunpack.c.l.bf16 %v152
      %v161 = vunpack.c.l.bf16 %v153
      %v162 = vunpack.c.l.bf16 %v154
      %v163 = vunpack.c.l.bf16 %v155
      %v164 = vunpack.c.l.bf16 %v156
      %v169 = vrot.slane %v161, 2
      %v170 = vrot.slane %v162, 2
      %v171 = vrot.slane %v163, 2
      %v172 = vrot.slane %v164, 2
      %v177 = vmax.f32 %v157, %v169
      %v178 = vmax.f32 %v158, %v170
      %v179 = vmax.f32 %v159, %v171
      %v180 = vmax.f32 %v160, %v172
      %v181 = vpack.c.bf16 %v177, %v177
      %v182 = vpack.c.bf16 %v178, %v178
      %v183 = vpack.c.bf16 %v179, %v179
      %v184 = vpack.c.bf16 %v180, %v180
      %s185 = scalar_lea.vmem %s111, 4
      %v186 = vld [vmem:[%s185] sm:$0x3]
      %v187 = vld [vmem:[%s185 + $0x4] sm:$0x3]
      %v188 = vld [vmem:[%s185 + $0x8] sm:$0x3]
      %v189 = vld [vmem:[%s185 + $0xc] sm:$0x3]
      %v190 = vunpack.c.l.bf16 %v181
      %v191 = vunpack.c.l.bf16 %v182
      %v192 = vunpack.c.l.bf16 %v183
      %v193 = vunpack.c.l.bf16 %v184
      %v194 = vunpack.c.l.bf16 %v186
      %v195 = vunpack.c.l.bf16 %v187
      %v196 = vunpack.c.l.bf16 %v188
      %v197 = vunpack.c.l.bf16 %v189
      %v198 = vmax.f32 %v190, %v194
      %v199 = vmax.f32 %v191, %v195
      %v200 = vmax.f32 %v192, %v196
      %v201 = vmax.f32 %v193, %v197
      %v202 = vpack.c.bf16 %v198, %v198
      %v203 = vpack.c.bf16 %v199, %v199
      %v204 = vpack.c.bf16 %v200, %v200
      %v205 = vpack.c.bf16 %v201, %v201
      %v206 = vld [vmem:[%s185] sm:$0x7]
      %v207 = vld [vmem:[%s185 + $0x4] sm:$0x7]
      %v208 = vld [vmem:[%s185 + $0x8] sm:$0x7]
      %v209 = vld [vmem:[%s185 + $0xc] sm:$0x7]
      %v210 = vunpack.c.l.bf16 %v202
      %v211 = vunpack.c.l.bf16 %v203
      %v212 = vunpack.c.l.bf16 %v204
      %v213 = vunpack.c.l.bf16 %v205
      %v214 = vunpack.c.l.bf16 %v206
      %v215 = vunpack.c.l.bf16 %v207
      %v216 = vunpack.c.l.bf16 %v208
      %v217 = vunpack.c.l.bf16 %v209
      %v222 = vrot.slane %v214, 1
      %v223 = vrot.slane %v215, 1
      %v224 = vrot.slane %v216, 1
      %v225 = vrot.slane %v217, 1
      %v230 = vmax.f32 %v210, %v222
      %v231 = vmax.f32 %v211, %v223
      %v232 = vmax.f32 %v212, %v224
      %v233 = vmax.f32 %v213, %v225
      %v234 = vpack.c.bf16 %v230, %v230
      %v235 = vpack.c.bf16 %v231, %v231
      %v236 = vpack.c.bf16 %v232, %v232
      %v237 = vpack.c.bf16 %v233, %v233
      %v238 = vld [vmem:[%s185] sm:$0x6]
      %v239 = vld [vmem:[%s185 + $0x4] sm:$0x6]
      %v240 = vld [vmem:[%s185 + $0x8] sm:$0x6]
      %v241 = vld [vmem:[%s185 + $0xc] sm:$0x6]
      %v242 = vunpack.c.l.bf16 %v234
      %v243 = vunpack.c.l.bf16 %v235
      %v244 = vunpack.c.l.bf16 %v236
      %v245 = vunpack.c.l.bf16 %v237
      %v246 = vunpack.c.l.bf16 %v238
      %v247 = vunpack.c.l.bf16 %v239
      %v248 = vunpack.c.l.bf16 %v240
      %v249 = vunpack.c.l.bf16 %v241
      %v254 = vrot.slane %v246, 2
      %v255 = vrot.slane %v247, 2
      %v256 = vrot.slane %v248, 2
      %v257 = vrot.slane %v249, 2
      %v262 = vmax.f32 %v242, %v254
      %v263 = vmax.f32 %v243, %v255
      %v264 = vmax.f32 %v244, %v256
      %v265 = vmax.f32 %v245, %v257
      %v266 = vpack.c.bf16 %v262, %v262
      %v267 = vpack.c.bf16 %v263, %v263
      %v268 = vpack.c.bf16 %v264, %v264
      %v269 = vpack.c.bf16 %v265, %v265
      %s270 = scalar_lea.vmem %s111, 8
      %v271 = vld [vmem:[%s270] sm:$0x3]
      %v272 = vld [vmem:[%s270 + $0x4] sm:$0x3]
      %v273 = vld [vmem:[%s270 + $0x8] sm:$0x3]
      %v274 = vld [vmem:[%s270 + $0xc] sm:$0x3]
      %v275 = vunpack.c.l.bf16 %v266
      %v276 = vunpack.c.l.bf16 %v267
      %v277 = vunpack.c.l.bf16 %v268
      %v278 = vunpack.c.l.bf16 %v269
      %v279 = vunpack.c.l.bf16 %v271
      %v280 = vunpack.c.l.bf16 %v272
      %v281 = vunpack.c.l.bf16 %v273
      %v282 = vunpack.c.l.bf16 %v274
      %v283 = vmax.f32 %v275, %v279
      %v284 = vmax.f32 %v276, %v280
      %v285 = vmax.f32 %v277, %v281
      %v286 = vmax.f32 %v278, %v282
      %v287 = vpack.c.bf16 %v283, %v283
      %v288 = vpack.c.bf16 %v284, %v284
      %v289 = vpack.c.bf16 %v285, %v285
      %v290 = vpack.c.bf16 %v286, %v286
      %v291 = vld [vmem:[%s270] sm:$0x7]
      %v292 = vld [vmem:[%s270 + $0x4] sm:$0x7]
      %v293 = vld [vmem:[%s270 + $0x8] sm:$0x7]
      %v294 = vld [vmem:[%s270 + $0xc] sm:$0x7]
      %v295 = vunpack.c.l.bf16 %v287
      %v296 = vunpack.c.l.bf16 %v288
      %v297 = vunpack.c.l.bf16 %v289
      %v298 = vunpack.c.l.bf16 %v290
      %v299 = vunpack.c.l.bf16 %v291
      %v300 = vunpack.c.l.bf16 %v292
      %v301 = vunpack.c.l.bf16 %v293
      %v302 = vunpack.c.l.bf16 %v294
      %v307 = vrot.slane %v299, 1
      %v308 = vrot.slane %v300, 1
      %v309 = vrot.slane %v301, 1
      %v310 = vrot.slane %v302, 1
      %v315 = vmax.f32 %v295, %v307
      %v316 = vmax.f32 %v296, %v308
      %v317 = vmax.f32 %v297, %v309
      %v318 = vmax.f32 %v298, %v310
      %v319 = vpack.c.bf16 %v315, %v315
      %v320 = vpack.c.bf16 %v316, %v316
      %v321 = vpack.c.bf16 %v317, %v317
      %v322 = vpack.c.bf16 %v318, %v318
      %v323 = vld [vmem:[%s270] sm:$0x6]
      %v324 = vld [vmem:[%s270 + $0x4] sm:$0x6]
      %v325 = vld [vmem:[%s270 + $0x8] sm:$0x6]
      %v326 = vld [vmem:[%s270 + $0xc] sm:$0x6]
      %v327 = vunpack.c.l.bf16 %v319
      %v328 = vunpack.c.l.bf16 %v320
      %v329 = vunpack.c.l.bf16 %v321
      %v330 = vunpack.c.l.bf16 %v322
      %v331 = vunpack.c.l.bf16 %v323
      %v332 = vunpack.c.l.bf16 %v324
      %v333 = vunpack.c.l.bf16 %v325
      %v334 = vunpack.c.l.bf16 %v326
      %v339 = vrot.slane %v331, 2
      %v340 = vrot.slane %v332, 2
      %v341 = vrot.slane %v333, 2
      %v342 = vrot.slane %v334, 2
      %v347 = vmax.f32 %v327, %v339
      %v348 = vmax.f32 %v328, %v340
      %v349 = vmax.f32 %v329, %v341
      %v350 = vmax.f32 %v330, %v342
      %v351 = vpack.c.bf16 %v347, %v347
      %v352 = vpack.c.bf16 %v348, %v348
      %v353 = vpack.c.bf16 %v349, %v349
      %v354 = vpack.c.bf16 %v350, %v350
      %vm355 = vcmask 91136
      %356 = vst.msk [vmem:[%s116] sm:$0x3] %vm355, %v351
      %357 = vst.msk [vmem:[%s116 + $0x2] sm:$0x3] %vm355, %v352
      %358 = vst.msk [vmem:[%s116 + $0x4] sm:$0x3] %vm355, %v353
      %359 = vst.msk [vmem:[%s116 + $0x6] sm:$0x3] %vm355, %v354
      %p360 = scmp.lt.s32.totalorder %s12, 1
      %s361 = scalar_select %p360, %s12, 1
      %s362 = smul.addr %s361, 4
      %s363 = smul.addr %s362, 2
      %s364 = scalar_lea.vmem %s1, %s363
      // Predicated region
      $region25: #{_lambda_.49} parent=23 // pred_check
        %p365 = pneg %p56
      $region26: #{_lambda_.49} parent=23 // pred_check_branch
        %367 = sbr.rel (%p365) target = $region28
      $region27: #{_lambda_.49} parent=23 // pred_region
        _
      $region28: #{_lambda_.49} parent=23 // pred_fallthru
        _
    $region24: #{_lambda_.49} parent=5 // pred_fallthru
      _
    %p368 = scmp.le.s32.totalorder 2, %s7
    // Predicated region
    $region29: #{_lambda_.49} parent=5 // pred_check
      %p369 = pneg %p368
    $region30: #{_lambda_.49} parent=5 // pred_check_branch
      %371 = sbr.rel (%p369) target = $region32
    $region31: #{_lambda_.49} parent=5 // pred_region
      %s372 = ssub.s32 %s7, 2
      // Predicated region
      $region33: #{_lambda_.49} parent=31 // pred_check
        %p373 = pneg %p62
      $region34: #{_lambda_.49} parent=31 // pred_check_branch
        %375 = sbr.rel (%p373) target = $region36
      $region35: #{_lambda_.49} parent=31 // pred_region
        %p376 = scmp.lt.s32.totalorder %s13, 1
        %s377 = scalar_select %p376, %s13, 1
        %s378 = smul.addr %s377, 4
        %s379 = smul.addr %s378, 2
        %s380 = scalar_lea.vmem %s1, %s379
      $region36: #{_lambda_.49} parent=31 // pred_fallthru
        _
    $region32: #{_lambda_.49} parent=5 // pred_fallthru
      _
  $region6: #{_lambda_.49} parent=0 // loop_footer
    %s11 = sadd.s32 1, %s7
  $region7: #{_lambda_.49} parent=0 // loop_footer_branch
    %6 = sbr.rel target = $region3
  $region8: #{_lambda_.49} parent=0 // loop_exit
    _

// kernel: _lambda_.50
$region0: #{_lambda_.50}
  #allocation0 [shape = 'u32[]', space=smem, size = 0x4, offset = 0x4, fixed_abs, tag = 'smem constant byte address 0x4 - core index']
  #allocation1 [shape = 'u32[72,128]{1,0:T(1,128)}', space=vmem, size = 0x9000, scoped, tag = 'internal scratch']
  #allocation2 [shape = 'f32[32,2]{1,0:T(8,128)}', space=vmem, size = 0x4000, scoped, tag = 'scratch operand']
  %s0 = inlined_call_operand.vmem [shape: bf16[32,12], index: 0, kind: input, shape index: {}]
  %s1 = inlined_call_operand.vmem [shape: bf16[12,2], index: 1, kind: input, shape index: {}]
  %s2 = inlined_call_operand.vmem [shape: f32[1,2], index: 2, kind: input, shape index: {}]
  %s3 = inlined_call_operand.vmem [shape: bf16[32,2], index: 3, kind: output, shape index: {}]
  %s4 = sld [smem:[#allocation0]]
  $region30: #{_lambda_.50} parent=0
    _
  %s6 = ssub.s32 1, %s4
  %s7 = scalar_select 0, %s6, %s4
  // Predicated region
  $region2: #{_lambda_.50} parent=0 // pred_check
    _
  $region3: #{_lambda_.50} parent=0 // pred_check_branch
    %9 = sbr.rel (0) target = $region5
  $region4: #{_lambda_.50} parent=0 // pred_region
    _
  $region5: #{_lambda_.50} parent=0 // pred_fallthru
    _
  // Predicated region
  $region6: #{_lambda_.50} parent=0 // pred_check
    _
  $region7: #{_lambda_.50} parent=0 // pred_check_branch
    %11 = sbr.rel (0) target = $region9
  $region8: #{_lambda_.50} parent=0 // pred_region
    _
  $region9: #{_lambda_.50} parent=0 // pred_fallthru
    _
  // Predicated region
  $region10: #{_lambda_.50} parent=0 // pred_check
    _
  $region11: #{_lambda_.50} parent=0 // pred_check_branch
    %13 = sbr.rel (0) target = $region13
  $region12: #{_lambda_.50} parent=0 // pred_region
    _
  $region13: #{_lambda_.50} parent=0 // pred_fallthru
    _
  %p15 = scmp.eq.s32.totalorder 0, 0
  // Predicated region
  $region14: #{_lambda_.50} parent=0 // pred_check
    %p16 = pneg %p15
  $region15: #{_lambda_.50} parent=0 // pred_check_branch
    %18 = sbr.rel (%p16) target = $region17
  $region16: #{_lambda_.50} parent=0 // pred_region
    %vm19 = vcmask 15360
    %20 = vst.msk [vmem:[#allocation2] sm:$0xff] %vm19, 0.0
    %21 = vst.msk [vmem:[#allocation2 + $0x8] sm:$0xff] %vm19, 0.0
    %22 = vst.msk [vmem:[#allocation2 + $0x10] sm:$0xff] %vm19, 0.0
    %23 = vst.msk [vmem:[#allocation2 + $0x18] sm:$0xff] %vm19, 0.0
  $region17: #{_lambda_.50} parent=0 // pred_fallthru
    _
  %v24 = vld [vmem:[%s0] sm:$0xf]
  %v25 = vld [vmem:[%s0 + $0x4] sm:$0xf]
  %v26 = vld [vmem:[%s0 + $0x8] sm:$0xf]
  %v27 = vld [vmem:[%s0 + $0xc] sm:$0xf]
  %v28 = vld [vmem:[#allocation2] sm:$0xff]
  %v29 = vld [vmem:[#allocation2 + $0x8] sm:$0xff]
  %v30 = vld [vmem:[#allocation2 + $0x10] sm:$0xff]
  %v31 = vld [vmem:[#allocation2 + $0x18] sm:$0xff]
  %v32 = vld [vmem:[%s1] sm:$0xf]
  %v33 = vld [vmem:[%s1 + $0x4] sm:$0x3]
  %v38 = vunpack.c.l.b16 %v24
  %v39 = vunpack.c.l.b16 %v25
  %v40 = vunpack.c.l.b16 %v26
  %v41 = vunpack.c.l.b16 %v27
  %v42 = vpack.c.b16 %v39, %v38
  %v43 = vpack.c.b16 %v41, %v40
  %v46 = vunpack.c.l.b16 %v32
  %v47 = vunpack.c.l.b16 %v33
  %v48 = vpack.c.b16 %v47, %v46
  %vm49 = vcmask 97280
  %v51 = vsel %vm49, %v42, 0
  %v54 = vsel %vm49, %v43, 0
  %vm56 = vcmask 1045504
  %v58 = vsel %vm56, %v48, 0
  %60 = vmatpush.bf16.msra.mxu0 0
  %61 = vmatpush.bf16.msra.mxu0 0
  %62 = vmatpush.bf16.msra.mxu0 0
  %63 = vmatpush.bf16.msra.mxu0 0
  %64 = vmatpush.bf16.msra.mxu0 0
  %65 = vmatpush.bf16.msra.mxu0 0
  %66 = vmatpush.bf16.msra.mxu0 0
  %67 = vmatpush.bf16.msra.mxu0 %v58
  %68 = vmatmul.bf16.gmra.mxu0 %v51
  %v69 = vpop.f32.mrf.mxu0
  %v70 = vadd.f32 0.0, %v69
  %v71 = vpop.f32.mrf.mxu0
  %v72 = vadd.f32 0.0, %v71
  %73 = vmatmul.bf16.gmra.mxu0 %v54
  %v74 = vpop.f32.mrf.mxu0
  %v75 = vadd.f32 0.0, %v74
  %v76 = vpop.f32.mrf.mxu0
  %v77 = vadd.f32 0.0, %v76
  %78 = vdwg.mxu0
  %v79 = vadd.f32 %v28, %v70
  %v80 = vadd.f32 %v29, %v72
  %v81 = vadd.f32 %v30, %v75
  %v82 = vadd.f32 %v31, %v77
  %vm83 = vcmask 15360
  %84 = vst.msk [vmem:[#allocation2] sm:$0xff] %vm83, %v79
  %85 = vst.msk [vmem:[#allocation2 + $0x8] sm:$0xff] %vm83, %v80
  %86 = vst.msk [vmem:[#allocation2 + $0x10] sm:$0xff] %vm83, %v81
  %87 = vst.msk [vmem:[#allocation2 + $0x18] sm:$0xff] %vm83, %v82
  // Predicated region
  $region18: #{_lambda_.50} parent=0 // pred_check
    %p88 = pneg %p15
  $region19: #{_lambda_.50} parent=0 // pred_check_branch
    %90 = sbr.rel (%p88) target = $region21
  $region20: #{_lambda_.50} parent=0 // pred_region
    %v91 = vld [vmem:[#allocation2] sm:$0xff]
    %v92 = vld [vmem:[#allocation2 + $0x8] sm:$0xff]
    %v93 = vld [vmem:[#allocation2 + $0x10] sm:$0xff]
    %v94 = vld [vmem:[#allocation2 + $0x18] sm:$0xff]
    %v95 = vld [vmem:[%s2] sm:$0x1]
    %v97 = vperm.slane %v95, 0
    %v99 = vadd.f32 %v91, %v97
    %v100 = vadd.f32 %v92, %v97
    %v101 = vadd.f32 %v93, %v97
    %v102 = vadd.f32 %v94, %v97
    %v103 = vmax.f32 %v99, 0.0
    %v104 = vmax.f32 %v100, 0.0
    %v105 = vmax.f32 %v101, 0.0
    %v106 = vmax.f32 %v102, 0.0
    %v107 = vpack.c.bf16 %v103, %v103
    %v108 = vpack.c.bf16 %v104, %v104
    %v109 = vpack.c.bf16 %v105, %v105
    %v110 = vpack.c.bf16 %v106, %v106
    %vm111 = vcmask 11264
    %112 = vst.msk [vmem:[%s3] sm:$0xf] %vm111, %v107
    %113 = vst.msk [vmem:[%s3 + $0x4] sm:$0xf] %vm111, %v108
    %114 = vst.msk [vmem:[%s3 + $0x8] sm:$0xf] %vm111, %v109
    %115 = vst.msk [vmem:[%s3 + $0xc] sm:$0xf] %vm111, %v110
  $region21: #{_lambda_.50} parent=0 // pred_fallthru
    _
  // Predicated region
  $region22: #{_lambda_.50} parent=0 // pred_check
    _
  $region23: #{_lambda_.50} parent=0 // pred_check_branch
    %117 = sbr.rel (0) target = $region25
  $region24: #{_lambda_.50} parent=0 // pred_region
    _
  $region25: #{_lambda_.50} parent=0 // pred_fallthru
    _
  // Predicated region
  $region26: #{_lambda_.50} parent=0 // pred_check
    _
  $region27: #{_lambda_.50} parent=0 // pred_check_branch
    %119 = sbr.rel (0) target = $region29
  $region28: #{_lambda_.50} parent=0 // pred_region
    _
  $region29: #{_lambda_.50} parent=0 // pred_fallthru
    _

// kernel: _lambda_.55
$region0: #{_lambda_.55}
  #allocation0 [shape = 'u32[]', space=smem, size = 0x4, offset = 0x4, fixed_abs, tag = 'smem constant byte address 0x4 - core index']
  #allocation1 [shape = 'u32[72,128]{1,0:T(1,128)}', space=vmem, size = 0x9000, scoped, tag = 'internal scratch']
  %s0 = inlined_call_operand.vmem [shape: bf16[2,6,6,20], index: 0, kind: input, shape index: {}]
  %s1 = inlined_call_operand.vmem [shape: bf16[2,4,4,20], index: 1, kind: output, shape index: {}]
  %s2 = sld [smem:[#allocation0]]
  $region37: #{_lambda_.55} parent=0
    _
  %s4 = ssub.s32 1, %s2
  %s5 = scalar_select 0, %s4, %s2
  loop: start=0, step=1, limit=4
  $region2: #{_lambda_.55} parent=0 // loop_pre_header
    _
  $region3: #{_lambda_.55} parent=0 // loop_header
    %s7 = sphi 0, %s11
    %p8 = scmp.ge.s32.totalorder %s7, 4
    %s17 = sphi 0, %s19
    %s20 = sphi 0, %s17
    %s21 = sphi 0, %s20
    %s37 = sphi 0, %s21
    %s43 = sphi 0, %s45
    %s46 = sphi 0, %s43
    %s47 = sphi 0, %s46
    %s63 = sphi 0, %s47
  $region4: #{_lambda_.55} parent=0 // loop_header_branch
    %10 = sbr.rel (%p8) target = $region8
  $region5: #{_lambda_.55} parent=0 // loop_body
    %s12 = ssub.s32 %s7, 1
    %s13 = ssub.s32 %s7, 2
    %s14 = sadd.s32 %s7, 1
    %s15 = ssub.s32 %s7, %s14
    %p16 = scmp.eq.s32.totalorder %s15, 0
    %s18 = sadd.s32 %s17, 1
    %s19 = scalar_select %p16, %s17, %s18
    %p22 = pneg %p16
    %p23 = scmp.eq.s32.totalorder %s7, 1
    %p24 = por %p22, %p23
    %p25 = scmp.ne.s32.totalorder %s17, %s20
    %p26 = scmp.eq.s32.totalorder %s7, 0
    %p27 = por %p25, %p26
    %p28 = scmp.ne.s32.totalorder %s17, %s20
    %p29 = scmp.eq.s32.totalorder %s12, 1
    %p30 = por %p28, %p29
    %p31 = scmp.ne.s32.totalorder %s20, %s21
    %p32 = scmp.eq.s32.totalorder %s12, 0
    %p33 = por %p31, %p32
    %p34 = scmp.ne.s32.totalorder %s20, %s21
    %p35 = scmp.eq.s32.totalorder %s13, 1
    %p36 = por %p34, %p35
    %p38 = scmp.ne.s32.totalorder %s21, %s37
    %p39 = scmp.eq.s32.totalorder %s13, 0
    %p40 = por %p38, %p39
    %s41 = ssub.s32 %s7, %s14
    %p42 = scmp.eq.s32.totalorder %s41, 0
    %s44 = sadd.s32 %s43, 1
    %s45 = scalar_select %p42, %s43, %s44
    %p48 = pneg %p42
    %p49 = scmp.eq.s32.totalorder %s7, 1
    %p50 = por %p48, %p49
    %p51 = scmp.ne.s32.totalorder %s43, %s46
    %p52 = scmp.eq.s32.totalorder %s7, 0
    %p53 = por %p51, %p52
    %p54 = scmp.ne.s32.totalorder %s43, %s46
    %p55 = scmp.eq.s32.totalorder %s12, 1
    %p56 = por %p54, %p55
    %p57 = scmp.ne.s32.totalorder %s46, %s47
    %p58 = scmp.eq.s32.totalorder %s12, 0
    %p59 = por %p57, %p58
    %p60 = scmp.ne.s32.totalorder %s46, %s47
    %p61 = scmp.eq.s32.totalorder %s13, 1
    %p62 = por %p60, %p61
    %p64 = scmp.ne.s32.totalorder %s47, %s63
    %p65 = scmp.eq.s32.totalorder %s13, 0
    %p66 = por %p64, %p65
    %p67 = scmp.le.s32.totalorder 1, %s7
    %p68 = scmp.lt.s32.totalorder %s7, 3
    %p69 = pnand %p67, %p68
    %p70 = pneg %p69
    // Predicated region
    $region9: #{_lambda_.55} parent=5 // pred_check
      _
    $region10: #{_lambda_.55} parent=5 // pred_check_branch
      %72 = sbr.rel (%p69) target = $region12
    $region11: #{_lambda_.55} parent=5 // pred_region
      %s73 = ssub.s32 %s7, 1
    $region12: #{_lambda_.55} parent=5 // pred_fallthru
      _
    %p74 = scmp.lt.s32.totalorder %s7, 2
    // Predicated region
    $region13: #{_lambda_.55} parent=5 // pred_check
      %p75 = pneg %p74
    $region14: #{_lambda_.55} parent=5 // pred_check_branch
      %77 = sbr.rel (%p75) target = $region16
    $region15: #{_lambda_.55} parent=5 // pred_region
      // Predicated region
      $region17: #{_lambda_.55} parent=15 // pred_check
        %p78 = pneg %p27
      $region18: #{_lambda_.55} parent=15 // pred_check_branch
        %80 = sbr.rel (%p78) target = $region20
      $region19: #{_lambda_.55} parent=15 // pred_region
        %p81 = scmp.lt.s32.totalorder %s7, 1
        %s82 = scalar_select %p81, %s7, 1
        %s83 = smul.addr %s82, 6
        %s84 = smul.addr %s83, 4
        %s85 = scalar_lea.vmem %s0, %s84
      $region20: #{_lambda_.55} parent=15 // pred_fallthru
        _
    $region16: #{_lambda_.55} parent=5 // pred_fallthru
      _
    %p86 = scmp.le.s32.totalorder 1, %s7
    %p87 = scmp.lt.s32.totalorder %s7, 3
    %p88 = pnand %p86, %p87
    %p89 = pneg %p88
    // Predicated region
    $region21: #{_lambda_.55} parent=5 // pred_check
      _
    $region22: #{_lambda_.55} parent=5 // pred_check_branch
      %91 = sbr.rel (%p88) target = $region24
    $region23: #{_lambda_.55} parent=5 // pred_region
      %s92 = ssub.s32 %s7, 1
      %p93 = scmp.lt.s32.totalorder %s12, 1
      %s94 = scalar_select %p93, %s12, 1
      %s95 = smul.addr %s94, 6
      %s96 = smul.addr %s95, 4
      %s97 = scalar_lea.vmem %s0, %s96
      %p98 = pneg %p33
      %p99 = pneg %p30
      %p100 = pneg %p59
      %p101 = pneg %p56
      %p102 = scmp.lt.s32.totalorder %s12, 1
      %s103 = scalar_select %p102, %s12, 1
      %s104 = smul.addr %s103, 4
      %s105 = smul.addr %s104, 2
      %s106 = scalar_lea.vmem %s1, %s105
      %p107 = scmp.lt.s32.totalorder %s12, 1
      %s108 = scalar_select %p107, %s12, 1
      %s109 = smul.addr %s108, 6
      %s110 = smul.addr %s109, 4
      %s111 = scalar_lea.vmem %s0, %s110
      %p112 = scmp.lt.s32.totalorder %s12, 1
      %s113 = scalar_select %p112, %s12, 1
      %s114 = smul.addr %s113, 4
      %s115 = smul.addr %s114, 2
      %s116 = scalar_lea.vmem %s1, %s115
      %v117 = vld [vmem:[%s111] sm:$0x3]
      %v118 = vld [vmem:[%s111 + $0x4] sm:$0x3]
      %v119 = vld [vmem:[%s111 + $0x8] sm:$0x3]
      %v120 = vld [vmem:[%s111 + $0xc] sm:$0x3]
      %v121 = vld [vmem:[%s111] sm:$0x7]
      %v122 = vld [vmem:[%s111 + $0x4] sm:$0x7]
      %v123 = vld [vmem:[%s111 + $0x8] sm:$0x7]
      %v124 = vld [vmem:[%s111 + $0xc] sm:$0x7]
      %v125 = vunpack.c.l.bf16 %v117
      %v126 = vunpack.c.l.bf16 %v118
      %v127 = vunpack.c.l.bf16 %v119
      %v128 = vunpack.c.l.bf16 %v120
      %v129 = vunpack.c.l.bf16 %v121
      %v130 = vunpack.c.l.bf16 %v122
      %v131 = vunpack.c.l.bf16 %v123
      %v132 = vunpack.c.l.bf16 %v124
      %v137 = vrot.slane %v129, 1
      %v138 = vrot.slane %v130, 1
      %v139 = vrot.slane %v131, 1
      %v140 = vrot.slane %v132, 1
      %v145 = vmax.f32 %v125, %v137
      %v146 = vmax.f32 %v126, %v138
      %v147 = vmax.f32 %v127, %v139
      %v148 = vmax.f32 %v128, %v140
      %v149 = vpack.c.bf16 %v145, %v145
      %v150 = vpack.c.bf16 %v146, %v146
      %v151 = vpack.c.bf16 %v147, %v147
      %v152 = vpack.c.bf16 %v148, %v148
      %v153 = vld [vmem:[%s111] sm:$0x6]
      %v154 = vld [vmem:[%s111 + $0x4] sm:$0x6]
      %v155 = vld [vmem:[%s111 + $0x8] sm:$0x6]
      %v156 = vld [vmem:[%s111 + $0xc] sm:$0x6]
      %v157 = vunpack.c.l.bf16 %v149
      %v158 = vunpack.c.l.bf16 %v150
      %v159 = vunpack.c.l.bf16 %v151
      %v160 = vunpack.c.l.bf16 %v152
      %v161 = vunpack.c.l.bf16 %v153
      %v162 = vunpack.c.l.bf16 %v154
      %v163 = vunpack.c.l.bf16 %v155
      %v164 = vunpack.c.l.bf16 %v156
      %v169 = vrot.slane %v161, 2
      %v170 = vrot.slane %v162, 2
      %v171 = vrot.slane %v163, 2
      %v172 = vrot.slane %v164, 2
      %v177 = vmax.f32 %v157, %v169
      %v178 = vmax.f32 %v158, %v170
      %v179 = vmax.f32 %v159, %v171
      %v180 = vmax.f32 %v160, %v172
      %v181 = vpack.c.bf16 %v177, %v177
      %v182 = vpack.c.bf16 %v178, %v178
      %v183 = vpack.c.bf16 %v179, %v179
      %v184 = vpack.c.bf16 %v180, %v180
      %s185 = scalar_lea.vmem %s111, 4
      %v186 = vld [vmem:[%s185] sm:$0x3]
      %v187 = vld [vmem:[%s185 + $0x4] sm:$0x3]
      %v188 = vld [vmem:[%s185 + $0x8] sm:$0x3]
      %v189 = vld [vmem:[%s185 + $0xc] sm:$0x3]
      %v190 = vunpack.c.l.bf16 %v181
      %v191 = vunpack.c.l.bf16 %v182
      %v192 = vunpack.c.l.bf16 %v183
      %v193 = vunpack.c.l.bf16 %v184
      %v194 = vunpack.c.l.bf16 %v186
      %v195 = vunpack.c.l.bf16 %v187
      %v196 = vunpack.c.l.bf16 %v188
      %v197 = vunpack.c.l.bf16 %v189
      %v198 = vmax.f32 %v190, %v194
      %v199 = vmax.f32 %v191, %v195
      %v200 = vmax.f32 %v192, %v196
      %v201 = vmax.f32 %v193, %v197
      %v202 = vpack.c.bf16 %v198, %v198
      %v203 = vpack.c.bf16 %v199, %v199
      %v204 = vpack.c.bf16 %v200, %v200
      %v205 = vpack.c.bf16 %v201, %v201
      %v206 = vld [vmem:[%s185] sm:$0x7]
      %v207 = vld [vmem:[%s185 + $0x4] sm:$0x7]
      %v208 = vld [vmem:[%s185 + $0x8] sm:$0x7]
      %v209 = vld [vmem:[%s185 + $0xc] sm:$0x7]
      %v210 = vunpack.c.l.bf16 %v202
      %v211 = vunpack.c.l.bf16 %v203
      %v212 = vunpack.c.l.bf16 %v204
      %v213 = vunpack.c.l.bf16 %v205
      %v214 = vunpack.c.l.bf16 %v206
      %v215 = vunpack.c.l.bf16 %v207
      %v216 = vunpack.c.l.bf16 %v208
      %v217 = vunpack.c.l.bf16 %v209
      %v222 = vrot.slane %v214, 1
      %v223 = vrot.slane %v215, 1
      %v224 = vrot.slane %v216, 1
      %v225 = vrot.slane %v217, 1
      %v230 = vmax.f32 %v210, %v222
      %v231 = vmax.f32 %v211, %v223
      %v232 = vmax.f32 %v212, %v224
      %v233 = vmax.f32 %v213, %v225
      %v234 = vpack.c.bf16 %v230, %v230
      %v235 = vpack.c.bf16 %v231, %v231
      %v236 = vpack.c.bf16 %v232, %v232
      %v237 = vpack.c.bf16 %v233, %v233
      %v238 = vld [vmem:[%s185] sm:$0x6]
      %v239 = vld [vmem:[%s185 + $0x4] sm:$0x6]
      %v240 = vld [vmem:[%s185 + $0x8] sm:$0x6]
      %v241 = vld [vmem:[%s185 + $0xc] sm:$0x6]
      %v242 = vunpack.c.l.bf16 %v234
      %v243 = vunpack.c.l.bf16 %v235
      %v244 = vunpack.c.l.bf16 %v236
      %v245 = vunpack.c.l.bf16 %v237
      %v246 = vunpack.c.l.bf16 %v238
      %v247 = vunpack.c.l.bf16 %v239
      %v248 = vunpack.c.l.bf16 %v240
      %v249 = vunpack.c.l.bf16 %v241
      %v254 = vrot.slane %v246, 2
      %v255 = vrot.slane %v247, 2
      %v256 = vrot.slane %v248, 2
      %v257 = vrot.slane %v249, 2
      %v262 = vmax.f32 %v242, %v254
      %v263 = vmax.f32 %v243, %v255
      %v264 = vmax.f32 %v244, %v256
      %v265 = vmax.f32 %v245, %v257
      %v266 = vpack.c.bf16 %v262, %v262
      %v267 = vpack.c.bf16 %v263, %v263
      %v268 = vpack.c.bf16 %v264, %v264
      %v269 = vpack.c.bf16 %v265, %v265
      %s270 = scalar_lea.vmem %s111, 8
      %v271 = vld [vmem:[%s270] sm:$0x3]
      %v272 = vld [vmem:[%s270 + $0x4] sm:$0x3]
      %v273 = vld [vmem:[%s270 + $0x8] sm:$0x3]
      %v274 = vld [vmem:[%s270 + $0xc] sm:$0x3]
      %v275 = vunpack.c.l.bf16 %v266
      %v276 = vunpack.c.l.bf16 %v267
      %v277 = vunpack.c.l.bf16 %v268
      %v278 = vunpack.c.l.bf16 %v269
      %v279 = vunpack.c.l.bf16 %v271
      %v280 = vunpack.c.l.bf16 %v272
      %v281 = vunpack.c.l.bf16 %v273
      %v282 = vunpack.c.l.bf16 %v274
      %v283 = vmax.f32 %v275, %v279
      %v284 = vmax.f32 %v276, %v280
      %v285 = vmax.f32 %v277, %v281
      %v286 = vmax.f32 %v278, %v282
      %v287 = vpack.c.bf16 %v283, %v283
      %v288 = vpack.c.bf16 %v284, %v284
      %v289 = vpack.c.bf16 %v285, %v285
      %v290 = vpack.c.bf16 %v286, %v286
      %v291 = vld [vmem:[%s270] sm:$0x7]
      %v292 = vld [vmem:[%s270 + $0x4] sm:$0x7]
      %v293 = vld [vmem:[%s270 + $0x8] sm:$0x7]
      %v294 = vld [vmem:[%s270 + $0xc] sm:$0x7]
      %v295 = vunpack.c.l.bf16 %v287
      %v296 = vunpack.c.l.bf16 %v288
      %v297 = vunpack.c.l.bf16 %v289
      %v298 = vunpack.c.l.bf16 %v290
      %v299 = vunpack.c.l.bf16 %v291
      %v300 = vunpack.c.l.bf16 %v292
      %v301 = vunpack.c.l.bf16 %v293
      %v302 = vunpack.c.l.bf16 %v294
      %v307 = vrot.slane %v299, 1
      %v308 = vrot.slane %v300, 1
      %v309 = vrot.slane %v301, 1
      %v310 = vrot.slane %v302, 1
      %v315 = vmax.f32 %v295, %v307
      %v316 = vmax.f32 %v296, %v308
      %v317 = vmax.f32 %v297, %v309
      %v318 = vmax.f32 %v298, %v310
      %v319 = vpack.c.bf16 %v315, %v315
      %v320 = vpack.c.bf16 %v316, %v316
      %v321 = vpack.c.bf16 %v317, %v317
      %v322 = vpack.c.bf16 %v318, %v318
      %v323 = vld [vmem:[%s270] sm:$0x6]
      %v324 = vld [vmem:[%s270 + $0x4] sm:$0x6]
      %v325 = vld [vmem:[%s270 + $0x8] sm:$0x6]
      %v326 = vld [vmem:[%s270 + $0xc] sm:$0x6]
      %v327 = vunpack.c.l.bf16 %v319
      %v328 = vunpack.c.l.bf16 %v320
      %v329 = vunpack.c.l.bf16 %v321
      %v330 = vunpack.c.l.bf16 %v322
      %v331 = vunpack.c.l.bf16 %v323
      %v332 = vunpack.c.l.bf16 %v324
      %v333 = vunpack.c.l.bf16 %v325
      %v334 = vunpack.c.l.bf16 %v326
      %v339 = vrot.slane %v331, 2
      %v340 = vrot.slane %v332, 2
      %v341 = vrot.slane %v333, 2
      %v342 = vrot.slane %v334, 2
      %v347 = vmax.f32 %v327, %v339
      %v348 = vmax.f32 %v328, %v340
      %v349 = vmax.f32 %v329, %v341
      %v350 = vmax.f32 %v330, %v342
      %v351 = vpack.c.bf16 %v347, %v347
      %v352 = vpack.c.bf16 %v348, %v348
      %v353 = vpack.c.bf16 %v349, %v349
      %v354 = vpack.c.bf16 %v350, %v350
      %vm355 = vcmask 156672
      %356 = vst.msk [vmem:[%s116] sm:$0x3] %vm355, %v351
      %357 = vst.msk [vmem:[%s116 + $0x2] sm:$0x3] %vm355, %v352
      %358 = vst.msk [vmem:[%s116 + $0x4] sm:$0x3] %vm355, %v353
      %359 = vst.msk [vmem:[%s116 + $0x6] sm:$0x3] %vm355, %v354
      %p360 = scmp.lt.s32.totalorder %s12, 1
      %s361 = scalar_select %p360, %s12, 1
      %s362 = smul.addr %s361, 4
      %s363 = smul.addr %s362, 2
      %s364 = scalar_lea.vmem %s1, %s363
      // Predicated region
      $region25: #{_lambda_.55} parent=23 // pred_check
        %p365 = pneg %p56
      $region26: #{_lambda_.55} parent=23 // pred_check_branch
        %367 = sbr.rel (%p365) target = $region28
      $region27: #{_lambda_.55} parent=23 // pred_region
        _
      $region28: #{_lambda_.55} parent=23 // pred_fallthru
        _
    $region24: #{_lambda_.55} parent=5 // pred_fallthru
      _
    %p368 = scmp.le.s32.totalorder 2, %s7
    // Predicated region
    $region29: #{_lambda_.55} parent=5 // pred_check
      %p369 = pneg %p368
    $region30: #{_lambda_.55} parent=5 // pred_check_branch
      %371 = sbr.rel (%p369) target = $region32
    $region31: #{_lambda_.55} parent=5 // pred_region
      %s372 = ssub.s32 %s7, 2
      // Predicated region
      $region33: #{_lambda_.55} parent=31 // pred_check
        %p373 = pneg %p62
      $region34: #{_lambda_.55} parent=31 // pred_check_branch
        %375 = sbr.rel (%p373) target = $region36
      $region35: #{_lambda_.55} parent=31 // pred_region
        %p376 = scmp.lt.s32.totalorder %s13, 1
        %s377 = scalar_select %p376, %s13, 1
        %s378 = smul.addr %s377, 4
        %s379 = smul.addr %s378, 2
        %s380 = scalar_lea.vmem %s1, %s379
      $region36: #{_lambda_.55} parent=31 // pred_fallthru
        _
    $region32: #{_lambda_.55} parent=5 // pred_fallthru
      _
  $region6: #{_lambda_.55} parent=0 // loop_footer
    %s11 = sadd.s32 1, %s7
  $region7: #{_lambda_.55} parent=0 // loop_footer_branch
    %6 = sbr.rel target = $region3
  $region8: #{_lambda_.55} parent=0 // loop_exit
    _

// kernel: _lambda_.56
$region0: #{_lambda_.56}
  #allocation0 [shape = 'u32[]', space=smem, size = 0x4, offset = 0x4, fixed_abs, tag = 'smem constant byte address 0x4 - core index']
  #allocation1 [shape = 'u32[72,128]{1,0:T(1,128)}', space=vmem, size = 0x9000, scoped, tag = 'internal scratch']
  #allocation2 [shape = 'f32[32,2]{1,0:T(8,128)}', space=vmem, size = 0x4000, scoped, tag = 'scratch operand']
  %s0 = inlined_call_operand.vmem [shape: bf16[32,20], index: 0, kind: input, shape index: {}]
  %s1 = inlined_call_operand.vmem [shape: bf16[20,2], index: 1, kind: input, shape index: {}]
  %s2 = inlined_call_operand.vmem [shape: f32[1,2], index: 2, kind: input, shape index: {}]
  %s3 = inlined_call_operand.vmem [shape: bf16[32,2], index: 3, kind: output, shape index: {}]
  %s4 = sld [smem:[#allocation0]]
  $region30: #{_lambda_.56} parent=0
    _
  %s6 = ssub.s32 1, %s4
  %s7 = scalar_select 0, %s6, %s4
  // Predicated region
  $region2: #{_lambda_.56} parent=0 // pred_check
    _
  $region3: #{_lambda_.56} parent=0 // pred_check_branch
    %9 = sbr.rel (0) target = $region5
  $region4: #{_lambda_.56} parent=0 // pred_region
    _
  $region5: #{_lambda_.56} parent=0 // pred_fallthru
    _
  // Predicated region
  $region6: #{_lambda_.56} parent=0 // pred_check
    _
  $region7: #{_lambda_.56} parent=0 // pred_check_branch
    %11 = sbr.rel (0) target = $region9
  $region8: #{_lambda_.56} parent=0 // pred_region
    _
  $region9: #{_lambda_.56} parent=0 // pred_fallthru
    _
  // Predicated region
  $region10: #{_lambda_.56} parent=0 // pred_check
    _
  $region11: #{_lambda_.56} parent=0 // pred_check_branch
    %13 = sbr.rel (0) target = $region13
  $region12: #{_lambda_.56} parent=0 // pred_region
    _
  $region13: #{_lambda_.56} parent=0 // pred_fallthru
    _
  %p15 = scmp.eq.s32.totalorder 0, 0
  // Predicated region
  $region14: #{_lambda_.56} parent=0 // pred_check
    %p16 = pneg %p15
  $region15: #{_lambda_.56} parent=0 // pred_check_branch
    %18 = sbr.rel (%p16) target = $region17
  $region16: #{_lambda_.56} parent=0 // pred_region
    %vm19 = vcmask 15360
    %20 = vst.msk [vmem:[#allocation2] sm:$0xff] %vm19, 0.0
    %21 = vst.msk [vmem:[#allocation2 + $0x8] sm:$0xff] %vm19, 0.0
    %22 = vst.msk [vmem:[#allocation2 + $0x10] sm:$0xff] %vm19, 0.0
    %23 = vst.msk [vmem:[#allocation2 + $0x18] sm:$0xff] %vm19, 0.0
  $region17: #{_lambda_.56} parent=0 // pred_fallthru
    _
  %v24 = vld [vmem:[%s0] sm:$0xf]
  %v25 = vld [vmem:[%s0 + $0x4] sm:$0xf]
  %v26 = vld [vmem:[%s0 + $0x8] sm:$0xf]
  %v27 = vld [vmem:[%s0 + $0xc] sm:$0xf]
  %v28 = vld [vmem:[#allocation2] sm:$0xff]
  %v29 = vld [vmem:[#allocation2 + $0x8] sm:$0xff]
  %v30 = vld [vmem:[#allocation2 + $0x10] sm:$0xff]
  %v31 = vld [vmem:[#allocation2 + $0x18] sm:$0xff]
  %v32 = vld [vmem:[%s1] sm:$0xf]
  %v33 = vld [vmem:[%s1 + $0x4] sm:$0xf]
  %v34 = vld [vmem:[%s1 + $0x8] sm:$0x3]
  %v39 = vunpack.c.l.b16 %v24
  %v40 = vunpack.c.l.b16 %v25
  %v41 = vunpack.c.l.b16 %v26
  %v42 = vunpack.c.l.b16 %v27
  %v43 = vpack.c.b16 %v40, %v39
  %v44 = vpack.c.b16 %v42, %v41
  %v48 = vunpack.c.l.b16 %v32
  %v49 = vunpack.c.l.b16 %v33
  %v50 = vunpack.c.l.b16 %v34
  %v51 = vpack.c.b16 %v49, %v48
  %v52 = vpack.c.b16 %v50, %v50
  %vm54 = vcmask 162816
  %v56 = vsel %vm54, %v43, 0
  %v59 = vsel %vm54, %v44, 0
  %vm61 = vcmask 1041408
  %v63 = vsel %vm61, %v52, 0
  %65 = vmatpush.bf16.msra.mxu0 0
  %66 = vmatpush.bf16.msra.mxu0 0
  %67 = vmatpush.bf16.msra.mxu0 0
  %68 = vmatpush.bf16.msra.mxu0 0
  %69 = vmatpush.bf16.msra.mxu0 0
  %70 = vmatpush.bf16.msra.mxu0 0
  %71 = vmatpush.bf16.msra.mxu0 %v63
  %72 = vmatpush.bf16.msra.mxu0 %v51
  %73 = vmatmul.bf16.gmra.mxu0 %v56
  %v74 = vpop.f32.mrf.mxu0
  %v75 = vadd.f32 0.0, %v74
  %v76 = vpop.f32.mrf.mxu0
  %v77 = vadd.f32 0.0, %v76
  %78 = vmatmul.bf16.gmra.mxu0 %v59
  %v79 = vpop.f32.mrf.mxu0
  %v80 = vadd.f32 0.0, %v79
  %v81 = vpop.f32.mrf.mxu0
  %v82 = vadd.f32 0.0, %v81
  %83 = vdwg.mxu0
  %v84 = vadd.f32 %v28, %v75
  %v85 = vadd.f32 %v29, %v77
  %v86 = vadd.f32 %v30, %v80
  %v87 = vadd.f32 %v31, %v82
  %vm88 = vcmask 15360
  %89 = vst.msk [vmem:[#allocation2] sm:$0xff] %vm88, %v84
  %90 = vst.msk [vmem:[#allocation2 + $0x8] sm:$0xff] %vm88, %v85
  %91 = vst.msk [vmem:[#allocation2 + $0x10] sm:$0xff] %vm88, %v86
  %92 = vst.msk [vmem:[#allocation2 + $0x18] sm:$0xff] %vm88, %v87
  // Predicated region
  $region18: #{_lambda_.56} parent=0 // pred_check
    %p93 = pneg %p15
  $region19: #{_lambda_.56} parent=0 // pred_check_branch
    %95 = sbr.rel (%p93) target = $region21
  $region20: #{_lambda_.56} parent=0 // pred_region
    %v96 = vld [vmem:[#allocation2] sm:$0xff]
    %v97 = vld [vmem:[#allocation2 + $0x8] sm:$0xff]
    %v98 = vld [vmem:[#allocation2 + $0x10] sm:$0xff]
    %v99 = vld [vmem:[#allocation2 + $0x18] sm:$0xff]
    %v100 = vld [vmem:[%s2] sm:$0x1]
    %v102 = vperm.slane %v100, 0
    %v104 = vadd.f32 %v96, %v102
    %v105 = vadd.f32 %v97, %v102
    %v106 = vadd.f32 %v98, %v102
    %v107 = vadd.f32 %v99, %v102
    %v108 = vmax.f32 %v104, 0.0
    %v109 = vmax.f32 %v105, 0.0
    %v110 = vmax.f32 %v106, 0.0
    %v111 = vmax.f32 %v107, 0.0
    %v112 = vpack.c.bf16 %v108, %v108
    %v113 = vpack.c.bf16 %v109, %v109
    %v114 = vpack.c.bf16 %v110, %v110
    %v115 = vpack.c.bf16 %v111, %v111
    %vm116 = vcmask 11264
    %117 = vst.msk [vmem:[%s3] sm:$0xf] %vm116, %v112
    %118 = vst.msk [vmem:[%s3 + $0x4] sm:$0xf] %vm116, %v113
    %119 = vst.msk [vmem:[%s3 + $0x8] sm:$0xf] %vm116, %v114
    %120 = vst.msk [vmem:[%s3 + $0xc] sm:$0xf] %vm116, %v115
  $region21: #{_lambda_.56} parent=0 // pred_fallthru
    _
  // Predicated region
  $region22: #{_lambda_.56} parent=0 // pred_check
    _
  $region23: #{_lambda_.56} parent=0 // pred_check_branch
    %122 = sbr.rel (0) target = $region25
  $region24: #{_lambda_.56} parent=0 // pred_region
    _
  $region25: #{_lambda_.56} parent=0 // pred_fallthru
    _
  // Predicated region
  $region26: #{_lambda_.56} parent=0 // pred_check
    _
  $region27: #{_lambda_.56} parent=0 // pred_check_branch
    %124 = sbr.rel (0) target = $region29
  $region28: #{_lambda_.56} parent=0 // pred_region
    _
  $region29: #{_lambda_.56} parent=0 // pred_fallthru
    _

// kernel: _lambda_.51
$region0: #{_lambda_.51}
  #allocation0 [shape = 'u32[]', space=smem, size = 0x4, offset = 0x4, fixed_abs, tag = 'smem constant byte address 0x4 - core index']
  #allocation1 [shape = 'u32[72,128]{1,0:T(1,128)}', space=vmem, size = 0x9000, scoped, tag = 'internal scratch']
  #allocation2 [shape = 'f32[32,6]{1,0:T(8,128)}', space=vmem, size = 0x4000, scoped, tag = 'scratch operand']
  %s0 = inlined_call_operand.vmem [shape: bf16[32,20], index: 0, kind: input, shape index: {}]
  %s1 = inlined_call_operand.vmem [shape: bf16[20,6], index: 1, kind: input, shape index: {}]
  %s2 = inlined_call_operand.vmem [shape: f32[1,6], index: 2, kind: input, shape index: {}]
  %s3 = inlined_call_operand.vmem [shape: bf16[32,6], index: 3, kind: output, shape index: {}]
  %s4 = sld [smem:[#allocation0]]
  $region30: #{_lambda_.51} parent=0
    _
  %s6 = ssub.s32 1, %s4
  %s7 = scalar_select 0, %s6, %s4
  // Predicated region
  $region2: #{_lambda_.51} parent=0 // pred_check
    _
  $region3: #{_lambda_.51} parent=0 // pred_check_branch
    %9 = sbr.rel (0) target = $region5
  $region4: #{_lambda_.51} parent=0 // pred_region
    _
  $region5: #{_lambda_.51} parent=0 // pred_fallthru
    _
  // Predicated region
  $region6: #{_lambda_.51} parent=0 // pred_check
    _
  $region7: #{_lambda_.51} parent=0 // pred_check_branch
    %11 = sbr.rel (0) target = $region9
  $region8: #{_lambda_.51} parent=0 // pred_region
    _
  $region9: #{_lambda_.51} parent=0 // pred_fallthru
    _
  // Predicated region
  $region10: #{_lambda_.51} parent=0 // pred_check
    _
  $region11: #{_lambda_.51} parent=0 // pred_check_branch
    %13 = sbr.rel (0) target = $region13
  $region12: #{_lambda_.51} parent=0 // pred_region
    _
  $region13: #{_lambda_.51} parent=0 // pred_fallthru
    _
  %p15 = scmp.eq.s32.totalorder 0, 0
  // Predicated region
  $region14: #{_lambda_.51} parent=0 // pred_check
    %p16 = pneg %p15
  $region15: #{_lambda_.51} parent=0 // pred_check_branch
    %18 = sbr.rel (%p16) target = $region17
  $region16: #{_lambda_.51} parent=0 // pred_region
    %vm19 = vcmask 48128
    %20 = vst.msk [vmem:[#allocation2] sm:$0xff] %vm19, 0.0
    %21 = vst.msk [vmem:[#allocation2 + $0x8] sm:$0xff] %vm19, 0.0
    %22 = vst.msk [vmem:[#allocation2 + $0x10] sm:$0xff] %vm19, 0.0
    %23 = vst.msk [vmem:[#allocation2 + $0x18] sm:$0xff] %vm19, 0.0
  $region17: #{_lambda_.51} parent=0 // pred_fallthru
    _
  %v24 = vld [vmem:[%s0] sm:$0xf]
  %v25 = vld [vmem:[%s0 + $0x4] sm:$0xf]
  %v26 = vld [vmem:[%s0 + $0x8] sm:$0xf]
  %v27 = vld [vmem:[%s0 + $0xc] sm:$0xf]
  %v28 = vld [vmem:[#allocation2] sm:$0xff]
  %v29 = vld [vmem:[#allocation2 + $0x8] sm:$0xff]
  %v30 = vld [vmem:[#allocation2 + $0x10] sm:$0xff]
  %v31 = vld [vmem:[#allocation2 + $0x18] sm:$0xff]
  %v32 = vld [vmem:[%s1] sm:$0xf]
  %v33 = vld [vmem:[%s1 + $0x4] sm:$0xf]
  %v34 = vld [vmem:[%s1 + $0x8] sm:$0x3]
  %v39 = vunpack.c.l.b16 %v24
  %v40 = vunpack.c.l.b16 %v25
  %v41 = vunpack.c.l.b16 %v26
  %v42 = vunpack.c.l.b16 %v27
  %v43 = vpack.c.b16 %v40, %v39
  %v44 = vpack.c.b16 %v42, %v41
  %v48 = vunpack.c.l.b16 %v32
  %v49 = vunpack.c.l.b16 %v33
  %v50 = vunpack.c.l.b16 %v34
  %v51 = vpack.c.b16 %v49, %v48
  %v52 = vpack.c.b16 %v50, %v50
  %vm54 = vcmask 162816
  %v56 = vsel %vm54, %v43, 0
  %v59 = vsel %vm54, %v44, 0
  %vm61 = vcmask 1041408
  %v63 = vsel %vm61, %v52, 0
  %65 = vmatpush.bf16.msra.mxu0 0
  %66 = vmatpush.bf16.msra.mxu0 0
  %67 = vmatpush.bf16.msra.mxu0 0
  %68 = vmatpush.bf16.msra.mxu0 0
  %69 = vmatpush.bf16.msra.mxu0 0
  %70 = vmatpush.bf16.msra.mxu0 0
  %71 = vmatpush.bf16.msra.mxu0 %v63
  %72 = vmatpush.bf16.msra.mxu0 %v51
  %73 = vmatmul.bf16.gmra.mxu0 %v56
  %v74 = vpop.f32.mrf.mxu0
  %v75 = vadd.f32 0.0, %v74
  %v76 = vpop.f32.mrf.mxu0
  %v77 = vadd.f32 0.0, %v76
  %78 = vmatmul.bf16.gmra.mxu0 %v59
  %v79 = vpop.f32.mrf.mxu0
  %v80 = vadd.f32 0.0, %v79
  %v81 = vpop.f32.mrf.mxu0
  %v82 = vadd.f32 0.0, %v81
  %83 = vdwg.mxu0
  %v84 = vadd.f32 %v28, %v75
  %v85 = vadd.f32 %v29, %v77
  %v86 = vadd.f32 %v30, %v80
  %v87 = vadd.f32 %v31, %v82
  %vm88 = vcmask 48128
  %89 = vst.msk [vmem:[#allocation2] sm:$0xff] %vm88, %v84
  %90 = vst.msk [vmem:[#allocation2 + $0x8] sm:$0xff] %vm88, %v85
  %91 = vst.msk [vmem:[#allocation2 + $0x10] sm:$0xff] %vm88, %v86
  %92 = vst.msk [vmem:[#allocation2 + $0x18] sm:$0xff] %vm88, %v87
  // Predicated region
  $region18: #{_lambda_.51} parent=0 // pred_check
    %p93 = pneg %p15
  $region19: #{_lambda_.51} parent=0 // pred_check_branch
    %95 = sbr.rel (%p93) target = $region21
  $region20: #{_lambda_.51} parent=0 // pred_region
    %v96 = vld [vmem:[#allocation2] sm:$0xff]
    %v97 = vld [vmem:[#allocation2 + $0x8] sm:$0xff]
    %v98 = vld [vmem:[#allocation2 + $0x10] sm:$0xff]
    %v99 = vld [vmem:[#allocation2 + $0x18] sm:$0xff]
    %v100 = vld [vmem:[%s2] sm:$0x1]
    %v102 = vperm.slane %v100, 0
    %v104 = vadd.f32 %v96, %v102
    %v105 = vadd.f32 %v97, %v102
    %v106 = vadd.f32 %v98, %v102
    %v107 = vadd.f32 %v99, %v102
    %v108 = vmax.f32 %v104, 0.0
    %v109 = vmax.f32 %v105, 0.0
    %v110 = vmax.f32 %v106, 0.0
    %v111 = vmax.f32 %v107, 0.0
    %v112 = vpack.c.bf16 %v108, %v108
    %v113 = vpack.c.bf16 %v109, %v109
    %v114 = vpack.c.bf16 %v110, %v110
    %v115 = vpack.c.bf16 %v111, %v111
    %vm116 = vcmask 44032
    %117 = vst.msk [vmem:[%s3] sm:$0xf] %vm116, %v112
    %118 = vst.msk [vmem:[%s3 + $0x4] sm:$0xf] %vm116, %v113
    %119 = vst.msk [vmem:[%s3 + $0x8] sm:$0xf] %vm116, %v114
    %120 = vst.msk [vmem:[%s3 + $0xc] sm:$0xf] %vm116, %v115
  $region21: #{_lambda_.51} parent=0 // pred_fallthru
    _
  // Predicated region
  $region22: #{_lambda_.51} parent=0 // pred_check
    _
  $region23: #{_lambda_.51} parent=0 // pred_check_branch
    %122 = sbr.rel (0) target = $region25
  $region24: #{_lambda_.51} parent=0 // pred_region
    _
  $region25: #{_lambda_.51} parent=0 // pred_fallthru
    _
  // Predicated region
  $region26: #{_lambda_.51} parent=0 // pred_check
    _
  $region27: #{_lambda_.51} parent=0 // pred_check_branch
    %124 = sbr.rel (0) target = $region29
  $region28: #{_lambda_.51} parent=0 // pred_region
    _
  $region29: #{_lambda_.51} parent=0 // pred_fallthru
    _

// kernel: _lambda_.57
$region0: #{_lambda_.57}
  #allocation0 [shape = 'u32[]', space=smem, size = 0x4, offset = 0x4, fixed_abs, tag = 'smem constant byte address 0x4 - core index']
  #allocation1 [shape = 'u32[72,128]{1,0:T(1,128)}', space=vmem, size = 0x9000, scoped, tag = 'internal scratch']
  %s0 = inlined_call_operand.vmem [shape: bf16[2,16,28], index: 0, kind: input, shape index: {}]
  %s1 = inlined_call_operand.vmem [shape: f32[28,10], index: 1, kind: input, shape index: {}]
  %s2 = inlined_call_operand.vmem [shape: f32[1,10], index: 2, kind: input, shape index: {}]
  %s3 = inlined_call_operand.hbm [shape: f32[2,10], index: 3, kind: output, shape index: {}]
  %s4 = sld [smem:[#allocation0]]
  $region22: #{_lambda_.57} parent=0
    _
  %s6 = ssub.s32 1, %s4
  %s7 = scalar_select 0, %s6, %s4
  $region1: #{_lambda_.57} parent=0
    #allocation2 [shape = 'u8[1024]{0}', space=vmem, size = 0x400, scoped, tag = 'output window, operand 0, single buffered']
    #allocation3 [shape = 's32[1]{0}', space=sflag, size = 0x4, scoped, tag = 'scoped memory for _lambda_.57']
    %8 = vsyncpa [#allocation3], 0
    // Predicated region
    $region2: #{_lambda_.57} parent=1 // pred_check
      _
    $region3: #{_lambda_.57} parent=1 // pred_check_branch
      %10 = sbr.rel (0) target = $region5
    $region4: #{_lambda_.57} parent=1 // pred_region
      _
    $region5: #{_lambda_.57} parent=1 // pred_fallthru
      _
    // Predicated region
    $region6: #{_lambda_.57} parent=1 // pred_check
      _
    $region7: #{_lambda_.57} parent=1 // pred_check_branch
      %12 = sbr.rel (0) target = $region9
    $region8: #{_lambda_.57} parent=1 // pred_region
      _
    $region9: #{_lambda_.57} parent=1 // pred_fallthru
      _
    // Predicated region
    $region10: #{_lambda_.57} parent=1 // pred_check
      _
    $region11: #{_lambda_.57} parent=1 // pred_check_branch
      %14 = sbr.rel (0) target = $region13
    $region12: #{_lambda_.57} parent=1 // pred_region
      _
    $region13: #{_lambda_.57} parent=1 // pred_fallthru
      _
    %v15 = vld [vmem:[%s0] sm:$0xf]
    %v16 = vld [vmem:[%s0 + $0x4] sm:$0xf]
    %v17 = vld [vmem:[%s0 + $0x8] sm:$0xf]
    %v18 = vld [vmem:[%s0 + $0xc] sm:$0xf]
    %v19 = vunpack.c.l.bf16 %v15
    %v20 = vunpack.c.l.bf16 %v16
    %v21 = vunpack.c.l.bf16 %v17
    %v22 = vunpack.c.l.bf16 %v18
    %v23 = vmax.f32 %v19, 0.0
    %v24 = vmax.f32 %v20, 0.0
    %v25 = vmax.f32 %v21, 0.0
    %v26 = vmax.f32 %v22, 0.0
    %vm27 = vcmask 228352
    %v28 = vsel %vm27, %v23, 0.0
    %v29 = vsel %vm27, %v24, 0.0
    %v30 = vadd.f32 %v28, %v29
    %v31 = vrot.slane %v30, 4
    %v32 = vadd.f32 %v30, %v31
    %v33 = vrot.slane %v32, 2
    %v34 = vadd.f32 %v32, %v33
    %v35 = vrot.slane %v34, 1
    %v36 = vadd.f32 %v34, %v35
    %v37 = vsel %vm27, %v25, 0.0
    %v38 = vsel %vm27, %v26, 0.0
    %v39 = vadd.f32 %v37, %v38
    %v40 = vrot.slane %v39, 4
    %v41 = vadd.f32 %v39, %v40
    %v42 = vrot.slane %v41, 2
    %v43 = vadd.f32 %v41, %v42
    %v44 = vrot.slane %v43, 1
    %v45 = vadd.f32 %v43, %v44
    %v46 = vrcp.pop 16.0
    %v47 = vmul.f32 16.0, %v46
    %v48 = vsub.f32 1.0, %v47
    %v49 = vmul.f32 %v46, %v48
    %v50 = vadd.f32 %v46, %v49
    %vm51 = vweird.f32 %v46
    %v52 = vsel %vm51, %v46, %v50
    %v53 = vmul.f32 %v36, %v52
    %v54 = vmul.f32 %v45, %v52
    %v55 = vld [vmem:[%s1] sm:$0xff]
    %v56 = vld [vmem:[%s1 + $0x8] sm:$0xff]
    %v57 = vld [vmem:[%s1 + $0x10] sm:$0xff]
    %v58 = vld [vmem:[%s1 + $0x18] sm:$0xf]
    %v59 = vld [vmem:[%s2] sm:$0x1]
    %v61 = vperm.slane %v59, 0
    %vm65 = vcmask 1041409
    %v66 = vsel %vm65, %v54, %v53
    %v67 = vsel %vm27, %v66, 0
    %vm69 = vcmask 1043456
    %v71 = vsel %vm69, %v58, 0
    %73 = vmatpush.msra.mxu0 0.0
    %74 = vmatpush.msra.mxu0 0.0
    %75 = vmatpush.msra.mxu0 0.0
    %76 = vmatpush.msra.mxu0 0.0
    %77 = vmatpush.msra.mxu0 0.0
    %78 = vmatpush.msra.mxu0 0.0
    %79 = vmatpush.msra.mxu0 0.0
    %80 = vmatpush.msra.mxu0 0.0
    %81 = vmatpush.msra.mxu0 0.0
    %82 = vmatpush.msra.mxu0 0.0
    %83 = vmatpush.msra.mxu0 0.0
    %84 = vmatpush.msra.mxu0 0.0
    %85 = vmatpush.msra.mxu0 %v71
    %86 = vmatpush.msra.mxu0 %v57
    %87 = vmatpush.msra.mxu0 %v56
    %88 = vmatpush.msra.mxu0 %v55
    %89 = vmatmul.f32.gmra.mxu0 %v67
    %v90 = vpop.f32.mrf.mxu0
    %v91 = vadd.f32 %v61, %v90
    %92 = vdwg.mxu0
    %vm93 = vcmask 74752
    %94 = vst.msk [vmem:[#allocation2] sm:$0x3] %vm93, %v91
    // Predicated region
    $region14: #{_lambda_.57} parent=1 // pred_check
      _
    $region15: #{_lambda_.57} parent=1 // pred_check_branch
      %96 = sbr.rel (0) target = $region17
    $region16: #{_lambda_.57} parent=1 // pred_region
      %98 = vsyncadd [#allocation3], 0
      %s100 = sshll.u32 [#allocation2], 4
      %s101 = int_to_ptr.vmem [resolvable:$true] %s100
      %s102 = sshll.u32 %s3, 4
      %s103 = int_to_ptr.hbm [resolvable:$true] %s102
      %105 = dma.vmem_to_hbm [thread:$0]  %s101, 32, %s103, [#allocation3]
    $region17: #{_lambda_.57} parent=1 // pred_fallthru
      _
    // Predicated region
    $region18: #{_lambda_.57} parent=1 // pred_check
      _
    $region19: #{_lambda_.57} parent=1 // pred_check_branch
      %107 = sbr.rel (0) target = $region21
    $region20: #{_lambda_.57} parent=1 // pred_region
      %109 = dma.done [#allocation3], 32
    $region21: #{_lambda_.57} parent=1 // pred_fallthru
      _
    %110 = vsyncpa [#allocation3], 1

</llo_original>
